<compile_context>
chip_gen: v7x
topology: tpu7x:2x2x1
jax: 0.10.0
libtpu: 0.0.40
codegen_flags: <defaults>
</compile_context>

<pallas_src>
import functools

import jax
import jax.numpy as jnp
from jax.experimental import pallas as pl
from jax.experimental.pallas import tpu as pltpu


LANES = 128   # lane-padded channel width carried between conv layers


# ----------------------------------------------------------------------------
# small helpers
# ----------------------------------------------------------------------------
def _round_up(x, m):
    return (x + m - 1) // m * m


def _pad_axis(x, axis, size):
    if x.shape[axis] == size:
        return x
    pads = [(0, 0)] * x.ndim
    pads[axis] = (0, size - x.shape[axis])
    return jnp.pad(x, pads)


def _pad2d(x, rows, cols):
    return _pad_axis(_pad_axis(x, 0, rows), 1, cols)


def _full_spec(shape):
    nd = len(shape)
    return pl.BlockSpec(shape, lambda *_: (0,) * nd)


# ----------------------------------------------------------------------------
# Tiled matmul + bias (+ReLU):  out[M,N] = A[M,K] @ B[K,N] + bias[1,N]
# bf16 MXU operands, f32 VMEM accumulator, pl.when init/finalize.
# ----------------------------------------------------------------------------
def _mm_kernel(a_ref, b_ref, bias_ref, o_ref, acc_ref, *, relu):
    @pl.when(pl.program_id(2) == 0)
    def _():
        acc_ref[...] = jnp.zeros_like(acc_ref)

    acc_ref[...] += jnp.dot(a_ref[...], b_ref[...],
                            preferred_element_type=jnp.float32)

    @pl.when(pl.program_id(2) == pl.num_programs(2) - 1)
    def _():
        out = acc_ref[...] + bias_ref[...]          # (1,TN) broadcasts over rows
        if relu:
            out = jnp.maximum(out, 0.0)
        o_ref[...] = out.astype(o_ref.dtype)


def _pick_tm(m, pref=256):
    m8 = _round_up(m, 8)
    tm = pref if m8 >= pref else m8
    return tm, _round_up(m8, tm)


def _pick_tn(n):
    npad = _round_up(n, 128)
    tn = 256 if (npad >= 256 and npad % 256 == 0) else 128
    return tn, npad


def _pick_tk(k):
    for tk in (512, 384, 256, 128):
        if k > tk and k % tk == 0:
            return tk
    return k


def pallas_matmul_bias(a, b, bias, relu=False):
    """A[M,K] @ B[K,N] + bias[N]; caller supplies lane-friendly N (mult of 128
    for the hot conv path).  Returns f32 (M, Npad)."""
    M, K = a.shape
    K2, N = b.shape
    assert K == K2

    TM, Mp = _pick_tm(M)
    TN, Np = _pick_tn(N)
    Kp = _round_up(K, 8)
    TK = _pick_tk(Kp)

    a_p = _pad2d(a, Mp, Kp).astype(jnp.bfloat16)
    b_p = _pad2d(b, Kp, Np).astype(jnp.bfloat16)
    bias_p = _pad2d(bias.reshape(1, N).astype(jnp.float32), 1, Np)

    out = pl.pallas_call(
        functools.partial(_mm_kernel, relu=relu),
        out_shape=jax.ShapeDtypeStruct((Mp, Np), jnp.float32),
        grid=(Mp // TM, Np // TN, Kp // TK),
        in_specs=[
            pl.BlockSpec((TM, TK), lambda i, j, k: (i, k)),
            pl.BlockSpec((TK, TN), lambda i, j, k: (k, j)),
            pl.BlockSpec((1, TN), lambda i, j, k: (0, j)),
        ],
        out_specs=pl.BlockSpec((TM, TN), lambda i, j, k: (i, j)),
        scratch_shapes=[pltpu.VMEM((TM, TN), jnp.float32)],
        compiler_params=pltpu.CompilerParams(
            dimension_semantics=("parallel", "parallel", "arbitrary"),
            vmem_limit_bytes=32 * 1024 * 1024),
        cost_estimate=pl.CostEstimate(
            flops=2 * Mp * Np * Kp,
            transcendentals=0,
            bytes_accessed=Mp * Kp * 2 + Kp * Np * 2 + Np * 4 + Mp * Np * 4),
    )(a_p, b_p, bias_p)
    return out[:M] if Mp != M else out


# ----------------------------------------------------------------------------
# Conv2d = im2col (NHWC, no transposes) + tiled Pallas GEMM, lane-padded Cout
# ----------------------------------------------------------------------------
def conv2d_nhwc(x, w_hwio, b, *, stride=1, pad=1, relu=False):
    """x:(N,H,W,Cin_store)  w:(kh,kw,Cin_store,Cout) -> (N,Ho,Wo,Cout_pad128).
    Padded channel lanes are exactly zero and are carried into the next layer."""
    N, H, W, Ci = x.shape
    kh, kw, Ci2, Co = w_hwio.shape
    assert Ci == Ci2
    Ho = (H + 2 * pad - kh) // stride + 1
    Wo = (W + 2 * pad - kw) // stride + 1

    # TODO(synk): move this im2col gather inside the Pallas kernel via shifted
    # pl.ds reads so the kh*kw expansion stays in VMEM at production sizes.
    xp = jnp.pad(x, ((0, 0), (pad, pad), (pad, pad), (0, 0)))
    cols = [xp[:, i:i + stride * Ho:stride, j:j + stride * Wo:stride, :]
            for i in range(kh) for j in range(kw)]
    a = jnp.stack(cols, axis=3).reshape(N * Ho * Wo, kh * kw * Ci)

    Cop = _round_up(max(Co, LANES), 128)
    wm = _pad_axis(w_hwio.reshape(kh * kw * Ci, Co), 1, Cop)
    bp = _pad_axis(b, 0, Cop)
    y = pallas_matmul_bias(a, wm, bp, relu=relu)          # (N*Ho*Wo, Cop)
    return y.reshape(N, Ho, Wo, Cop)


def upsample2x_nhwc(x):
    # TODO(synk): fold nearest-neighbour upsample into the conv's input gather
    # instead of materializing the 4x tensor in HBM.
    return jnp.repeat(jnp.repeat(x, 2, axis=1), 2, axis=2)


# ----------------------------------------------------------------------------
# Fused head: GAP (as MXU matmul) -> encoder_fc -> {classifier, decoder fc}
# ----------------------------------------------------------------------------
def _head_kernel(p_ref, x_ref, wenc_ref, benc_ref, wc1_ref, bc1_ref,
                 wc2_ref, bc2_ref, wdfc_ref, bdfc_ref,
                 lat_ref, yhat_ref, dec_ref):
    f32, bf16 = jnp.float32, jnp.bfloat16
    # global average pool == P @ X  (P: per-sample 1/(Ho*Wo) pooling matrix)
    pooled = jnp.dot(p_ref[...], x_ref[...], preferred_element_type=f32)
    # encoder_fc
    latent = jnp.dot(pooled.astype(bf16), wenc_ref[...],
                     preferred_element_type=f32) + benc_ref[...]
    lat_ref[...] = latent.astype(lat_ref.dtype)
    lb = latent.astype(bf16)
    # classifier: Linear -> ReLU -> Linear
    c = jnp.maximum(jnp.dot(lb, wc1_ref[...], preferred_element_type=f32)
                    + bc1_ref[...], 0.0)
    yhat_ref[...] = (jnp.dot(c.astype(bf16), wc2_ref[...],
                             preferred_element_type=f32)
                     + bc2_ref[...]).astype(yhat_ref.dtype)
    # decoder input FC (+ReLU)
    dec_ref[...] = jnp.maximum(
        jnp.dot(lb, wdfc_ref[...], preferred_element_type=f32) + bdfc_ref[...],
        0.0).astype(dec_ref.dtype)


def pallas_fused_head(pm, xflat, wenc, benc, wc1, bc1, wc2, bc2, wdfc, bdfc):
    nb = pm.shape[0]
    bf = jnp.bfloat16
    args = (pm.astype(bf), xflat.astype(bf), wenc.astype(bf), benc,
            wc1.astype(bf), bc1, wc2.astype(bf), bc2, wdfc.astype(bf), bdfc)
    zp, clsp, dd = wenc.shape[1], wc2.shape[1], wdfc.shape[1]
    return pl.pallas_call(
        _head_kernel,
        out_shape=(jax.ShapeDtypeStruct((nb, zp), jnp.float32),
                   jax.ShapeDtypeStruct((nb, clsp), jnp.float32),
                   jax.ShapeDtypeStruct((nb, dd), jnp.float32)),
        grid=(1,),
        in_specs=[_full_spec(a.shape) for a in args],
        out_specs=(_full_spec((nb, zp)), _full_spec((nb, clsp)),
                   _full_spec((nb, dd))),
        compiler_params=pltpu.CompilerParams(
            vmem_limit_bytes=32 * 1024 * 1024),
    )(*args)


# ----------------------------------------------------------------------------
# Deterministic stand-in parameters (padded lanes are exactly zero so results
# equal the unpadded reference computation).
# ----------------------------------------------------------------------------
def init_params(key, in_ch=3, z_dim=32, n_class=5):
    CP = LANES
    ZP = _round_up(z_dim, 128)
    CLSP = _round_up(n_class, 128)
    CLS_HID = 256            # nn.Linear(z_dim, 256) per the reference module
    BC, BH, BW = 64, 4, 4    # decoder bottleneck (stand-in for (2048, 28, 28))

    ks = jax.random.split(key, 10)

    def conv_p(k, cin_true, cin_store, cout):
        w = jax.random.normal(k, (3, 3, cin_true, cout), jnp.float32)
        w = w * (2.0 / (cin_true * 9)) ** 0.5
        return _pad_axis(w, 2, cin_store), jnp.zeros((cout,), jnp.float32)

    def linear_p(k, fin, fout):
        kw_, kb = jax.random.split(k)
        s = 1.0 / fin ** 0.5
        w = jax.random.uniform(kw_, (fin, fout), jnp.float32, -s, s)
        b = jax.random.uniform(kb, (fout,), jnp.float32, -s, s)
        return w, b

    p = {}
    # encoder (stand-in for modules.resnet18): three strided conv+ReLU stages
    p["enc1"] = conv_p(ks[0], in_ch, in_ch, 16)
    p["enc2"] = conv_p(ks[1], 16, CP, 32)
    p["enc3"] = conv_p(ks[2], 32, CP, BC)
    # encoder_fc = nn.Linear(bottleneck_channels, z_dim)
    w, b = linear_p(ks[3], BC, z_dim)
    p["enc_fc"] = (_pad2d(w, CP, ZP), _pad2d(b.reshape(1, -1), 1, ZP))
    # classifier (z_cac is None branch): Linear(z,256) -> ReLU -> Linear(256,n)
    w, b = linear_p(ks[8], z_dim, CLS_HID)
    p["cls1"] = (_pad_axis(w, 0, ZP), b.reshape(1, CLS_HID))
    w, b = linear_p(ks[9], CLS_HID, n_class)
    p["cls2"] = (_pad2d(w, CLS_HID, CLSP), _pad2d(b.reshape(1, -1), 1, CLSP))
    # decoder (stand-in for modules.ResDeconv): fc -> 3x (upsample2x, conv)
    w, b = linear_p(ks[4], z_dim, BH * BW * BC)
    w = _pad_axis(w.reshape(z_dim, BH, BW, BC), 3, CP).reshape(z_dim, BH * BW * CP)
    b = _pad_axis(b.reshape(BH, BW, BC), 2, CP).reshape(1, BH * BW * CP)
    p["dec_fc"] = (_pad_axis(w, 0, ZP), b)
    p["dec1"] = conv_p(ks[5], BC, CP, 32)
    p["dec2"] = conv_p(ks[6], 32, CP, 16)
    p["dec3"] = conv_p(ks[7], 16, CP, in_ch)
    return p


# ----------------------------------------------------------------------------
# Forward pass (mirrors CXRAutoencoder.forward, z_cac=None branch)
# ----------------------------------------------------------------------------
def cxr_autoencoder_forward(params, x, *, z_dim, n_class):
    N = x.shape[0]
    # NCHW -> NHWC once at the boundary; all internal activations stay NHWC.
    h = jnp.transpose(x, (0, 2, 3, 1))

    # latent_code = self.encoder(x)
    h = conv2d_nhwc(h, *params["enc1"], stride=2, relu=True)   # (N,16,16,128)
    h = conv2d_nhwc(h, *params["enc2"], stride=2, relu=True)   # (N, 8, 8,128)
    h = conv2d_nhwc(h, *params["enc3"], stride=2, relu=True)   # (N, 4, 4,128)

    # fused head: mean(-1).mean(-1) (as MXU matmul) -> encoder_fc ->
    #             classifier (2 Linear) and decoder FC, one Pallas launch.
    _, Hb, Wb, Cb = h.shape
    hw = Hb * Wb
    pmat = jnp.kron(jnp.eye(N, dtype=jnp.float32),
                    jnp.ones((1, hw), jnp.float32) / hw)        # (N, N*hw)
    pmat = _pad_axis(pmat, 0, 8)                                # sublane pad
    xflat = h.reshape(N * hw, Cb)
    latent_p, yhat_p, dec_p = pallas_fused_head(
        pmat, xflat, *params["enc_fc"], *params["cls1"], *params["cls2"],
        *params["dec_fc"])

    latent_code = latent_p[:N, :z_dim]
    y_hat = yhat_p[:N, :n_class]

    # x_hat = self.decoder(latent_code)
    d = dec_p[:N].reshape(N, 4, 4, LANES)                       # bottleneck
    d = conv2d_nhwc(upsample2x_nhwc(d), *params["dec1"], stride=1, relu=True)
    d = conv2d_nhwc(upsample2x_nhwc(d), *params["dec2"], stride=1, relu=True)
    d = conv2d_nhwc(upsample2x_nhwc(d), *params["dec3"], stride=1, relu=False)
    x_hat = jnp.transpose(d[..., :x.shape[1]], (0, 3, 1, 2))    # NHWC -> NCHW

    return {"x_hat": x_hat, "y_hat": y_hat, "latent_code": latent_code}


if __name__ == "__main__":
    key = jax.random.PRNGKey(0)
    pkey, xkey = jax.random.split(key)

    Z_DIM, N_CLASS = 32, 5
    params = init_params(pkey, in_ch=3, z_dim=Z_DIM, n_class=N_CLASS)

    x = jax.random.normal(xkey, (2, 3, 32, 32), jnp.float32)    # NCHW stand-in
    fwd = jax.jit(functools.partial(cxr_autoencoder_forward,
                                    z_dim=Z_DIM, n_class=N_CLASS))
    out = jax.block_until_ready(fwd(params, x))

    assert out["x_hat"].shape == (2, 3, 32, 32)
    assert out["y_hat"].shape == (2, N_CLASS)
    assert out["latent_code"].shape == (2, Z_DIM)
    print("KERNEL_OK")
</pallas_src>

<mosaic_0001>
module attributes {stable_mosaic.version = 11 : i64} {
  func.func @_mm_kernel(%arg0: i32, %arg1: i32, %arg2: i32, %arg3: memref<256x32xbf16, #tpu.memory_space<vmem>>, %arg4: memref<32x128xbf16, #tpu.memory_space<vmem>>, %arg5: memref<1x128xf32, #tpu.memory_space<vmem>>, %arg6: memref<256x128xf32, #tpu.memory_space<vmem>>, %arg7: memref<256x128xf32, #tpu.memory_space<vmem>>) attributes {dimension_semantics = [#tpu.dimension_semantics<parallel>, #tpu.dimension_semantics<parallel>, #tpu.dimension_semantics<arbitrary>], iteration_bounds = array<i64: 2, 1, 1>, scalar_prefetch = 0 : i64, scratch_operands = 1 : i64, tpu.core_type = #tpu.core_type<tc>, window_params = [{transform_indices = @transform_0, window_bounds = array<i64: 256, 32>}, {transform_indices = @transform_1, window_bounds = array<i64: 32, 128>}, {transform_indices = @transform_2, window_bounds = array<i64: 1, 128>}, {transform_indices = @transform_3, window_bounds = array<i64: 256, 128>}]} {
    %c0_i32 = arith.constant 0 : i32
    %0 = arith.cmpi eq, %arg2, %c0_i32 : i32
    %1 = arith.extui %0 : i1 to i32
    %c0_i32_0 = arith.constant 0 : i32
    %2 = arith.cmpi ne, %1, %c0_i32_0 : i32
    scf.if %2 {
      %cst_10 = arith.constant 0.000000e+00 : f32
      %12 = vector.broadcast %cst_10 : f32 to vector<256x128xf32>
      %c0_11 = arith.constant 0 : index
      %c0_12 = arith.constant 0 : index
      %13 = vector.load %arg7[%c0_11, %c0_12] : memref<256x128xf32, #tpu.memory_space<vmem>>, vector<256x128xf32>
      tpu.vector_store %arg7[%c0_11, %c0_12], %12 {strides = array<i32>} : memref<256x128xf32, #tpu.memory_space<vmem>>, vector<256x128xf32>,
    } else {
    }
    %c0 = arith.constant 0 : index
    %c0_1 = arith.constant 0 : index
    %3 = vector.load %arg7[%c0, %c0_1] : memref<256x128xf32, #tpu.memory_space<vmem>>, vector<256x128xf32>
    %c0_2 = arith.constant 0 : index
    %c0_3 = arith.constant 0 : index
    %4 = vector.load %arg3[%c0_2, %c0_3] : memref<256x32xbf16, #tpu.memory_space<vmem>>, vector<256x32xbf16>
    %c0_4 = arith.constant 0 : index
    %c0_5 = arith.constant 0 : index
    %5 = vector.load %arg4[%c0_4, %c0_5] : memref<32x128xbf16, #tpu.memory_space<vmem>>, vector<32x128xbf16>
    %cst = arith.constant dense<0.000000e+00> : vector<256x128xf32>
    %6 = tpu.matmul %4, %5, %cst {dimension_numbers = #tpu.dot_dimension_numbers<[1], [0], [0], [1], [0, 0, 1, 1], [], []>} : vector<256x32xbf16>, vector<32x128xbf16>, vector<256x128xf32> -> vector<256x128xf32>
    %7 = arith.addf %3, %6 : vector<256x128xf32>
    %c0_6 = arith.constant 0 : index
    %c0_7 = arith.constant 0 : index
    %8 = vector.load %arg7[%c0_6, %c0_7] : memref<256x128xf32, #tpu.memory_space<vmem>>, vector<256x128xf32>
    tpu.vector_store %arg7[%c0_6, %c0_7], %7 {strides = array<i32>} : memref<256x128xf32, #tpu.memory_space<vmem>>, vector<256x128xf32>,
    %c0_i32_8 = arith.constant 0 : i32
    %9 = arith.cmpi eq, %arg2, %c0_i32_8 : i32
    %10 = arith.extui %9 : i1 to i32
    %c0_i32_9 = arith.constant 0 : i32
    %11 = arith.cmpi ne, %10, %c0_i32_9 : i32
    scf.if %11 {
      %c0_10 = arith.constant 0 : index
      %c0_11 = arith.constant 0 : index
      %12 = vector.load %arg7[%c0_10, %c0_11] : memref<256x128xf32, #tpu.memory_space<vmem>>, vector<256x128xf32>
      %c0_12 = arith.constant 0 : index
      %c0_13 = arith.constant 0 : index
      %13 = vector.load %arg5[%c0_12, %c0_13] : memref<1x128xf32, #tpu.memory_space<vmem>>, vector<1x128xf32>
      %14 = vector.broadcast %13 : vector<1x128xf32> to vector<256x128xf32>
      %15 = arith.addf %12, %14 : vector<256x128xf32>
      %cst_14 = arith.constant 0.000000e+00 : f32
      %16 = vector.broadcast %cst_14 : f32 to vector<256x128xf32>
      %17 = arith.maximumf %15, %16 : vector<256x128xf32>
      %c0_15 = arith.constant 0 : index
      %c0_16 = arith.constant 0 : index
      %18 = vector.load %arg6[%c0_15, %c0_16] : memref<256x128xf32, #tpu.memory_space<vmem>>, vector<256x128xf32>
      tpu.vector_store %arg6[%c0_15, %c0_16], %17 {strides = array<i32>} : memref<256x128xf32, #tpu.memory_space<vmem>>, vector<256x128xf32>,
    } else {
    }
    return
  }
  func.func @transform_0(%arg0: i32, %arg1: i32, %arg2: i32) -> (i32, i32) {
    %c0_i32 = arith.constant 0 : i32
    return %arg0, %arg2 : i32, i32
  }
  func.func @transform_1(%arg0: i32, %arg1: i32, %arg2: i32) -> (i32, i32) {
    %c0_i32 = arith.constant 0 : i32
    return %arg2, %arg1 : i32, i32
  }
  func.func @transform_2(%arg0: i32, %arg1: i32, %arg2: i32) -> (i32, i32) {
    %c0_i32 = arith.constant 0 : i32
    %c0_i32_0 = arith.constant 0 : i32
    return %c0_i32, %arg1 : i32, i32
  }
  func.func @transform_3(%arg0: i32, %arg1: i32, %arg2: i32) -> (i32, i32) {
    %c0_i32 = arith.constant 0 : i32
    return %arg0, %arg1 : i32, i32
  }
}

module attributes {stable_mosaic.version = 11 : i64} {
  func.func @_mm_kernel(%arg0: i32, %arg1: i32, %arg2: i32, %arg3: memref<128x384xbf16, #tpu.memory_space<vmem>>, %arg4: memref<384x128xbf16, #tpu.memory_space<vmem>>, %arg5: memref<1x128xf32, #tpu.memory_space<vmem>>, %arg6: memref<128x128xf32, #tpu.memory_space<vmem>>, %arg7: memref<128x128xf32, #tpu.memory_space<vmem>>) attributes {dimension_semantics = [#tpu.dimension_semantics<parallel>, #tpu.dimension_semantics<parallel>, #tpu.dimension_semantics<arbitrary>], iteration_bounds = array<i64: 1, 1, 3>, scalar_prefetch = 0 : i64, scratch_operands = 1 : i64, tpu.core_type = #tpu.core_type<tc>, window_params = [{transform_indices = @transform_0, window_bounds = array<i64: 128, 384>}, {transform_indices = @transform_1, window_bounds = array<i64: 384, 128>}, {transform_indices = @transform_2, window_bounds = array<i64: 1, 128>}, {transform_indices = @transform_3, window_bounds = array<i64: 128, 128>}]} {
    %c0_i32 = arith.constant 0 : i32
    %0 = arith.cmpi eq, %arg2, %c0_i32 : i32
    %1 = arith.extui %0 : i1 to i32
    %c0_i32_0 = arith.constant 0 : i32
    %2 = arith.cmpi ne, %1, %c0_i32_0 : i32
    scf.if %2 {
      %cst_9 = arith.constant 0.000000e+00 : f32
      %12 = vector.broadcast %cst_9 : f32 to vector<128x128xf32>
      %c0_10 = arith.constant 0 : index
      %c0_11 = arith.constant 0 : index
      %13 = vector.load %arg7[%c0_10, %c0_11] : memref<128x128xf32, #tpu.memory_space<vmem>>, vector<128x128xf32>
      tpu.vector_store %arg7[%c0_10, %c0_11], %12 {strides = array<i32>} : memref<128x128xf32, #tpu.memory_space<vmem>>, vector<128x128xf32>,
    } else {
    }
    %c0 = arith.constant 0 : index
    %c0_1 = arith.constant 0 : index
    %3 = vector.load %arg7[%c0, %c0_1] : memref<128x128xf32, #tpu.memory_space<vmem>>, vector<128x128xf32>
    %c0_2 = arith.constant 0 : index
    %c0_3 = arith.constant 0 : index
    %4 = vector.load %arg3[%c0_2, %c0_3] : memref<128x384xbf16, #tpu.memory_space<vmem>>, vector<128x384xbf16>
    %c0_4 = arith.constant 0 : index
    %c0_5 = arith.constant 0 : index
    %5 = vector.load %arg4[%c0_4, %c0_5] : memref<384x128xbf16, #tpu.memory_space<vmem>>, vector<384x128xbf16>
    %cst = arith.constant dense<0.000000e+00> : vector<128x128xf32>
    %6 = tpu.matmul %4, %5, %cst {dimension_numbers = #tpu.dot_dimension_numbers<[1], [0], [0], [1], [0, 0, 1, 1], [], []>} : vector<128x384xbf16>, vector<384x128xbf16>, vector<128x128xf32> -> vector<128x128xf32>
    %7 = arith.addf %3, %6 : vector<128x128xf32>
    %c0_6 = arith.constant 0 : index
    %c0_7 = arith.constant 0 : index
    %8 = vector.load %arg7[%c0_6, %c0_7] : memref<128x128xf32, #tpu.memory_space<vmem>>, vector<128x128xf32>
    tpu.vector_store %arg7[%c0_6, %c0_7], %7 {strides = array<i32>} : memref<128x128xf32, #tpu.memory_space<vmem>>, vector<128x128xf32>,
    %c2_i32 = arith.constant 2 : i32
    %9 = arith.cmpi eq, %arg2, %c2_i32 : i32
    %10 = arith.extui %9 : i1 to i32
    %c0_i32_8 = arith.constant 0 : i32
    %11 = arith.cmpi ne, %10, %c0_i32_8 : i32
    scf.if %11 {
      %c0_9 = arith.constant 0 : index
      %c0_10 = arith.constant 0 : index
      %12 = vector.load %arg7[%c0_9, %c0_10] : memref<128x128xf32, #tpu.memory_space<vmem>>, vector<128x128xf32>
      %c0_11 = arith.constant 0 : index
      %c0_12 = arith.constant 0 : index
      %13 = vector.load %arg5[%c0_11, %c0_12] : memref<1x128xf32, #tpu.memory_space<vmem>>, vector<1x128xf32>
      %14 = vector.broadcast %13 : vector<1x128xf32> to vector<128x128xf32>
      %15 = arith.addf %12, %14 : vector<128x128xf32>
      %cst_13 = arith.constant 0.000000e+00 : f32
      %16 = vector.broadcast %cst_13 : f32 to vector<128x128xf32>
      %17 = arith.maximumf %15, %16 : vector<128x128xf32>
      %c0_14 = arith.constant 0 : index
      %c0_15 = arith.constant 0 : index
      %18 = vector.load %arg6[%c0_14, %c0_15] : memref<128x128xf32, #tpu.memory_space<vmem>>, vector<128x128xf32>
      tpu.vector_store %arg6[%c0_14, %c0_15], %17 {strides = array<i32>} : memref<128x128xf32, #tpu.memory_space<vmem>>, vector<128x128xf32>,
    } else {
    }
    return
  }
  func.func @transform_0(%arg0: i32, %arg1: i32, %arg2: i32) -> (i32, i32) {
    %c0_i32 = arith.constant 0 : i32
    return %arg0, %arg2 : i32, i32
  }
  func.func @transform_1(%arg0: i32, %arg1: i32, %arg2: i32) -> (i32, i32) {
    %c0_i32 = arith.constant 0 : i32
    return %arg2, %arg1 : i32, i32
  }
  func.func @transform_2(%arg0: i32, %arg1: i32, %arg2: i32) -> (i32, i32) {
    %c0_i32 = arith.constant 0 : i32
    %c0_i32_0 = arith.constant 0 : i32
    return %c0_i32, %arg1 : i32, i32
  }
  func.func @transform_3(%arg0: i32, %arg1: i32, %arg2: i32) -> (i32, i32) {
    %c0_i32 = arith.constant 0 : i32
    return %arg0, %arg1 : i32, i32
  }
}

module attributes {stable_mosaic.version = 11 : i64} {
  func.func @_mm_kernel(%arg0: i32, %arg1: i32, %arg2: i32, %arg3: memref<32x384xbf16, #tpu.memory_space<vmem>>, %arg4: memref<384x128xbf16, #tpu.memory_space<vmem>>, %arg5: memref<1x128xf32, #tpu.memory_space<vmem>>, %arg6: memref<32x128xf32, #tpu.memory_space<vmem>>, %arg7: memref<32x128xf32, #tpu.memory_space<vmem>>) attributes {dimension_semantics = [#tpu.dimension_semantics<parallel>, #tpu.dimension_semantics<parallel>, #tpu.dimension_semantics<arbitrary>], iteration_bounds = array<i64: 1, 1, 3>, scalar_prefetch = 0 : i64, scratch_operands = 1 : i64, tpu.core_type = #tpu.core_type<tc>, window_params = [{transform_indices = @transform_0, window_bounds = array<i64: 32, 384>}, {transform_indices = @transform_1, window_bounds = array<i64: 384, 128>}, {transform_indices = @transform_2, window_bounds = array<i64: 1, 128>}, {transform_indices = @transform_3, window_bounds = array<i64: 32, 128>}]} {
    %c0_i32 = arith.constant 0 : i32
    %0 = arith.cmpi eq, %arg2, %c0_i32 : i32
    %1 = arith.extui %0 : i1 to i32
    %c0_i32_0 = arith.constant 0 : i32
    %2 = arith.cmpi ne, %1, %c0_i32_0 : i32
    scf.if %2 {
      %cst_9 = arith.constant 0.000000e+00 : f32
      %12 = vector.broadcast %cst_9 : f32 to vector<32x128xf32>
      %c0_10 = arith.constant 0 : index
      %c0_11 = arith.constant 0 : index
      %13 = vector.load %arg7[%c0_10, %c0_11] : memref<32x128xf32, #tpu.memory_space<vmem>>, vector<32x128xf32>
      tpu.vector_store %arg7[%c0_10, %c0_11], %12 {strides = array<i32>} : memref<32x128xf32, #tpu.memory_space<vmem>>, vector<32x128xf32>,
    } else {
    }
    %c0 = arith.constant 0 : index
    %c0_1 = arith.constant 0 : index
    %3 = vector.load %arg7[%c0, %c0_1] : memref<32x128xf32, #tpu.memory_space<vmem>>, vector<32x128xf32>
    %c0_2 = arith.constant 0 : index
    %c0_3 = arith.constant 0 : index
    %4 = vector.load %arg3[%c0_2, %c0_3] : memref<32x384xbf16, #tpu.memory_space<vmem>>, vector<32x384xbf16>
    %c0_4 = arith.constant 0 : index
    %c0_5 = arith.constant 0 : index
    %5 = vector.load %arg4[%c0_4, %c0_5] : memref<384x128xbf16, #tpu.memory_space<vmem>>, vector<384x128xbf16>
    %cst = arith.constant dense<0.000000e+00> : vector<32x128xf32>
    %6 = tpu.matmul %4, %5, %cst {dimension_numbers = #tpu.dot_dimension_numbers<[1], [0], [0], [1], [0, 0, 1, 1], [], []>} : vector<32x384xbf16>, vector<384x128xbf16>, vector<32x128xf32> -> vector<32x128xf32>
    %7 = arith.addf %3, %6 : vector<32x128xf32>
    %c0_6 = arith.constant 0 : index
    %c0_7 = arith.constant 0 : index
    %8 = vector.load %arg7[%c0_6, %c0_7] : memref<32x128xf32, #tpu.memory_space<vmem>>, vector<32x128xf32>
    tpu.vector_store %arg7[%c0_6, %c0_7], %7 {strides = array<i32>} : memref<32x128xf32, #tpu.memory_space<vmem>>, vector<32x128xf32>,
    %c2_i32 = arith.constant 2 : i32
    %9 = arith.cmpi eq, %arg2, %c2_i32 : i32
    %10 = arith.extui %9 : i1 to i32
    %c0_i32_8 = arith.constant 0 : i32
    %11 = arith.cmpi ne, %10, %c0_i32_8 : i32
    scf.if %11 {
      %c0_9 = arith.constant 0 : index
      %c0_10 = arith.constant 0 : index
      %12 = vector.load %arg7[%c0_9, %c0_10] : memref<32x128xf32, #tpu.memory_space<vmem>>, vector<32x128xf32>
      %c0_11 = arith.constant 0 : index
      %c0_12 = arith.constant 0 : index
      %13 = vector.load %arg5[%c0_11, %c0_12] : memref<1x128xf32, #tpu.memory_space<vmem>>, vector<1x128xf32>
      %14 = vector.broadcast %13 : vector<1x128xf32> to vector<32x128xf32>
      %15 = arith.addf %12, %14 : vector<32x128xf32>
      %cst_13 = arith.constant 0.000000e+00 : f32
      %16 = vector.broadcast %cst_13 : f32 to vector<32x128xf32>
      %17 = arith.maximumf %15, %16 : vector<32x128xf32>
      %c0_14 = arith.constant 0 : index
      %c0_15 = arith.constant 0 : index
      %18 = vector.load %arg6[%c0_14, %c0_15] : memref<32x128xf32, #tpu.memory_space<vmem>>, vector<32x128xf32>
      tpu.vector_store %arg6[%c0_14, %c0_15], %17 {strides = array<i32>} : memref<32x128xf32, #tpu.memory_space<vmem>>, vector<32x128xf32>,
    } else {
    }
    return
  }
  func.func @transform_0(%arg0: i32, %arg1: i32, %arg2: i32) -> (i32, i32) {
    %c0_i32 = arith.constant 0 : i32
    return %arg0, %arg2 : i32, i32
  }
  func.func @transform_1(%arg0: i32, %arg1: i32, %arg2: i32) -> (i32, i32) {
    %c0_i32 = arith.constant 0 : i32
    return %arg2, %arg1 : i32, i32
  }
  func.func @transform_2(%arg0: i32, %arg1: i32, %arg2: i32) -> (i32, i32) {
    %c0_i32 = arith.constant 0 : i32
    %c0_i32_0 = arith.constant 0 : i32
    return %c0_i32, %arg1 : i32, i32
  }
  func.func @transform_3(%arg0: i32, %arg1: i32, %arg2: i32) -> (i32, i32) {
    %c0_i32 = arith.constant 0 : i32
    return %arg0, %arg1 : i32, i32
  }
}

module attributes {stable_mosaic.version = 11 : i64} {
  func.func @_head_kernel(%arg0: i32, %arg1: memref<8x32xbf16, #tpu.memory_space<vmem>>, %arg2: memref<32x128xbf16, #tpu.memory_space<vmem>>, %arg3: memref<128x128xbf16, #tpu.memory_space<vmem>>, %arg4: memref<1x128xf32, #tpu.memory_space<vmem>>, %arg5: memref<128x256xbf16, #tpu.memory_space<vmem>>, %arg6: memref<1x256xf32, #tpu.memory_space<vmem>>, %arg7: memref<256x128xbf16, #tpu.memory_space<vmem>>, %arg8: memref<1x128xf32, #tpu.memory_space<vmem>>, %arg9: memref<128x2048xbf16, #tpu.memory_space<vmem>>, %arg10: memref<1x2048xf32, #tpu.memory_space<vmem>>, %arg11: memref<8x128xf32, #tpu.memory_space<vmem>>, %arg12: memref<8x128xf32, #tpu.memory_space<vmem>>, %arg13: memref<8x2048xf32, #tpu.memory_space<vmem>>) attributes {dimension_semantics = [#tpu.dimension_semantics<arbitrary>], iteration_bounds = array<i64: 1>, scalar_prefetch = 0 : i64, scratch_operands = 0 : i64, tpu.core_type = #tpu.core_type<tc>, window_params = [{pipeline_mode = #tpu.pipeline_mode<synchronous>, transform_indices = @transform_0, window_bounds = array<i64: 8, 32>}, {pipeline_mode = #tpu.pipeline_mode<synchronous>, transform_indices = @transform_1, window_bounds = array<i64: 32, 128>}, {pipeline_mode = #tpu.pipeline_mode<synchronous>, transform_indices = @transform_2, window_bounds = array<i64: 128, 128>}, {pipeline_mode = #tpu.pipeline_mode<synchronous>, transform_indices = @transform_3, window_bounds = array<i64: 1, 128>}, {pipeline_mode = #tpu.pipeline_mode<synchronous>, transform_indices = @transform_4, window_bounds = array<i64: 128, 256>}, {pipeline_mode = #tpu.pipeline_mode<synchronous>, transform_indices = @transform_5, window_bounds = array<i64: 1, 256>}, {pipeline_mode = #tpu.pipeline_mode<synchronous>, transform_indices = @transform_6, window_bounds = array<i64: 256, 128>}, {pipeline_mode = #tpu.pipeline_mode<synchronous>, transform_indices = @transform_7, window_bounds = array<i64: 1, 128>}, {pipeline_mode = #tpu.pipeline_mode<synchronous>, transform_indices = @transform_8, window_bounds = array<i64: 128, 2048>}, {pipeline_mode = #tpu.pipeline_mode<synchronous>, transform_indices = @transform_9, window_bounds = array<i64: 1, 2048>}, {pipeline_mode = #tpu.pipeline_mode<synchronous>, transform_indices = @transform_10, window_bounds = array<i64: 8, 128>}, {pipeline_mode = #tpu.pipeline_mode<synchronous>, transform_indices = @transform_11, window_bounds = array<i64: 8, 128>}, {pipeline_mode = #tpu.pipeline_mode<synchronous>, transform_indices = @transform_12, window_bounds = array<i64: 8, 2048>}]} {
    %c0 = arith.constant 0 : index
    %c0_0 = arith.constant 0 : index
    %0 = vector.load %arg1[%c0, %c0_0] : memref<8x32xbf16, #tpu.memory_space<vmem>>, vector<8x32xbf16>
    %c0_1 = arith.constant 0 : index
    %c0_2 = arith.constant 0 : index
    %1 = vector.load %arg2[%c0_1, %c0_2] : memref<32x128xbf16, #tpu.memory_space<vmem>>, vector<32x128xbf16>
    %cst = arith.constant dense<0.000000e+00> : vector<8x128xf32>
    %2 = tpu.matmul %0, %1, %cst {dimension_numbers = #tpu.dot_dimension_numbers<[1], [0], [0], [1], [0, 0, 1, 1], [], []>} : vector<8x32xbf16>, vector<32x128xbf16>, vector<8x128xf32> -> vector<8x128xf32>
    %3 = arith.truncf %2 : vector<8x128xf32> to vector<8x128xbf16>
    %c0_3 = arith.constant 0 : index
    %c0_4 = arith.constant 0 : index
    %4 = vector.load %arg3[%c0_3, %c0_4] : memref<128x128xbf16, #tpu.memory_space<vmem>>, vector<128x128xbf16>
    %cst_5 = arith.constant dense<0.000000e+00> : vector<8x128xf32>
    %5 = tpu.matmul %3, %4, %cst_5 {dimension_numbers = #tpu.dot_dimension_numbers<[1], [0], [0], [1], [0, 0, 1, 1], [], []>} : vector<8x128xbf16>, vector<128x128xbf16>, vector<8x128xf32> -> vector<8x128xf32>
    %c0_6 = arith.constant 0 : index
    %c0_7 = arith.constant 0 : index
    %6 = vector.load %arg4[%c0_6, %c0_7] : memref<1x128xf32, #tpu.memory_space<vmem>>, vector<1x128xf32>
    %7 = vector.broadcast %6 : vector<1x128xf32> to vector<8x128xf32>
    %8 = arith.addf %5, %7 : vector<8x128xf32>
    %c0_8 = arith.constant 0 : index
    %c0_9 = arith.constant 0 : index
    %9 = vector.load %arg11[%c0_8, %c0_9] : memref<8x128xf32, #tpu.memory_space<vmem>>, vector<8x128xf32>
    tpu.vector_store %arg11[%c0_8, %c0_9], %8 {strides = array<i32>} : memref<8x128xf32, #tpu.memory_space<vmem>>, vector<8x128xf32>,
    %10 = arith.truncf %8 : vector<8x128xf32> to vector<8x128xbf16>
    %c0_10 = arith.constant 0 : index
    %c0_11 = arith.constant 0 : index
    %11 = vector.load %arg5[%c0_10, %c0_11] : memref<128x256xbf16, #tpu.memory_space<vmem>>, vector<128x256xbf16>
    %cst_12 = arith.constant dense<0.000000e+00> : vector<8x256xf32>
    %12 = tpu.matmul %10, %11, %cst_12 {dimension_numbers = #tpu.dot_dimension_numbers<[1], [0], [0], [1], [0, 0, 1, 1], [], []>} : vector<8x128xbf16>, vector<128x256xbf16>, vector<8x256xf32> -> vector<8x256xf32>
    %c0_13 = arith.constant 0 : index
    %c0_14 = arith.constant 0 : index
    %13 = vector.load %arg6[%c0_13, %c0_14] : memref<1x256xf32, #tpu.memory_space<vmem>>, vector<1x256xf32>
    %14 = vector.broadcast %13 : vector<1x256xf32> to vector<8x256xf32>
    %15 = arith.addf %12, %14 : vector<8x256xf32>
    %cst_15 = arith.constant 0.000000e+00 : f32
    %16 = vector.broadcast %cst_15 : f32 to vector<8x256xf32>
    %17 = arith.maximumf %15, %16 : vector<8x256xf32>
    %18 = arith.truncf %17 : vector<8x256xf32> to vector<8x256xbf16>
    %c0_16 = arith.constant 0 : index
    %c0_17 = arith.constant 0 : index
    %19 = vector.load %arg7[%c0_16, %c0_17] : memref<256x128xbf16, #tpu.memory_space<vmem>>, vector<256x128xbf16>
    %cst_18 = arith.constant dense<0.000000e+00> : vector<8x128xf32>
    %20 = tpu.matmul %18, %19, %cst_18 {dimension_numbers = #tpu.dot_dimension_numbers<[1], [0], [0], [1], [0, 0, 1, 1], [], []>} : vector<8x256xbf16>, vector<256x128xbf16>, vector<8x128xf32> -> vector<8x128xf32>
    %c0_19 = arith.constant 0 : index
    %c0_20 = arith.constant 0 : index
    %21 = vector.load %arg8[%c0_19, %c0_20] : memref<1x128xf32, #tpu.memory_space<vmem>>, vector<1x128xf32>
    %22 = vector.broadcast %21 : vector<1x128xf32> to vector<8x128xf32>
    %23 = arith.addf %20, %22 : vector<8x128xf32>
    %c0_21 = arith.constant 0 : index
    %c0_22 = arith.constant 0 : index
    %24 = vector.load %arg12[%c0_21, %c0_22] : memref<8x128xf32, #tpu.memory_space<vmem>>, vector<8x128xf32>
    tpu.vector_store %arg12[%c0_21, %c0_22], %23 {strides = array<i32>} : memref<8x128xf32, #tpu.memory_space<vmem>>, vector<8x128xf32>,
    %c0_23 = arith.constant 0 : index
    %c0_24 = arith.constant 0 : index
    %25 = vector.load %arg9[%c0_23, %c0_24] : memref<128x2048xbf16, #tpu.memory_space<vmem>>, vector<128x2048xbf16>
    %cst_25 = arith.constant dense<0.000000e+00> : vector<8x2048xf32>
    %26 = tpu.matmul %10, %25, %cst_25 {dimension_numbers = #tpu.dot_dimension_numbers<[1], [0], [0], [1], [0, 0, 1, 1], [], []>} : vector<8x128xbf16>, vector<128x2048xbf16>, vector<8x2048xf32> -> vector<8x2048xf32>
    %c0_26 = arith.constant 0 : index
    %c0_27 = arith.constant 0 : index
    %27 = vector.load %arg10[%c0_26, %c0_27] : memref<1x2048xf32, #tpu.memory_space<vmem>>, vector<1x2048xf32>
    %28 = vector.broadcast %27 : vector<1x2048xf32> to vector<8x2048xf32>
    %29 = arith.addf %26, %28 : vector<8x2048xf32>
    %cst_28 = arith.constant 0.000000e+00 : f32
    %30 = vector.broadcast %cst_28 : f32 to vector<8x2048xf32>
    %31 = arith.maximumf %29, %30 : vector<8x2048xf32>
    %c0_29 = arith.constant 0 : index
    %c0_30 = arith.constant 0 : index
    %32 = vector.load %arg13[%c0_29, %c0_30] : memref<8x2048xf32, #tpu.memory_space<vmem>>, vector<8x2048xf32>
    tpu.vector_store %arg13[%c0_29, %c0_30], %31 {strides = array<i32>} : memref<8x2048xf32, #tpu.memory_space<vmem>>, vector<8x2048xf32>,
    return
  }
  func.func @transform_0(%arg0: i32) -> (i32, i32) {
    %c0_i32 = arith.constant 0 : i32
    %c0_i32_0 = arith.constant 0 : i32
    %c0_i32_1 = arith.constant 0 : i32
    return %c0_i32, %c0_i32_0 : i32, i32
  }
  func.func @transform_1(%arg0: i32) -> (i32, i32) {
    %c0_i32 = arith.constant 0 : i32
    %c0_i32_0 = arith.constant 0 : i32
    %c0_i32_1 = arith.constant 0 : i32
    return %c0_i32, %c0_i32_0 : i32, i32
  }
  func.func @transform_2(%arg0: i32) -> (i32, i32) {
    %c0_i32 = arith.constant 0 : i32
    %c0_i32_0 = arith.constant 0 : i32
    %c0_i32_1 = arith.constant 0 : i32
    return %c0_i32, %c0_i32_0 : i32, i32
  }
  func.func @transform_3(%arg0: i32) -> (i32, i32) {
    %c0_i32 = arith.constant 0 : i32
    %c0_i32_0 = arith.constant 0 : i32
    %c0_i32_1 = arith.constant 0 : i32
    return %c0_i32, %c0_i32_0 : i32, i32
  }
  func.func @transform_4(%arg0: i32) -> (i32, i32) {
    %c0_i32 = arith.constant 0 : i32
    %c0_i32_0 = arith.constant 0 : i32
    %c0_i32_1 = arith.constant 0 : i32
    return %c0_i32, %c0_i32_0 : i32, i32
  }
  func.func @transform_5(%arg0: i32) -> (i32, i32) {
    %c0_i32 = arith.constant 0 : i32
    %c0_i32_0 = arith.constant 0 : i32
    %c0_i32_1 = arith.constant 0 : i32
    return %c0_i32, %c0_i32_0 : i32, i32
  }
  func.func @transform_6(%arg0: i32) -> (i32, i32) {
    %c0_i32 = arith.constant 0 : i32
    %c0_i32_0 = arith.constant 0 : i32
    %c0_i32_1 = arith.constant 0 : i32
    return %c0_i32, %c0_i32_0 : i32, i32
  }
  func.func @transform_7(%arg0: i32) -> (i32, i32) {
    %c0_i32 = arith.constant 0 : i32
    %c0_i32_0 = arith.constant 0 : i32
    %c0_i32_1 = arith.constant 0 : i32
    return %c0_i32, %c0_i32_0 : i32, i32
  }
  func.func @transform_8(%arg0: i32) -> (i32, i32) {
    %c0_i32 = arith.constant 0 : i32
    %c0_i32_0 = arith.constant 0 : i32
    %c0_i32_1 = arith.constant 0 : i32
    return %c0_i32, %c0_i32_0 : i32, i32
  }
  func.func @transform_9(%arg0: i32) -> (i32, i32) {
    %c0_i32 = arith.constant 0 : i32
    %c0_i32_0 = arith.constant 0 : i32
    %c0_i32_1 = arith.constant 0 : i32
    return %c0_i32, %c0_i32_0 : i32, i32
  }
  func.func @transform_10(%arg0: i32) -> (i32, i32) {
    %c0_i32 = arith.constant 0 : i32
    %c0_i32_0 = arith.constant 0 : i32
    %c0_i32_1 = arith.constant 0 : i32
    return %c0_i32, %c0_i32_0 : i32, i32
  }
  func.func @transform_11(%arg0: i32) -> (i32, i32) {
    %c0_i32 = arith.constant 0 : i32
    %c0_i32_0 = arith.constant 0 : i32
    %c0_i32_1 = arith.constant 0 : i32
    return %c0_i32, %c0_i32_0 : i32, i32
  }
  func.func @transform_12(%arg0: i32) -> (i32, i32) {
    %c0_i32 = arith.constant 0 : i32
    %c0_i32_0 = arith.constant 0 : i32
    %c0_i32_1 = arith.constant 0 : i32
    return %c0_i32, %c0_i32_0 : i32, i32
  }
}

module attributes {stable_mosaic.version = 11 : i64} {
  func.func @_mm_kernel(%arg0: i32, %arg1: i32, %arg2: i32, %arg3: memref<256x384xbf16, #tpu.memory_space<vmem>>, %arg4: memref<384x128xbf16, #tpu.memory_space<vmem>>, %arg5: memref<1x128xf32, #tpu.memory_space<vmem>>, %arg6: memref<256x128xf32, #tpu.memory_space<vmem>>, %arg7: memref<256x128xf32, #tpu.memory_space<vmem>>) attributes {dimension_semantics = [#tpu.dimension_semantics<parallel>, #tpu.dimension_semantics<parallel>, #tpu.dimension_semantics<arbitrary>], iteration_bounds = array<i64: 2, 1, 3>, scalar_prefetch = 0 : i64, scratch_operands = 1 : i64, tpu.core_type = #tpu.core_type<tc>, window_params = [{transform_indices = @transform_0, window_bounds = array<i64: 256, 384>}, {transform_indices = @transform_1, window_bounds = array<i64: 384, 128>}, {transform_indices = @transform_2, window_bounds = array<i64: 1, 128>}, {transform_indices = @transform_3, window_bounds = array<i64: 256, 128>}]} {
    %c0_i32 = arith.constant 0 : i32
    %0 = arith.cmpi eq, %arg2, %c0_i32 : i32
    %1 = arith.extui %0 : i1 to i32
    %c0_i32_0 = arith.constant 0 : i32
    %2 = arith.cmpi ne, %1, %c0_i32_0 : i32
    scf.if %2 {
      %cst_9 = arith.constant 0.000000e+00 : f32
      %12 = vector.broadcast %cst_9 : f32 to vector<256x128xf32>
      %c0_10 = arith.constant 0 : index
      %c0_11 = arith.constant 0 : index
      %13 = vector.load %arg7[%c0_10, %c0_11] : memref<256x128xf32, #tpu.memory_space<vmem>>, vector<256x128xf32>
      tpu.vector_store %arg7[%c0_10, %c0_11], %12 {strides = array<i32>} : memref<256x128xf32, #tpu.memory_space<vmem>>, vector<256x128xf32>,
    } else {
    }
    %c0 = arith.constant 0 : index
    %c0_1 = arith.constant 0 : index
    %3 = vector.load %arg7[%c0, %c0_1] : memref<256x128xf32, #tpu.memory_space<vmem>>, vector<256x128xf32>
    %c0_2 = arith.constant 0 : index
    %c0_3 = arith.constant 0 : index
    %4 = vector.load %arg3[%c0_2, %c0_3] : memref<256x384xbf16, #tpu.memory_space<vmem>>, vector<256x384xbf16>
    %c0_4 = arith.constant 0 : index
    %c0_5 = arith.constant 0 : index
    %5 = vector.load %arg4[%c0_4, %c0_5] : memref<384x128xbf16, #tpu.memory_space<vmem>>, vector<384x128xbf16>
    %cst = arith.constant dense<0.000000e+00> : vector<256x128xf32>
    %6 = tpu.matmul %4, %5, %cst {dimension_numbers = #tpu.dot_dimension_numbers<[1], [0], [0], [1], [0, 0, 1, 1], [], []>} : vector<256x384xbf16>, vector<384x128xbf16>, vector<256x128xf32> -> vector<256x128xf32>
    %7 = arith.addf %3, %6 : vector<256x128xf32>
    %c0_6 = arith.constant 0 : index
    %c0_7 = arith.constant 0 : index
    %8 = vector.load %arg7[%c0_6, %c0_7] : memref<256x128xf32, #tpu.memory_space<vmem>>, vector<256x128xf32>
    tpu.vector_store %arg7[%c0_6, %c0_7], %7 {strides = array<i32>} : memref<256x128xf32, #tpu.memory_space<vmem>>, vector<256x128xf32>,
    %c2_i32 = arith.constant 2 : i32
    %9 = arith.cmpi eq, %arg2, %c2_i32 : i32
    %10 = arith.extui %9 : i1 to i32
    %c0_i32_8 = arith.constant 0 : i32
    %11 = arith.cmpi ne, %10, %c0_i32_8 : i32
    scf.if %11 {
      %c0_9 = arith.constant 0 : index
      %c0_10 = arith.constant 0 : index
      %12 = vector.load %arg7[%c0_9, %c0_10] : memref<256x128xf32, #tpu.memory_space<vmem>>, vector<256x128xf32>
      %c0_11 = arith.constant 0 : index
      %c0_12 = arith.constant 0 : index
      %13 = vector.load %arg5[%c0_11, %c0_12] : memref<1x128xf32, #tpu.memory_space<vmem>>, vector<1x128xf32>
      %14 = vector.broadcast %13 : vector<1x128xf32> to vector<256x128xf32>
      %15 = arith.addf %12, %14 : vector<256x128xf32>
      %cst_13 = arith.constant 0.000000e+00 : f32
      %16 = vector.broadcast %cst_13 : f32 to vector<256x128xf32>
      %17 = arith.maximumf %15, %16 : vector<256x128xf32>
      %c0_14 = arith.constant 0 : index
      %c0_15 = arith.constant 0 : index
      %18 = vector.load %arg6[%c0_14, %c0_15] : memref<256x128xf32, #tpu.memory_space<vmem>>, vector<256x128xf32>
      tpu.vector_store %arg6[%c0_14, %c0_15], %17 {strides = array<i32>} : memref<256x128xf32, #tpu.memory_space<vmem>>, vector<256x128xf32>,
    } else {
    }
    return
  }
  func.func @transform_0(%arg0: i32, %arg1: i32, %arg2: i32) -> (i32, i32) {
    %c0_i32 = arith.constant 0 : i32
    return %arg0, %arg2 : i32, i32
  }
  func.func @transform_1(%arg0: i32, %arg1: i32, %arg2: i32) -> (i32, i32) {
    %c0_i32 = arith.constant 0 : i32
    return %arg2, %arg1 : i32, i32
  }
  func.func @transform_2(%arg0: i32, %arg1: i32, %arg2: i32) -> (i32, i32) {
    %c0_i32 = arith.constant 0 : i32
    %c0_i32_0 = arith.constant 0 : i32
    return %c0_i32, %arg1 : i32, i32
  }
  func.func @transform_3(%arg0: i32, %arg1: i32, %arg2: i32) -> (i32, i32) {
    %c0_i32 = arith.constant 0 : i32
    return %arg0, %arg1 : i32, i32
  }
}

module attributes {stable_mosaic.version = 11 : i64} {
  func.func @_mm_kernel(%arg0: i32, %arg1: i32, %arg2: i32, %arg3: memref<256x384xbf16, #tpu.memory_space<vmem>>, %arg4: memref<384x128xbf16, #tpu.memory_space<vmem>>, %arg5: memref<1x128xf32, #tpu.memory_space<vmem>>, %arg6: memref<256x128xf32, #tpu.memory_space<vmem>>, %arg7: memref<256x128xf32, #tpu.memory_space<vmem>>) attributes {dimension_semantics = [#tpu.dimension_semantics<parallel>, #tpu.dimension_semantics<parallel>, #tpu.dimension_semantics<arbitrary>], iteration_bounds = array<i64: 8, 1, 3>, scalar_prefetch = 0 : i64, scratch_operands = 1 : i64, tpu.core_type = #tpu.core_type<tc>, window_params = [{transform_indices = @transform_0, window_bounds = array<i64: 256, 384>}, {transform_indices = @transform_1, window_bounds = array<i64: 384, 128>}, {transform_indices = @transform_2, window_bounds = array<i64: 1, 128>}, {transform_indices = @transform_3, window_bounds = array<i64: 256, 128>}]} {
    %c0_i32 = arith.constant 0 : i32
    %0 = arith.cmpi eq, %arg2, %c0_i32 : i32
    %1 = arith.extui %0 : i1 to i32
    %c0_i32_0 = arith.constant 0 : i32
    %2 = arith.cmpi ne, %1, %c0_i32_0 : i32
    scf.if %2 {
      %cst_9 = arith.constant 0.000000e+00 : f32
      %12 = vector.broadcast %cst_9 : f32 to vector<256x128xf32>
      %c0_10 = arith.constant 0 : index
      %c0_11 = arith.constant 0 : index
      %13 = vector.load %arg7[%c0_10, %c0_11] : memref<256x128xf32, #tpu.memory_space<vmem>>, vector<256x128xf32>
      tpu.vector_store %arg7[%c0_10, %c0_11], %12 {strides = array<i32>} : memref<256x128xf32, #tpu.memory_space<vmem>>, vector<256x128xf32>,
    } else {
    }
    %c0 = arith.constant 0 : index
    %c0_1 = arith.constant 0 : index
    %3 = vector.load %arg7[%c0, %c0_1] : memref<256x128xf32, #tpu.memory_space<vmem>>, vector<256x128xf32>
    %c0_2 = arith.constant 0 : index
    %c0_3 = arith.constant 0 : index
    %4 = vector.load %arg3[%c0_2, %c0_3] : memref<256x384xbf16, #tpu.memory_space<vmem>>, vector<256x384xbf16>
    %c0_4 = arith.constant 0 : index
    %c0_5 = arith.constant 0 : index
    %5 = vector.load %arg4[%c0_4, %c0_5] : memref<384x128xbf16, #tpu.memory_space<vmem>>, vector<384x128xbf16>
    %cst = arith.constant dense<0.000000e+00> : vector<256x128xf32>
    %6 = tpu.matmul %4, %5, %cst {dimension_numbers = #tpu.dot_dimension_numbers<[1], [0], [0], [1], [0, 0, 1, 1], [], []>} : vector<256x384xbf16>, vector<384x128xbf16>, vector<256x128xf32> -> vector<256x128xf32>
    %7 = arith.addf %3, %6 : vector<256x128xf32>
    %c0_6 = arith.constant 0 : index
    %c0_7 = arith.constant 0 : index
    %8 = vector.load %arg7[%c0_6, %c0_7] : memref<256x128xf32, #tpu.memory_space<vmem>>, vector<256x128xf32>
    tpu.vector_store %arg7[%c0_6, %c0_7], %7 {strides = array<i32>} : memref<256x128xf32, #tpu.memory_space<vmem>>, vector<256x128xf32>,
    %c2_i32 = arith.constant 2 : i32
    %9 = arith.cmpi eq, %arg2, %c2_i32 : i32
    %10 = arith.extui %9 : i1 to i32
    %c0_i32_8 = arith.constant 0 : i32
    %11 = arith.cmpi ne, %10, %c0_i32_8 : i32
    scf.if %11 {
      %c0_9 = arith.constant 0 : index
      %c0_10 = arith.constant 0 : index
      %12 = vector.load %arg7[%c0_9, %c0_10] : memref<256x128xf32, #tpu.memory_space<vmem>>, vector<256x128xf32>
      %c0_11 = arith.constant 0 : index
      %c0_12 = arith.constant 0 : index
      %13 = vector.load %arg5[%c0_11, %c0_12] : memref<1x128xf32, #tpu.memory_space<vmem>>, vector<1x128xf32>
      %14 = vector.broadcast %13 : vector<1x128xf32> to vector<256x128xf32>
      %15 = arith.addf %12, %14 : vector<256x128xf32>
      %c0_13 = arith.constant 0 : index
      %c0_14 = arith.constant 0 : index
      %16 = vector.load %arg6[%c0_13, %c0_14] : memref<256x128xf32, #tpu.memory_space<vmem>>, vector<256x128xf32>
      tpu.vector_store %arg6[%c0_13, %c0_14], %15 {strides = array<i32>} : memref<256x128xf32, #tpu.memory_space<vmem>>, vector<256x128xf32>,
    } else {
    }
    return
  }
  func.func @transform_0(%arg0: i32, %arg1: i32, %arg2: i32) -> (i32, i32) {
    %c0_i32 = arith.constant 0 : i32
    return %arg0, %arg2 : i32, i32
  }
  func.func @transform_1(%arg0: i32, %arg1: i32, %arg2: i32) -> (i32, i32) {
    %c0_i32 = arith.constant 0 : i32
    return %arg2, %arg1 : i32, i32
  }
  func.func @transform_2(%arg0: i32, %arg1: i32, %arg2: i32) -> (i32, i32) {
    %c0_i32 = arith.constant 0 : i32
    %c0_i32_0 = arith.constant 0 : i32
    return %c0_i32, %arg1 : i32, i32
  }
  func.func @transform_3(%arg0: i32, %arg1: i32, %arg2: i32) -> (i32, i32) {
    %c0_i32 = arith.constant 0 : i32
    return %arg0, %arg1 : i32, i32
  }
}

</mosaic_0001>

<llo_original>
// kernel: cxr_autoencoder_forward.7
$region0: #{cxr_autoencoder_forward.7}
  #allocation0 [shape = 'u32[]', space=smem, size = 0x4, offset = 0x4, fixed_abs, tag = 'smem constant byte address 0x4 - core index']
  #allocation1 [shape = 'u32[144,128]{1,0:T(1,128)}', space=vmem, size = 0x12000, scoped, tag = 'internal scratch']
  #allocation2 [shape = 'f32[256,128]{1,0:T(8,128)}', space=vmem, size = 0x20000, scoped, tag = 'scratch operand']
  %s0 = inlined_call_operand.vmem [shape: bf16[512,32], index: 0, kind: input, shape index: {}]
  %s1 = inlined_call_operand.vmem [shape: bf16[32,128], index: 1, kind: input, shape index: {}]
  %s2 = inlined_call_operand.vmem [shape: f32[1,128], index: 2, kind: input, shape index: {}]
  %s3 = inlined_call_operand.vmem [shape: f32[512,128], index: 3, kind: output, shape index: {}]
  %s4 = sld [smem:[#allocation0]]
  $region53: #{cxr_autoencoder_forward.7} parent=0
    _
  %s6 = ssub.s32 1, %s4
  %s7 = scalar_select 0, %s6, %s4
  loop: start=0, step=1, limit=4
  $region2: #{cxr_autoencoder_forward.7} parent=0 // loop_pre_header
    _
  $region3: #{cxr_autoencoder_forward.7} parent=0 // loop_header
    %s9 = sphi 0, %s13
    %p10 = scmp.ge.s32.totalorder %s9, 4
    %s16 = sphi 0, %s35
    %s17 = sphi 0, %s31
    %s18 = sphi 0, %s27
    %s19 = sphi 0, %s16
    %s20 = sphi 0, %s17
    %s21 = sphi 0, %s18
    %s22 = sphi 0, %s19
    %s23 = sphi 0, %s20
    %s24 = sphi 0, %s21
    %s40 = sphi 0, %s42
    %s43 = sphi 0, %s40
    %s44 = sphi 0, %s43
    %s60 = sphi 0, %s44
    %s68 = sphi 0, %s70
    %s71 = sphi 0, %s68
    %s72 = sphi 0, %s71
    %s88 = sphi 0, %s72
    %s94 = sphi 0, %s96
    %s97 = sphi 0, %s94
    %s98 = sphi 0, %s97
    %s114 = sphi 0, %s98
    %s122 = sphi 0, %s124
    %s125 = sphi 0, %s122
    %s126 = sphi 0, %s125
    %s142 = sphi 0, %s126
  $region4: #{cxr_autoencoder_forward.7} parent=0 // loop_header_branch
    %12 = sbr.rel (%p10) target = $region8
  $region5: #{cxr_autoencoder_forward.7} parent=0 // loop_body
    %s14 = ssub.s32 %s9, 1
    %s15 = ssub.s32 %s9, 2
    %s25 = sadd.s32 1, %s18
    %p26 = scmp.ge.s32.totalorder %s25, 1
    %s27 = scalar_select %p26, 0, %s25
    %s28 = sadd.s32 1, %s17
    %s29 = scalar_select %p26, %s28, %s17
    %p30 = scmp.ge.s32.totalorder %s29, 1
    %s31 = scalar_select %p30, 0, %s29
    %s32 = sadd.s32 1, %s16
    %s33 = scalar_select %p30, %s32, %s16
    %p34 = scmp.ge.s32.totalorder %s33, 2
    %s35 = scalar_select %p34, 0, %s33
    %s36 = ssub.s32 %s16, %s35
    %s37 = ssub.s32 %s18, %s27
    %s38 = sor.u32 %s36, %s37
    %p39 = scmp.eq.s32.totalorder %s38, 0
    %s41 = sadd.s32 %s40, 1
    %s42 = scalar_select %p39, %s40, %s41
    %p45 = pneg %p39
    %p46 = scmp.eq.s32.totalorder %s9, 1
    %p47 = por %p45, %p46
    %p48 = scmp.ne.s32.totalorder %s40, %s43
    %p49 = scmp.eq.s32.totalorder %s9, 0
    %p50 = por %p48, %p49
    %p51 = scmp.ne.s32.totalorder %s40, %s43
    %p52 = scmp.eq.s32.totalorder %s14, 1
    %p53 = por %p51, %p52
    %p54 = scmp.ne.s32.totalorder %s43, %s44
    %p55 = scmp.eq.s32.totalorder %s14, 0
    %p56 = por %p54, %p55
    %p57 = scmp.ne.s32.totalorder %s43, %s44
    %p58 = scmp.eq.s32.totalorder %s15, 1
    %p59 = por %p57, %p58
    %p61 = scmp.ne.s32.totalorder %s44, %s60
    %p62 = scmp.eq.s32.totalorder %s15, 0
    %p63 = por %p61, %p62
    %s64 = ssub.s32 %s18, %s27
    %s65 = ssub.s32 %s17, %s31
    %s66 = sor.u32 %s64, %s65
    %p67 = scmp.eq.s32.totalorder %s66, 0
    %s69 = sadd.s32 %s68, 1
    %s70 = scalar_select %p67, %s68, %s69
    %p73 = pneg %p67
    %p74 = scmp.eq.s32.totalorder %s9, 1
    %p75 = por %p73, %p74
    %p76 = scmp.ne.s32.totalorder %s68, %s71
    %p77 = scmp.eq.s32.totalorder %s9, 0
    %p78 = por %p76, %p77
    %p79 = scmp.ne.s32.totalorder %s68, %s71
    %p80 = scmp.eq.s32.totalorder %s14, 1
    %p81 = por %p79, %p80
    %p82 = scmp.ne.s32.totalorder %s71, %s72
    %p83 = scmp.eq.s32.totalorder %s14, 0
    %p84 = por %p82, %p83
    %p85 = scmp.ne.s32.totalorder %s71, %s72
    %p86 = scmp.eq.s32.totalorder %s15, 1
    %p87 = por %p85, %p86
    %p89 = scmp.ne.s32.totalorder %s72, %s88
    %p90 = scmp.eq.s32.totalorder %s15, 0
    %p91 = por %p89, %p90
    %s92 = ssub.s32 %s17, %s31
    %p93 = scmp.eq.s32.totalorder %s92, 0
    %s95 = sadd.s32 %s94, 1
    %s96 = scalar_select %p93, %s94, %s95
    %p99 = pneg %p93
    %p100 = scmp.eq.s32.totalorder %s9, 1
    %p101 = por %p99, %p100
    %p102 = scmp.ne.s32.totalorder %s94, %s97
    %p103 = scmp.eq.s32.totalorder %s9, 0
    %p104 = por %p102, %p103
    %p105 = scmp.ne.s32.totalorder %s94, %s97
    %p106 = scmp.eq.s32.totalorder %s14, 1
    %p107 = por %p105, %p106
    %p108 = scmp.ne.s32.totalorder %s97, %s98
    %p109 = scmp.eq.s32.totalorder %s14, 0
    %p110 = por %p108, %p109
    %p111 = scmp.ne.s32.totalorder %s97, %s98
    %p112 = scmp.eq.s32.totalorder %s15, 1
    %p113 = por %p111, %p112
    %p115 = scmp.ne.s32.totalorder %s98, %s114
    %p116 = scmp.eq.s32.totalorder %s15, 0
    %p117 = por %p115, %p116
    %s118 = ssub.s32 %s16, %s35
    %s119 = ssub.s32 %s17, %s31
    %s120 = sor.u32 %s118, %s119
    %p121 = scmp.eq.s32.totalorder %s120, 0
    %s123 = sadd.s32 %s122, 1
    %s124 = scalar_select %p121, %s122, %s123
    %p127 = pneg %p121
    %p128 = scmp.eq.s32.totalorder %s9, 1
    %p129 = por %p127, %p128
    %p130 = scmp.ne.s32.totalorder %s122, %s125
    %p131 = scmp.eq.s32.totalorder %s9, 0
    %p132 = por %p130, %p131
    %p133 = scmp.ne.s32.totalorder %s122, %s125
    %p134 = scmp.eq.s32.totalorder %s14, 1
    %p135 = por %p133, %p134
    %p136 = scmp.ne.s32.totalorder %s125, %s126
    %p137 = scmp.eq.s32.totalorder %s14, 0
    %p138 = por %p136, %p137
    %p139 = scmp.ne.s32.totalorder %s125, %s126
    %p140 = scmp.eq.s32.totalorder %s15, 1
    %p141 = por %p139, %p140
    %p143 = scmp.ne.s32.totalorder %s126, %s142
    %p144 = scmp.eq.s32.totalorder %s15, 0
    %p145 = por %p143, %p144
    %p146 = scmp.le.s32.totalorder 1, %s9
    %p147 = scmp.lt.s32.totalorder %s9, 3
    %p148 = pnand %p146, %p147
    %p149 = pneg %p148
    // Predicated region
    $region9: #{cxr_autoencoder_forward.7} parent=5 // pred_check
      _
    $region10: #{cxr_autoencoder_forward.7} parent=5 // pred_check_branch
      %151 = sbr.rel (%p148) target = $region12
    $region11: #{cxr_autoencoder_forward.7} parent=5 // pred_region
      %s152 = ssub.s32 %s9, 1
      // Predicated region
      $region13: #{cxr_autoencoder_forward.7} parent=11 // pred_check
        %p153 = pneg %p84
      $region14: #{cxr_autoencoder_forward.7} parent=11 // pred_check_branch
        %155 = sbr.rel (%p153) target = $region16
      $region15: #{cxr_autoencoder_forward.7} parent=11 // pred_region
        %s156 = smul.u32 4, %s21
        %p157 = scmp.lt.s32.totalorder %s156, 3
        %s158 = scalar_select %p157, %s156, 3
        %p159 = scmp.lt.s32.totalorder %s20, 0
        %s160 = scalar_select %p159, %s20, 0
        %s161 = sadd.s32 %s160, %s158
        %s162 = smul.addr %s161, 4
        %s163 = scalar_lea.vmem %s1, %s162
        %s164 = smul.u32 4, %s21
      $region16: #{cxr_autoencoder_forward.7} parent=11 // pred_fallthru
        _
      // Predicated region
      $region17: #{cxr_autoencoder_forward.7} parent=11 // pred_check
        %p165 = pneg %p110
      $region18: #{cxr_autoencoder_forward.7} parent=11 // pred_check_branch
        %167 = sbr.rel (%p165) target = $region20
      $region19: #{cxr_autoencoder_forward.7} parent=11 // pred_region
        %p168 = scmp.lt.s32.totalorder %s20, 0
        %s169 = scalar_select %p168, %s20, 0
        %s170 = scalar_lea.vmem %s2, %s169
      $region20: #{cxr_autoencoder_forward.7} parent=11 // pred_fallthru
        _
    $region12: #{cxr_autoencoder_forward.7} parent=5 // pred_fallthru
      _
    %p171 = scmp.lt.s32.totalorder %s9, 2
    // Predicated region
    $region21: #{cxr_autoencoder_forward.7} parent=5 // pred_check
      %p172 = pneg %p171
    $region22: #{cxr_autoencoder_forward.7} parent=5 // pred_check_branch
      %174 = sbr.rel (%p172) target = $region24
    $region23: #{cxr_autoencoder_forward.7} parent=5 // pred_region
      // Predicated region
      $region25: #{cxr_autoencoder_forward.7} parent=23 // pred_check
        %p175 = pneg %p50
      $region26: #{cxr_autoencoder_forward.7} parent=23 // pred_check_branch
        %177 = sbr.rel (%p175) target = $region28
      $region27: #{cxr_autoencoder_forward.7} parent=23 // pred_region
        %s178 = smul.u32 32, %s16
        %p179 = scmp.lt.s32.totalorder %s178, 63
        %s180 = scalar_select %p179, %s178, 63
        %p181 = scmp.lt.s32.totalorder %s18, 0
        %s182 = scalar_select %p181, %s18, 0
        %s183 = sadd.s32 %s182, %s180
        %s184 = smul.addr %s183, 4
        %s185 = scalar_lea.vmem %s0, %s184
        %s186 = smul.u32 32, %s16
      $region28: #{cxr_autoencoder_forward.7} parent=23 // pred_fallthru
        _
    $region24: #{cxr_autoencoder_forward.7} parent=5 // pred_fallthru
      _
    %p187 = scmp.le.s32.totalorder 1, %s9
    %p188 = scmp.lt.s32.totalorder %s9, 3
    %p189 = pnand %p187, %p188
    %p190 = pneg %p189
    // Predicated region
    $region29: #{cxr_autoencoder_forward.7} parent=5 // pred_check
      _
    $region30: #{cxr_autoencoder_forward.7} parent=5 // pred_check_branch
      %192 = sbr.rel (%p189) target = $region32
    $region31: #{cxr_autoencoder_forward.7} parent=5 // pred_region
      %s193 = ssub.s32 %s9, 1
      %s194 = smul.u32 32, %s19
      %p195 = scmp.lt.s32.totalorder %s194, 63
      %s196 = scalar_select %p195, %s194, 63
      %p197 = scmp.lt.s32.totalorder %s21, 0
      %s198 = scalar_select %p197, %s21, 0
      %s199 = sadd.s32 %s198, %s196
      %s200 = smul.addr %s199, 4
      %s201 = scalar_lea.vmem %s0, %s200
      %p202 = pneg %p56
      %p203 = pneg %p53
      %s204 = smul.u32 4, %s21
      %p205 = scmp.lt.s32.totalorder %s204, 3
      %s206 = scalar_select %p205, %s204, 3
      %p207 = scmp.lt.s32.totalorder %s20, 0
      %s208 = scalar_select %p207, %s20, 0
      %s209 = sadd.s32 %s208, %s206
      %s210 = smul.addr %s209, 4
      %s211 = scalar_lea.vmem %s1, %s210
      %p212 = pneg %p84
      %p213 = pneg %p81
      %p214 = scmp.lt.s32.totalorder %s20, 0
      %s215 = scalar_select %p214, %s20, 0
      %s216 = scalar_lea.vmem %s2, %s215
      %p217 = pneg %p110
      %p218 = pneg %p107
      %p219 = pneg %p138
      %p220 = pneg %p135
      %s221 = smul.u32 32, %s19
      %p222 = scmp.lt.s32.totalorder %s221, 63
      %s223 = scalar_select %p222, %s221, 63
      %p224 = scmp.lt.s32.totalorder %s20, 0
      %s225 = scalar_select %p224, %s20, 0
      %s226 = sadd.s32 %s225, %s223
      %s227 = smul.addr %s226, 8
      %s228 = scalar_lea.vmem %s3, %s227
      %s229 = smul.u32 32, %s19
      %p230 = scmp.lt.s32.totalorder %s229, 63
      %s231 = scalar_select %p230, %s229, 63
      %p232 = scmp.lt.s32.totalorder %s21, 0
      %s233 = scalar_select %p232, %s21, 0
      %s234 = sadd.s32 %s233, %s231
      %s235 = smul.addr %s234, 4
      %s236 = scalar_lea.vmem %s0, %s235
      %s237 = smul.u32 32, %s19
      %s238 = smul.u32 4, %s21
      %p239 = scmp.lt.s32.totalorder %s238, 3
      %s240 = scalar_select %p239, %s238, 3
      %p241 = scmp.lt.s32.totalorder %s20, 0
      %s242 = scalar_select %p241, %s20, 0
      %s243 = sadd.s32 %s242, %s240
      %s244 = smul.addr %s243, 4
      %s245 = scalar_lea.vmem %s1, %s244
      %s246 = smul.u32 4, %s21
      %p247 = scmp.lt.s32.totalorder %s20, 0
      %s248 = scalar_select %p247, %s20, 0
      %s249 = scalar_lea.vmem %s2, %s248
      %s250 = smul.u32 32, %s19
      %p251 = scmp.lt.s32.totalorder %s250, 63
      %s252 = scalar_select %p251, %s250, 63
      %p253 = scmp.lt.s32.totalorder %s20, 0
      %s254 = scalar_select %p253, %s20, 0
      %s255 = sadd.s32 %s254, %s252
      %s256 = smul.addr %s255, 8
      %s257 = scalar_lea.vmem %s3, %s256
      %s258 = smul.u32 32, %s19
      %p260 = scmp.eq.s32.totalorder %s21, 0
      // Predicated region
      $region33: #{cxr_autoencoder_forward.7} parent=31 // pred_check
        %p261 = pneg %p260
      $region34: #{cxr_autoencoder_forward.7} parent=31 // pred_check_branch
        %263 = sbr.rel (%p261) target = $region36
      $region35: #{cxr_autoencoder_forward.7} parent=31 // pred_region
        %264 = vst [vmem:[#allocation2] sm:$0xff] 0.0
        %265 = vst [vmem:[#allocation2 + $0x8] sm:$0xff] 0.0
        %266 = vst [vmem:[#allocation2 + $0x10] sm:$0xff] 0.0
        %267 = vst [vmem:[#allocation2 + $0x18] sm:$0xff] 0.0
        %268 = vst [vmem:[#allocation2 + $0x20] sm:$0xff] 0.0
        %269 = vst [vmem:[#allocation2 + $0x28] sm:$0xff] 0.0
        %270 = vst [vmem:[#allocation2 + $0x30] sm:$0xff] 0.0
        %271 = vst [vmem:[#allocation2 + $0x38] sm:$0xff] 0.0
        %272 = vst [vmem:[#allocation2 + $0x40] sm:$0xff] 0.0
        %273 = vst [vmem:[#allocation2 + $0x48] sm:$0xff] 0.0
        %274 = vst [vmem:[#allocation2 + $0x50] sm:$0xff] 0.0
        %275 = vst [vmem:[#allocation2 + $0x58] sm:$0xff] 0.0
        %276 = vst [vmem:[#allocation2 + $0x60] sm:$0xff] 0.0
        %277 = vst [vmem:[#allocation2 + $0x68] sm:$0xff] 0.0
        %278 = vst [vmem:[#allocation2 + $0x70] sm:$0xff] 0.0
        %279 = vst [vmem:[#allocation2 + $0x78] sm:$0xff] 0.0
        %280 = vst [vmem:[#allocation2 + $0x80] sm:$0xff] 0.0
        %281 = vst [vmem:[#allocation2 + $0x88] sm:$0xff] 0.0
        %282 = vst [vmem:[#allocation2 + $0x90] sm:$0xff] 0.0
        %283 = vst [vmem:[#allocation2 + $0x98] sm:$0xff] 0.0
        %284 = vst [vmem:[#allocation2 + $0xa0] sm:$0xff] 0.0
        %285 = vst [vmem:[#allocation2 + $0xa8] sm:$0xff] 0.0
        %286 = vst [vmem:[#allocation2 + $0xb0] sm:$0xff] 0.0
        %287 = vst [vmem:[#allocation2 + $0xb8] sm:$0xff] 0.0
        %288 = vst [vmem:[#allocation2 + $0xc0] sm:$0xff] 0.0
        %289 = vst [vmem:[#allocation2 + $0xc8] sm:$0xff] 0.0
        %290 = vst [vmem:[#allocation2 + $0xd0] sm:$0xff] 0.0
        %291 = vst [vmem:[#allocation2 + $0xd8] sm:$0xff] 0.0
        %292 = vst [vmem:[#allocation2 + $0xe0] sm:$0xff] 0.0
        %293 = vst [vmem:[#allocation2 + $0xe8] sm:$0xff] 0.0
        %294 = vst [vmem:[#allocation2 + $0xf0] sm:$0xff] 0.0
        %295 = vst [vmem:[#allocation2 + $0xf8] sm:$0xff] 0.0
      $region36: #{cxr_autoencoder_forward.7} parent=31 // pred_fallthru
        _
      %v296 = vld [vmem:[#allocation2] sm:$0xff]
      %v297 = vld [vmem:[#allocation2 + $0x8] sm:$0xff]
      %v298 = vld [vmem:[#allocation2 + $0x10] sm:$0xff]
      %v299 = vld [vmem:[#allocation2 + $0x18] sm:$0xff]
      %v300 = vld [vmem:[#allocation2 + $0x20] sm:$0xff]
      %v301 = vld [vmem:[#allocation2 + $0x28] sm:$0xff]
      %v302 = vld [vmem:[#allocation2 + $0x30] sm:$0xff]
      %v303 = vld [vmem:[#allocation2 + $0x38] sm:$0xff]
      %v304 = vld [vmem:[#allocation2 + $0x40] sm:$0xff]
      %v305 = vld [vmem:[#allocation2 + $0x48] sm:$0xff]
      %v306 = vld [vmem:[#allocation2 + $0x50] sm:$0xff]
      %v307 = vld [vmem:[#allocation2 + $0x58] sm:$0xff]
      %v308 = vld [vmem:[#allocation2 + $0x60] sm:$0xff]
      %v309 = vld [vmem:[#allocation2 + $0x68] sm:$0xff]
      %v310 = vld [vmem:[#allocation2 + $0x70] sm:$0xff]
      %v311 = vld [vmem:[#allocation2 + $0x78] sm:$0xff]
      %v312 = vld [vmem:[#allocation2 + $0x80] sm:$0xff]
      %v313 = vld [vmem:[#allocation2 + $0x88] sm:$0xff]
      %v314 = vld [vmem:[#allocation2 + $0x90] sm:$0xff]
      %v315 = vld [vmem:[#allocation2 + $0x98] sm:$0xff]
      %v316 = vld [vmem:[#allocation2 + $0xa0] sm:$0xff]
      %v317 = vld [vmem:[#allocation2 + $0xa8] sm:$0xff]
      %v318 = vld [vmem:[#allocation2 + $0xb0] sm:$0xff]
      %v319 = vld [vmem:[#allocation2 + $0xb8] sm:$0xff]
      %v320 = vld [vmem:[#allocation2 + $0xc0] sm:$0xff]
      %v321 = vld [vmem:[#allocation2 + $0xc8] sm:$0xff]
      %v322 = vld [vmem:[#allocation2 + $0xd0] sm:$0xff]
      %v323 = vld [vmem:[#allocation2 + $0xd8] sm:$0xff]
      %v324 = vld [vmem:[#allocation2 + $0xe0] sm:$0xff]
      %v325 = vld [vmem:[#allocation2 + $0xe8] sm:$0xff]
      %v326 = vld [vmem:[#allocation2 + $0xf0] sm:$0xff]
      %v327 = vld [vmem:[#allocation2 + $0xf8] sm:$0xff]
      %v328 = vld [vmem:[%s236] sm:$0xf]
      %v329 = vld [vmem:[%s236 + $0x4] sm:$0xf]
      %v330 = vld [vmem:[%s236 + $0x8] sm:$0xf]
      %v331 = vld [vmem:[%s236 + $0xc] sm:$0xf]
      %v332 = vld [vmem:[%s236 + $0x10] sm:$0xf]
      %v333 = vld [vmem:[%s236 + $0x14] sm:$0xf]
      %v334 = vld [vmem:[%s236 + $0x18] sm:$0xf]
      %v335 = vld [vmem:[%s236 + $0x1c] sm:$0xf]
      %v336 = vld [vmem:[%s236 + $0x20] sm:$0xf]
      %v337 = vld [vmem:[%s236 + $0x24] sm:$0xf]
      %v338 = vld [vmem:[%s236 + $0x28] sm:$0xf]
      %v339 = vld [vmem:[%s236 + $0x2c] sm:$0xf]
      %v340 = vld [vmem:[%s236 + $0x30] sm:$0xf]
      %v341 = vld [vmem:[%s236 + $0x34] sm:$0xf]
      %v342 = vld [vmem:[%s236 + $0x38] sm:$0xf]
      %v343 = vld [vmem:[%s236 + $0x3c] sm:$0xf]
      %v344 = vld [vmem:[%s236 + $0x40] sm:$0xf]
      %v345 = vld [vmem:[%s236 + $0x44] sm:$0xf]
      %v346 = vld [vmem:[%s236 + $0x48] sm:$0xf]
      %v347 = vld [vmem:[%s236 + $0x4c] sm:$0xf]
      %v348 = vld [vmem:[%s236 + $0x50] sm:$0xf]
      %v349 = vld [vmem:[%s236 + $0x54] sm:$0xf]
      %v350 = vld [vmem:[%s236 + $0x58] sm:$0xf]
      %v351 = vld [vmem:[%s236 + $0x5c] sm:$0xf]
      %v352 = vld [vmem:[%s236 + $0x60] sm:$0xf]
      %v353 = vld [vmem:[%s236 + $0x64] sm:$0xf]
      %v354 = vld [vmem:[%s236 + $0x68] sm:$0xf]
      %v355 = vld [vmem:[%s236 + $0x6c] sm:$0xf]
      %v356 = vld [vmem:[%s236 + $0x70] sm:$0xf]
      %v357 = vld [vmem:[%s236 + $0x74] sm:$0xf]
      %v358 = vld [vmem:[%s236 + $0x78] sm:$0xf]
      %v359 = vld [vmem:[%s236 + $0x7c] sm:$0xf]
      %v360 = vld [vmem:[%s245] sm:$0xf]
      %v361 = vld [vmem:[%s245 + $0x4] sm:$0xf]
      %v362 = vld [vmem:[%s245 + $0x8] sm:$0xf]
      %v363 = vld [vmem:[%s245 + $0xc] sm:$0xf]
      %v396 = vunpack.c.l.b16 %v328
      %v397 = vunpack.c.l.b16 %v329
      %v398 = vunpack.c.l.b16 %v330
      %v399 = vunpack.c.l.b16 %v331
      %v400 = vunpack.c.l.b16 %v332
      %v401 = vunpack.c.l.b16 %v333
      %v402 = vunpack.c.l.b16 %v334
      %v403 = vunpack.c.l.b16 %v335
      %v404 = vunpack.c.l.b16 %v336
      %v405 = vunpack.c.l.b16 %v337
      %v406 = vunpack.c.l.b16 %v338
      %v407 = vunpack.c.l.b16 %v339
      %v408 = vunpack.c.l.b16 %v340
      %v409 = vunpack.c.l.b16 %v341
      %v410 = vunpack.c.l.b16 %v342
      %v411 = vunpack.c.l.b16 %v343
      %v412 = vunpack.c.l.b16 %v344
      %v413 = vunpack.c.l.b16 %v345
      %v414 = vunpack.c.l.b16 %v346
      %v415 = vunpack.c.l.b16 %v347
      %v416 = vunpack.c.l.b16 %v348
      %v417 = vunpack.c.l.b16 %v349
      %v418 = vunpack.c.l.b16 %v350
      %v419 = vunpack.c.l.b16 %v351
      %v420 = vunpack.c.l.b16 %v352
      %v421 = vunpack.c.l.b16 %v353
      %v422 = vunpack.c.l.b16 %v354
      %v423 = vunpack.c.l.b16 %v355
      %v424 = vunpack.c.l.b16 %v356
      %v425 = vunpack.c.l.b16 %v357
      %v426 = vunpack.c.l.b16 %v358
      %v427 = vunpack.c.l.b16 %v359
      %v428 = vpack.c.b16 %v397, %v396
      %v429 = vpack.c.b16 %v399, %v398
      %v430 = vpack.c.b16 %v401, %v400
      %v431 = vpack.c.b16 %v403, %v402
      %v432 = vpack.c.b16 %v405, %v404
      %v433 = vpack.c.b16 %v407, %v406
      %v434 = vpack.c.b16 %v409, %v408
      %v435 = vpack.c.b16 %v411, %v410
      %v436 = vpack.c.b16 %v413, %v412
      %v437 = vpack.c.b16 %v415, %v414
      %v438 = vpack.c.b16 %v417, %v416
      %v439 = vpack.c.b16 %v419, %v418
      %v440 = vpack.c.b16 %v421, %v420
      %v441 = vpack.c.b16 %v423, %v422
      %v442 = vpack.c.b16 %v425, %v424
      %v443 = vpack.c.b16 %v427, %v426
      %v448 = vunpack.c.l.b16 %v360
      %v449 = vunpack.c.l.b16 %v361
      %v450 = vunpack.c.l.b16 %v362
      %v451 = vunpack.c.l.b16 %v363
      %v452 = vpack.c.b16 %v449, %v448
      %v453 = vpack.c.b16 %v451, %v450
      %vm456 = vcmask 261120
      %v458 = vsel %vm456, %v428, 0
      %v461 = vsel %vm456, %v429, 0
      %v464 = vsel %vm456, %v430, 0
      %v467 = vsel %vm456, %v431, 0
      %v470 = vsel %vm456, %v432, 0
      %v473 = vsel %vm456, %v433, 0
      %v476 = vsel %vm456, %v434, 0
      %v479 = vsel %vm456, %v435, 0
      %v482 = vsel %vm456, %v436, 0
      %v485 = vsel %vm456, %v437, 0
      %v488 = vsel %vm456, %v438, 0
      %v491 = vsel %vm456, %v439, 0
      %v494 = vsel %vm456, %v440, 0
      %v497 = vsel %vm456, %v441, 0
      %v500 = vsel %vm456, %v442, 0
      %v503 = vsel %vm456, %v443, 0
      %505 = vmatprep.subr.bf16.mxu0 0
      %506 = vmatpush1.bf16.msra.mxu0 %v452
      %507 = vmatprep.subr.bf16.mxu0 0
      %508 = vmatpush1.bf16.msra.mxu0 %v453
      %509 = vmatprep.subr.bf16.mxu0 0
      %510 = vmatpush1.bf16.msra.mxu0 0
      %511 = vmatprep.subr.bf16.mxu0 0
      %512 = vmatpush1.bf16.msra.mxu0 0
      %513 = vmatprep.subr.bf16.mxu0 0
      %514 = vmatpush1.bf16.msra.mxu0 0
      %515 = vmatprep.subr.bf16.mxu0 0
      %516 = vmatpush1.bf16.msra.mxu0 0
      %517 = vmatprep.subr.bf16.mxu0 0
      %518 = vmatpush1.bf16.msra.mxu0 0
      %519 = vmatprep.subr.bf16.mxu0 0
      %520 = vmatpush1.bf16.msra.mxu0 0
      %521 = vmatprep.subr.bf16.mxu0 0
      %522 = vmatpush1.bf16.msra.mxu0 0
      %523 = vmatprep.subr.bf16.mxu0 0
      %524 = vmatpush1.bf16.msra.mxu0 0
      %525 = vmatprep.subr.bf16.mxu0 0
      %526 = vmatpush1.bf16.msra.mxu0 0
      %527 = vmatprep.subr.bf16.mxu0 0
      %528 = vmatpush1.bf16.msra.mxu0 0
      %529 = vmatprep.subr.bf16.mxu0 0
      %530 = vmatpush1.bf16.msra.mxu0 0
      %531 = vmatprep.subr.bf16.mxu0 0
      %532 = vmatpush1.bf16.msra.mxu0 0
      %533 = vmatprep.subr.bf16.mxu0 0
      %534 = vmatpush1.bf16.msra.mxu0 0
      %535 = vmatprep.subr.bf16.mxu0 0
      %536 = vmatpush1.bf16.msra.mxu0 0
      %537 = vmatprep.mubr.bf16.mxu0 0
      %538 = vmatmul.mubr.bf16.gmra.mrb[0].mxu0 %v458
      %v539 = vpop.f32.mrb[0].mxu0
      %v540 = vadd.f32 0.0, %v539
      %v541 = vpop.f32.mrb[0].mxu0
      %v542 = vpop.f32.mrb[0].mxu0
      %v543 = vadd.f32 0.0, %v542
      %v544 = vpop.f32.mrb[0].mxu0
      %545 = vmatprep.mubr.bf16.mxu0 0
      %546 = vmatmul.mubr.bf16.gmra.mrb[0].mxu0 %v461
      %v547 = vpop.f32.mrb[0].mxu0
      %v548 = vadd.f32 0.0, %v547
      %v549 = vpop.f32.mrb[0].mxu0
      %v550 = vpop.f32.mrb[0].mxu0
      %v551 = vadd.f32 0.0, %v550
      %v552 = vpop.f32.mrb[0].mxu0
      %553 = vmatprep.mubr.bf16.mxu0 0
      %554 = vmatmul.mubr.bf16.gmra.mrb[0].mxu0 %v464
      %v555 = vpop.f32.mrb[0].mxu0
      %v556 = vadd.f32 0.0, %v555
      %v557 = vpop.f32.mrb[0].mxu0
      %v558 = vpop.f32.mrb[0].mxu0
      %v559 = vadd.f32 0.0, %v558
      %v560 = vpop.f32.mrb[0].mxu0
      %561 = vmatprep.mubr.bf16.mxu0 0
      %562 = vmatmul.mubr.bf16.gmra.mrb[0].mxu0 %v467
      %v563 = vpop.f32.mrb[0].mxu0
      %v564 = vadd.f32 0.0, %v563
      %v565 = vpop.f32.mrb[0].mxu0
      %v566 = vpop.f32.mrb[0].mxu0
      %v567 = vadd.f32 0.0, %v566
      %v568 = vpop.f32.mrb[0].mxu0
      %569 = vmatprep.mubr.bf16.mxu0 0
      %570 = vmatmul.mubr.bf16.gmra.mrb[0].mxu0 %v470
      %v571 = vpop.f32.mrb[0].mxu0
      %v572 = vadd.f32 0.0, %v571
      %v573 = vpop.f32.mrb[0].mxu0
      %v574 = vpop.f32.mrb[0].mxu0
      %v575 = vadd.f32 0.0, %v574
      %v576 = vpop.f32.mrb[0].mxu0
      %577 = vmatprep.mubr.bf16.mxu0 0
      %578 = vmatmul.mubr.bf16.gmra.mrb[0].mxu0 %v473
      %v579 = vpop.f32.mrb[0].mxu0
      %v580 = vadd.f32 0.0, %v579
      %v581 = vpop.f32.mrb[0].mxu0
      %v582 = vpop.f32.mrb[0].mxu0
      %v583 = vadd.f32 0.0, %v582
      %v584 = vpop.f32.mrb[0].mxu0
      %585 = vmatprep.mubr.bf16.mxu0 0
      %586 = vmatmul.mubr.bf16.gmra.mrb[0].mxu0 %v476
      %v587 = vpop.f32.mrb[0].mxu0
      %v588 = vadd.f32 0.0, %v587
      %v589 = vpop.f32.mrb[0].mxu0
      %v590 = vpop.f32.mrb[0].mxu0
      %v591 = vadd.f32 0.0, %v590
      %v592 = vpop.f32.mrb[0].mxu0
      %593 = vmatprep.mubr.bf16.mxu0 0
      %594 = vmatmul.mubr.bf16.gmra.mrb[0].mxu0 %v479
      %v595 = vpop.f32.mrb[0].mxu0
      %v596 = vadd.f32 0.0, %v595
      %v597 = vpop.f32.mrb[0].mxu0
      %v598 = vpop.f32.mrb[0].mxu0
      %v599 = vadd.f32 0.0, %v598
      %v600 = vpop.f32.mrb[0].mxu0
      %601 = vmatprep.mubr.bf16.mxu0 0
      %602 = vmatmul.mubr.bf16.gmra.mrb[0].mxu0 %v482
      %v603 = vpop.f32.mrb[0].mxu0
      %v604 = vadd.f32 0.0, %v603
      %v605 = vpop.f32.mrb[0].mxu0
      %v606 = vpop.f32.mrb[0].mxu0
      %v607 = vadd.f32 0.0, %v606
      %v608 = vpop.f32.mrb[0].mxu0
      %609 = vmatprep.mubr.bf16.mxu0 0
      %610 = vmatmul.mubr.bf16.gmra.mrb[0].mxu0 %v485
      %v611 = vpop.f32.mrb[0].mxu0
      %v612 = vadd.f32 0.0, %v611
      %v613 = vpop.f32.mrb[0].mxu0
      %v614 = vpop.f32.mrb[0].mxu0
      %v615 = vadd.f32 0.0, %v614
      %v616 = vpop.f32.mrb[0].mxu0
      %617 = vmatprep.mubr.bf16.mxu0 0
      %618 = vmatmul.mubr.bf16.gmra.mrb[0].mxu0 %v488
      %v619 = vpop.f32.mrb[0].mxu0
      %v620 = vadd.f32 0.0, %v619
      %v621 = vpop.f32.mrb[0].mxu0
      %v622 = vpop.f32.mrb[0].mxu0
      %v623 = vadd.f32 0.0, %v622
      %v624 = vpop.f32.mrb[0].mxu0
      %625 = vmatprep.mubr.bf16.mxu0 0
      %626 = vmatmul.mubr.bf16.gmra.mrb[0].mxu0 %v491
      %v627 = vpop.f32.mrb[0].mxu0
      %v628 = vadd.f32 0.0, %v627
      %v629 = vpop.f32.mrb[0].mxu0
      %v630 = vpop.f32.mrb[0].mxu0
      %v631 = vadd.f32 0.0, %v630
      %v632 = vpop.f32.mrb[0].mxu0
      %633 = vmatprep.mubr.bf16.mxu0 0
      %634 = vmatmul.mubr.bf16.gmra.mrb[0].mxu0 %v494
      %v635 = vpop.f32.mrb[0].mxu0
      %v636 = vadd.f32 0.0, %v635
      %v637 = vpop.f32.mrb[0].mxu0
      %v638 = vpop.f32.mrb[0].mxu0
      %v639 = vadd.f32 0.0, %v638
      %v640 = vpop.f32.mrb[0].mxu0
      %641 = vmatprep.mubr.bf16.mxu0 0
      %642 = vmatmul.mubr.bf16.gmra.mrb[0].mxu0 %v497
      %v643 = vpop.f32.mrb[0].mxu0
      %v644 = vadd.f32 0.0, %v643
      %v645 = vpop.f32.mrb[0].mxu0
      %v646 = vpop.f32.mrb[0].mxu0
      %v647 = vadd.f32 0.0, %v646
      %v648 = vpop.f32.mrb[0].mxu0
      %649 = vmatprep.mubr.bf16.mxu0 0
      %650 = vmatmul.mubr.bf16.gmra.mrb[0].mxu0 %v500
      %v651 = vpop.f32.mrb[0].mxu0
      %v652 = vadd.f32 0.0, %v651
      %v653 = vpop.f32.mrb[0].mxu0
      %v654 = vpop.f32.mrb[0].mxu0
      %v655 = vadd.f32 0.0, %v654
      %v656 = vpop.f32.mrb[0].mxu0
      %657 = vmatprep.mubr.bf16.mxu0 0
      %658 = vmatmul.mubr.bf16.gmra.mrb[0].mxu0 %v503
      %v659 = vpop.f32.mrb[0].mxu0
      %v660 = vadd.f32 0.0, %v659
      %v661 = vpop.f32.mrb[0].mxu0
      %v662 = vpop.f32.mrb[0].mxu0
      %v663 = vadd.f32 0.0, %v662
      %v664 = vpop.f32.mrb[0].mxu0
      %665 = vdwg.mxu0
      %v666 = vadd.f32 %v296, %v540
      %v667 = vadd.f32 %v297, %v543
      %v668 = vadd.f32 %v298, %v548
      %v669 = vadd.f32 %v299, %v551
      %v670 = vadd.f32 %v300, %v556
      %v671 = vadd.f32 %v301, %v559
      %v672 = vadd.f32 %v302, %v564
      %v673 = vadd.f32 %v303, %v567
      %v674 = vadd.f32 %v304, %v572
      %v675 = vadd.f32 %v305, %v575
      %v676 = vadd.f32 %v306, %v580
      %v677 = vadd.f32 %v307, %v583
      %v678 = vadd.f32 %v308, %v588
      %v679 = vadd.f32 %v309, %v591
      %v680 = vadd.f32 %v310, %v596
      %v681 = vadd.f32 %v311, %v599
      %v682 = vadd.f32 %v312, %v604
      %v683 = vadd.f32 %v313, %v607
      %v684 = vadd.f32 %v314, %v612
      %v685 = vadd.f32 %v315, %v615
      %v686 = vadd.f32 %v316, %v620
      %v687 = vadd.f32 %v317, %v623
      %v688 = vadd.f32 %v318, %v628
      %v689 = vadd.f32 %v319, %v631
      %v690 = vadd.f32 %v320, %v636
      %v691 = vadd.f32 %v321, %v639
      %v692 = vadd.f32 %v322, %v644
      %v693 = vadd.f32 %v323, %v647
      %v694 = vadd.f32 %v324, %v652
      %v695 = vadd.f32 %v325, %v655
      %v696 = vadd.f32 %v326, %v660
      %v697 = vadd.f32 %v327, %v663
      %698 = vst [vmem:[#allocation2] sm:$0xff] %v666
      %699 = vst [vmem:[#allocation2 + $0x8] sm:$0xff] %v667
      %700 = vst [vmem:[#allocation2 + $0x10] sm:$0xff] %v668
      %701 = vst [vmem:[#allocation2 + $0x18] sm:$0xff] %v669
      %702 = vst [vmem:[#allocation2 + $0x20] sm:$0xff] %v670
      %703 = vst [vmem:[#allocation2 + $0x28] sm:$0xff] %v671
      %704 = vst [vmem:[#allocation2 + $0x30] sm:$0xff] %v672
      %705 = vst [vmem:[#allocation2 + $0x38] sm:$0xff] %v673
      %706 = vst [vmem:[#allocation2 + $0x40] sm:$0xff] %v674
      %707 = vst [vmem:[#allocation2 + $0x48] sm:$0xff] %v675
      %708 = vst [vmem:[#allocation2 + $0x50] sm:$0xff] %v676
      %709 = vst [vmem:[#allocation2 + $0x58] sm:$0xff] %v677
      %710 = vst [vmem:[#allocation2 + $0x60] sm:$0xff] %v678
      %711 = vst [vmem:[#allocation2 + $0x68] sm:$0xff] %v679
      %712 = vst [vmem:[#allocation2 + $0x70] sm:$0xff] %v680
      %713 = vst [vmem:[#allocation2 + $0x78] sm:$0xff] %v681
      %714 = vst [vmem:[#allocation2 + $0x80] sm:$0xff] %v682
      %715 = vst [vmem:[#allocation2 + $0x88] sm:$0xff] %v683
      %716 = vst [vmem:[#allocation2 + $0x90] sm:$0xff] %v684
      %717 = vst [vmem:[#allocation2 + $0x98] sm:$0xff] %v685
      %718 = vst [vmem:[#allocation2 + $0xa0] sm:$0xff] %v686
      %719 = vst [vmem:[#allocation2 + $0xa8] sm:$0xff] %v687
      %720 = vst [vmem:[#allocation2 + $0xb0] sm:$0xff] %v688
      %721 = vst [vmem:[#allocation2 + $0xb8] sm:$0xff] %v689
      %722 = vst [vmem:[#allocation2 + $0xc0] sm:$0xff] %v690
      %723 = vst [vmem:[#allocation2 + $0xc8] sm:$0xff] %v691
      %724 = vst [vmem:[#allocation2 + $0xd0] sm:$0xff] %v692
      %725 = vst [vmem:[#allocation2 + $0xd8] sm:$0xff] %v693
      %726 = vst [vmem:[#allocation2 + $0xe0] sm:$0xff] %v694
      %727 = vst [vmem:[#allocation2 + $0xe8] sm:$0xff] %v695
      %728 = vst [vmem:[#allocation2 + $0xf0] sm:$0xff] %v696
      %729 = vst [vmem:[#allocation2 + $0xf8] sm:$0xff] %v697
      // Predicated region
      $region37: #{cxr_autoencoder_forward.7} parent=31 // pred_check
        %p730 = pneg %p260
      $region38: #{cxr_autoencoder_forward.7} parent=31 // pred_check_branch
        %732 = sbr.rel (%p730) target = $region40
      $region39: #{cxr_autoencoder_forward.7} parent=31 // pred_region
        %v733 = vld [vmem:[#allocation2] sm:$0xff]
        %v734 = vld [vmem:[#allocation2 + $0x8] sm:$0xff]
        %v735 = vld [vmem:[#allocation2 + $0x10] sm:$0xff]
        %v736 = vld [vmem:[#allocation2 + $0x18] sm:$0xff]
        %v737 = vld [vmem:[#allocation2 + $0x20] sm:$0xff]
        %v738 = vld [vmem:[#allocation2 + $0x28] sm:$0xff]
        %v739 = vld [vmem:[#allocation2 + $0x30] sm:$0xff]
        %v740 = vld [vmem:[#allocation2 + $0x38] sm:$0xff]
        %v741 = vld [vmem:[#allocation2 + $0x40] sm:$0xff]
        %v742 = vld [vmem:[#allocation2 + $0x48] sm:$0xff]
        %v743 = vld [vmem:[#allocation2 + $0x50] sm:$0xff]
        %v744 = vld [vmem:[#allocation2 + $0x58] sm:$0xff]
        %v745 = vld [vmem:[#allocation2 + $0x60] sm:$0xff]
        %v746 = vld [vmem:[#allocation2 + $0x68] sm:$0xff]
        %v747 = vld [vmem:[#allocation2 + $0x70] sm:$0xff]
        %v748 = vld [vmem:[#allocation2 + $0x78] sm:$0xff]
        %v749 = vld [vmem:[#allocation2 + $0x80] sm:$0xff]
        %v750 = vld [vmem:[#allocation2 + $0x88] sm:$0xff]
        %v751 = vld [vmem:[#allocation2 + $0x90] sm:$0xff]
        %v752 = vld [vmem:[#allocation2 + $0x98] sm:$0xff]
        %v753 = vld [vmem:[#allocation2 + $0xa0] sm:$0xff]
        %v754 = vld [vmem:[#allocation2 + $0xa8] sm:$0xff]
        %v755 = vld [vmem:[#allocation2 + $0xb0] sm:$0xff]
        %v756 = vld [vmem:[#allocation2 + $0xb8] sm:$0xff]
        %v757 = vld [vmem:[#allocation2 + $0xc0] sm:$0xff]
        %v758 = vld [vmem:[#allocation2 + $0xc8] sm:$0xff]
        %v759 = vld [vmem:[#allocation2 + $0xd0] sm:$0xff]
        %v760 = vld [vmem:[#allocation2 + $0xd8] sm:$0xff]
        %v761 = vld [vmem:[#allocation2 + $0xe0] sm:$0xff]
        %v762 = vld [vmem:[#allocation2 + $0xe8] sm:$0xff]
        %v763 = vld [vmem:[#allocation2 + $0xf0] sm:$0xff]
        %v764 = vld [vmem:[#allocation2 + $0xf8] sm:$0xff]
        %v765 = vld [vmem:[%s249] sm:$0x1]
        %v767 = vlaneseq
        %v768 = vshrl.u32 %v767, 7
        %v769 = vsub.s32 0, %v768
        %v770 = vrot.slane %v765, %v769
        %v772 = vadd.f32 %v733, %v770
        %v773 = vadd.f32 %v734, %v770
        %v774 = vadd.f32 %v735, %v770
        %v775 = vadd.f32 %v736, %v770
        %v776 = vadd.f32 %v737, %v770
        %v777 = vadd.f32 %v738, %v770
        %v778 = vadd.f32 %v739, %v770
        %v779 = vadd.f32 %v740, %v770
        %v780 = vadd.f32 %v741, %v770
        %v781 = vadd.f32 %v742, %v770
        %v782 = vadd.f32 %v743, %v770
        %v783 = vadd.f32 %v744, %v770
        %v784 = vadd.f32 %v745, %v770
        %v785 = vadd.f32 %v746, %v770
        %v786 = vadd.f32 %v747, %v770
        %v787 = vadd.f32 %v748, %v770
        %v788 = vadd.f32 %v749, %v770
        %v789 = vadd.f32 %v750, %v770
        %v790 = vadd.f32 %v751, %v770
        %v791 = vadd.f32 %v752, %v770
        %v792 = vadd.f32 %v753, %v770
        %v793 = vadd.f32 %v754, %v770
        %v794 = vadd.f32 %v755, %v770
        %v795 = vadd.f32 %v756, %v770
        %v796 = vadd.f32 %v757, %v770
        %v797 = vadd.f32 %v758, %v770
        %v798 = vadd.f32 %v759, %v770
        %v799 = vadd.f32 %v760, %v770
        %v800 = vadd.f32 %v761, %v770
        %v801 = vadd.f32 %v762, %v770
        %v802 = vadd.f32 %v763, %v770
        %v803 = vadd.f32 %v764, %v770
        %v804 = vmax.f32 %v772, 0.0
        %v805 = vmax.f32 %v773, 0.0
        %v806 = vmax.f32 %v774, 0.0
        %v807 = vmax.f32 %v775, 0.0
        %v808 = vmax.f32 %v776, 0.0
        %v809 = vmax.f32 %v777, 0.0
        %v810 = vmax.f32 %v778, 0.0
        %v811 = vmax.f32 %v779, 0.0
        %v812 = vmax.f32 %v780, 0.0
        %v813 = vmax.f32 %v781, 0.0
        %v814 = vmax.f32 %v782, 0.0
        %v815 = vmax.f32 %v783, 0.0
        %v816 = vmax.f32 %v784, 0.0
        %v817 = vmax.f32 %v785, 0.0
        %v818 = vmax.f32 %v786, 0.0
        %v819 = vmax.f32 %v787, 0.0
        %v820 = vmax.f32 %v788, 0.0
        %v821 = vmax.f32 %v789, 0.0
        %v822 = vmax.f32 %v790, 0.0
        %v823 = vmax.f32 %v791, 0.0
        %v824 = vmax.f32 %v792, 0.0
        %v825 = vmax.f32 %v793, 0.0
        %v826 = vmax.f32 %v794, 0.0
        %v827 = vmax.f32 %v795, 0.0
        %v828 = vmax.f32 %v796, 0.0
        %v829 = vmax.f32 %v797, 0.0
        %v830 = vmax.f32 %v798, 0.0
        %v831 = vmax.f32 %v799, 0.0
        %v832 = vmax.f32 %v800, 0.0
        %v833 = vmax.f32 %v801, 0.0
        %v834 = vmax.f32 %v802, 0.0
        %v835 = vmax.f32 %v803, 0.0
        %836 = vst [vmem:[%s257] sm:$0xff] %v804
        %837 = vst [vmem:[%s257 + $0x8] sm:$0xff] %v805
        %838 = vst [vmem:[%s257 + $0x10] sm:$0xff] %v806
        %839 = vst [vmem:[%s257 + $0x18] sm:$0xff] %v807
        %840 = vst [vmem:[%s257 + $0x20] sm:$0xff] %v808
        %841 = vst [vmem:[%s257 + $0x28] sm:$0xff] %v809
        %842 = vst [vmem:[%s257 + $0x30] sm:$0xff] %v810
        %843 = vst [vmem:[%s257 + $0x38] sm:$0xff] %v811
        %844 = vst [vmem:[%s257 + $0x40] sm:$0xff] %v812
        %845 = vst [vmem:[%s257 + $0x48] sm:$0xff] %v813
        %846 = vst [vmem:[%s257 + $0x50] sm:$0xff] %v814
        %847 = vst [vmem:[%s257 + $0x58] sm:$0xff] %v815
        %848 = vst [vmem:[%s257 + $0x60] sm:$0xff] %v816
        %849 = vst [vmem:[%s257 + $0x68] sm:$0xff] %v817
        %850 = vst [vmem:[%s257 + $0x70] sm:$0xff] %v818
        %851 = vst [vmem:[%s257 + $0x78] sm:$0xff] %v819
        %852 = vst [vmem:[%s257 + $0x80] sm:$0xff] %v820
        %853 = vst [vmem:[%s257 + $0x88] sm:$0xff] %v821
        %854 = vst [vmem:[%s257 + $0x90] sm:$0xff] %v822
        %855 = vst [vmem:[%s257 + $0x98] sm:$0xff] %v823
        %856 = vst [vmem:[%s257 + $0xa0] sm:$0xff] %v824
        %857 = vst [vmem:[%s257 + $0xa8] sm:$0xff] %v825
        %858 = vst [vmem:[%s257 + $0xb0] sm:$0xff] %v826
        %859 = vst [vmem:[%s257 + $0xb8] sm:$0xff] %v827
        %860 = vst [vmem:[%s257 + $0xc0] sm:$0xff] %v828
        %861 = vst [vmem:[%s257 + $0xc8] sm:$0xff] %v829
        %862 = vst [vmem:[%s257 + $0xd0] sm:$0xff] %v830
        %863 = vst [vmem:[%s257 + $0xd8] sm:$0xff] %v831
        %864 = vst [vmem:[%s257 + $0xe0] sm:$0xff] %v832
        %865 = vst [vmem:[%s257 + $0xe8] sm:$0xff] %v833
        %866 = vst [vmem:[%s257 + $0xf0] sm:$0xff] %v834
        %867 = vst [vmem:[%s257 + $0xf8] sm:$0xff] %v835
      $region40: #{cxr_autoencoder_forward.7} parent=31 // pred_fallthru
        _
      %s868 = smul.u32 32, %s19
      %p869 = scmp.lt.s32.totalorder %s868, 63
      %s870 = scalar_select %p869, %s868, 63
      %p871 = scmp.lt.s32.totalorder %s20, 0
      %s872 = scalar_select %p871, %s20, 0
      %s873 = sadd.s32 %s872, %s870
      %s874 = smul.addr %s873, 8
      %s875 = scalar_lea.vmem %s3, %s874
      // Predicated region
      $region41: #{cxr_autoencoder_forward.7} parent=31 // pred_check
        %p876 = pneg %p135
      $region42: #{cxr_autoencoder_forward.7} parent=31 // pred_check_branch
        %878 = sbr.rel (%p876) target = $region44
      $region43: #{cxr_autoencoder_forward.7} parent=31 // pred_region
        %s879 = smul.u32 32, %s19
      $region44: #{cxr_autoencoder_forward.7} parent=31 // pred_fallthru
        _
    $region32: #{cxr_autoencoder_forward.7} parent=5 // pred_fallthru
      _
    %p880 = scmp.le.s32.totalorder 2, %s9
    // Predicated region
    $region45: #{cxr_autoencoder_forward.7} parent=5 // pred_check
      %p881 = pneg %p880
    $region46: #{cxr_autoencoder_forward.7} parent=5 // pred_check_branch
      %883 = sbr.rel (%p881) target = $region48
    $region47: #{cxr_autoencoder_forward.7} parent=5 // pred_region
      %s884 = ssub.s32 %s9, 2
      // Predicated region
      $region49: #{cxr_autoencoder_forward.7} parent=47 // pred_check
        %p885 = pneg %p141
      $region50: #{cxr_autoencoder_forward.7} parent=47 // pred_check_branch
        %887 = sbr.rel (%p885) target = $region52
      $region51: #{cxr_autoencoder_forward.7} parent=47 // pred_region
        %s888 = smul.u32 32, %s22
        %p889 = scmp.lt.s32.totalorder %s888, 63
        %s890 = scalar_select %p889, %s888, 63
        %p891 = scmp.lt.s32.totalorder %s23, 0
        %s892 = scalar_select %p891, %s23, 0
        %s893 = sadd.s32 %s892, %s890
        %s894 = smul.addr %s893, 8
        %s895 = scalar_lea.vmem %s3, %s894
      $region52: #{cxr_autoencoder_forward.7} parent=47 // pred_fallthru
        _
    $region48: #{cxr_autoencoder_forward.7} parent=5 // pred_fallthru
      _
  $region6: #{cxr_autoencoder_forward.7} parent=0 // loop_footer
    %s13 = sadd.s32 1, %s9
  $region7: #{cxr_autoencoder_forward.7} parent=0 // loop_footer_branch
    %8 = sbr.rel target = $region3
  $region8: #{cxr_autoencoder_forward.7} parent=0 // loop_exit
    _

// kernel: cxr_autoencoder_forward.8
$region0: #{cxr_autoencoder_forward.8}
  #allocation0 [shape = 'u32[]', space=smem, size = 0x4, offset = 0x4, fixed_abs, tag = 'smem constant byte address 0x4 - core index']
  #allocation1 [shape = 'u32[144,128]{1,0:T(1,128)}', space=vmem, size = 0x12000, scoped, tag = 'internal scratch']
  #allocation2 [shape = 'f32[128,128]{1,0:T(8,128)}', space=vmem, size = 0x10000, scoped, tag = 'scratch operand']
  %s0 = inlined_call_operand.vmem [shape: bf16[128,1152], index: 0, kind: input, shape index: {}]
  %s1 = inlined_call_operand.vmem [shape: bf16[1152,128], index: 1, kind: input, shape index: {}]
  %s2 = inlined_call_operand.vmem [shape: f32[1,128], index: 2, kind: input, shape index: {}]
  %s3 = inlined_call_operand.vmem [shape: f32[128,128], index: 3, kind: output, shape index: {}]
  %s4 = sld [smem:[#allocation0]]
  $region79: #{cxr_autoencoder_forward.8} parent=0
    _
  %s6 = ssub.s32 1, %s4
  %s7 = scalar_select 0, %s6, %s4
  $region1: #{cxr_autoencoder_forward.8} parent=0
    #allocation3 [shape = 'u8[196608]{0}', space=vmem, size = 0x30000, scoped, tag = 'input window, operand 0']
    loop: start=0, step=1, limit=5
    $region2: #{cxr_autoencoder_forward.8} parent=1 // loop_pre_header
      _
    $region3: #{cxr_autoencoder_forward.8} parent=1 // loop_header
      %s9 = sphi 0, %s13
      %p10 = scmp.ge.s32.totalorder %s9, 5
      %s16 = sphi 0, %s35
      %s17 = sphi 0, %s31
      %s18 = sphi 0, %s27
      %s19 = sphi 0, %s16
      %s20 = sphi 0, %s17
      %s21 = sphi 0, %s18
      %s22 = sphi 0, %s19
      %s23 = sphi 0, %s20
      %s24 = sphi 0, %s21
      %s40 = sphi 0, %s42
      %s43 = sphi 0, %s40
      %s44 = sphi 0, %s43
      %s60 = sphi 0, %s44
      %s68 = sphi 0, %s70
      %s71 = sphi 0, %s68
      %s72 = sphi 0, %s71
      %s88 = sphi 0, %s72
      %s94 = sphi 0, %s96
      %s97 = sphi 0, %s94
      %s98 = sphi 0, %s97
      %s114 = sphi 0, %s98
      %s122 = sphi 0, %s124
      %s125 = sphi 0, %s122
      %s126 = sphi 0, %s125
      %s142 = sphi 0, %s126
    $region4: #{cxr_autoencoder_forward.8} parent=1 // loop_header_branch
      %12 = sbr.rel (%p10) target = $region8
    $region5: #{cxr_autoencoder_forward.8} parent=1 // loop_body
      %s14 = ssub.s32 %s9, 1
      %s15 = ssub.s32 %s9, 2
      %s25 = sadd.s32 1, %s18
      %p26 = scmp.ge.s32.totalorder %s25, 3
      %s27 = scalar_select %p26, 0, %s25
      %s28 = sadd.s32 1, %s17
      %s29 = scalar_select %p26, %s28, %s17
      %p30 = scmp.ge.s32.totalorder %s29, 1
      %s31 = scalar_select %p30, 0, %s29
      %s32 = sadd.s32 1, %s16
      %s33 = scalar_select %p30, %s32, %s16
      %p34 = scmp.ge.s32.totalorder %s33, 1
      %s35 = scalar_select %p34, 0, %s33
      %s36 = ssub.s32 %s16, %s35
      %s37 = ssub.s32 %s18, %s27
      %s38 = sor.u32 %s36, %s37
      %p39 = scmp.eq.s32.totalorder %s38, 0
      %s41 = sadd.s32 %s40, 1
      %s42 = scalar_select %p39, %s40, %s41
      %p45 = pneg %p39
      %p46 = scmp.eq.s32.totalorder %s9, 2
      %p47 = por %p45, %p46
      %p48 = scmp.ne.s32.totalorder %s40, %s43
      %p49 = scmp.eq.s32.totalorder %s9, 0
      %p50 = por %p48, %p49
      %p51 = scmp.ne.s32.totalorder %s40, %s43
      %p52 = scmp.eq.s32.totalorder %s14, 2
      %p53 = por %p51, %p52
      %p54 = scmp.ne.s32.totalorder %s43, %s44
      %p55 = scmp.eq.s32.totalorder %s14, 0
      %p56 = por %p54, %p55
      %p57 = scmp.ne.s32.totalorder %s43, %s44
      %p58 = scmp.eq.s32.totalorder %s15, 2
      %p59 = por %p57, %p58
      %p61 = scmp.ne.s32.totalorder %s44, %s60
      %p62 = scmp.eq.s32.totalorder %s15, 0
      %p63 = por %p61, %p62
      %s64 = ssub.s32 %s18, %s27
      %s65 = ssub.s32 %s17, %s31
      %s66 = sor.u32 %s64, %s65
      %p67 = scmp.eq.s32.totalorder %s66, 0
      %s69 = sadd.s32 %s68, 1
      %s70 = scalar_select %p67, %s68, %s69
      %p73 = pneg %p67
      %p74 = scmp.eq.s32.totalorder %s9, 2
      %p75 = por %p73, %p74
      %p76 = scmp.ne.s32.totalorder %s68, %s71
      %p77 = scmp.eq.s32.totalorder %s9, 0
      %p78 = por %p76, %p77
      %p79 = scmp.ne.s32.totalorder %s68, %s71
      %p80 = scmp.eq.s32.totalorder %s14, 2
      %p81 = por %p79, %p80
      %p82 = scmp.ne.s32.totalorder %s71, %s72
      %p83 = scmp.eq.s32.totalorder %s14, 0
      %p84 = por %p82, %p83
      %p85 = scmp.ne.s32.totalorder %s71, %s72
      %p86 = scmp.eq.s32.totalorder %s15, 2
      %p87 = por %p85, %p86
      %p89 = scmp.ne.s32.totalorder %s72, %s88
      %p90 = scmp.eq.s32.totalorder %s15, 0
      %p91 = por %p89, %p90
      %s92 = ssub.s32 %s17, %s31
      %p93 = scmp.eq.s32.totalorder %s92, 0
      %s95 = sadd.s32 %s94, 1
      %s96 = scalar_select %p93, %s94, %s95
      %p99 = pneg %p93
      %p100 = scmp.eq.s32.totalorder %s9, 2
      %p101 = por %p99, %p100
      %p102 = scmp.ne.s32.totalorder %s94, %s97
      %p103 = scmp.eq.s32.totalorder %s9, 0
      %p104 = por %p102, %p103
      %p105 = scmp.ne.s32.totalorder %s94, %s97
      %p106 = scmp.eq.s32.totalorder %s14, 2
      %p107 = por %p105, %p106
      %p108 = scmp.ne.s32.totalorder %s97, %s98
      %p109 = scmp.eq.s32.totalorder %s14, 0
      %p110 = por %p108, %p109
      %p111 = scmp.ne.s32.totalorder %s97, %s98
      %p112 = scmp.eq.s32.totalorder %s15, 2
      %p113 = por %p111, %p112
      %p115 = scmp.ne.s32.totalorder %s98, %s114
      %p116 = scmp.eq.s32.totalorder %s15, 0
      %p117 = por %p115, %p116
      %s118 = ssub.s32 %s16, %s35
      %s119 = ssub.s32 %s17, %s31
      %s120 = sor.u32 %s118, %s119
      %p121 = scmp.eq.s32.totalorder %s120, 0
      %s123 = sadd.s32 %s122, 1
      %s124 = scalar_select %p121, %s122, %s123
      %p127 = pneg %p121
      %p128 = scmp.eq.s32.totalorder %s9, 2
      %p129 = por %p127, %p128
      %p130 = scmp.ne.s32.totalorder %s122, %s125
      %p131 = scmp.eq.s32.totalorder %s9, 0
      %p132 = por %p130, %p131
      %p133 = scmp.ne.s32.totalorder %s122, %s125
      %p134 = scmp.eq.s32.totalorder %s14, 2
      %p135 = por %p133, %p134
      %p136 = scmp.ne.s32.totalorder %s125, %s126
      %p137 = scmp.eq.s32.totalorder %s14, 0
      %p138 = por %p136, %p137
      %p139 = scmp.ne.s32.totalorder %s125, %s126
      %p140 = scmp.eq.s32.totalorder %s15, 2
      %p141 = por %p139, %p140
      %p143 = scmp.ne.s32.totalorder %s126, %s142
      %p144 = scmp.eq.s32.totalorder %s15, 0
      %p145 = por %p143, %p144
      %p146 = scmp.le.s32.totalorder 1, %s9
      %p147 = scmp.lt.s32.totalorder %s9, 4
      %p148 = pnand %p146, %p147
      %p149 = pneg %p148
      // Predicated region
      $region9: #{cxr_autoencoder_forward.8} parent=5 // pred_check
        _
      $region10: #{cxr_autoencoder_forward.8} parent=5 // pred_check_branch
        %151 = sbr.rel (%p148) target = $region12
      $region11: #{cxr_autoencoder_forward.8} parent=5 // pred_region
        %s152 = ssub.s32 %s9, 1
        // Predicated region
        $region13: #{cxr_autoencoder_forward.8} parent=11 // pred_check
          %p153 = pneg %p110
        $region14: #{cxr_autoencoder_forward.8} parent=11 // pred_check_branch
          %155 = sbr.rel (%p153) target = $region16
        $region15: #{cxr_autoencoder_forward.8} parent=11 // pred_region
          %p156 = scmp.lt.s32.totalorder %s20, 0
          %s157 = scalar_select %p156, %s20, 0
          %s158 = scalar_lea.vmem %s2, %s157
        $region16: #{cxr_autoencoder_forward.8} parent=11 // pred_fallthru
          _
      $region12: #{cxr_autoencoder_forward.8} parent=5 // pred_fallthru
        _
      %p159 = scmp.lt.s32.totalorder %s9, 3
      // Predicated region
      $region17: #{cxr_autoencoder_forward.8} parent=5 // pred_check
        %p160 = pneg %p159
      $region18: #{cxr_autoencoder_forward.8} parent=5 // pred_check_branch
        %162 = sbr.rel (%p160) target = $region20
      $region19: #{cxr_autoencoder_forward.8} parent=5 // pred_region
        // Predicated region
        $region21: #{cxr_autoencoder_forward.8} parent=19 // pred_check
          %p163 = pneg %p50
        $region22: #{cxr_autoencoder_forward.8} parent=19 // pred_check_branch
          %165 = sbr.rel (%p163) target = $region24
        $region23: #{cxr_autoencoder_forward.8} parent=19 // pred_region
          %s166 = sand.u32 %s40, 1
          %s167 = sand.u32 %s40, 1
          %s168 = smul.addr %s167, 192
          %s169 = scalar_lea.vmem [#allocation3], %s168
          %s170 = smul.u32 16, %s16
          %s171 = smul.u32 3, %s18
          %s172 = smul.addr %s170, 9
          %s173 = sadd.s32 %s171, %s172
          %s174 = smul.addr %s173, 4
          %s175 = scalar_lea.vmem %s0, %s174
          // Predicated region
          $region25: #{cxr_autoencoder_forward.8} parent=23 // pred_check
            _
          $region26: #{cxr_autoencoder_forward.8} parent=23 // pred_check_branch
            %177 = sbr.rel (0) target = $region28
          $region27: #{cxr_autoencoder_forward.8} parent=23 // pred_region
            // Predicated region
            $region29: #{cxr_autoencoder_forward.8} parent=27 // pred_check
              _
            $region30: #{cxr_autoencoder_forward.8} parent=27 // pred_check_branch
              %179 = sbr.rel (0) target = $region32
            $region31: #{cxr_autoencoder_forward.8} parent=27 // pred_region
              %s180 = scalar_lea.vmem %s175, 8
              %s181 = scalar_lea.vmem %s169, 8 [#allocation3]
              loop: start=0, step=1, limit=1
              $region33: #{cxr_autoencoder_forward.8} parent=31 // loop_pre_header
                _
              $region34: #{cxr_autoencoder_forward.8} parent=31 // loop_header
                %s183 = sphi 0, %s187
                %p184 = scmp.ge.s32.totalorder %s183, 1
                %s188 = sphi %s175, %s175
                %s189 = sphi %s169, %s169
              $region35: #{cxr_autoencoder_forward.8} parent=31 // loop_header_branch
                %186 = sbr.rel (%p184) target = $region39
              $region36: #{cxr_autoencoder_forward.8} parent=31 // loop_body
                %v190 = vld [vmem:[%s188] sm:$0xff]
                %191 = vst [vmem:[%s189] sm:$0xff] %v190
                %v192 = vld [vmem:[%s188 + $0x24] sm:$0xff]
                %193 = vst [vmem:[%s189 + $0xc] sm:$0xff] %v192
                %v194 = vld [vmem:[%s188 + $0x48] sm:$0xff]
                %195 = vst [vmem:[%s189 + $0x18] sm:$0xff] %v194
                %v196 = vld [vmem:[%s188 + $0x6c] sm:$0xff]
                %197 = vst [vmem:[%s189 + $0x24] sm:$0xff] %v196
                %v198 = vld [vmem:[%s188 + $0x90] sm:$0xff]
                %199 = vst [vmem:[%s189 + $0x30] sm:$0xff] %v198
                %v200 = vld [vmem:[%s188 + $0xb4] sm:$0xff]
                %201 = vst [vmem:[%s189 + $0x3c] sm:$0xff] %v200
                %v202 = vld [vmem:[%s188 + $0xd8] sm:$0xff]
                %203 = vst [vmem:[%s189 + $0x48] sm:$0xff] %v202
                %v204 = vld [vmem:[%s188 + $0xfc] sm:$0xff]
                %205 = vst [vmem:[%s189 + $0x54] sm:$0xff] %v204
                %v206 = vld [vmem:[%s188 + $0x120] sm:$0xff]
                %207 = vst [vmem:[%s189 + $0x60] sm:$0xff] %v206
                %v208 = vld [vmem:[%s188 + $0x144] sm:$0xff]
                %209 = vst [vmem:[%s189 + $0x6c] sm:$0xff] %v208
                %v210 = vld [vmem:[%s188 + $0x168] sm:$0xff]
                %211 = vst [vmem:[%s189 + $0x78] sm:$0xff] %v210
                %v212 = vld [vmem:[%s188 + $0x18c] sm:$0xff]
                %213 = vst [vmem:[%s189 + $0x84] sm:$0xff] %v212
                %v214 = vld [vmem:[%s188 + $0x1b0] sm:$0xff]
                %215 = vst [vmem:[%s189 + $0x90] sm:$0xff] %v214
                %v216 = vld [vmem:[%s188 + $0x1d4] sm:$0xff]
                %217 = vst [vmem:[%s189 + $0x9c] sm:$0xff] %v216
                %v218 = vld [vmem:[%s188 + $0x1f8] sm:$0xff]
                %219 = vst [vmem:[%s189 + $0xa8] sm:$0xff] %v218
                %v220 = vld [vmem:[%s188 + $0x21c] sm:$0xff]
                %221 = vst [vmem:[%s189 + $0xb4] sm:$0xff] %v220
              $region37: #{cxr_autoencoder_forward.8} parent=31 // loop_footer
                %s187 = sadd.s32 1, %s183
              $region38: #{cxr_autoencoder_forward.8} parent=31 // loop_footer_branch
                %182 = sbr.rel target = $region34
              $region39: #{cxr_autoencoder_forward.8} parent=31 // loop_exit
                _
              loop: start=0, step=1, limit=1
              $region40: #{cxr_autoencoder_forward.8} parent=31 // loop_pre_header
                _
              $region41: #{cxr_autoencoder_forward.8} parent=31 // loop_header
                %s224 = sphi 0, %s228
                %p225 = scmp.ge.s32.totalorder %s224, 1
                %s229 = sphi %s180, %s180
                %s230 = sphi %s181, %s181
              $region42: #{cxr_autoencoder_forward.8} parent=31 // loop_header_branch
                %227 = sbr.rel (%p225) target = $region46
              $region43: #{cxr_autoencoder_forward.8} parent=31 // loop_body
                %v231 = vld [vmem:[%s229] sm:$0xf]
                %232 = vst [vmem:[%s230] sm:$0xf] %v231
                %v233 = vld [vmem:[%s229 + $0x24] sm:$0xf]
                %234 = vst [vmem:[%s230 + $0xc] sm:$0xf] %v233
                %v235 = vld [vmem:[%s229 + $0x48] sm:$0xf]
                %236 = vst [vmem:[%s230 + $0x18] sm:$0xf] %v235
                %v237 = vld [vmem:[%s229 + $0x6c] sm:$0xf]
                %238 = vst [vmem:[%s230 + $0x24] sm:$0xf] %v237
                %v239 = vld [vmem:[%s229 + $0x90] sm:$0xf]
                %240 = vst [vmem:[%s230 + $0x30] sm:$0xf] %v239
                %v241 = vld [vmem:[%s229 + $0xb4] sm:$0xf]
                %242 = vst [vmem:[%s230 + $0x3c] sm:$0xf] %v241
                %v243 = vld [vmem:[%s229 + $0xd8] sm:$0xf]
                %244 = vst [vmem:[%s230 + $0x48] sm:$0xf] %v243
                %v245 = vld [vmem:[%s229 + $0xfc] sm:$0xf]
                %246 = vst [vmem:[%s230 + $0x54] sm:$0xf] %v245
                %v247 = vld [vmem:[%s229 + $0x120] sm:$0xf]
                %248 = vst [vmem:[%s230 + $0x60] sm:$0xf] %v247
                %v249 = vld [vmem:[%s229 + $0x144] sm:$0xf]
                %250 = vst [vmem:[%s230 + $0x6c] sm:$0xf] %v249
                %v251 = vld [vmem:[%s229 + $0x168] sm:$0xf]
                %252 = vst [vmem:[%s230 + $0x78] sm:$0xf] %v251
                %v253 = vld [vmem:[%s229 + $0x18c] sm:$0xf]
                %254 = vst [vmem:[%s230 + $0x84] sm:$0xf] %v253
                %v255 = vld [vmem:[%s229 + $0x1b0] sm:$0xf]
                %256 = vst [vmem:[%s230 + $0x90] sm:$0xf] %v255
                %v257 = vld [vmem:[%s229 + $0x1d4] sm:$0xf]
                %258 = vst [vmem:[%s230 + $0x9c] sm:$0xf] %v257
                %v259 = vld [vmem:[%s229 + $0x1f8] sm:$0xf]
                %260 = vst [vmem:[%s230 + $0xa8] sm:$0xf] %v259
                %v261 = vld [vmem:[%s229 + $0x21c] sm:$0xf]
                %262 = vst [vmem:[%s230 + $0xb4] sm:$0xf] %v261
              $region44: #{cxr_autoencoder_forward.8} parent=31 // loop_footer
                %s228 = sadd.s32 1, %s224
              $region45: #{cxr_autoencoder_forward.8} parent=31 // loop_footer_branch
                %223 = sbr.rel target = $region41
              $region46: #{cxr_autoencoder_forward.8} parent=31 // loop_exit
                _
            $region32: #{cxr_autoencoder_forward.8} parent=27 // pred_fallthru
              _
          $region28: #{cxr_autoencoder_forward.8} parent=23 // pred_fallthru
            _
          %263 = vnop
        $region24: #{cxr_autoencoder_forward.8} parent=19 // pred_fallthru
          _
        // Predicated region
        $region47: #{cxr_autoencoder_forward.8} parent=19 // pred_check
          %p264 = pneg %p78
        $region48: #{cxr_autoencoder_forward.8} parent=19 // pred_check_branch
          %266 = sbr.rel (%p264) target = $region50
        $region49: #{cxr_autoencoder_forward.8} parent=19 // pred_region
          %s267 = smul.u32 48, %s18
          %p268 = scmp.lt.s32.totalorder %s267, 143
          %s269 = scalar_select %p268, %s267, 143
          %p270 = scmp.lt.s32.totalorder %s17, 0
          %s271 = scalar_select %p270, %s17, 0
          %s272 = sadd.s32 %s271, %s269
          %s273 = smul.addr %s272, 4
          %s274 = scalar_lea.vmem %s1, %s273
          %s275 = smul.u32 48, %s18
        $region50: #{cxr_autoencoder_forward.8} parent=19 // pred_fallthru
          _
      $region20: #{cxr_autoencoder_forward.8} parent=5 // pred_fallthru
        _
      %p276 = scmp.le.s32.totalorder 1, %s9
      %p277 = scmp.lt.s32.totalorder %s9, 4
      %p278 = pnand %p276, %p277
      %p279 = pneg %p278
      // Predicated region
      $region51: #{cxr_autoencoder_forward.8} parent=5 // pred_check
        _
      $region52: #{cxr_autoencoder_forward.8} parent=5 // pred_check_branch
        %281 = sbr.rel (%p278) target = $region54
      $region53: #{cxr_autoencoder_forward.8} parent=5 // pred_region
        %s282 = ssub.s32 %s9, 1
        %s283 = sand.u32 %s43, 1
        %s284 = sand.u32 %s43, 1
        %s285 = smul.addr %s284, 192
        %s286 = scalar_lea.vmem [#allocation3], %s285
        // Predicated region
        $region55: #{cxr_autoencoder_forward.8} parent=53 // pred_check
          %p287 = pneg %p56
        $region56: #{cxr_autoencoder_forward.8} parent=53 // pred_check_branch
          %289 = sbr.rel (%p287) target = $region58
        $region57: #{cxr_autoencoder_forward.8} parent=53 // pred_region
          _
        $region58: #{cxr_autoencoder_forward.8} parent=53 // pred_fallthru
          _
        %s290 = sand.u32 %s43, 1
        %s291 = sand.u32 %s43, 1
        %s292 = smul.addr %s291, 192
        %s293 = scalar_lea.vmem [#allocation3], %s292
        %p294 = pneg %p56
        %p295 = pneg %p53
        %s296 = smul.u32 48, %s21
        %p297 = scmp.lt.s32.totalorder %s296, 143
        %s298 = scalar_select %p297, %s296, 143
        %p299 = scmp.lt.s32.totalorder %s20, 0
        %s300 = scalar_select %p299, %s20, 0
        %s301 = sadd.s32 %s300, %s298
        %s302 = smul.addr %s301, 4
        %s303 = scalar_lea.vmem %s1, %s302
        %p304 = pneg %p84
        %p305 = pneg %p81
        %p306 = scmp.lt.s32.totalorder %s20, 0
        %s307 = scalar_select %p306, %s20, 0
        %s308 = scalar_lea.vmem %s2, %s307
        %p309 = pneg %p110
        %p310 = pneg %p107
        %p311 = pneg %p138
        %p312 = pneg %p135
        %s313 = smul.u32 16, %s19
        %p314 = scmp.lt.s32.totalorder %s313, 15
        %s315 = scalar_select %p314, %s313, 15
        %p316 = scmp.lt.s32.totalorder %s20, 0
        %s317 = scalar_select %p316, %s20, 0
        %s318 = sadd.s32 %s317, %s315
        %s319 = smul.addr %s318, 8
        %s320 = scalar_lea.vmem %s3, %s319
        %s321 = smul.u32 16, %s19
        %s322 = smul.u32 3, %s21
        %s323 = smul.u32 48, %s21
        %p324 = scmp.lt.s32.totalorder %s323, 143
        %s325 = scalar_select %p324, %s323, 143
        %p326 = scmp.lt.s32.totalorder %s20, 0
        %s327 = scalar_select %p326, %s20, 0
        %s328 = sadd.s32 %s327, %s325
        %s329 = smul.addr %s328, 4
        %s330 = scalar_lea.vmem %s1, %s329
        %s331 = smul.u32 48, %s21
        %p332 = scmp.lt.s32.totalorder %s20, 0
        %s333 = scalar_select %p332, %s20, 0
        %s334 = scalar_lea.vmem %s2, %s333
        %s335 = smul.u32 16, %s19
        %p336 = scmp.lt.s32.totalorder %s335, 15
        %s337 = scalar_select %p336, %s335, 15
        %p338 = scmp.lt.s32.totalorder %s20, 0
        %s339 = scalar_select %p338, %s20, 0
        %s340 = sadd.s32 %s339, %s337
        %s341 = smul.addr %s340, 8
        %s342 = scalar_lea.vmem %s3, %s341
        %s343 = smul.u32 16, %s19
        %p345 = scmp.eq.s32.totalorder %s21, 0
        // Predicated region
        $region59: #{cxr_autoencoder_forward.8} parent=53 // pred_check
          %p346 = pneg %p345
        $region60: #{cxr_autoencoder_forward.8} parent=53 // pred_check_branch
          %348 = sbr.rel (%p346) target = $region62
        $region61: #{cxr_autoencoder_forward.8} parent=53 // pred_region
          %349 = vst [vmem:[#allocation2] sm:$0xff] 0.0
          %350 = vst [vmem:[#allocation2 + $0x8] sm:$0xff] 0.0
          %351 = vst [vmem:[#allocation2 + $0x10] sm:$0xff] 0.0
          %352 = vst [vmem:[#allocation2 + $0x18] sm:$0xff] 0.0
          %353 = vst [vmem:[#allocation2 + $0x20] sm:$0xff] 0.0
          %354 = vst [vmem:[#allocation2 + $0x28] sm:$0xff] 0.0
          %355 = vst [vmem:[#allocation2 + $0x30] sm:$0xff] 0.0
          %356 = vst [vmem:[#allocation2 + $0x38] sm:$0xff] 0.0
          %357 = vst [vmem:[#allocation2 + $0x40] sm:$0xff] 0.0
          %358 = vst [vmem:[#allocation2 + $0x48] sm:$0xff] 0.0
          %359 = vst [vmem:[#allocation2 + $0x50] sm:$0xff] 0.0
          %360 = vst [vmem:[#allocation2 + $0x58] sm:$0xff] 0.0
          %361 = vst [vmem:[#allocation2 + $0x60] sm:$0xff] 0.0
          %362 = vst [vmem:[#allocation2 + $0x68] sm:$0xff] 0.0
          %363 = vst [vmem:[#allocation2 + $0x70] sm:$0xff] 0.0
          %364 = vst [vmem:[#allocation2 + $0x78] sm:$0xff] 0.0
        $region62: #{cxr_autoencoder_forward.8} parent=53 // pred_fallthru
          _
        %v365 = vld [vmem:[#allocation2] sm:$0xff]
        %v366 = vld [vmem:[#allocation2 + $0x8] sm:$0xff]
        %v367 = vld [vmem:[#allocation2 + $0x10] sm:$0xff]
        %v368 = vld [vmem:[#allocation2 + $0x18] sm:$0xff]
        %v369 = vld [vmem:[#allocation2 + $0x20] sm:$0xff]
        %v370 = vld [vmem:[#allocation2 + $0x28] sm:$0xff]
        %v371 = vld [vmem:[#allocation2 + $0x30] sm:$0xff]
        %v372 = vld [vmem:[#allocation2 + $0x38] sm:$0xff]
        %v373 = vld [vmem:[#allocation2 + $0x40] sm:$0xff]
        %v374 = vld [vmem:[#allocation2 + $0x48] sm:$0xff]
        %v375 = vld [vmem:[#allocation2 + $0x50] sm:$0xff]
        %v376 = vld [vmem:[#allocation2 + $0x58] sm:$0xff]
        %v377 = vld [vmem:[#allocation2 + $0x60] sm:$0xff]
        %v378 = vld [vmem:[#allocation2 + $0x68] sm:$0xff]
        %v379 = vld [vmem:[#allocation2 + $0x70] sm:$0xff]
        %v380 = vld [vmem:[#allocation2 + $0x78] sm:$0xff]
        %v381 = vld [vmem:[%s286] sm:$0xff]
        %v382 = vld [vmem:[%s286 + $0x8] sm:$0xf]
        %v383 = vld [vmem:[%s286 + $0xc] sm:$0xff]
        %v384 = vld [vmem:[%s286 + $0x14] sm:$0xf]
        %v385 = vld [vmem:[%s286 + $0x18] sm:$0xff]
        %v386 = vld [vmem:[%s286 + $0x20] sm:$0xf]
        %v387 = vld [vmem:[%s286 + $0x24] sm:$0xff]
        %v388 = vld [vmem:[%s286 + $0x2c] sm:$0xf]
        %v389 = vld [vmem:[%s286 + $0x30] sm:$0xff]
        %v390 = vld [vmem:[%s286 + $0x38] sm:$0xf]
        %v391 = vld [vmem:[%s286 + $0x3c] sm:$0xff]
        %v392 = vld [vmem:[%s286 + $0x44] sm:$0xf]
        %v393 = vld [vmem:[%s286 + $0x48] sm:$0xff]
        %v394 = vld [vmem:[%s286 + $0x50] sm:$0xf]
        %v395 = vld [vmem:[%s286 + $0x54] sm:$0xff]
        %v396 = vld [vmem:[%s286 + $0x5c] sm:$0xf]
        %v397 = vld [vmem:[%s286 + $0x60] sm:$0xff]
        %v398 = vld [vmem:[%s286 + $0x68] sm:$0xf]
        %v399 = vld [vmem:[%s286 + $0x6c] sm:$0xff]
        %v400 = vld [vmem:[%s286 + $0x74] sm:$0xf]
        %v401 = vld [vmem:[%s286 + $0x78] sm:$0xff]
        %v402 = vld [vmem:[%s286 + $0x80] sm:$0xf]
        %v403 = vld [vmem:[%s286 + $0x84] sm:$0xff]
        %v404 = vld [vmem:[%s286 + $0x8c] sm:$0xf]
        %v405 = vld [vmem:[%s286 + $0x90] sm:$0xff]
        %v406 = vld [vmem:[%s286 + $0x98] sm:$0xf]
        %v407 = vld [vmem:[%s286 + $0x9c] sm:$0xff]
        %v408 = vld [vmem:[%s286 + $0xa4] sm:$0xf]
        %v409 = vld [vmem:[%s286 + $0xa8] sm:$0xff]
        %v410 = vld [vmem:[%s286 + $0xb0] sm:$0xf]
        %v411 = vld [vmem:[%s286 + $0xb4] sm:$0xff]
        %v412 = vld [vmem:[%s286 + $0xbc] sm:$0xf]
        %v413 = vld [vmem:[%s330] sm:$0xf]
        %v414 = vld [vmem:[%s330 + $0x4] sm:$0xf]
        %v415 = vld [vmem:[%s330 + $0x8] sm:$0xf]
        %v416 = vld [vmem:[%s330 + $0xc] sm:$0xf]
        %v417 = vld [vmem:[%s330 + $0x10] sm:$0xf]
        %v418 = vld [vmem:[%s330 + $0x14] sm:$0xf]
        %v419 = vld [vmem:[%s330 + $0x18] sm:$0xf]
        %v420 = vld [vmem:[%s330 + $0x1c] sm:$0xf]
        %v421 = vld [vmem:[%s330 + $0x20] sm:$0xf]
        %v422 = vld [vmem:[%s330 + $0x24] sm:$0xf]
        %v423 = vld [vmem:[%s330 + $0x28] sm:$0xf]
        %v424 = vld [vmem:[%s330 + $0x2c] sm:$0xf]
        %v425 = vld [vmem:[%s330 + $0x30] sm:$0xf]
        %v426 = vld [vmem:[%s330 + $0x34] sm:$0xf]
        %v427 = vld [vmem:[%s330 + $0x38] sm:$0xf]
        %v428 = vld [vmem:[%s330 + $0x3c] sm:$0xf]
        %v429 = vld [vmem:[%s330 + $0x40] sm:$0xf]
        %v430 = vld [vmem:[%s330 + $0x44] sm:$0xf]
        %v431 = vld [vmem:[%s330 + $0x48] sm:$0xf]
        %v432 = vld [vmem:[%s330 + $0x4c] sm:$0xf]
        %v433 = vld [vmem:[%s330 + $0x50] sm:$0xf]
        %v434 = vld [vmem:[%s330 + $0x54] sm:$0xf]
        %v435 = vld [vmem:[%s330 + $0x58] sm:$0xf]
        %v436 = vld [vmem:[%s330 + $0x5c] sm:$0xf]
        %v437 = vld [vmem:[%s330 + $0x60] sm:$0xf]
        %v438 = vld [vmem:[%s330 + $0x64] sm:$0xf]
        %v439 = vld [vmem:[%s330 + $0x68] sm:$0xf]
        %v440 = vld [vmem:[%s330 + $0x6c] sm:$0xf]
        %v441 = vld [vmem:[%s330 + $0x70] sm:$0xf]
        %v442 = vld [vmem:[%s330 + $0x74] sm:$0xf]
        %v443 = vld [vmem:[%s330 + $0x78] sm:$0xf]
        %v444 = vld [vmem:[%s330 + $0x7c] sm:$0xf]
        %v445 = vld [vmem:[%s330 + $0x80] sm:$0xf]
        %v446 = vld [vmem:[%s330 + $0x84] sm:$0xf]
        %v447 = vld [vmem:[%s330 + $0x88] sm:$0xf]
        %v448 = vld [vmem:[%s330 + $0x8c] sm:$0xf]
        %v449 = vld [vmem:[%s330 + $0x90] sm:$0xf]
        %v450 = vld [vmem:[%s330 + $0x94] sm:$0xf]
        %v451 = vld [vmem:[%s330 + $0x98] sm:$0xf]
        %v452 = vld [vmem:[%s330 + $0x9c] sm:$0xf]
        %v453 = vld [vmem:[%s330 + $0xa0] sm:$0xf]
        %v454 = vld [vmem:[%s330 + $0xa4] sm:$0xf]
        %v455 = vld [vmem:[%s330 + $0xa8] sm:$0xf]
        %v456 = vld [vmem:[%s330 + $0xac] sm:$0xf]
        %v457 = vld [vmem:[%s330 + $0xb0] sm:$0xf]
        %v458 = vld [vmem:[%s330 + $0xb4] sm:$0xf]
        %v459 = vld [vmem:[%s330 + $0xb8] sm:$0xf]
        %v460 = vld [vmem:[%s330 + $0xbc] sm:$0xf]
        %v493 = vunpack.c.l.b16 %v381
        %v494 = vunpack.c.h.b16 %v381
        %v495 = vunpack.c.l.b16 %v382
        %v496 = vunpack.c.l.b16 %v383
        %v497 = vunpack.c.h.b16 %v383
        %v498 = vunpack.c.l.b16 %v384
        %v499 = vunpack.c.l.b16 %v385
        %v500 = vunpack.c.h.b16 %v385
        %v501 = vunpack.c.l.b16 %v386
        %v502 = vunpack.c.l.b16 %v387
        %v503 = vunpack.c.h.b16 %v387
        %v504 = vunpack.c.l.b16 %v388
        %v505 = vunpack.c.l.b16 %v389
        %v506 = vunpack.c.h.b16 %v389
        %v507 = vunpack.c.l.b16 %v390
        %v508 = vunpack.c.l.b16 %v391
        %v509 = vunpack.c.h.b16 %v391
        %v510 = vunpack.c.l.b16 %v392
        %v511 = vunpack.c.l.b16 %v393
        %v512 = vunpack.c.h.b16 %v393
        %v513 = vunpack.c.l.b16 %v394
        %v514 = vunpack.c.l.b16 %v395
        %v515 = vunpack.c.h.b16 %v395
        %v516 = vunpack.c.l.b16 %v396
        %v517 = vunpack.c.l.b16 %v397
        %v518 = vunpack.c.h.b16 %v397
        %v519 = vunpack.c.l.b16 %v398
        %v520 = vunpack.c.l.b16 %v399
        %v521 = vunpack.c.h.b16 %v399
        %v522 = vunpack.c.l.b16 %v400
        %v523 = vunpack.c.l.b16 %v401
        %v524 = vunpack.c.h.b16 %v401
        %v525 = vunpack.c.l.b16 %v402
        %v526 = vunpack.c.l.b16 %v403
        %v527 = vunpack.c.h.b16 %v403
        %v528 = vunpack.c.l.b16 %v404
        %v529 = vunpack.c.l.b16 %v405
        %v530 = vunpack.c.h.b16 %v405
        %v531 = vunpack.c.l.b16 %v406
        %v532 = vunpack.c.l.b16 %v407
        %v533 = vunpack.c.h.b16 %v407
        %v534 = vunpack.c.l.b16 %v408
        %v535 = vunpack.c.l.b16 %v409
        %v536 = vunpack.c.h.b16 %v409
        %v537 = vunpack.c.l.b16 %v410
        %v538 = vunpack.c.l.b16 %v411
        %v539 = vunpack.c.h.b16 %v411
        %v540 = vunpack.c.l.b16 %v412
        %v541 = vpack.c.b16 %v496, %v493
        %v542 = vpack.c.b16 %v497, %v494
        %v543 = vpack.c.b16 %v498, %v495
        %v544 = vpack.c.b16 %v502, %v499
        %v545 = vpack.c.b16 %v503, %v500
        %v546 = vpack.c.b16 %v504, %v501
        %v547 = vpack.c.b16 %v508, %v505
        %v548 = vpack.c.b16 %v509, %v506
        %v549 = vpack.c.b16 %v510, %v507
        %v550 = vpack.c.b16 %v514, %v511
        %v551 = vpack.c.b16 %v515, %v512
        %v552 = vpack.c.b16 %v516, %v513
        %v553 = vpack.c.b16 %v520, %v517
        %v554 = vpack.c.b16 %v521, %v518
        %v555 = vpack.c.b16 %v522, %v519
        %v556 = vpack.c.b16 %v526, %v523
        %v557 = vpack.c.b16 %v527, %v524
        %v558 = vpack.c.b16 %v528, %v525
        %v559 = vpack.c.b16 %v532, %v529
        %v560 = vpack.c.b16 %v533, %v530
        %v561 = vpack.c.b16 %v534, %v531
        %v562 = vpack.c.b16 %v538, %v535
        %v563 = vpack.c.b16 %v539, %v536
        %v564 = vpack.c.b16 %v540, %v537
        %v637 = vunpack.c.l.b16 %v413
        %v638 = vunpack.c.l.b16 %v414
        %v639 = vunpack.c.l.b16 %v415
        %v640 = vunpack.c.l.b16 %v416
        %v641 = vunpack.c.l.b16 %v417
        %v642 = vunpack.c.l.b16 %v418
        %v643 = vunpack.c.l.b16 %v419
        %v644 = vunpack.c.l.b16 %v420
        %v645 = vunpack.c.l.b16 %v421
        %v646 = vunpack.c.l.b16 %v422
        %v647 = vunpack.c.l.b16 %v423
        %v648 = vunpack.c.l.b16 %v424
        %v649 = vunpack.c.l.b16 %v425
        %v650 = vunpack.c.l.b16 %v426
        %v651 = vunpack.c.l.b16 %v427
        %v652 = vunpack.c.l.b16 %v428
        %v653 = vunpack.c.l.b16 %v429
        %v654 = vunpack.c.l.b16 %v430
        %v655 = vunpack.c.l.b16 %v431
        %v656 = vunpack.c.l.b16 %v432
        %v657 = vunpack.c.l.b16 %v433
        %v658 = vunpack.c.l.b16 %v434
        %v659 = vunpack.c.l.b16 %v435
        %v660 = vunpack.c.l.b16 %v436
        %v661 = vunpack.c.l.b16 %v437
        %v662 = vunpack.c.l.b16 %v438
        %v663 = vunpack.c.l.b16 %v439
        %v664 = vunpack.c.l.b16 %v440
        %v665 = vunpack.c.l.b16 %v441
        %v666 = vunpack.c.l.b16 %v442
        %v667 = vunpack.c.l.b16 %v443
        %v668 = vunpack.c.l.b16 %v444
        %v669 = vunpack.c.l.b16 %v445
        %v670 = vunpack.c.l.b16 %v446
        %v671 = vunpack.c.l.b16 %v447
        %v672 = vunpack.c.l.b16 %v448
        %v673 = vunpack.c.l.b16 %v449
        %v674 = vunpack.c.l.b16 %v450
        %v675 = vunpack.c.l.b16 %v451
        %v676 = vunpack.c.l.b16 %v452
        %v677 = vunpack.c.l.b16 %v453
        %v678 = vunpack.c.l.b16 %v454
        %v679 = vunpack.c.l.b16 %v455
        %v680 = vunpack.c.l.b16 %v456
        %v681 = vunpack.c.l.b16 %v457
        %v682 = vunpack.c.l.b16 %v458
        %v683 = vunpack.c.l.b16 %v459
        %v684 = vunpack.c.l.b16 %v460
        %v685 = vpack.c.b16 %v638, %v637
        %v686 = vpack.c.b16 %v640, %v639
        %v687 = vpack.c.b16 %v642, %v641
        %v688 = vpack.c.b16 %v644, %v643
        %v689 = vpack.c.b16 %v646, %v645
        %v690 = vpack.c.b16 %v648, %v647
        %v691 = vpack.c.b16 %v650, %v649
        %v692 = vpack.c.b16 %v652, %v651
        %v693 = vpack.c.b16 %v654, %v653
        %v694 = vpack.c.b16 %v656, %v655
        %v695 = vpack.c.b16 %v658, %v657
        %v696 = vpack.c.b16 %v660, %v659
        %v697 = vpack.c.b16 %v662, %v661
        %v698 = vpack.c.b16 %v664, %v663
        %v699 = vpack.c.b16 %v666, %v665
        %v700 = vpack.c.b16 %v668, %v667
        %v701 = vpack.c.b16 %v670, %v669
        %v702 = vpack.c.b16 %v672, %v671
        %v703 = vpack.c.b16 %v674, %v673
        %v704 = vpack.c.b16 %v676, %v675
        %v705 = vpack.c.b16 %v678, %v677
        %v706 = vpack.c.b16 %v680, %v679
        %v707 = vpack.c.b16 %v682, %v681
        %v708 = vpack.c.b16 %v684, %v683
        %733 = vmatprep.subr.bf16.mxu0 0
        %734 = vmatpush1.bf16.msra.mxu0 %v685
        %735 = vmatprep.subr.bf16.mxu0 0
        %736 = vmatpush1.bf16.msra.mxu0 %v686
        %737 = vmatprep.subr.bf16.mxu0 0
        %738 = vmatpush1.bf16.msra.mxu0 %v687
        %739 = vmatprep.subr.bf16.mxu0 0
        %740 = vmatpush1.bf16.msra.mxu0 %v688
        %741 = vmatprep.subr.bf16.mxu0 0
        %742 = vmatpush1.bf16.msra.mxu0 %v689
        %743 = vmatprep.subr.bf16.mxu0 0
        %744 = vmatpush1.bf16.msra.mxu0 %v690
        %745 = vmatprep.subr.bf16.mxu0 0
        %746 = vmatpush1.bf16.msra.mxu0 %v691
        %747 = vmatprep.subr.bf16.mxu0 0
        %748 = vmatpush1.bf16.msra.mxu0 %v692
        %749 = vmatprep.subr.bf16.mxu0 0
        %750 = vmatpush1.bf16.msra.mxu0 %v693
        %751 = vmatprep.subr.bf16.mxu0 0
        %752 = vmatpush1.bf16.msra.mxu0 %v694
        %753 = vmatprep.subr.bf16.mxu0 0
        %754 = vmatpush1.bf16.msra.mxu0 %v695
        %755 = vmatprep.subr.bf16.mxu0 0
        %756 = vmatpush1.bf16.msra.mxu0 %v696
        %757 = vmatprep.subr.bf16.mxu0 0
        %758 = vmatpush1.bf16.msra.mxu0 %v697
        %759 = vmatprep.subr.bf16.mxu0 0
        %760 = vmatpush1.bf16.msra.mxu0 %v698
        %761 = vmatprep.subr.bf16.mxu0 0
        %762 = vmatpush1.bf16.msra.mxu0 %v699
        %763 = vmatprep.subr.bf16.mxu0 0
        %764 = vmatpush1.bf16.msra.mxu0 %v700
        %765 = vmatprep.mubr.bf16.mxu0 %v542
        %766 = vmatmul.mubr.bf16.gmra.mrb[0].mxu0 %v541
        %v767 = vpop.f32.mrb[0].mxu0
        %v768 = vadd.f32 0.0, %v767
        %v769 = vpop.f32.mrb[0].mxu0
        %v770 = vpop.f32.mrb[0].mxu0
        %v771 = vadd.f32 0.0, %v770
        %v772 = vpop.f32.mrb[0].mxu0
        %773 = vmatprep.mubr.bf16.mxu0 %v545
        %774 = vmatmul.mubr.bf16.gmra.mrb[0].mxu0 %v544
        %v775 = vpop.f32.mrb[0].mxu0
        %v776 = vadd.f32 0.0, %v775
        %v777 = vpop.f32.mrb[0].mxu0
        %v778 = vpop.f32.mrb[0].mxu0
        %v779 = vadd.f32 0.0, %v778
        %v780 = vpop.f32.mrb[0].mxu0
        %781 = vmatprep.mubr.bf16.mxu0 %v548
        %782 = vmatmul.mubr.bf16.gmra.mrb[0].mxu0 %v547
        %v783 = vpop.f32.mrb[0].mxu0
        %v784 = vadd.f32 0.0, %v783
        %v785 = vpop.f32.mrb[0].mxu0
        %v786 = vpop.f32.mrb[0].mxu0
        %v787 = vadd.f32 0.0, %v786
        %v788 = vpop.f32.mrb[0].mxu0
        %789 = vmatprep.mubr.bf16.mxu0 %v551
        %790 = vmatmul.mubr.bf16.gmra.mrb[0].mxu0 %v550
        %v791 = vpop.f32.mrb[0].mxu0
        %v792 = vadd.f32 0.0, %v791
        %v793 = vpop.f32.mrb[0].mxu0
        %v794 = vpop.f32.mrb[0].mxu0
        %v795 = vadd.f32 0.0, %v794
        %v796 = vpop.f32.mrb[0].mxu0
        %797 = vmatprep.mubr.bf16.mxu0 %v554
        %798 = vmatmul.mubr.bf16.gmra.mrb[0].mxu0 %v553
        %v799 = vpop.f32.mrb[0].mxu0
        %v800 = vadd.f32 0.0, %v799
        %v801 = vpop.f32.mrb[0].mxu0
        %v802 = vpop.f32.mrb[0].mxu0
        %v803 = vadd.f32 0.0, %v802
        %v804 = vpop.f32.mrb[0].mxu0
        %805 = vmatprep.mubr.bf16.mxu0 %v557
        %806 = vmatmul.mubr.bf16.gmra.mrb[0].mxu0 %v556
        %v807 = vpop.f32.mrb[0].mxu0
        %v808 = vadd.f32 0.0, %v807
        %v809 = vpop.f32.mrb[0].mxu0
        %v810 = vpop.f32.mrb[0].mxu0
        %v811 = vadd.f32 0.0, %v810
        %v812 = vpop.f32.mrb[0].mxu0
        %813 = vmatprep.mubr.bf16.mxu0 %v560
        %814 = vmatmul.mubr.bf16.gmra.mrb[0].mxu0 %v559
        %v815 = vpop.f32.mrb[0].mxu0
        %v816 = vadd.f32 0.0, %v815
        %v817 = vpop.f32.mrb[0].mxu0
        %v818 = vpop.f32.mrb[0].mxu0
        %v819 = vadd.f32 0.0, %v818
        %v820 = vpop.f32.mrb[0].mxu0
        %821 = vmatprep.mubr.bf16.mxu0 %v563
        %822 = vmatmul.mubr.bf16.gmra.mrb[0].mxu0 %v562
        %v823 = vpop.f32.mrb[0].mxu0
        %v824 = vadd.f32 0.0, %v823
        %v825 = vpop.f32.mrb[0].mxu0
        %v826 = vpop.f32.mrb[0].mxu0
        %v827 = vadd.f32 0.0, %v826
        %v828 = vpop.f32.mrb[0].mxu0
        %829 = vdwg.mxu0
        %830 = vmatprep.subr.bf16.mxu0 0
        %831 = vmatpush1.bf16.msra.mxu0 %v701
        %832 = vmatprep.subr.bf16.mxu0 0
        %833 = vmatpush1.bf16.msra.mxu0 %v702
        %834 = vmatprep.subr.bf16.mxu0 0
        %835 = vmatpush1.bf16.msra.mxu0 %v703
        %836 = vmatprep.subr.bf16.mxu0 0
        %837 = vmatpush1.bf16.msra.mxu0 %v704
        %838 = vmatprep.subr.bf16.mxu0 0
        %839 = vmatpush1.bf16.msra.mxu0 %v705
        %840 = vmatprep.subr.bf16.mxu0 0
        %841 = vmatpush1.bf16.msra.mxu0 %v706
        %842 = vmatprep.subr.bf16.mxu0 0
        %843 = vmatpush1.bf16.msra.mxu0 %v707
        %844 = vmatprep.subr.bf16.mxu0 0
        %845 = vmatpush1.bf16.msra.mxu0 %v708
        %846 = vmatprep.subr.bf16.mxu0 0
        %847 = vmatpush1.bf16.msra.mxu0 0
        %848 = vmatprep.subr.bf16.mxu0 0
        %849 = vmatpush1.bf16.msra.mxu0 0
        %850 = vmatprep.subr.bf16.mxu0 0
        %851 = vmatpush1.bf16.msra.mxu0 0
        %852 = vmatprep.subr.bf16.mxu0 0
        %853 = vmatpush1.bf16.msra.mxu0 0
        %854 = vmatprep.subr.bf16.mxu0 0
        %855 = vmatpush1.bf16.msra.mxu0 0
        %856 = vmatprep.subr.bf16.mxu0 0
        %857 = vmatpush1.bf16.msra.mxu0 0
        %858 = vmatprep.subr.bf16.mxu0 0
        %859 = vmatpush1.bf16.msra.mxu0 0
        %860 = vmatprep.subr.bf16.mxu0 0
        %861 = vmatpush1.bf16.msra.mxu0 0
        %862 = vmatprep.mubr.bf16.mxu0 0
        %863 = vmatmul.mubr.bf16.gmra.mrb[0].mxu0 %v543
        %v864 = vpop.f32.mrb[0].mxu0
        %v865 = vadd.f32 %v768, %v864
        %v866 = vpop.f32.mrb[0].mxu0
        %v867 = vpop.f32.mrb[0].mxu0
        %v868 = vadd.f32 %v771, %v867
        %v869 = vpop.f32.mrb[0].mxu0
        %870 = vmatprep.mubr.bf16.mxu0 0
        %871 = vmatmul.mubr.bf16.gmra.mrb[0].mxu0 %v546
        %v872 = vpop.f32.mrb[0].mxu0
        %v873 = vadd.f32 %v776, %v872
        %v874 = vpop.f32.mrb[0].mxu0
        %v875 = vpop.f32.mrb[0].mxu0
        %v876 = vadd.f32 %v779, %v875
        %v877 = vpop.f32.mrb[0].mxu0
        %878 = vmatprep.mubr.bf16.mxu0 0
        %879 = vmatmul.mubr.bf16.gmra.mrb[0].mxu0 %v549
        %v880 = vpop.f32.mrb[0].mxu0
        %v881 = vadd.f32 %v784, %v880
        %v882 = vpop.f32.mrb[0].mxu0
        %v883 = vpop.f32.mrb[0].mxu0
        %v884 = vadd.f32 %v787, %v883
        %v885 = vpop.f32.mrb[0].mxu0
        %886 = vmatprep.mubr.bf16.mxu0 0
        %887 = vmatmul.mubr.bf16.gmra.mrb[0].mxu0 %v552
        %v888 = vpop.f32.mrb[0].mxu0
        %v889 = vadd.f32 %v792, %v888
        %v890 = vpop.f32.mrb[0].mxu0
        %v891 = vpop.f32.mrb[0].mxu0
        %v892 = vadd.f32 %v795, %v891
        %v893 = vpop.f32.mrb[0].mxu0
        %894 = vmatprep.mubr.bf16.mxu0 0
        %895 = vmatmul.mubr.bf16.gmra.mrb[0].mxu0 %v555
        %v896 = vpop.f32.mrb[0].mxu0
        %v897 = vadd.f32 %v800, %v896
        %v898 = vpop.f32.mrb[0].mxu0
        %v899 = vpop.f32.mrb[0].mxu0
        %v900 = vadd.f32 %v803, %v899
        %v901 = vpop.f32.mrb[0].mxu0
        %902 = vmatprep.mubr.bf16.mxu0 0
        %903 = vmatmul.mubr.bf16.gmra.mrb[0].mxu0 %v558
        %v904 = vpop.f32.mrb[0].mxu0
        %v905 = vadd.f32 %v808, %v904
        %v906 = vpop.f32.mrb[0].mxu0
        %v907 = vpop.f32.mrb[0].mxu0
        %v908 = vadd.f32 %v811, %v907
        %v909 = vpop.f32.mrb[0].mxu0
        %910 = vmatprep.mubr.bf16.mxu0 0
        %911 = vmatmul.mubr.bf16.gmra.mrb[0].mxu0 %v561
        %v912 = vpop.f32.mrb[0].mxu0
        %v913 = vadd.f32 %v816, %v912
        %v914 = vpop.f32.mrb[0].mxu0
        %v915 = vpop.f32.mrb[0].mxu0
        %v916 = vadd.f32 %v819, %v915
        %v917 = vpop.f32.mrb[0].mxu0
        %918 = vmatprep.mubr.bf16.mxu0 0
        %919 = vmatmul.mubr.bf16.gmra.mrb[0].mxu0 %v564
        %v920 = vpop.f32.mrb[0].mxu0
        %v921 = vadd.f32 %v824, %v920
        %v922 = vpop.f32.mrb[0].mxu0
        %v923 = vpop.f32.mrb[0].mxu0
        %v924 = vadd.f32 %v827, %v923
        %v925 = vpop.f32.mrb[0].mxu0
        %926 = vdwg.mxu0
        %v927 = vadd.f32 %v365, %v865
        %v928 = vadd.f32 %v366, %v868
        %v929 = vadd.f32 %v367, %v873
        %v930 = vadd.f32 %v368, %v876
        %v931 = vadd.f32 %v369, %v881
        %v932 = vadd.f32 %v370, %v884
        %v933 = vadd.f32 %v371, %v889
        %v934 = vadd.f32 %v372, %v892
        %v935 = vadd.f32 %v373, %v897
        %v936 = vadd.f32 %v374, %v900
        %v937 = vadd.f32 %v375, %v905
        %v938 = vadd.f32 %v376, %v908
        %v939 = vadd.f32 %v377, %v913
        %v940 = vadd.f32 %v378, %v916
        %v941 = vadd.f32 %v379, %v921
        %v942 = vadd.f32 %v380, %v924
        %943 = vst [vmem:[#allocation2] sm:$0xff] %v927
        %944 = vst [vmem:[#allocation2 + $0x8] sm:$0xff] %v928
        %945 = vst [vmem:[#allocation2 + $0x10] sm:$0xff] %v929
        %946 = vst [vmem:[#allocation2 + $0x18] sm:$0xff] %v930
        %947 = vst [vmem:[#allocation2 + $0x20] sm:$0xff] %v931
        %948 = vst [vmem:[#allocation2 + $0x28] sm:$0xff] %v932
        %949 = vst [vmem:[#allocation2 + $0x30] sm:$0xff] %v933
        %950 = vst [vmem:[#allocation2 + $0x38] sm:$0xff] %v934
        %951 = vst [vmem:[#allocation2 + $0x40] sm:$0xff] %v935
        %952 = vst [vmem:[#allocation2 + $0x48] sm:$0xff] %v936
        %953 = vst [vmem:[#allocation2 + $0x50] sm:$0xff] %v937
        %954 = vst [vmem:[#allocation2 + $0x58] sm:$0xff] %v938
        %955 = vst [vmem:[#allocation2 + $0x60] sm:$0xff] %v939
        %956 = vst [vmem:[#allocation2 + $0x68] sm:$0xff] %v940
        %957 = vst [vmem:[#allocation2 + $0x70] sm:$0xff] %v941
        %958 = vst [vmem:[#allocation2 + $0x78] sm:$0xff] %v942
        %p959 = scmp.eq.s32.totalorder %s21, 2
        // Predicated region
        $region63: #{cxr_autoencoder_forward.8} parent=53 // pred_check
          %p960 = pneg %p959
        $region64: #{cxr_autoencoder_forward.8} parent=53 // pred_check_branch
          %962 = sbr.rel (%p960) target = $region66
        $region65: #{cxr_autoencoder_forward.8} parent=53 // pred_region
          %v963 = vld [vmem:[#allocation2] sm:$0xff]
          %v964 = vld [vmem:[#allocation2 + $0x8] sm:$0xff]
          %v965 = vld [vmem:[#allocation2 + $0x10] sm:$0xff]
          %v966 = vld [vmem:[#allocation2 + $0x18] sm:$0xff]
          %v967 = vld [vmem:[#allocation2 + $0x20] sm:$0xff]
          %v968 = vld [vmem:[#allocation2 + $0x28] sm:$0xff]
          %v969 = vld [vmem:[#allocation2 + $0x30] sm:$0xff]
          %v970 = vld [vmem:[#allocation2 + $0x38] sm:$0xff]
          %v971 = vld [vmem:[#allocation2 + $0x40] sm:$0xff]
          %v972 = vld [vmem:[#allocation2 + $0x48] sm:$0xff]
          %v973 = vld [vmem:[#allocation2 + $0x50] sm:$0xff]
          %v974 = vld [vmem:[#allocation2 + $0x58] sm:$0xff]
          %v975 = vld [vmem:[#allocation2 + $0x60] sm:$0xff]
          %v976 = vld [vmem:[#allocation2 + $0x68] sm:$0xff]
          %v977 = vld [vmem:[#allocation2 + $0x70] sm:$0xff]
          %v978 = vld [vmem:[#allocation2 + $0x78] sm:$0xff]
          %v979 = vld [vmem:[%s334] sm:$0x1]
          %v981 = vlaneseq
          %v982 = vshrl.u32 %v981, 7
          %v983 = vsub.s32 0, %v982
          %v984 = vrot.slane %v979, %v983
          %v986 = vadd.f32 %v963, %v984
          %v987 = vadd.f32 %v964, %v984
          %v988 = vadd.f32 %v965, %v984
          %v989 = vadd.f32 %v966, %v984
          %v990 = vadd.f32 %v967, %v984
          %v991 = vadd.f32 %v968, %v984
          %v992 = vadd.f32 %v969, %v984
          %v993 = vadd.f32 %v970, %v984
          %v994 = vadd.f32 %v971, %v984
          %v995 = vadd.f32 %v972, %v984
          %v996 = vadd.f32 %v973, %v984
          %v997 = vadd.f32 %v974, %v984
          %v998 = vadd.f32 %v975, %v984
          %v999 = vadd.f32 %v976, %v984
          %v1000 = vadd.f32 %v977, %v984
          %v1001 = vadd.f32 %v978, %v984
          %v1002 = vmax.f32 %v986, 0.0
          %v1003 = vmax.f32 %v987, 0.0
          %v1004 = vmax.f32 %v988, 0.0
          %v1005 = vmax.f32 %v989, 0.0
          %v1006 = vmax.f32 %v990, 0.0
          %v1007 = vmax.f32 %v991, 0.0
          %v1008 = vmax.f32 %v992, 0.0
          %v1009 = vmax.f32 %v993, 0.0
          %v1010 = vmax.f32 %v994, 0.0
          %v1011 = vmax.f32 %v995, 0.0
          %v1012 = vmax.f32 %v996, 0.0
          %v1013 = vmax.f32 %v997, 0.0
          %v1014 = vmax.f32 %v998, 0.0
          %v1015 = vmax.f32 %v999, 0.0
          %v1016 = vmax.f32 %v1000, 0.0
          %v1017 = vmax.f32 %v1001, 0.0
          %1018 = vst [vmem:[%s342] sm:$0xff] %v1002
          %1019 = vst [vmem:[%s342 + $0x8] sm:$0xff] %v1003
          %1020 = vst [vmem:[%s342 + $0x10] sm:$0xff] %v1004
          %1021 = vst [vmem:[%s342 + $0x18] sm:$0xff] %v1005
          %1022 = vst [vmem:[%s342 + $0x20] sm:$0xff] %v1006
          %1023 = vst [vmem:[%s342 + $0x28] sm:$0xff] %v1007
          %1024 = vst [vmem:[%s342 + $0x30] sm:$0xff] %v1008
          %1025 = vst [vmem:[%s342 + $0x38] sm:$0xff] %v1009
          %1026 = vst [vmem:[%s342 + $0x40] sm:$0xff] %v1010
          %1027 = vst [vmem:[%s342 + $0x48] sm:$0xff] %v1011
          %1028 = vst [vmem:[%s342 + $0x50] sm:$0xff] %v1012
          %1029 = vst [vmem:[%s342 + $0x58] sm:$0xff] %v1013
          %1030 = vst [vmem:[%s342 + $0x60] sm:$0xff] %v1014
          %1031 = vst [vmem:[%s342 + $0x68] sm:$0xff] %v1015
          %1032 = vst [vmem:[%s342 + $0x70] sm:$0xff] %v1016
          %1033 = vst [vmem:[%s342 + $0x78] sm:$0xff] %v1017
        $region66: #{cxr_autoencoder_forward.8} parent=53 // pred_fallthru
          _
        %s1034 = smul.u32 16, %s19
        %p1035 = scmp.lt.s32.totalorder %s1034, 15
        %s1036 = scalar_select %p1035, %s1034, 15
        %p1037 = scmp.lt.s32.totalorder %s20, 0
        %s1038 = scalar_select %p1037, %s20, 0
        %s1039 = sadd.s32 %s1038, %s1036
        %s1040 = smul.addr %s1039, 8
        %s1041 = scalar_lea.vmem %s3, %s1040
        // Predicated region
        $region67: #{cxr_autoencoder_forward.8} parent=53 // pred_check
          %p1042 = pneg %p135
        $region68: #{cxr_autoencoder_forward.8} parent=53 // pred_check_branch
          %1044 = sbr.rel (%p1042) target = $region70
        $region69: #{cxr_autoencoder_forward.8} parent=53 // pred_region
          %s1045 = smul.u32 16, %s19
        $region70: #{cxr_autoencoder_forward.8} parent=53 // pred_fallthru
          _
        // Predicated region
        $region71: #{cxr_autoencoder_forward.8} parent=53 // pred_check
          %p1046 = pneg %p135
        $region72: #{cxr_autoencoder_forward.8} parent=53 // pred_check_branch
          %1048 = sbr.rel (%p1046) target = $region74
        $region73: #{cxr_autoencoder_forward.8} parent=53 // pred_region
          %s1049 = smul.u32 16, %s19
          %p1050 = scmp.lt.s32.totalorder %s1049, 15
          %s1051 = scalar_select %p1050, %s1049, 15
          %p1052 = scmp.lt.s32.totalorder %s20, 0
          %s1053 = scalar_select %p1052, %s20, 0
          %s1054 = sadd.s32 %s1053, %s1051
          %s1055 = smul.addr %s1054, 8
          %s1056 = scalar_lea.vmem %s3, %s1055
        $region74: #{cxr_autoencoder_forward.8} parent=53 // pred_fallthru
          _
      $region54: #{cxr_autoencoder_forward.8} parent=5 // pred_fallthru
        _
      %p1057 = scmp.le.s32.totalorder 2, %s9
      // Predicated region
      $region75: #{cxr_autoencoder_forward.8} parent=5 // pred_check
        %p1058 = pneg %p1057
      $region76: #{cxr_autoencoder_forward.8} parent=5 // pred_check_branch
        %1060 = sbr.rel (%p1058) target = $region78
      $region77: #{cxr_autoencoder_forward.8} parent=5 // pred_region
        %s1061 = ssub.s32 %s9, 2
      $region78: #{cxr_autoencoder_forward.8} parent=5 // pred_fallthru
        _
    $region6: #{cxr_autoencoder_forward.8} parent=1 // loop_footer
      %s13 = sadd.s32 1, %s9
    $region7: #{cxr_autoencoder_forward.8} parent=1 // loop_footer_branch
      %8 = sbr.rel target = $region3
    $region8: #{cxr_autoencoder_forward.8} parent=1 // loop_exit
      _

// kernel: cxr_autoencoder_forward.9
$region0: #{cxr_autoencoder_forward.9}
  #allocation0 [shape = 'u32[]', space=smem, size = 0x4, offset = 0x4, fixed_abs, tag = 'smem constant byte address 0x4 - core index']
  #allocation1 [shape = 'u32[144,128]{1,0:T(1,128)}', space=vmem, size = 0x12000, scoped, tag = 'internal scratch']
  #allocation2 [shape = 'f32[32,128]{1,0:T(8,128)}', space=vmem, size = 0x4000, scoped, tag = 'scratch operand']
  %s0 = inlined_call_operand.vmem [shape: bf16[32,1152], index: 0, kind: input, shape index: {}]
  %s1 = inlined_call_operand.vmem [shape: bf16[1152,128], index: 1, kind: input, shape index: {}]
  %s2 = inlined_call_operand.vmem [shape: f32[1,128], index: 2, kind: input, shape index: {}]
  %s3 = inlined_call_operand.vmem [shape: f32[32,128], index: 3, kind: output, shape index: {}]
  %s4 = sld [smem:[#allocation0]]
  $region79: #{cxr_autoencoder_forward.9} parent=0
    _
  %s6 = ssub.s32 1, %s4
  %s7 = scalar_select 0, %s6, %s4
  $region1: #{cxr_autoencoder_forward.9} parent=0
    #allocation3 [shape = 'u8[49152]{0}', space=vmem, size = 0xc000, scoped, tag = 'input window, operand 0']
    loop: start=0, step=1, limit=5
    $region2: #{cxr_autoencoder_forward.9} parent=1 // loop_pre_header
      _
    $region3: #{cxr_autoencoder_forward.9} parent=1 // loop_header
      %s9 = sphi 0, %s13
      %p10 = scmp.ge.s32.totalorder %s9, 5
      %s16 = sphi 0, %s35
      %s17 = sphi 0, %s31
      %s18 = sphi 0, %s27
      %s19 = sphi 0, %s16
      %s20 = sphi 0, %s17
      %s21 = sphi 0, %s18
      %s22 = sphi 0, %s19
      %s23 = sphi 0, %s20
      %s24 = sphi 0, %s21
      %s40 = sphi 0, %s42
      %s43 = sphi 0, %s40
      %s44 = sphi 0, %s43
      %s60 = sphi 0, %s44
      %s68 = sphi 0, %s70
      %s71 = sphi 0, %s68
      %s72 = sphi 0, %s71
      %s88 = sphi 0, %s72
      %s94 = sphi 0, %s96
      %s97 = sphi 0, %s94
      %s98 = sphi 0, %s97
      %s114 = sphi 0, %s98
      %s122 = sphi 0, %s124
      %s125 = sphi 0, %s122
      %s126 = sphi 0, %s125
      %s142 = sphi 0, %s126
    $region4: #{cxr_autoencoder_forward.9} parent=1 // loop_header_branch
      %12 = sbr.rel (%p10) target = $region8
    $region5: #{cxr_autoencoder_forward.9} parent=1 // loop_body
      %s14 = ssub.s32 %s9, 1
      %s15 = ssub.s32 %s9, 2
      %s25 = sadd.s32 1, %s18
      %p26 = scmp.ge.s32.totalorder %s25, 3
      %s27 = scalar_select %p26, 0, %s25
      %s28 = sadd.s32 1, %s17
      %s29 = scalar_select %p26, %s28, %s17
      %p30 = scmp.ge.s32.totalorder %s29, 1
      %s31 = scalar_select %p30, 0, %s29
      %s32 = sadd.s32 1, %s16
      %s33 = scalar_select %p30, %s32, %s16
      %p34 = scmp.ge.s32.totalorder %s33, 1
      %s35 = scalar_select %p34, 0, %s33
      %s36 = ssub.s32 %s16, %s35
      %s37 = ssub.s32 %s18, %s27
      %s38 = sor.u32 %s36, %s37
      %p39 = scmp.eq.s32.totalorder %s38, 0
      %s41 = sadd.s32 %s40, 1
      %s42 = scalar_select %p39, %s40, %s41
      %p45 = pneg %p39
      %p46 = scmp.eq.s32.totalorder %s9, 2
      %p47 = por %p45, %p46
      %p48 = scmp.ne.s32.totalorder %s40, %s43
      %p49 = scmp.eq.s32.totalorder %s9, 0
      %p50 = por %p48, %p49
      %p51 = scmp.ne.s32.totalorder %s40, %s43
      %p52 = scmp.eq.s32.totalorder %s14, 2
      %p53 = por %p51, %p52
      %p54 = scmp.ne.s32.totalorder %s43, %s44
      %p55 = scmp.eq.s32.totalorder %s14, 0
      %p56 = por %p54, %p55
      %p57 = scmp.ne.s32.totalorder %s43, %s44
      %p58 = scmp.eq.s32.totalorder %s15, 2
      %p59 = por %p57, %p58
      %p61 = scmp.ne.s32.totalorder %s44, %s60
      %p62 = scmp.eq.s32.totalorder %s15, 0
      %p63 = por %p61, %p62
      %s64 = ssub.s32 %s18, %s27
      %s65 = ssub.s32 %s17, %s31
      %s66 = sor.u32 %s64, %s65
      %p67 = scmp.eq.s32.totalorder %s66, 0
      %s69 = sadd.s32 %s68, 1
      %s70 = scalar_select %p67, %s68, %s69
      %p73 = pneg %p67
      %p74 = scmp.eq.s32.totalorder %s9, 2
      %p75 = por %p73, %p74
      %p76 = scmp.ne.s32.totalorder %s68, %s71
      %p77 = scmp.eq.s32.totalorder %s9, 0
      %p78 = por %p76, %p77
      %p79 = scmp.ne.s32.totalorder %s68, %s71
      %p80 = scmp.eq.s32.totalorder %s14, 2
      %p81 = por %p79, %p80
      %p82 = scmp.ne.s32.totalorder %s71, %s72
      %p83 = scmp.eq.s32.totalorder %s14, 0
      %p84 = por %p82, %p83
      %p85 = scmp.ne.s32.totalorder %s71, %s72
      %p86 = scmp.eq.s32.totalorder %s15, 2
      %p87 = por %p85, %p86
      %p89 = scmp.ne.s32.totalorder %s72, %s88
      %p90 = scmp.eq.s32.totalorder %s15, 0
      %p91 = por %p89, %p90
      %s92 = ssub.s32 %s17, %s31
      %p93 = scmp.eq.s32.totalorder %s92, 0
      %s95 = sadd.s32 %s94, 1
      %s96 = scalar_select %p93, %s94, %s95
      %p99 = pneg %p93
      %p100 = scmp.eq.s32.totalorder %s9, 2
      %p101 = por %p99, %p100
      %p102 = scmp.ne.s32.totalorder %s94, %s97
      %p103 = scmp.eq.s32.totalorder %s9, 0
      %p104 = por %p102, %p103
      %p105 = scmp.ne.s32.totalorder %s94, %s97
      %p106 = scmp.eq.s32.totalorder %s14, 2
      %p107 = por %p105, %p106
      %p108 = scmp.ne.s32.totalorder %s97, %s98
      %p109 = scmp.eq.s32.totalorder %s14, 0
      %p110 = por %p108, %p109
      %p111 = scmp.ne.s32.totalorder %s97, %s98
      %p112 = scmp.eq.s32.totalorder %s15, 2
      %p113 = por %p111, %p112
      %p115 = scmp.ne.s32.totalorder %s98, %s114
      %p116 = scmp.eq.s32.totalorder %s15, 0
      %p117 = por %p115, %p116
      %s118 = ssub.s32 %s16, %s35
      %s119 = ssub.s32 %s17, %s31
      %s120 = sor.u32 %s118, %s119
      %p121 = scmp.eq.s32.totalorder %s120, 0
      %s123 = sadd.s32 %s122, 1
      %s124 = scalar_select %p121, %s122, %s123
      %p127 = pneg %p121
      %p128 = scmp.eq.s32.totalorder %s9, 2
      %p129 = por %p127, %p128
      %p130 = scmp.ne.s32.totalorder %s122, %s125
      %p131 = scmp.eq.s32.totalorder %s9, 0
      %p132 = por %p130, %p131
      %p133 = scmp.ne.s32.totalorder %s122, %s125
      %p134 = scmp.eq.s32.totalorder %s14, 2
      %p135 = por %p133, %p134
      %p136 = scmp.ne.s32.totalorder %s125, %s126
      %p137 = scmp.eq.s32.totalorder %s14, 0
      %p138 = por %p136, %p137
      %p139 = scmp.ne.s32.totalorder %s125, %s126
      %p140 = scmp.eq.s32.totalorder %s15, 2
      %p141 = por %p139, %p140
      %p143 = scmp.ne.s32.totalorder %s126, %s142
      %p144 = scmp.eq.s32.totalorder %s15, 0
      %p145 = por %p143, %p144
      %p146 = scmp.le.s32.totalorder 1, %s9
      %p147 = scmp.lt.s32.totalorder %s9, 4
      %p148 = pnand %p146, %p147
      %p149 = pneg %p148
      // Predicated region
      $region9: #{cxr_autoencoder_forward.9} parent=5 // pred_check
        _
      $region10: #{cxr_autoencoder_forward.9} parent=5 // pred_check_branch
        %151 = sbr.rel (%p148) target = $region12
      $region11: #{cxr_autoencoder_forward.9} parent=5 // pred_region
        %s152 = ssub.s32 %s9, 1
        // Predicated region
        $region13: #{cxr_autoencoder_forward.9} parent=11 // pred_check
          %p153 = pneg %p110
        $region14: #{cxr_autoencoder_forward.9} parent=11 // pred_check_branch
          %155 = sbr.rel (%p153) target = $region16
        $region15: #{cxr_autoencoder_forward.9} parent=11 // pred_region
          %p156 = scmp.lt.s32.totalorder %s20, 0
          %s157 = scalar_select %p156, %s20, 0
          %s158 = scalar_lea.vmem %s2, %s157
        $region16: #{cxr_autoencoder_forward.9} parent=11 // pred_fallthru
          _
      $region12: #{cxr_autoencoder_forward.9} parent=5 // pred_fallthru
        _
      %p159 = scmp.lt.s32.totalorder %s9, 3
      // Predicated region
      $region17: #{cxr_autoencoder_forward.9} parent=5 // pred_check
        %p160 = pneg %p159
      $region18: #{cxr_autoencoder_forward.9} parent=5 // pred_check_branch
        %162 = sbr.rel (%p160) target = $region20
      $region19: #{cxr_autoencoder_forward.9} parent=5 // pred_region
        // Predicated region
        $region21: #{cxr_autoencoder_forward.9} parent=19 // pred_check
          %p163 = pneg %p50
        $region22: #{cxr_autoencoder_forward.9} parent=19 // pred_check_branch
          %165 = sbr.rel (%p163) target = $region24
        $region23: #{cxr_autoencoder_forward.9} parent=19 // pred_region
          %s166 = sand.u32 %s40, 1
          %s167 = sand.u32 %s40, 1
          %s168 = smul.addr %s167, 48
          %s169 = scalar_lea.vmem [#allocation3], %s168
          %s170 = smul.u32 4, %s16
          %s171 = smul.u32 3, %s18
          %s172 = smul.addr %s170, 9
          %s173 = sadd.s32 %s171, %s172
          %s174 = smul.addr %s173, 4
          %s175 = scalar_lea.vmem %s0, %s174
          // Predicated region
          $region25: #{cxr_autoencoder_forward.9} parent=23 // pred_check
            _
          $region26: #{cxr_autoencoder_forward.9} parent=23 // pred_check_branch
            %177 = sbr.rel (0) target = $region28
          $region27: #{cxr_autoencoder_forward.9} parent=23 // pred_region
            // Predicated region
            $region29: #{cxr_autoencoder_forward.9} parent=27 // pred_check
              _
            $region30: #{cxr_autoencoder_forward.9} parent=27 // pred_check_branch
              %179 = sbr.rel (0) target = $region32
            $region31: #{cxr_autoencoder_forward.9} parent=27 // pred_region
              %s180 = scalar_lea.vmem %s175, 8
              %s181 = scalar_lea.vmem %s169, 8 [#allocation3]
              loop: start=0, step=1, limit=1
              $region33: #{cxr_autoencoder_forward.9} parent=31 // loop_pre_header
                _
              $region34: #{cxr_autoencoder_forward.9} parent=31 // loop_header
                %s183 = sphi 0, %s187
                %p184 = scmp.ge.s32.totalorder %s183, 1
                %s188 = sphi %s175, %s175
                %s189 = sphi %s169, %s169
              $region35: #{cxr_autoencoder_forward.9} parent=31 // loop_header_branch
                %186 = sbr.rel (%p184) target = $region39
              $region36: #{cxr_autoencoder_forward.9} parent=31 // loop_body
                %v190 = vld [vmem:[%s188] sm:$0xff]
                %191 = vst [vmem:[%s189] sm:$0xff] %v190
                %v192 = vld [vmem:[%s188 + $0x24] sm:$0xff]
                %193 = vst [vmem:[%s189 + $0xc] sm:$0xff] %v192
                %v194 = vld [vmem:[%s188 + $0x48] sm:$0xff]
                %195 = vst [vmem:[%s189 + $0x18] sm:$0xff] %v194
                %v196 = vld [vmem:[%s188 + $0x6c] sm:$0xff]
                %197 = vst [vmem:[%s189 + $0x24] sm:$0xff] %v196
              $region37: #{cxr_autoencoder_forward.9} parent=31 // loop_footer
                %s187 = sadd.s32 1, %s183
              $region38: #{cxr_autoencoder_forward.9} parent=31 // loop_footer_branch
                %182 = sbr.rel target = $region34
              $region39: #{cxr_autoencoder_forward.9} parent=31 // loop_exit
                _
              loop: start=0, step=1, limit=1
              $region40: #{cxr_autoencoder_forward.9} parent=31 // loop_pre_header
                _
              $region41: #{cxr_autoencoder_forward.9} parent=31 // loop_header
                %s200 = sphi 0, %s204
                %p201 = scmp.ge.s32.totalorder %s200, 1
                %s205 = sphi %s180, %s180
                %s206 = sphi %s181, %s181
              $region42: #{cxr_autoencoder_forward.9} parent=31 // loop_header_branch
                %203 = sbr.rel (%p201) target = $region46
              $region43: #{cxr_autoencoder_forward.9} parent=31 // loop_body
                %v207 = vld [vmem:[%s205] sm:$0xf]
                %208 = vst [vmem:[%s206] sm:$0xf] %v207
                %v209 = vld [vmem:[%s205 + $0x24] sm:$0xf]
                %210 = vst [vmem:[%s206 + $0xc] sm:$0xf] %v209
                %v211 = vld [vmem:[%s205 + $0x48] sm:$0xf]
                %212 = vst [vmem:[%s206 + $0x18] sm:$0xf] %v211
                %v213 = vld [vmem:[%s205 + $0x6c] sm:$0xf]
                %214 = vst [vmem:[%s206 + $0x24] sm:$0xf] %v213
              $region44: #{cxr_autoencoder_forward.9} parent=31 // loop_footer
                %s204 = sadd.s32 1, %s200
              $region45: #{cxr_autoencoder_forward.9} parent=31 // loop_footer_branch
                %199 = sbr.rel target = $region41
              $region46: #{cxr_autoencoder_forward.9} parent=31 // loop_exit
                _
            $region32: #{cxr_autoencoder_forward.9} parent=27 // pred_fallthru
              _
          $region28: #{cxr_autoencoder_forward.9} parent=23 // pred_fallthru
            _
          %215 = vnop
        $region24: #{cxr_autoencoder_forward.9} parent=19 // pred_fallthru
          _
        // Predicated region
        $region47: #{cxr_autoencoder_forward.9} parent=19 // pred_check
          %p216 = pneg %p78
        $region48: #{cxr_autoencoder_forward.9} parent=19 // pred_check_branch
          %218 = sbr.rel (%p216) target = $region50
        $region49: #{cxr_autoencoder_forward.9} parent=19 // pred_region
          %s219 = smul.u32 48, %s18
          %p220 = scmp.lt.s32.totalorder %s219, 143
          %s221 = scalar_select %p220, %s219, 143
          %p222 = scmp.lt.s32.totalorder %s17, 0
          %s223 = scalar_select %p222, %s17, 0
          %s224 = sadd.s32 %s223, %s221
          %s225 = smul.addr %s224, 4
          %s226 = scalar_lea.vmem %s1, %s225
          %s227 = smul.u32 48, %s18
        $region50: #{cxr_autoencoder_forward.9} parent=19 // pred_fallthru
          _
      $region20: #{cxr_autoencoder_forward.9} parent=5 // pred_fallthru
        _
      %p228 = scmp.le.s32.totalorder 1, %s9
      %p229 = scmp.lt.s32.totalorder %s9, 4
      %p230 = pnand %p228, %p229
      %p231 = pneg %p230
      // Predicated region
      $region51: #{cxr_autoencoder_forward.9} parent=5 // pred_check
        _
      $region52: #{cxr_autoencoder_forward.9} parent=5 // pred_check_branch
        %233 = sbr.rel (%p230) target = $region54
      $region53: #{cxr_autoencoder_forward.9} parent=5 // pred_region
        %s234 = ssub.s32 %s9, 1
        %s235 = sand.u32 %s43, 1
        %s236 = sand.u32 %s43, 1
        %s237 = smul.addr %s236, 48
        %s238 = scalar_lea.vmem [#allocation3], %s237
        // Predicated region
        $region55: #{cxr_autoencoder_forward.9} parent=53 // pred_check
          %p239 = pneg %p56
        $region56: #{cxr_autoencoder_forward.9} parent=53 // pred_check_branch
          %241 = sbr.rel (%p239) target = $region58
        $region57: #{cxr_autoencoder_forward.9} parent=53 // pred_region
          _
        $region58: #{cxr_autoencoder_forward.9} parent=53 // pred_fallthru
          _
        %s242 = sand.u32 %s43, 1
        %s243 = sand.u32 %s43, 1
        %s244 = smul.addr %s243, 48
        %s245 = scalar_lea.vmem [#allocation3], %s244
        %p246 = pneg %p56
        %p247 = pneg %p53
        %s248 = smul.u32 48, %s21
        %p249 = scmp.lt.s32.totalorder %s248, 143
        %s250 = scalar_select %p249, %s248, 143
        %p251 = scmp.lt.s32.totalorder %s20, 0
        %s252 = scalar_select %p251, %s20, 0
        %s253 = sadd.s32 %s252, %s250
        %s254 = smul.addr %s253, 4
        %s255 = scalar_lea.vmem %s1, %s254
        %p256 = pneg %p84
        %p257 = pneg %p81
        %p258 = scmp.lt.s32.totalorder %s20, 0
        %s259 = scalar_select %p258, %s20, 0
        %s260 = scalar_lea.vmem %s2, %s259
        %p261 = pneg %p110
        %p262 = pneg %p107
        %p263 = pneg %p138
        %p264 = pneg %p135
        %s265 = smul.u32 4, %s19
        %p266 = scmp.lt.s32.totalorder %s265, 3
        %s267 = scalar_select %p266, %s265, 3
        %p268 = scmp.lt.s32.totalorder %s20, 0
        %s269 = scalar_select %p268, %s20, 0
        %s270 = sadd.s32 %s269, %s267
        %s271 = smul.addr %s270, 8
        %s272 = scalar_lea.vmem %s3, %s271
        %s273 = smul.u32 4, %s19
        %s274 = smul.u32 3, %s21
        %s275 = smul.u32 48, %s21
        %p276 = scmp.lt.s32.totalorder %s275, 143
        %s277 = scalar_select %p276, %s275, 143
        %p278 = scmp.lt.s32.totalorder %s20, 0
        %s279 = scalar_select %p278, %s20, 0
        %s280 = sadd.s32 %s279, %s277
        %s281 = smul.addr %s280, 4
        %s282 = scalar_lea.vmem %s1, %s281
        %s283 = smul.u32 48, %s21
        %p284 = scmp.lt.s32.totalorder %s20, 0
        %s285 = scalar_select %p284, %s20, 0
        %s286 = scalar_lea.vmem %s2, %s285
        %s287 = smul.u32 4, %s19
        %p288 = scmp.lt.s32.totalorder %s287, 3
        %s289 = scalar_select %p288, %s287, 3
        %p290 = scmp.lt.s32.totalorder %s20, 0
        %s291 = scalar_select %p290, %s20, 0
        %s292 = sadd.s32 %s291, %s289
        %s293 = smul.addr %s292, 8
        %s294 = scalar_lea.vmem %s3, %s293
        %s295 = smul.u32 4, %s19
        %p297 = scmp.eq.s32.totalorder %s21, 0
        // Predicated region
        $region59: #{cxr_autoencoder_forward.9} parent=53 // pred_check
          %p298 = pneg %p297
        $region60: #{cxr_autoencoder_forward.9} parent=53 // pred_check_branch
          %300 = sbr.rel (%p298) target = $region62
        $region61: #{cxr_autoencoder_forward.9} parent=53 // pred_region
          %301 = vst [vmem:[#allocation2] sm:$0xff] 0.0
          %302 = vst [vmem:[#allocation2 + $0x8] sm:$0xff] 0.0
          %303 = vst [vmem:[#allocation2 + $0x10] sm:$0xff] 0.0
          %304 = vst [vmem:[#allocation2 + $0x18] sm:$0xff] 0.0
        $region62: #{cxr_autoencoder_forward.9} parent=53 // pred_fallthru
          _
        %v305 = vld [vmem:[#allocation2] sm:$0xff]
        %v306 = vld [vmem:[#allocation2 + $0x8] sm:$0xff]
        %v307 = vld [vmem:[#allocation2 + $0x10] sm:$0xff]
        %v308 = vld [vmem:[#allocation2 + $0x18] sm:$0xff]
        %v309 = vld [vmem:[%s238] sm:$0xff]
        %v310 = vld [vmem:[%s238 + $0x8] sm:$0xf]
        %v311 = vld [vmem:[%s238 + $0xc] sm:$0xff]
        %v312 = vld [vmem:[%s238 + $0x14] sm:$0xf]
        %v313 = vld [vmem:[%s238 + $0x18] sm:$0xff]
        %v314 = vld [vmem:[%s238 + $0x20] sm:$0xf]
        %v315 = vld [vmem:[%s238 + $0x24] sm:$0xff]
        %v316 = vld [vmem:[%s238 + $0x2c] sm:$0xf]
        %v317 = vld [vmem:[%s282] sm:$0xf]
        %v318 = vld [vmem:[%s282 + $0x4] sm:$0xf]
        %v319 = vld [vmem:[%s282 + $0x8] sm:$0xf]
        %v320 = vld [vmem:[%s282 + $0xc] sm:$0xf]
        %v321 = vld [vmem:[%s282 + $0x10] sm:$0xf]
        %v322 = vld [vmem:[%s282 + $0x14] sm:$0xf]
        %v323 = vld [vmem:[%s282 + $0x18] sm:$0xf]
        %v324 = vld [vmem:[%s282 + $0x1c] sm:$0xf]
        %v325 = vld [vmem:[%s282 + $0x20] sm:$0xf]
        %v326 = vld [vmem:[%s282 + $0x24] sm:$0xf]
        %v327 = vld [vmem:[%s282 + $0x28] sm:$0xf]
        %v328 = vld [vmem:[%s282 + $0x2c] sm:$0xf]
        %v329 = vld [vmem:[%s282 + $0x30] sm:$0xf]
        %v330 = vld [vmem:[%s282 + $0x34] sm:$0xf]
        %v331 = vld [vmem:[%s282 + $0x38] sm:$0xf]
        %v332 = vld [vmem:[%s282 + $0x3c] sm:$0xf]
        %v333 = vld [vmem:[%s282 + $0x40] sm:$0xf]
        %v334 = vld [vmem:[%s282 + $0x44] sm:$0xf]
        %v335 = vld [vmem:[%s282 + $0x48] sm:$0xf]
        %v336 = vld [vmem:[%s282 + $0x4c] sm:$0xf]
        %v337 = vld [vmem:[%s282 + $0x50] sm:$0xf]
        %v338 = vld [vmem:[%s282 + $0x54] sm:$0xf]
        %v339 = vld [vmem:[%s282 + $0x58] sm:$0xf]
        %v340 = vld [vmem:[%s282 + $0x5c] sm:$0xf]
        %v341 = vld [vmem:[%s282 + $0x60] sm:$0xf]
        %v342 = vld [vmem:[%s282 + $0x64] sm:$0xf]
        %v343 = vld [vmem:[%s282 + $0x68] sm:$0xf]
        %v344 = vld [vmem:[%s282 + $0x6c] sm:$0xf]
        %v345 = vld [vmem:[%s282 + $0x70] sm:$0xf]
        %v346 = vld [vmem:[%s282 + $0x74] sm:$0xf]
        %v347 = vld [vmem:[%s282 + $0x78] sm:$0xf]
        %v348 = vld [vmem:[%s282 + $0x7c] sm:$0xf]
        %v349 = vld [vmem:[%s282 + $0x80] sm:$0xf]
        %v350 = vld [vmem:[%s282 + $0x84] sm:$0xf]
        %v351 = vld [vmem:[%s282 + $0x88] sm:$0xf]
        %v352 = vld [vmem:[%s282 + $0x8c] sm:$0xf]
        %v353 = vld [vmem:[%s282 + $0x90] sm:$0xf]
        %v354 = vld [vmem:[%s282 + $0x94] sm:$0xf]
        %v355 = vld [vmem:[%s282 + $0x98] sm:$0xf]
        %v356 = vld [vmem:[%s282 + $0x9c] sm:$0xf]
        %v357 = vld [vmem:[%s282 + $0xa0] sm:$0xf]
        %v358 = vld [vmem:[%s282 + $0xa4] sm:$0xf]
        %v359 = vld [vmem:[%s282 + $0xa8] sm:$0xf]
        %v360 = vld [vmem:[%s282 + $0xac] sm:$0xf]
        %v361 = vld [vmem:[%s282 + $0xb0] sm:$0xf]
        %v362 = vld [vmem:[%s282 + $0xb4] sm:$0xf]
        %v363 = vld [vmem:[%s282 + $0xb8] sm:$0xf]
        %v364 = vld [vmem:[%s282 + $0xbc] sm:$0xf]
        %v373 = vunpack.c.l.b16 %v309
        %v374 = vunpack.c.h.b16 %v309
        %v375 = vunpack.c.l.b16 %v310
        %v376 = vunpack.c.l.b16 %v311
        %v377 = vunpack.c.h.b16 %v311
        %v378 = vunpack.c.l.b16 %v312
        %v379 = vunpack.c.l.b16 %v313
        %v380 = vunpack.c.h.b16 %v313
        %v381 = vunpack.c.l.b16 %v314
        %v382 = vunpack.c.l.b16 %v315
        %v383 = vunpack.c.h.b16 %v315
        %v384 = vunpack.c.l.b16 %v316
        %v385 = vpack.c.b16 %v376, %v373
        %v386 = vpack.c.b16 %v377, %v374
        %v387 = vpack.c.b16 %v378, %v375
        %v388 = vpack.c.b16 %v382, %v379
        %v389 = vpack.c.b16 %v383, %v380
        %v390 = vpack.c.b16 %v384, %v381
        %v445 = vunpack.c.l.b16 %v317
        %v446 = vunpack.c.l.b16 %v318
        %v447 = vunpack.c.l.b16 %v319
        %v448 = vunpack.c.l.b16 %v320
        %v449 = vunpack.c.l.b16 %v321
        %v450 = vunpack.c.l.b16 %v322
        %v451 = vunpack.c.l.b16 %v323
        %v452 = vunpack.c.l.b16 %v324
        %v453 = vunpack.c.l.b16 %v325
        %v454 = vunpack.c.l.b16 %v326
        %v455 = vunpack.c.l.b16 %v327
        %v456 = vunpack.c.l.b16 %v328
        %v457 = vunpack.c.l.b16 %v329
        %v458 = vunpack.c.l.b16 %v330
        %v459 = vunpack.c.l.b16 %v331
        %v460 = vunpack.c.l.b16 %v332
        %v461 = vunpack.c.l.b16 %v333
        %v462 = vunpack.c.l.b16 %v334
        %v463 = vunpack.c.l.b16 %v335
        %v464 = vunpack.c.l.b16 %v336
        %v465 = vunpack.c.l.b16 %v337
        %v466 = vunpack.c.l.b16 %v338
        %v467 = vunpack.c.l.b16 %v339
        %v468 = vunpack.c.l.b16 %v340
        %v469 = vunpack.c.l.b16 %v341
        %v470 = vunpack.c.l.b16 %v342
        %v471 = vunpack.c.l.b16 %v343
        %v472 = vunpack.c.l.b16 %v344
        %v473 = vunpack.c.l.b16 %v345
        %v474 = vunpack.c.l.b16 %v346
        %v475 = vunpack.c.l.b16 %v347
        %v476 = vunpack.c.l.b16 %v348
        %v477 = vunpack.c.l.b16 %v349
        %v478 = vunpack.c.l.b16 %v350
        %v479 = vunpack.c.l.b16 %v351
        %v480 = vunpack.c.l.b16 %v352
        %v481 = vunpack.c.l.b16 %v353
        %v482 = vunpack.c.l.b16 %v354
        %v483 = vunpack.c.l.b16 %v355
        %v484 = vunpack.c.l.b16 %v356
        %v485 = vunpack.c.l.b16 %v357
        %v486 = vunpack.c.l.b16 %v358
        %v487 = vunpack.c.l.b16 %v359
        %v488 = vunpack.c.l.b16 %v360
        %v489 = vunpack.c.l.b16 %v361
        %v490 = vunpack.c.l.b16 %v362
        %v491 = vunpack.c.l.b16 %v363
        %v492 = vunpack.c.l.b16 %v364
        %v493 = vpack.c.b16 %v446, %v445
        %v494 = vpack.c.b16 %v448, %v447
        %v495 = vpack.c.b16 %v450, %v449
        %v496 = vpack.c.b16 %v452, %v451
        %v497 = vpack.c.b16 %v454, %v453
        %v498 = vpack.c.b16 %v456, %v455
        %v499 = vpack.c.b16 %v458, %v457
        %v500 = vpack.c.b16 %v460, %v459
        %v501 = vpack.c.b16 %v462, %v461
        %v502 = vpack.c.b16 %v464, %v463
        %v503 = vpack.c.b16 %v466, %v465
        %v504 = vpack.c.b16 %v468, %v467
        %v505 = vpack.c.b16 %v470, %v469
        %v506 = vpack.c.b16 %v472, %v471
        %v507 = vpack.c.b16 %v474, %v473
        %v508 = vpack.c.b16 %v476, %v475
        %v509 = vpack.c.b16 %v478, %v477
        %v510 = vpack.c.b16 %v480, %v479
        %v511 = vpack.c.b16 %v482, %v481
        %v512 = vpack.c.b16 %v484, %v483
        %v513 = vpack.c.b16 %v486, %v485
        %v514 = vpack.c.b16 %v488, %v487
        %v515 = vpack.c.b16 %v490, %v489
        %v516 = vpack.c.b16 %v492, %v491
        %541 = vmatprep.subr.bf16.mxu0 0
        %542 = vmatpush1.bf16.msra.mxu0 %v493
        %543 = vmatprep.subr.bf16.mxu0 0
        %544 = vmatpush1.bf16.msra.mxu0 %v494
        %545 = vmatprep.subr.bf16.mxu0 0
        %546 = vmatpush1.bf16.msra.mxu0 %v495
        %547 = vmatprep.subr.bf16.mxu0 0
        %548 = vmatpush1.bf16.msra.mxu0 %v496
        %549 = vmatprep.subr.bf16.mxu0 0
        %550 = vmatpush1.bf16.msra.mxu0 %v497
        %551 = vmatprep.subr.bf16.mxu0 0
        %552 = vmatpush1.bf16.msra.mxu0 %v498
        %553 = vmatprep.subr.bf16.mxu0 0
        %554 = vmatpush1.bf16.msra.mxu0 %v499
        %555 = vmatprep.subr.bf16.mxu0 0
        %556 = vmatpush1.bf16.msra.mxu0 %v500
        %557 = vmatprep.subr.bf16.mxu0 0
        %558 = vmatpush1.bf16.msra.mxu0 %v501
        %559 = vmatprep.subr.bf16.mxu0 0
        %560 = vmatpush1.bf16.msra.mxu0 %v502
        %561 = vmatprep.subr.bf16.mxu0 0
        %562 = vmatpush1.bf16.msra.mxu0 %v503
        %563 = vmatprep.subr.bf16.mxu0 0
        %564 = vmatpush1.bf16.msra.mxu0 %v504
        %565 = vmatprep.subr.bf16.mxu0 0
        %566 = vmatpush1.bf16.msra.mxu0 %v505
        %567 = vmatprep.subr.bf16.mxu0 0
        %568 = vmatpush1.bf16.msra.mxu0 %v506
        %569 = vmatprep.subr.bf16.mxu0 0
        %570 = vmatpush1.bf16.msra.mxu0 %v507
        %571 = vmatprep.subr.bf16.mxu0 0
        %572 = vmatpush1.bf16.msra.mxu0 %v508
        %573 = vmatprep.mubr.bf16.mxu0 %v386
        %574 = vmatmul.mubr.bf16.gmra.mrb[0].mxu0 %v385
        %v575 = vpop.f32.mrb[0].mxu0
        %v576 = vadd.f32 0.0, %v575
        %v577 = vpop.f32.mrb[0].mxu0
        %v578 = vpop.f32.mrb[0].mxu0
        %v579 = vadd.f32 0.0, %v578
        %v580 = vpop.f32.mrb[0].mxu0
        %581 = vmatprep.mubr.bf16.mxu0 %v389
        %582 = vmatmul.mubr.bf16.gmra.mrb[0].mxu0 %v388
        %v583 = vpop.f32.mrb[0].mxu0
        %v584 = vadd.f32 0.0, %v583
        %v585 = vpop.f32.mrb[0].mxu0
        %v586 = vpop.f32.mrb[0].mxu0
        %v587 = vadd.f32 0.0, %v586
        %v588 = vpop.f32.mrb[0].mxu0
        %589 = vdwg.mxu0
        %590 = vmatprep.subr.bf16.mxu0 0
        %591 = vmatpush1.bf16.msra.mxu0 %v509
        %592 = vmatprep.subr.bf16.mxu0 0
        %593 = vmatpush1.bf16.msra.mxu0 %v510
        %594 = vmatprep.subr.bf16.mxu0 0
        %595 = vmatpush1.bf16.msra.mxu0 %v511
        %596 = vmatprep.subr.bf16.mxu0 0
        %597 = vmatpush1.bf16.msra.mxu0 %v512
        %598 = vmatprep.subr.bf16.mxu0 0
        %599 = vmatpush1.bf16.msra.mxu0 %v513
        %600 = vmatprep.subr.bf16.mxu0 0
        %601 = vmatpush1.bf16.msra.mxu0 %v514
        %602 = vmatprep.subr.bf16.mxu0 0
        %603 = vmatpush1.bf16.msra.mxu0 %v515
        %604 = vmatprep.subr.bf16.mxu0 0
        %605 = vmatpush1.bf16.msra.mxu0 %v516
        %606 = vmatprep.subr.bf16.mxu0 0
        %607 = vmatpush1.bf16.msra.mxu0 0
        %608 = vmatprep.subr.bf16.mxu0 0
        %609 = vmatpush1.bf16.msra.mxu0 0
        %610 = vmatprep.subr.bf16.mxu0 0
        %611 = vmatpush1.bf16.msra.mxu0 0
        %612 = vmatprep.subr.bf16.mxu0 0
        %613 = vmatpush1.bf16.msra.mxu0 0
        %614 = vmatprep.subr.bf16.mxu0 0
        %615 = vmatpush1.bf16.msra.mxu0 0
        %616 = vmatprep.subr.bf16.mxu0 0
        %617 = vmatpush1.bf16.msra.mxu0 0
        %618 = vmatprep.subr.bf16.mxu0 0
        %619 = vmatpush1.bf16.msra.mxu0 0
        %620 = vmatprep.subr.bf16.mxu0 0
        %621 = vmatpush1.bf16.msra.mxu0 0
        %622 = vmatprep.mubr.bf16.mxu0 0
        %623 = vmatmul.mubr.bf16.gmra.mrb[0].mxu0 %v387
        %v624 = vpop.f32.mrb[0].mxu0
        %v625 = vadd.f32 %v576, %v624
        %v626 = vpop.f32.mrb[0].mxu0
        %v627 = vpop.f32.mrb[0].mxu0
        %v628 = vadd.f32 %v579, %v627
        %v629 = vpop.f32.mrb[0].mxu0
        %630 = vmatprep.mubr.bf16.mxu0 0
        %631 = vmatmul.mubr.bf16.gmra.mrb[0].mxu0 %v390
        %v632 = vpop.f32.mrb[0].mxu0
        %v633 = vadd.f32 %v584, %v632
        %v634 = vpop.f32.mrb[0].mxu0
        %v635 = vpop.f32.mrb[0].mxu0
        %v636 = vadd.f32 %v587, %v635
        %v637 = vpop.f32.mrb[0].mxu0
        %638 = vdwg.mxu0
        %v639 = vadd.f32 %v305, %v625
        %v640 = vadd.f32 %v306, %v628
        %v641 = vadd.f32 %v307, %v633
        %v642 = vadd.f32 %v308, %v636
        %643 = vst [vmem:[#allocation2] sm:$0xff] %v639
        %644 = vst [vmem:[#allocation2 + $0x8] sm:$0xff] %v640
        %645 = vst [vmem:[#allocation2 + $0x10] sm:$0xff] %v641
        %646 = vst [vmem:[#allocation2 + $0x18] sm:$0xff] %v642
        %p647 = scmp.eq.s32.totalorder %s21, 2
        // Predicated region
        $region63: #{cxr_autoencoder_forward.9} parent=53 // pred_check
          %p648 = pneg %p647
        $region64: #{cxr_autoencoder_forward.9} parent=53 // pred_check_branch
          %650 = sbr.rel (%p648) target = $region66
        $region65: #{cxr_autoencoder_forward.9} parent=53 // pred_region
          %v651 = vld [vmem:[#allocation2] sm:$0xff]
          %v652 = vld [vmem:[#allocation2 + $0x8] sm:$0xff]
          %v653 = vld [vmem:[#allocation2 + $0x10] sm:$0xff]
          %v654 = vld [vmem:[#allocation2 + $0x18] sm:$0xff]
          %v655 = vld [vmem:[%s286] sm:$0x1]
          %v657 = vlaneseq
          %v658 = vshrl.u32 %v657, 7
          %v659 = vsub.s32 0, %v658
          %v660 = vrot.slane %v655, %v659
          %v662 = vadd.f32 %v651, %v660
          %v663 = vadd.f32 %v652, %v660
          %v664 = vadd.f32 %v653, %v660
          %v665 = vadd.f32 %v654, %v660
          %v666 = vmax.f32 %v662, 0.0
          %v667 = vmax.f32 %v663, 0.0
          %v668 = vmax.f32 %v664, 0.0
          %v669 = vmax.f32 %v665, 0.0
          %670 = vst [vmem:[%s294] sm:$0xff] %v666
          %671 = vst [vmem:[%s294 + $0x8] sm:$0xff] %v667
          %672 = vst [vmem:[%s294 + $0x10] sm:$0xff] %v668
          %673 = vst [vmem:[%s294 + $0x18] sm:$0xff] %v669
        $region66: #{cxr_autoencoder_forward.9} parent=53 // pred_fallthru
          _
        %s674 = smul.u32 4, %s19
        %p675 = scmp.lt.s32.totalorder %s674, 3
        %s676 = scalar_select %p675, %s674, 3
        %p677 = scmp.lt.s32.totalorder %s20, 0
        %s678 = scalar_select %p677, %s20, 0
        %s679 = sadd.s32 %s678, %s676
        %s680 = smul.addr %s679, 8
        %s681 = scalar_lea.vmem %s3, %s680
        // Predicated region
        $region67: #{cxr_autoencoder_forward.9} parent=53 // pred_check
          %p682 = pneg %p135
        $region68: #{cxr_autoencoder_forward.9} parent=53 // pred_check_branch
          %684 = sbr.rel (%p682) target = $region70
        $region69: #{cxr_autoencoder_forward.9} parent=53 // pred_region
          %s685 = smul.u32 4, %s19
        $region70: #{cxr_autoencoder_forward.9} parent=53 // pred_fallthru
          _
        // Predicated region
        $region71: #{cxr_autoencoder_forward.9} parent=53 // pred_check
          %p686 = pneg %p135
        $region72: #{cxr_autoencoder_forward.9} parent=53 // pred_check_branch
          %688 = sbr.rel (%p686) target = $region74
        $region73: #{cxr_autoencoder_forward.9} parent=53 // pred_region
          %s689 = smul.u32 4, %s19
          %p690 = scmp.lt.s32.totalorder %s689, 3
          %s691 = scalar_select %p690, %s689, 3
          %p692 = scmp.lt.s32.totalorder %s20, 0
          %s693 = scalar_select %p692, %s20, 0
          %s694 = sadd.s32 %s693, %s691
          %s695 = smul.addr %s694, 8
          %s696 = scalar_lea.vmem %s3, %s695
        $region74: #{cxr_autoencoder_forward.9} parent=53 // pred_fallthru
          _
      $region54: #{cxr_autoencoder_forward.9} parent=5 // pred_fallthru
        _
      %p697 = scmp.le.s32.totalorder 2, %s9
      // Predicated region
      $region75: #{cxr_autoencoder_forward.9} parent=5 // pred_check
        %p698 = pneg %p697
      $region76: #{cxr_autoencoder_forward.9} parent=5 // pred_check_branch
        %700 = sbr.rel (%p698) target = $region78
      $region77: #{cxr_autoencoder_forward.9} parent=5 // pred_region
        %s701 = ssub.s32 %s9, 2
      $region78: #{cxr_autoencoder_forward.9} parent=5 // pred_fallthru
        _
    $region6: #{cxr_autoencoder_forward.9} parent=1 // loop_footer
      %s13 = sadd.s32 1, %s9
    $region7: #{cxr_autoencoder_forward.9} parent=1 // loop_footer_branch
      %8 = sbr.rel target = $region3
    $region8: #{cxr_autoencoder_forward.9} parent=1 // loop_exit
      _

// kernel: cxr_autoencoder_forward.10
$region0: #{cxr_autoencoder_forward.10}
  #allocation0 [shape = 'u32[]', space=smem, size = 0x4, offset = 0x4, fixed_abs, tag = 'smem constant byte address 0x4 - core index']
  #allocation1 [shape = 'u32[144,128]{1,0:T(1,128)}', space=vmem, size = 0x12000, scoped, tag = 'internal scratch']
  %s0 = inlined_call_operand.vmem [shape: bf16[8,32], index: 0, kind: input, shape index: {}]
  %s1 = inlined_call_operand.vmem [shape: bf16[32,128], index: 1, kind: input, shape index: {}]
  %s2 = inlined_call_operand.vmem [shape: bf16[128,128], index: 2, kind: input, shape index: {}]
  %s3 = inlined_call_operand.vmem [shape: f32[1,128], index: 3, kind: input, shape index: {}]
  %s4 = inlined_call_operand.vmem [shape: bf16[128,256], index: 4, kind: input, shape index: {}]
  %s5 = inlined_call_operand.vmem [shape: f32[1,256], index: 5, kind: input, shape index: {}]
  %s6 = inlined_call_operand.vmem [shape: bf16[256,128], index: 6, kind: input, shape index: {}]
  %s7 = inlined_call_operand.vmem [shape: f32[1,128], index: 7, kind: input, shape index: {}]
  %s8 = inlined_call_operand.vmem [shape: bf16[128,2048], index: 8, kind: input, shape index: {}]
  %s9 = inlined_call_operand.vmem [shape: f32[1,2048], index: 9, kind: input, shape index: {}]
  %s10 = inlined_call_operand.vmem [shape: f32[8,128], index: 10, kind: output, shape index: {0}]
  %s11 = inlined_call_operand.vmem [shape: f32[8,128], index: 11, kind: output, shape index: {1}]
  %s12 = inlined_call_operand.vmem [shape: f32[8,2048], index: 12, kind: output, shape index: {2}]
  %13 = xla_tuple %s10, %s11, %s12
  %s14 = sld [smem:[#allocation0]]
  $region66: #{cxr_autoencoder_forward.10} parent=0
    _
  %s16 = ssub.s32 1, %s14
  %s17 = scalar_select 0, %s16, %s14
  // Predicated region
  $region2: #{cxr_autoencoder_forward.10} parent=0 // pred_check
    _
  $region3: #{cxr_autoencoder_forward.10} parent=0 // pred_check_branch
    %19 = sbr.rel (0) target = $region5
  $region4: #{cxr_autoencoder_forward.10} parent=0 // pred_region
    _
  $region5: #{cxr_autoencoder_forward.10} parent=0 // pred_fallthru
    _
  // Predicated region
  $region6: #{cxr_autoencoder_forward.10} parent=0 // pred_check
    _
  $region7: #{cxr_autoencoder_forward.10} parent=0 // pred_check_branch
    %21 = sbr.rel (0) target = $region9
  $region8: #{cxr_autoencoder_forward.10} parent=0 // pred_region
    _
  $region9: #{cxr_autoencoder_forward.10} parent=0 // pred_fallthru
    _
  // Predicated region
  $region10: #{cxr_autoencoder_forward.10} parent=0 // pred_check
    _
  $region11: #{cxr_autoencoder_forward.10} parent=0 // pred_check_branch
    %23 = sbr.rel (0) target = $region13
  $region12: #{cxr_autoencoder_forward.10} parent=0 // pred_region
    _
  $region13: #{cxr_autoencoder_forward.10} parent=0 // pred_fallthru
    _
  // Predicated region
  $region14: #{cxr_autoencoder_forward.10} parent=0 // pred_check
    _
  $region15: #{cxr_autoencoder_forward.10} parent=0 // pred_check_branch
    %25 = sbr.rel (0) target = $region17
  $region16: #{cxr_autoencoder_forward.10} parent=0 // pred_region
    _
  $region17: #{cxr_autoencoder_forward.10} parent=0 // pred_fallthru
    _
  // Predicated region
  $region18: #{cxr_autoencoder_forward.10} parent=0 // pred_check
    _
  $region19: #{cxr_autoencoder_forward.10} parent=0 // pred_check_branch
    %27 = sbr.rel (0) target = $region21
  $region20: #{cxr_autoencoder_forward.10} parent=0 // pred_region
    _
  $region21: #{cxr_autoencoder_forward.10} parent=0 // pred_fallthru
    _
  // Predicated region
  $region22: #{cxr_autoencoder_forward.10} parent=0 // pred_check
    _
  $region23: #{cxr_autoencoder_forward.10} parent=0 // pred_check_branch
    %29 = sbr.rel (0) target = $region25
  $region24: #{cxr_autoencoder_forward.10} parent=0 // pred_region
    _
  $region25: #{cxr_autoencoder_forward.10} parent=0 // pred_fallthru
    _
  // Predicated region
  $region26: #{cxr_autoencoder_forward.10} parent=0 // pred_check
    _
  $region27: #{cxr_autoencoder_forward.10} parent=0 // pred_check_branch
    %31 = sbr.rel (0) target = $region29
  $region28: #{cxr_autoencoder_forward.10} parent=0 // pred_region
    _
  $region29: #{cxr_autoencoder_forward.10} parent=0 // pred_fallthru
    _
  // Predicated region
  $region30: #{cxr_autoencoder_forward.10} parent=0 // pred_check
    _
  $region31: #{cxr_autoencoder_forward.10} parent=0 // pred_check_branch
    %33 = sbr.rel (0) target = $region33
  $region32: #{cxr_autoencoder_forward.10} parent=0 // pred_region
    _
  $region33: #{cxr_autoencoder_forward.10} parent=0 // pred_fallthru
    _
  // Predicated region
  $region34: #{cxr_autoencoder_forward.10} parent=0 // pred_check
    _
  $region35: #{cxr_autoencoder_forward.10} parent=0 // pred_check_branch
    %35 = sbr.rel (0) target = $region37
  $region36: #{cxr_autoencoder_forward.10} parent=0 // pred_region
    _
  $region37: #{cxr_autoencoder_forward.10} parent=0 // pred_fallthru
    _
  // Predicated region
  $region38: #{cxr_autoencoder_forward.10} parent=0 // pred_check
    _
  $region39: #{cxr_autoencoder_forward.10} parent=0 // pred_check_branch
    %37 = sbr.rel (0) target = $region41
  $region40: #{cxr_autoencoder_forward.10} parent=0 // pred_region
    _
  $region41: #{cxr_autoencoder_forward.10} parent=0 // pred_fallthru
    _
  %v39 = vld [vmem:[%s0] sm:$0xf]
  %v40 = vld [vmem:[%s1] sm:$0xf]
  %v41 = vld [vmem:[%s1 + $0x4] sm:$0xf]
  %v42 = vld [vmem:[%s1 + $0x8] sm:$0xf]
  %v43 = vld [vmem:[%s1 + $0xc] sm:$0xf]
  %v48 = vunpack.c.l.b16 %v40
  %v49 = vunpack.c.l.b16 %v41
  %v50 = vunpack.c.l.b16 %v42
  %v51 = vunpack.c.l.b16 %v43
  %v52 = vpack.c.b16 %v49, %v48
  %v53 = vpack.c.b16 %v51, %v50
  %vm56 = vcmask 261120
  %v58 = vsel %vm56, %v39, 0
  %60 = vmatprep.subr.bf16.mxu0 0
  %61 = vmatpush1.bf16.msra.mxu0 %v52
  %62 = vmatprep.subr.bf16.mxu0 0
  %63 = vmatpush1.bf16.msra.mxu0 %v53
  %64 = vmatprep.subr.bf16.mxu0 0
  %65 = vmatpush1.bf16.msra.mxu0 0
  %66 = vmatprep.subr.bf16.mxu0 0
  %67 = vmatpush1.bf16.msra.mxu0 0
  %68 = vmatprep.subr.bf16.mxu0 0
  %69 = vmatpush1.bf16.msra.mxu0 0
  %70 = vmatprep.subr.bf16.mxu0 0
  %71 = vmatpush1.bf16.msra.mxu0 0
  %72 = vmatprep.subr.bf16.mxu0 0
  %73 = vmatpush1.bf16.msra.mxu0 0
  %74 = vmatprep.subr.bf16.mxu0 0
  %75 = vmatpush1.bf16.msra.mxu0 0
  %76 = vmatprep.subr.bf16.mxu0 0
  %77 = vmatpush1.bf16.msra.mxu0 0
  %78 = vmatprep.subr.bf16.mxu0 0
  %79 = vmatpush1.bf16.msra.mxu0 0
  %80 = vmatprep.subr.bf16.mxu0 0
  %81 = vmatpush1.bf16.msra.mxu0 0
  %82 = vmatprep.subr.bf16.mxu0 0
  %83 = vmatpush1.bf16.msra.mxu0 0
  %84 = vmatprep.subr.bf16.mxu0 0
  %85 = vmatpush1.bf16.msra.mxu0 0
  %86 = vmatprep.subr.bf16.mxu0 0
  %87 = vmatpush1.bf16.msra.mxu0 0
  %88 = vmatprep.subr.bf16.mxu0 0
  %89 = vmatpush1.bf16.msra.mxu0 0
  %90 = vmatprep.subr.bf16.mxu0 0
  %91 = vmatpush1.bf16.msra.mxu0 0
  %92 = vmatprep.mubr.bf16.mxu0 0
  %93 = vmatmul.mubr.bf16.gmra.mrb[0].mxu0 %v58
  %v94 = vpop.f32.mrb[0].mxu0
  %v95 = vadd.f32 0.0, %v94
  %v96 = vpop.f32.mrb[0].mxu0
  %v97 = vpop.f32.mrb[0].mxu0
  %v98 = vpop.f32.mrb[0].mxu0
  %99 = vdwg.mxu0
  %v100 = vpack.c.bf16 %v95, %v95
  %v101 = vld [vmem:[%s2] sm:$0xf]
  %v102 = vld [vmem:[%s2 + $0x4] sm:$0xf]
  %v103 = vld [vmem:[%s2 + $0x8] sm:$0xf]
  %v104 = vld [vmem:[%s2 + $0xc] sm:$0xf]
  %v105 = vld [vmem:[%s2 + $0x10] sm:$0xf]
  %v106 = vld [vmem:[%s2 + $0x14] sm:$0xf]
  %v107 = vld [vmem:[%s2 + $0x18] sm:$0xf]
  %v108 = vld [vmem:[%s2 + $0x1c] sm:$0xf]
  %v109 = vld [vmem:[%s2 + $0x20] sm:$0xf]
  %v110 = vld [vmem:[%s2 + $0x24] sm:$0xf]
  %v111 = vld [vmem:[%s2 + $0x28] sm:$0xf]
  %v112 = vld [vmem:[%s2 + $0x2c] sm:$0xf]
  %v113 = vld [vmem:[%s2 + $0x30] sm:$0xf]
  %v114 = vld [vmem:[%s2 + $0x34] sm:$0xf]
  %v115 = vld [vmem:[%s2 + $0x38] sm:$0xf]
  %v116 = vld [vmem:[%s2 + $0x3c] sm:$0xf]
  %v117 = vld [vmem:[%s3] sm:$0x1]
  %v119 = vlaneseq
  %v120 = vshrl.u32 %v119, 7
  %v121 = vsub.s32 0, %v120
  %v122 = vrot.slane %v117, %v121
  %v140 = vunpack.c.l.b16 %v101
  %v141 = vunpack.c.l.b16 %v102
  %v142 = vunpack.c.l.b16 %v103
  %v143 = vunpack.c.l.b16 %v104
  %v144 = vunpack.c.l.b16 %v105
  %v145 = vunpack.c.l.b16 %v106
  %v146 = vunpack.c.l.b16 %v107
  %v147 = vunpack.c.l.b16 %v108
  %v148 = vunpack.c.l.b16 %v109
  %v149 = vunpack.c.l.b16 %v110
  %v150 = vunpack.c.l.b16 %v111
  %v151 = vunpack.c.l.b16 %v112
  %v152 = vunpack.c.l.b16 %v113
  %v153 = vunpack.c.l.b16 %v114
  %v154 = vunpack.c.l.b16 %v115
  %v155 = vunpack.c.l.b16 %v116
  %v156 = vpack.c.b16 %v141, %v140
  %v157 = vpack.c.b16 %v143, %v142
  %v158 = vpack.c.b16 %v145, %v144
  %v159 = vpack.c.b16 %v147, %v146
  %v160 = vpack.c.b16 %v149, %v148
  %v161 = vpack.c.b16 %v151, %v150
  %v162 = vpack.c.b16 %v153, %v152
  %v163 = vpack.c.b16 %v155, %v154
  %172 = vmatprep.subr.bf16.mxu0 0
  %173 = vmatpush1.bf16.msra.mxu0 %v156
  %174 = vmatprep.subr.bf16.mxu0 0
  %175 = vmatpush1.bf16.msra.mxu0 %v157
  %176 = vmatprep.subr.bf16.mxu0 0
  %177 = vmatpush1.bf16.msra.mxu0 %v158
  %178 = vmatprep.subr.bf16.mxu0 0
  %179 = vmatpush1.bf16.msra.mxu0 %v159
  %180 = vmatprep.subr.bf16.mxu0 0
  %181 = vmatpush1.bf16.msra.mxu0 %v160
  %182 = vmatprep.subr.bf16.mxu0 0
  %183 = vmatpush1.bf16.msra.mxu0 %v161
  %184 = vmatprep.subr.bf16.mxu0 0
  %185 = vmatpush1.bf16.msra.mxu0 %v162
  %186 = vmatprep.subr.bf16.mxu0 0
  %187 = vmatpush1.bf16.msra.mxu0 %v163
  %188 = vmatprep.subr.bf16.mxu0 0
  %189 = vmatpush1.bf16.msra.mxu0 0
  %190 = vmatprep.subr.bf16.mxu0 0
  %191 = vmatpush1.bf16.msra.mxu0 0
  %192 = vmatprep.subr.bf16.mxu0 0
  %193 = vmatpush1.bf16.msra.mxu0 0
  %194 = vmatprep.subr.bf16.mxu0 0
  %195 = vmatpush1.bf16.msra.mxu0 0
  %196 = vmatprep.subr.bf16.mxu0 0
  %197 = vmatpush1.bf16.msra.mxu0 0
  %198 = vmatprep.subr.bf16.mxu0 0
  %199 = vmatpush1.bf16.msra.mxu0 0
  %200 = vmatprep.subr.bf16.mxu0 0
  %201 = vmatpush1.bf16.msra.mxu0 0
  %202 = vmatprep.subr.bf16.mxu0 0
  %203 = vmatpush1.bf16.msra.mxu0 0
  %204 = vmatprep.mubr.bf16.mxu0 0
  %205 = vmatmul.mubr.bf16.gmra.mrb[0].mxu0 %v100
  %v206 = vpop.f32.mrb[0].mxu0
  %v207 = vadd.f32 %v122, %v206
  %v208 = vpop.f32.mrb[0].mxu0
  %v209 = vpop.f32.mrb[0].mxu0
  %v210 = vpop.f32.mrb[0].mxu0
  %211 = vdwg.mxu0
  %212 = vst [vmem:[%s10] sm:$0xff] %v207
  %v213 = vpack.c.bf16 %v207, %v207
  %v214 = vld [vmem:[%s4] sm:$0xff]
  %v215 = vld [vmem:[%s4 + $0x8] sm:$0xff]
  %v216 = vld [vmem:[%s4 + $0x10] sm:$0xff]
  %v217 = vld [vmem:[%s4 + $0x18] sm:$0xff]
  %v218 = vld [vmem:[%s4 + $0x20] sm:$0xff]
  %v219 = vld [vmem:[%s4 + $0x28] sm:$0xff]
  %v220 = vld [vmem:[%s4 + $0x30] sm:$0xff]
  %v221 = vld [vmem:[%s4 + $0x38] sm:$0xff]
  %v222 = vld [vmem:[%s4 + $0x40] sm:$0xff]
  %v223 = vld [vmem:[%s4 + $0x48] sm:$0xff]
  %v224 = vld [vmem:[%s4 + $0x50] sm:$0xff]
  %v225 = vld [vmem:[%s4 + $0x58] sm:$0xff]
  %v226 = vld [vmem:[%s4 + $0x60] sm:$0xff]
  %v227 = vld [vmem:[%s4 + $0x68] sm:$0xff]
  %v228 = vld [vmem:[%s4 + $0x70] sm:$0xff]
  %v229 = vld [vmem:[%s4 + $0x78] sm:$0xff]
  %v230 = vld [vmem:[%s5] sm:$0x3]
  %v232 = vlaneseq
  %v233 = vshrl.u32 %v232, 7
  %v234 = vsub.s32 0, %v233
  %v235 = vrot.slane %v230, %v234
  %v236 = vlaneseq
  %v237 = vshrl.u32 %v236, 7
  %v238 = vsub.s32 1, %v237
  %v239 = vrot.slane %v230, %v238
  %v258 = vunpack.c.l.b16 %v214
  %v259 = vunpack.c.h.b16 %v214
  %v260 = vunpack.c.l.b16 %v215
  %v261 = vunpack.c.h.b16 %v215
  %v262 = vunpack.c.l.b16 %v216
  %v263 = vunpack.c.h.b16 %v216
  %v264 = vunpack.c.l.b16 %v217
  %v265 = vunpack.c.h.b16 %v217
  %v266 = vunpack.c.l.b16 %v218
  %v267 = vunpack.c.h.b16 %v218
  %v268 = vunpack.c.l.b16 %v219
  %v269 = vunpack.c.h.b16 %v219
  %v270 = vunpack.c.l.b16 %v220
  %v271 = vunpack.c.h.b16 %v220
  %v272 = vunpack.c.l.b16 %v221
  %v273 = vunpack.c.h.b16 %v221
  %v274 = vunpack.c.l.b16 %v222
  %v275 = vunpack.c.h.b16 %v222
  %v276 = vunpack.c.l.b16 %v223
  %v277 = vunpack.c.h.b16 %v223
  %v278 = vunpack.c.l.b16 %v224
  %v279 = vunpack.c.h.b16 %v224
  %v280 = vunpack.c.l.b16 %v225
  %v281 = vunpack.c.h.b16 %v225
  %v282 = vunpack.c.l.b16 %v226
  %v283 = vunpack.c.h.b16 %v226
  %v284 = vunpack.c.l.b16 %v227
  %v285 = vunpack.c.h.b16 %v227
  %v286 = vunpack.c.l.b16 %v228
  %v287 = vunpack.c.h.b16 %v228
  %v288 = vunpack.c.l.b16 %v229
  %v289 = vunpack.c.h.b16 %v229
  %v290 = vpack.c.b16 %v260, %v258
  %v291 = vpack.c.b16 %v261, %v259
  %v292 = vpack.c.b16 %v264, %v262
  %v293 = vpack.c.b16 %v265, %v263
  %v294 = vpack.c.b16 %v268, %v266
  %v295 = vpack.c.b16 %v269, %v267
  %v296 = vpack.c.b16 %v272, %v270
  %v297 = vpack.c.b16 %v273, %v271
  %v298 = vpack.c.b16 %v276, %v274
  %v299 = vpack.c.b16 %v277, %v275
  %v300 = vpack.c.b16 %v280, %v278
  %v301 = vpack.c.b16 %v281, %v279
  %v302 = vpack.c.b16 %v284, %v282
  %v303 = vpack.c.b16 %v285, %v283
  %v304 = vpack.c.b16 %v288, %v286
  %v305 = vpack.c.b16 %v289, %v287
  %322 = vmatprep.subr.bf16.mxu0 %v291
  %323 = vmatpush1.bf16.msra.mxu0 %v290
  %324 = vmatprep.subr.bf16.mxu0 %v293
  %325 = vmatpush1.bf16.msra.mxu0 %v292
  %326 = vmatprep.subr.bf16.mxu0 %v295
  %327 = vmatpush1.bf16.msra.mxu0 %v294
  %328 = vmatprep.subr.bf16.mxu0 %v297
  %329 = vmatpush1.bf16.msra.mxu0 %v296
  %330 = vmatprep.subr.bf16.mxu0 %v299
  %331 = vmatpush1.bf16.msra.mxu0 %v298
  %332 = vmatprep.subr.bf16.mxu0 %v301
  %333 = vmatpush1.bf16.msra.mxu0 %v300
  %334 = vmatprep.subr.bf16.mxu0 %v303
  %335 = vmatpush1.bf16.msra.mxu0 %v302
  %336 = vmatprep.subr.bf16.mxu0 %v305
  %337 = vmatpush1.bf16.msra.mxu0 %v304
  %338 = vmatprep.subr.bf16.mxu0 0
  %339 = vmatpush1.bf16.msra.mxu0 0
  %340 = vmatprep.subr.bf16.mxu0 0
  %341 = vmatpush1.bf16.msra.mxu0 0
  %342 = vmatprep.subr.bf16.mxu0 0
  %343 = vmatpush1.bf16.msra.mxu0 0
  %344 = vmatprep.subr.bf16.mxu0 0
  %345 = vmatpush1.bf16.msra.mxu0 0
  %346 = vmatprep.subr.bf16.mxu0 0
  %347 = vmatpush1.bf16.msra.mxu0 0
  %348 = vmatprep.subr.bf16.mxu0 0
  %349 = vmatpush1.bf16.msra.mxu0 0
  %350 = vmatprep.subr.bf16.mxu0 0
  %351 = vmatpush1.bf16.msra.mxu0 0
  %352 = vmatprep.subr.bf16.mxu0 0
  %353 = vmatpush1.bf16.msra.mxu0 0
  %354 = vmatprep.mubr.bf16.mxu0 0
  %355 = vmatmul.mubr.bf16.gmra.mrb[0].mxu0 %v213
  %v356 = vpop.f32.mrb[0].mxu0
  %v357 = vadd.f32 %v235, %v356
  %v358 = vpop.f32.mrb[0].mxu0
  %v359 = vadd.f32 %v239, %v358
  %v360 = vpop.f32.mrb[0].mxu0
  %v361 = vpop.f32.mrb[0].mxu0
  %362 = vdwg.mxu0
  %v363 = vmax.f32 %v357, 0.0
  %v364 = vmax.f32 %v359, 0.0
  %v365 = vpack.c.bf16 %v363, %v363
  %v366 = vpack.c.bf16 %v364, %v364
  %v367 = vld [vmem:[%s6] sm:$0xf]
  %v368 = vld [vmem:[%s6 + $0x4] sm:$0xf]
  %v369 = vld [vmem:[%s6 + $0x8] sm:$0xf]
  %v370 = vld [vmem:[%s6 + $0xc] sm:$0xf]
  %v371 = vld [vmem:[%s6 + $0x10] sm:$0xf]
  %v372 = vld [vmem:[%s6 + $0x14] sm:$0xf]
  %v373 = vld [vmem:[%s6 + $0x18] sm:$0xf]
  %v374 = vld [vmem:[%s6 + $0x1c] sm:$0xf]
  %v375 = vld [vmem:[%s6 + $0x20] sm:$0xf]
  %v376 = vld [vmem:[%s6 + $0x24] sm:$0xf]
  %v377 = vld [vmem:[%s6 + $0x28] sm:$0xf]
  %v378 = vld [vmem:[%s6 + $0x2c] sm:$0xf]
  %v379 = vld [vmem:[%s6 + $0x30] sm:$0xf]
  %v380 = vld [vmem:[%s6 + $0x34] sm:$0xf]
  %v381 = vld [vmem:[%s6 + $0x38] sm:$0xf]
  %v382 = vld [vmem:[%s6 + $0x3c] sm:$0xf]
  %v383 = vld [vmem:[%s6 + $0x40] sm:$0xf]
  %v384 = vld [vmem:[%s6 + $0x44] sm:$0xf]
  %v385 = vld [vmem:[%s6 + $0x48] sm:$0xf]
  %v386 = vld [vmem:[%s6 + $0x4c] sm:$0xf]
  %v387 = vld [vmem:[%s6 + $0x50] sm:$0xf]
  %v388 = vld [vmem:[%s6 + $0x54] sm:$0xf]
  %v389 = vld [vmem:[%s6 + $0x58] sm:$0xf]
  %v390 = vld [vmem:[%s6 + $0x5c] sm:$0xf]
  %v391 = vld [vmem:[%s6 + $0x60] sm:$0xf]
  %v392 = vld [vmem:[%s6 + $0x64] sm:$0xf]
  %v393 = vld [vmem:[%s6 + $0x68] sm:$0xf]
  %v394 = vld [vmem:[%s6 + $0x6c] sm:$0xf]
  %v395 = vld [vmem:[%s6 + $0x70] sm:$0xf]
  %v396 = vld [vmem:[%s6 + $0x74] sm:$0xf]
  %v397 = vld [vmem:[%s6 + $0x78] sm:$0xf]
  %v398 = vld [vmem:[%s6 + $0x7c] sm:$0xf]
  %v399 = vld [vmem:[%s7] sm:$0x1]
  %v401 = vlaneseq
  %v402 = vshrl.u32 %v401, 7
  %v403 = vsub.s32 0, %v402
  %v404 = vrot.slane %v399, %v403
  %v438 = vunpack.c.l.b16 %v367
  %v439 = vunpack.c.l.b16 %v368
  %v440 = vunpack.c.l.b16 %v369
  %v441 = vunpack.c.l.b16 %v370
  %v442 = vunpack.c.l.b16 %v371
  %v443 = vunpack.c.l.b16 %v372
  %v444 = vunpack.c.l.b16 %v373
  %v445 = vunpack.c.l.b16 %v374
  %v446 = vunpack.c.l.b16 %v375
  %v447 = vunpack.c.l.b16 %v376
  %v448 = vunpack.c.l.b16 %v377
  %v449 = vunpack.c.l.b16 %v378
  %v450 = vunpack.c.l.b16 %v379
  %v451 = vunpack.c.l.b16 %v380
  %v452 = vunpack.c.l.b16 %v381
  %v453 = vunpack.c.l.b16 %v382
  %v454 = vunpack.c.l.b16 %v383
  %v455 = vunpack.c.l.b16 %v384
  %v456 = vunpack.c.l.b16 %v385
  %v457 = vunpack.c.l.b16 %v386
  %v458 = vunpack.c.l.b16 %v387
  %v459 = vunpack.c.l.b16 %v388
  %v460 = vunpack.c.l.b16 %v389
  %v461 = vunpack.c.l.b16 %v390
  %v462 = vunpack.c.l.b16 %v391
  %v463 = vunpack.c.l.b16 %v392
  %v464 = vunpack.c.l.b16 %v393
  %v465 = vunpack.c.l.b16 %v394
  %v466 = vunpack.c.l.b16 %v395
  %v467 = vunpack.c.l.b16 %v396
  %v468 = vunpack.c.l.b16 %v397
  %v469 = vunpack.c.l.b16 %v398
  %v470 = vpack.c.b16 %v439, %v438
  %v471 = vpack.c.b16 %v441, %v440
  %v472 = vpack.c.b16 %v443, %v442
  %v473 = vpack.c.b16 %v445, %v444
  %v474 = vpack.c.b16 %v447, %v446
  %v475 = vpack.c.b16 %v449, %v448
  %v476 = vpack.c.b16 %v451, %v450
  %v477 = vpack.c.b16 %v453, %v452
  %v478 = vpack.c.b16 %v455, %v454
  %v479 = vpack.c.b16 %v457, %v456
  %v480 = vpack.c.b16 %v459, %v458
  %v481 = vpack.c.b16 %v461, %v460
  %v482 = vpack.c.b16 %v463, %v462
  %v483 = vpack.c.b16 %v465, %v464
  %v484 = vpack.c.b16 %v467, %v466
  %v485 = vpack.c.b16 %v469, %v468
  %502 = vmatprep.subr.bf16.mxu0 0
  %503 = vmatpush1.bf16.msra.mxu0 %v470
  %504 = vmatprep.subr.bf16.mxu0 0
  %505 = vmatpush1.bf16.msra.mxu0 %v471
  %506 = vmatprep.subr.bf16.mxu0 0
  %507 = vmatpush1.bf16.msra.mxu0 %v472
  %508 = vmatprep.subr.bf16.mxu0 0
  %509 = vmatpush1.bf16.msra.mxu0 %v473
  %510 = vmatprep.subr.bf16.mxu0 0
  %511 = vmatpush1.bf16.msra.mxu0 %v474
  %512 = vmatprep.subr.bf16.mxu0 0
  %513 = vmatpush1.bf16.msra.mxu0 %v475
  %514 = vmatprep.subr.bf16.mxu0 0
  %515 = vmatpush1.bf16.msra.mxu0 %v476
  %516 = vmatprep.subr.bf16.mxu0 0
  %517 = vmatpush1.bf16.msra.mxu0 %v477
  %518 = vmatprep.subr.bf16.mxu0 0
  %519 = vmatpush1.bf16.msra.mxu0 %v478
  %520 = vmatprep.subr.bf16.mxu0 0
  %521 = vmatpush1.bf16.msra.mxu0 %v479
  %522 = vmatprep.subr.bf16.mxu0 0
  %523 = vmatpush1.bf16.msra.mxu0 %v480
  %524 = vmatprep.subr.bf16.mxu0 0
  %525 = vmatpush1.bf16.msra.mxu0 %v481
  %526 = vmatprep.subr.bf16.mxu0 0
  %527 = vmatpush1.bf16.msra.mxu0 %v482
  %528 = vmatprep.subr.bf16.mxu0 0
  %529 = vmatpush1.bf16.msra.mxu0 %v483
  %530 = vmatprep.subr.bf16.mxu0 0
  %531 = vmatpush1.bf16.msra.mxu0 %v484
  %532 = vmatprep.subr.bf16.mxu0 0
  %533 = vmatpush1.bf16.msra.mxu0 %v485
  %534 = vmatprep.mubr.bf16.mxu0 %v366
  %535 = vmatmul.mubr.bf16.gmra.mrb[0].mxu0 %v365
  %v536 = vpop.f32.mrb[0].mxu0
  %v537 = vadd.f32 %v404, %v536
  %v538 = vpop.f32.mrb[0].mxu0
  %v539 = vpop.f32.mrb[0].mxu0
  %v540 = vpop.f32.mrb[0].mxu0
  %541 = vdwg.mxu0
  %542 = vst [vmem:[%s11] sm:$0xff] %v537
  %v543 = vld [vmem:[%s8] sm:$0xff]
  %v544 = vld [vmem:[%s8 + $0x8] sm:$0xff]
  %v545 = vld [vmem:[%s8 + $0x10] sm:$0xff]
  %v546 = vld [vmem:[%s8 + $0x18] sm:$0xff]
  %v547 = vld [vmem:[%s8 + $0x20] sm:$0xff]
  %v548 = vld [vmem:[%s8 + $0x28] sm:$0xff]
  %v549 = vld [vmem:[%s8 + $0x30] sm:$0xff]
  %v550 = vld [vmem:[%s8 + $0x38] sm:$0xff]
  %v551 = vld [vmem:[%s8 + $0x40] sm:$0xff]
  %v552 = vld [vmem:[%s8 + $0x48] sm:$0xff]
  %v553 = vld [vmem:[%s8 + $0x50] sm:$0xff]
  %v554 = vld [vmem:[%s8 + $0x58] sm:$0xff]
  %v555 = vld [vmem:[%s8 + $0x60] sm:$0xff]
  %v556 = vld [vmem:[%s8 + $0x68] sm:$0xff]
  %v557 = vld [vmem:[%s8 + $0x70] sm:$0xff]
  %v558 = vld [vmem:[%s8 + $0x78] sm:$0xff]
  %v559 = vld [vmem:[%s8 + $0x80] sm:$0xff]
  %v560 = vld [vmem:[%s8 + $0x88] sm:$0xff]
  %v561 = vld [vmem:[%s8 + $0x90] sm:$0xff]
  %v562 = vld [vmem:[%s8 + $0x98] sm:$0xff]
  %v563 = vld [vmem:[%s8 + $0xa0] sm:$0xff]
  %v564 = vld [vmem:[%s8 + $0xa8] sm:$0xff]
  %v565 = vld [vmem:[%s8 + $0xb0] sm:$0xff]
  %v566 = vld [vmem:[%s8 + $0xb8] sm:$0xff]
  %v567 = vld [vmem:[%s8 + $0xc0] sm:$0xff]
  %v568 = vld [vmem:[%s8 + $0xc8] sm:$0xff]
  %v569 = vld [vmem:[%s8 + $0xd0] sm:$0xff]
  %v570 = vld [vmem:[%s8 + $0xd8] sm:$0xff]
  %v571 = vld [vmem:[%s8 + $0xe0] sm:$0xff]
  %v572 = vld [vmem:[%s8 + $0xe8] sm:$0xff]
  %v573 = vld [vmem:[%s8 + $0xf0] sm:$0xff]
  %v574 = vld [vmem:[%s8 + $0xf8] sm:$0xff]
  %v575 = vld [vmem:[%s8 + $0x100] sm:$0xff]
  %v576 = vld [vmem:[%s8 + $0x108] sm:$0xff]
  %v577 = vld [vmem:[%s8 + $0x110] sm:$0xff]
  %v578 = vld [vmem:[%s8 + $0x118] sm:$0xff]
  %v579 = vld [vmem:[%s8 + $0x120] sm:$0xff]
  %v580 = vld [vmem:[%s8 + $0x128] sm:$0xff]
  %v581 = vld [vmem:[%s8 + $0x130] sm:$0xff]
  %v582 = vld [vmem:[%s8 + $0x138] sm:$0xff]
  %v583 = vld [vmem:[%s8 + $0x140] sm:$0xff]
  %v584 = vld [vmem:[%s8 + $0x148] sm:$0xff]
  %v585 = vld [vmem:[%s8 + $0x150] sm:$0xff]
  %v586 = vld [vmem:[%s8 + $0x158] sm:$0xff]
  %v587 = vld [vmem:[%s8 + $0x160] sm:$0xff]
  %v588 = vld [vmem:[%s8 + $0x168] sm:$0xff]
  %v589 = vld [vmem:[%s8 + $0x170] sm:$0xff]
  %v590 = vld [vmem:[%s8 + $0x178] sm:$0xff]
  %v591 = vld [vmem:[%s8 + $0x180] sm:$0xff]
  %v592 = vld [vmem:[%s8 + $0x188] sm:$0xff]
  %v593 = vld [vmem:[%s8 + $0x190] sm:$0xff]
  %v594 = vld [vmem:[%s8 + $0x198] sm:$0xff]
  %v595 = vld [vmem:[%s8 + $0x1a0] sm:$0xff]
  %v596 = vld [vmem:[%s8 + $0x1a8] sm:$0xff]
  %v597 = vld [vmem:[%s8 + $0x1b0] sm:$0xff]
  %v598 = vld [vmem:[%s8 + $0x1b8] sm:$0xff]
  %v599 = vld [vmem:[%s8 + $0x1c0] sm:$0xff]
  %v600 = vld [vmem:[%s8 + $0x1c8] sm:$0xff]
  %v601 = vld [vmem:[%s8 + $0x1d0] sm:$0xff]
  %v602 = vld [vmem:[%s8 + $0x1d8] sm:$0xff]
  %v603 = vld [vmem:[%s8 + $0x1e0] sm:$0xff]
  %v604 = vld [vmem:[%s8 + $0x1e8] sm:$0xff]
  %v605 = vld [vmem:[%s8 + $0x1f0] sm:$0xff]
  %v606 = vld [vmem:[%s8 + $0x1f8] sm:$0xff]
  %v607 = vld [vmem:[%s8 + $0x200] sm:$0xff]
  %v608 = vld [vmem:[%s8 + $0x208] sm:$0xff]
  %v609 = vld [vmem:[%s8 + $0x210] sm:$0xff]
  %v610 = vld [vmem:[%s8 + $0x218] sm:$0xff]
  %v611 = vld [vmem:[%s8 + $0x220] sm:$0xff]
  %v612 = vld [vmem:[%s8 + $0x228] sm:$0xff]
  %v613 = vld [vmem:[%s8 + $0x230] sm:$0xff]
  %v614 = vld [vmem:[%s8 + $0x238] sm:$0xff]
  %v615 = vld [vmem:[%s8 + $0x240] sm:$0xff]
  %v616 = vld [vmem:[%s8 + $0x248] sm:$0xff]
  %v617 = vld [vmem:[%s8 + $0x250] sm:$0xff]
  %v618 = vld [vmem:[%s8 + $0x258] sm:$0xff]
  %v619 = vld [vmem:[%s8 + $0x260] sm:$0xff]
  %v620 = vld [vmem:[%s8 + $0x268] sm:$0xff]
  %v621 = vld [vmem:[%s8 + $0x270] sm:$0xff]
  %v622 = vld [vmem:[%s8 + $0x278] sm:$0xff]
  %v623 = vld [vmem:[%s8 + $0x280] sm:$0xff]
  %v624 = vld [vmem:[%s8 + $0x288] sm:$0xff]
  %v625 = vld [vmem:[%s8 + $0x290] sm:$0xff]
  %v626 = vld [vmem:[%s8 + $0x298] sm:$0xff]
  %v627 = vld [vmem:[%s8 + $0x2a0] sm:$0xff]
  %v628 = vld [vmem:[%s8 + $0x2a8] sm:$0xff]
  %v629 = vld [vmem:[%s8 + $0x2b0] sm:$0xff]
  %v630 = vld [vmem:[%s8 + $0x2b8] sm:$0xff]
  %v631 = vld [vmem:[%s8 + $0x2c0] sm:$0xff]
  %v632 = vld [vmem:[%s8 + $0x2c8] sm:$0xff]
  %v633 = vld [vmem:[%s8 + $0x2d0] sm:$0xff]
  %v634 = vld [vmem:[%s8 + $0x2d8] sm:$0xff]
  %v635 = vld [vmem:[%s8 + $0x2e0] sm:$0xff]
  %v636 = vld [vmem:[%s8 + $0x2e8] sm:$0xff]
  %v637 = vld [vmem:[%s8 + $0x2f0] sm:$0xff]
  %v638 = vld [vmem:[%s8 + $0x2f8] sm:$0xff]
  %v639 = vld [vmem:[%s8 + $0x300] sm:$0xff]
  %v640 = vld [vmem:[%s8 + $0x308] sm:$0xff]
  %v641 = vld [vmem:[%s8 + $0x310] sm:$0xff]
  %v642 = vld [vmem:[%s8 + $0x318] sm:$0xff]
  %v643 = vld [vmem:[%s8 + $0x320] sm:$0xff]
  %v644 = vld [vmem:[%s8 + $0x328] sm:$0xff]
  %v645 = vld [vmem:[%s8 + $0x330] sm:$0xff]
  %v646 = vld [vmem:[%s8 + $0x338] sm:$0xff]
  %v647 = vld [vmem:[%s8 + $0x340] sm:$0xff]
  %v648 = vld [vmem:[%s8 + $0x348] sm:$0xff]
  %v649 = vld [vmem:[%s8 + $0x350] sm:$0xff]
  %v650 = vld [vmem:[%s8 + $0x358] sm:$0xff]
  %v651 = vld [vmem:[%s8 + $0x360] sm:$0xff]
  %v652 = vld [vmem:[%s8 + $0x368] sm:$0xff]
  %v653 = vld [vmem:[%s8 + $0x370] sm:$0xff]
  %v654 = vld [vmem:[%s8 + $0x378] sm:$0xff]
  %v655 = vld [vmem:[%s8 + $0x380] sm:$0xff]
  %v656 = vld [vmem:[%s8 + $0x388] sm:$0xff]
  %v657 = vld [vmem:[%s8 + $0x390] sm:$0xff]
  %v658 = vld [vmem:[%s8 + $0x398] sm:$0xff]
  %v659 = vld [vmem:[%s8 + $0x3a0] sm:$0xff]
  %v660 = vld [vmem:[%s8 + $0x3a8] sm:$0xff]
  %v661 = vld [vmem:[%s8 + $0x3b0] sm:$0xff]
  %v662 = vld [vmem:[%s8 + $0x3b8] sm:$0xff]
  %v663 = vld [vmem:[%s8 + $0x3c0] sm:$0xff]
  %v664 = vld [vmem:[%s8 + $0x3c8] sm:$0xff]
  %v665 = vld [vmem:[%s8 + $0x3d0] sm:$0xff]
  %v666 = vld [vmem:[%s8 + $0x3d8] sm:$0xff]
  %v667 = vld [vmem:[%s8 + $0x3e0] sm:$0xff]
  %v668 = vld [vmem:[%s8 + $0x3e8] sm:$0xff]
  %v669 = vld [vmem:[%s8 + $0x3f0] sm:$0xff]
  %v670 = vld [vmem:[%s8 + $0x3f8] sm:$0xff]
  %v671 = vld [vmem:[%s9] sm:$0xff]
  %v672 = vld [vmem:[%s9 + $0x8] sm:$0xff]
  %v675 = vlaneseq
  %v676 = vshrl.u32 %v675, 7
  %v677 = vsub.s32 0, %v676
  %v678 = vrot.slane %v671, %v677
  %v679 = vlaneseq
  %v680 = vshrl.u32 %v679, 7
  %v681 = vsub.s32 1, %v680
  %v682 = vrot.slane %v671, %v681
  %v683 = vlaneseq
  %v684 = vshrl.u32 %v683, 7
  %v685 = vsub.s32 2, %v684
  %v686 = vrot.slane %v671, %v685
  %v687 = vlaneseq
  %v688 = vshrl.u32 %v687, 7
  %v689 = vsub.s32 3, %v688
  %v690 = vrot.slane %v671, %v689
  %v691 = vlaneseq
  %v692 = vshrl.u32 %v691, 7
  %v693 = vsub.s32 4, %v692
  %v694 = vrot.slane %v671, %v693
  %v695 = vlaneseq
  %v696 = vshrl.u32 %v695, 7
  %v697 = vsub.s32 5, %v696
  %v698 = vrot.slane %v671, %v697
  %v699 = vlaneseq
  %v700 = vshrl.u32 %v699, 7
  %v701 = vsub.s32 6, %v700
  %v702 = vrot.slane %v671, %v701
  %v703 = vlaneseq
  %v704 = vshrl.u32 %v703, 7
  %v705 = vsub.s32 7, %v704
  %v706 = vrot.slane %v671, %v705
  %v707 = vlaneseq
  %v708 = vshrl.u32 %v707, 7
  %v709 = vsub.s32 0, %v708
  %v710 = vrot.slane %v672, %v709
  %v711 = vlaneseq
  %v712 = vshrl.u32 %v711, 7
  %v713 = vsub.s32 1, %v712
  %v714 = vrot.slane %v672, %v713
  %v715 = vlaneseq
  %v716 = vshrl.u32 %v715, 7
  %v717 = vsub.s32 2, %v716
  %v718 = vrot.slane %v672, %v717
  %v719 = vlaneseq
  %v720 = vshrl.u32 %v719, 7
  %v721 = vsub.s32 3, %v720
  %v722 = vrot.slane %v672, %v721
  %v723 = vlaneseq
  %v724 = vshrl.u32 %v723, 7
  %v725 = vsub.s32 4, %v724
  %v726 = vrot.slane %v672, %v725
  %v727 = vlaneseq
  %v728 = vshrl.u32 %v727, 7
  %v729 = vsub.s32 5, %v728
  %v730 = vrot.slane %v672, %v729
  %v731 = vlaneseq
  %v732 = vshrl.u32 %v731, 7
  %v733 = vsub.s32 6, %v732
  %v734 = vrot.slane %v672, %v733
  %v735 = vlaneseq
  %v736 = vshrl.u32 %v735, 7
  %v737 = vsub.s32 7, %v736
  %v738 = vrot.slane %v672, %v737
  %v883 = vunpack.c.l.b16 %v543
  %v884 = vunpack.c.h.b16 %v543
  %v885 = vunpack.c.l.b16 %v544
  %v886 = vunpack.c.h.b16 %v544
  %v887 = vunpack.c.l.b16 %v545
  %v888 = vunpack.c.h.b16 %v545
  %v889 = vunpack.c.l.b16 %v546
  %v890 = vunpack.c.h.b16 %v546
  %v891 = vunpack.c.l.b16 %v547
  %v892 = vunpack.c.h.b16 %v547
  %v893 = vunpack.c.l.b16 %v548
  %v894 = vunpack.c.h.b16 %v548
  %v895 = vunpack.c.l.b16 %v549
  %v896 = vunpack.c.h.b16 %v549
  %v897 = vunpack.c.l.b16 %v550
  %v898 = vunpack.c.h.b16 %v550
  %v899 = vunpack.c.l.b16 %v551
  %v900 = vunpack.c.h.b16 %v551
  %v901 = vunpack.c.l.b16 %v552
  %v902 = vunpack.c.h.b16 %v552
  %v903 = vunpack.c.l.b16 %v553
  %v904 = vunpack.c.h.b16 %v553
  %v905 = vunpack.c.l.b16 %v554
  %v906 = vunpack.c.h.b16 %v554
  %v907 = vunpack.c.l.b16 %v555
  %v908 = vunpack.c.h.b16 %v555
  %v909 = vunpack.c.l.b16 %v556
  %v910 = vunpack.c.h.b16 %v556
  %v911 = vunpack.c.l.b16 %v557
  %v912 = vunpack.c.h.b16 %v557
  %v913 = vunpack.c.l.b16 %v558
  %v914 = vunpack.c.h.b16 %v558
  %v915 = vunpack.c.l.b16 %v559
  %v916 = vunpack.c.h.b16 %v559
  %v917 = vunpack.c.l.b16 %v560
  %v918 = vunpack.c.h.b16 %v560
  %v919 = vunpack.c.l.b16 %v561
  %v920 = vunpack.c.h.b16 %v561
  %v921 = vunpack.c.l.b16 %v562
  %v922 = vunpack.c.h.b16 %v562
  %v923 = vunpack.c.l.b16 %v563
  %v924 = vunpack.c.h.b16 %v563
  %v925 = vunpack.c.l.b16 %v564
  %v926 = vunpack.c.h.b16 %v564
  %v927 = vunpack.c.l.b16 %v565
  %v928 = vunpack.c.h.b16 %v565
  %v929 = vunpack.c.l.b16 %v566
  %v930 = vunpack.c.h.b16 %v566
  %v931 = vunpack.c.l.b16 %v567
  %v932 = vunpack.c.h.b16 %v567
  %v933 = vunpack.c.l.b16 %v568
  %v934 = vunpack.c.h.b16 %v568
  %v935 = vunpack.c.l.b16 %v569
  %v936 = vunpack.c.h.b16 %v569
  %v937 = vunpack.c.l.b16 %v570
  %v938 = vunpack.c.h.b16 %v570
  %v939 = vunpack.c.l.b16 %v571
  %v940 = vunpack.c.h.b16 %v571
  %v941 = vunpack.c.l.b16 %v572
  %v942 = vunpack.c.h.b16 %v572
  %v943 = vunpack.c.l.b16 %v573
  %v944 = vunpack.c.h.b16 %v573
  %v945 = vunpack.c.l.b16 %v574
  %v946 = vunpack.c.h.b16 %v574
  %v947 = vunpack.c.l.b16 %v575
  %v948 = vunpack.c.h.b16 %v575
  %v949 = vunpack.c.l.b16 %v576
  %v950 = vunpack.c.h.b16 %v576
  %v951 = vunpack.c.l.b16 %v577
  %v952 = vunpack.c.h.b16 %v577
  %v953 = vunpack.c.l.b16 %v578
  %v954 = vunpack.c.h.b16 %v578
  %v955 = vunpack.c.l.b16 %v579
  %v956 = vunpack.c.h.b16 %v579
  %v957 = vunpack.c.l.b16 %v580
  %v958 = vunpack.c.h.b16 %v580
  %v959 = vunpack.c.l.b16 %v581
  %v960 = vunpack.c.h.b16 %v581
  %v961 = vunpack.c.l.b16 %v582
  %v962 = vunpack.c.h.b16 %v582
  %v963 = vunpack.c.l.b16 %v583
  %v964 = vunpack.c.h.b16 %v583
  %v965 = vunpack.c.l.b16 %v584
  %v966 = vunpack.c.h.b16 %v584
  %v967 = vunpack.c.l.b16 %v585
  %v968 = vunpack.c.h.b16 %v585
  %v969 = vunpack.c.l.b16 %v586
  %v970 = vunpack.c.h.b16 %v586
  %v971 = vunpack.c.l.b16 %v587
  %v972 = vunpack.c.h.b16 %v587
  %v973 = vunpack.c.l.b16 %v588
  %v974 = vunpack.c.h.b16 %v588
  %v975 = vunpack.c.l.b16 %v589
  %v976 = vunpack.c.h.b16 %v589
  %v977 = vunpack.c.l.b16 %v590
  %v978 = vunpack.c.h.b16 %v590
  %v979 = vunpack.c.l.b16 %v591
  %v980 = vunpack.c.h.b16 %v591
  %v981 = vunpack.c.l.b16 %v592
  %v982 = vunpack.c.h.b16 %v592
  %v983 = vunpack.c.l.b16 %v593
  %v984 = vunpack.c.h.b16 %v593
  %v985 = vunpack.c.l.b16 %v594
  %v986 = vunpack.c.h.b16 %v594
  %v987 = vunpack.c.l.b16 %v595
  %v988 = vunpack.c.h.b16 %v595
  %v989 = vunpack.c.l.b16 %v596
  %v990 = vunpack.c.h.b16 %v596
  %v991 = vunpack.c.l.b16 %v597
  %v992 = vunpack.c.h.b16 %v597
  %v993 = vunpack.c.l.b16 %v598
  %v994 = vunpack.c.h.b16 %v598
  %v995 = vunpack.c.l.b16 %v599
  %v996 = vunpack.c.h.b16 %v599
  %v997 = vunpack.c.l.b16 %v600
  %v998 = vunpack.c.h.b16 %v600
  %v999 = vunpack.c.l.b16 %v601
  %v1000 = vunpack.c.h.b16 %v601
  %v1001 = vunpack.c.l.b16 %v602
  %v1002 = vunpack.c.h.b16 %v602
  %v1003 = vunpack.c.l.b16 %v603
  %v1004 = vunpack.c.h.b16 %v603
  %v1005 = vunpack.c.l.b16 %v604
  %v1006 = vunpack.c.h.b16 %v604
  %v1007 = vunpack.c.l.b16 %v605
  %v1008 = vunpack.c.h.b16 %v605
  %v1009 = vunpack.c.l.b16 %v606
  %v1010 = vunpack.c.h.b16 %v606
  %v1011 = vunpack.c.l.b16 %v607
  %v1012 = vunpack.c.h.b16 %v607
  %v1013 = vunpack.c.l.b16 %v608
  %v1014 = vunpack.c.h.b16 %v608
  %v1015 = vunpack.c.l.b16 %v609
  %v1016 = vunpack.c.h.b16 %v609
  %v1017 = vunpack.c.l.b16 %v610
  %v1018 = vunpack.c.h.b16 %v610
  %v1019 = vunpack.c.l.b16 %v611
  %v1020 = vunpack.c.h.b16 %v611
  %v1021 = vunpack.c.l.b16 %v612
  %v1022 = vunpack.c.h.b16 %v612
  %v1023 = vunpack.c.l.b16 %v613
  %v1024 = vunpack.c.h.b16 %v613
  %v1025 = vunpack.c.l.b16 %v614
  %v1026 = vunpack.c.h.b16 %v614
  %v1027 = vunpack.c.l.b16 %v615
  %v1028 = vunpack.c.h.b16 %v615
  %v1029 = vunpack.c.l.b16 %v616
  %v1030 = vunpack.c.h.b16 %v616
  %v1031 = vunpack.c.l.b16 %v617
  %v1032 = vunpack.c.h.b16 %v617
  %v1033 = vunpack.c.l.b16 %v618
  %v1034 = vunpack.c.h.b16 %v618
  %v1035 = vunpack.c.l.b16 %v619
  %v1036 = vunpack.c.h.b16 %v619
  %v1037 = vunpack.c.l.b16 %v620
  %v1038 = vunpack.c.h.b16 %v620
  %v1039 = vunpack.c.l.b16 %v621
  %v1040 = vunpack.c.h.b16 %v621
  %v1041 = vunpack.c.l.b16 %v622
  %v1042 = vunpack.c.h.b16 %v622
  %v1043 = vunpack.c.l.b16 %v623
  %v1044 = vunpack.c.h.b16 %v623
  %v1045 = vunpack.c.l.b16 %v624
  %v1046 = vunpack.c.h.b16 %v624
  %v1047 = vunpack.c.l.b16 %v625
  %v1048 = vunpack.c.h.b16 %v625
  %v1049 = vunpack.c.l.b16 %v626
  %v1050 = vunpack.c.h.b16 %v626
  %v1051 = vunpack.c.l.b16 %v627
  %v1052 = vunpack.c.h.b16 %v627
  %v1053 = vunpack.c.l.b16 %v628
  %v1054 = vunpack.c.h.b16 %v628
  %v1055 = vunpack.c.l.b16 %v629
  %v1056 = vunpack.c.h.b16 %v629
  %v1057 = vunpack.c.l.b16 %v630
  %v1058 = vunpack.c.h.b16 %v630
  %v1059 = vunpack.c.l.b16 %v631
  %v1060 = vunpack.c.h.b16 %v631
  %v1061 = vunpack.c.l.b16 %v632
  %v1062 = vunpack.c.h.b16 %v632
  %v1063 = vunpack.c.l.b16 %v633
  %v1064 = vunpack.c.h.b16 %v633
  %v1065 = vunpack.c.l.b16 %v634
  %v1066 = vunpack.c.h.b16 %v634
  %v1067 = vunpack.c.l.b16 %v635
  %v1068 = vunpack.c.h.b16 %v635
  %v1069 = vunpack.c.l.b16 %v636
  %v1070 = vunpack.c.h.b16 %v636
  %v1071 = vunpack.c.l.b16 %v637
  %v1072 = vunpack.c.h.b16 %v637
  %v1073 = vunpack.c.l.b16 %v638
  %v1074 = vunpack.c.h.b16 %v638
  %v1075 = vunpack.c.l.b16 %v639
  %v1076 = vunpack.c.h.b16 %v639
  %v1077 = vunpack.c.l.b16 %v640
  %v1078 = vunpack.c.h.b16 %v640
  %v1079 = vunpack.c.l.b16 %v641
  %v1080 = vunpack.c.h.b16 %v641
  %v1081 = vunpack.c.l.b16 %v642
  %v1082 = vunpack.c.h.b16 %v642
  %v1083 = vunpack.c.l.b16 %v643
  %v1084 = vunpack.c.h.b16 %v643
  %v1085 = vunpack.c.l.b16 %v644
  %v1086 = vunpack.c.h.b16 %v644
  %v1087 = vunpack.c.l.b16 %v645
  %v1088 = vunpack.c.h.b16 %v645
  %v1089 = vunpack.c.l.b16 %v646
  %v1090 = vunpack.c.h.b16 %v646
  %v1091 = vunpack.c.l.b16 %v647
  %v1092 = vunpack.c.h.b16 %v647
  %v1093 = vunpack.c.l.b16 %v648
  %v1094 = vunpack.c.h.b16 %v648
  %v1095 = vunpack.c.l.b16 %v649
  %v1096 = vunpack.c.h.b16 %v649
  %v1097 = vunpack.c.l.b16 %v650
  %v1098 = vunpack.c.h.b16 %v650
  %v1099 = vunpack.c.l.b16 %v651
  %v1100 = vunpack.c.h.b16 %v651
  %v1101 = vunpack.c.l.b16 %v652
  %v1102 = vunpack.c.h.b16 %v652
  %v1103 = vunpack.c.l.b16 %v653
  %v1104 = vunpack.c.h.b16 %v653
  %v1105 = vunpack.c.l.b16 %v654
  %v1106 = vunpack.c.h.b16 %v654
  %v1107 = vunpack.c.l.b16 %v655
  %v1108 = vunpack.c.h.b16 %v655
  %v1109 = vunpack.c.l.b16 %v656
  %v1110 = vunpack.c.h.b16 %v656
  %v1111 = vunpack.c.l.b16 %v657
  %v1112 = vunpack.c.h.b16 %v657
  %v1113 = vunpack.c.l.b16 %v658
  %v1114 = vunpack.c.h.b16 %v658
  %v1115 = vunpack.c.l.b16 %v659
  %v1116 = vunpack.c.h.b16 %v659
  %v1117 = vunpack.c.l.b16 %v660
  %v1118 = vunpack.c.h.b16 %v660
  %v1119 = vunpack.c.l.b16 %v661
  %v1120 = vunpack.c.h.b16 %v661
  %v1121 = vunpack.c.l.b16 %v662
  %v1122 = vunpack.c.h.b16 %v662
  %v1123 = vunpack.c.l.b16 %v663
  %v1124 = vunpack.c.h.b16 %v663
  %v1125 = vunpack.c.l.b16 %v664
  %v1126 = vunpack.c.h.b16 %v664
  %v1127 = vunpack.c.l.b16 %v665
  %v1128 = vunpack.c.h.b16 %v665
  %v1129 = vunpack.c.l.b16 %v666
  %v1130 = vunpack.c.h.b16 %v666
  %v1131 = vunpack.c.l.b16 %v667
  %v1132 = vunpack.c.h.b16 %v667
  %v1133 = vunpack.c.l.b16 %v668
  %v1134 = vunpack.c.h.b16 %v668
  %v1135 = vunpack.c.l.b16 %v669
  %v1136 = vunpack.c.h.b16 %v669
  %v1137 = vunpack.c.l.b16 %v670
  %v1138 = vunpack.c.h.b16 %v670
  %v1139 = vpack.c.b16 %v899, %v883
  %v1140 = vpack.c.b16 %v900, %v884
  %v1141 = vpack.c.b16 %v901, %v885
  %v1142 = vpack.c.b16 %v902, %v886
  %v1143 = vpack.c.b16 %v903, %v887
  %v1144 = vpack.c.b16 %v904, %v888
  %v1145 = vpack.c.b16 %v905, %v889
  %v1146 = vpack.c.b16 %v906, %v890
  %v1147 = vpack.c.b16 %v907, %v891
  %v1148 = vpack.c.b16 %v908, %v892
  %v1149 = vpack.c.b16 %v909, %v893
  %v1150 = vpack.c.b16 %v910, %v894
  %v1151 = vpack.c.b16 %v911, %v895
  %v1152 = vpack.c.b16 %v912, %v896
  %v1153 = vpack.c.b16 %v913, %v897
  %v1154 = vpack.c.b16 %v914, %v898
  %v1155 = vpack.c.b16 %v931, %v915
  %v1156 = vpack.c.b16 %v932, %v916
  %v1157 = vpack.c.b16 %v933, %v917
  %v1158 = vpack.c.b16 %v934, %v918
  %v1159 = vpack.c.b16 %v935, %v919
  %v1160 = vpack.c.b16 %v936, %v920
  %v1161 = vpack.c.b16 %v937, %v921
  %v1162 = vpack.c.b16 %v938, %v922
  %v1163 = vpack.c.b16 %v939, %v923
  %v1164 = vpack.c.b16 %v940, %v924
  %v1165 = vpack.c.b16 %v941, %v925
  %v1166 = vpack.c.b16 %v942, %v926
  %v1167 = vpack.c.b16 %v943, %v927
  %v1168 = vpack.c.b16 %v944, %v928
  %v1169 = vpack.c.b16 %v945, %v929
  %v1170 = vpack.c.b16 %v946, %v930
  %v1171 = vpack.c.b16 %v963, %v947
  %v1172 = vpack.c.b16 %v964, %v948
  %v1173 = vpack.c.b16 %v965, %v949
  %v1174 = vpack.c.b16 %v966, %v950
  %v1175 = vpack.c.b16 %v967, %v951
  %v1176 = vpack.c.b16 %v968, %v952
  %v1177 = vpack.c.b16 %v969, %v953
  %v1178 = vpack.c.b16 %v970, %v954
  %v1179 = vpack.c.b16 %v971, %v955
  %v1180 = vpack.c.b16 %v972, %v956
  %v1181 = vpack.c.b16 %v973, %v957
  %v1182 = vpack.c.b16 %v974, %v958
  %v1183 = vpack.c.b16 %v975, %v959
  %v1184 = vpack.c.b16 %v976, %v960
  %v1185 = vpack.c.b16 %v977, %v961
  %v1186 = vpack.c.b16 %v978, %v962
  %v1187 = vpack.c.b16 %v995, %v979
  %v1188 = vpack.c.b16 %v996, %v980
  %v1189 = vpack.c.b16 %v997, %v981
  %v1190 = vpack.c.b16 %v998, %v982
  %v1191 = vpack.c.b16 %v999, %v983
  %v1192 = vpack.c.b16 %v1000, %v984
  %v1193 = vpack.c.b16 %v1001, %v985
  %v1194 = vpack.c.b16 %v1002, %v986
  %v1195 = vpack.c.b16 %v1003, %v987
  %v1196 = vpack.c.b16 %v1004, %v988
  %v1197 = vpack.c.b16 %v1005, %v989
  %v1198 = vpack.c.b16 %v1006, %v990
  %v1199 = vpack.c.b16 %v1007, %v991
  %v1200 = vpack.c.b16 %v1008, %v992
  %v1201 = vpack.c.b16 %v1009, %v993
  %v1202 = vpack.c.b16 %v1010, %v994
  %v1203 = vpack.c.b16 %v1027, %v1011
  %v1204 = vpack.c.b16 %v1028, %v1012
  %v1205 = vpack.c.b16 %v1029, %v1013
  %v1206 = vpack.c.b16 %v1030, %v1014
  %v1207 = vpack.c.b16 %v1031, %v1015
  %v1208 = vpack.c.b16 %v1032, %v1016
  %v1209 = vpack.c.b16 %v1033, %v1017
  %v1210 = vpack.c.b16 %v1034, %v1018
  %v1211 = vpack.c.b16 %v1035, %v1019
  %v1212 = vpack.c.b16 %v1036, %v1020
  %v1213 = vpack.c.b16 %v1037, %v1021
  %v1214 = vpack.c.b16 %v1038, %v1022
  %v1215 = vpack.c.b16 %v1039, %v1023
  %v1216 = vpack.c.b16 %v1040, %v1024
  %v1217 = vpack.c.b16 %v1041, %v1025
  %v1218 = vpack.c.b16 %v1042, %v1026
  %v1219 = vpack.c.b16 %v1059, %v1043
  %v1220 = vpack.c.b16 %v1060, %v1044
  %v1221 = vpack.c.b16 %v1061, %v1045
  %v1222 = vpack.c.b16 %v1062, %v1046
  %v1223 = vpack.c.b16 %v1063, %v1047
  %v1224 = vpack.c.b16 %v1064, %v1048
  %v1225 = vpack.c.b16 %v1065, %v1049
  %v1226 = vpack.c.b16 %v1066, %v1050
  %v1227 = vpack.c.b16 %v1067, %v1051
  %v1228 = vpack.c.b16 %v1068, %v1052
  %v1229 = vpack.c.b16 %v1069, %v1053
  %v1230 = vpack.c.b16 %v1070, %v1054
  %v1231 = vpack.c.b16 %v1071, %v1055
  %v1232 = vpack.c.b16 %v1072, %v1056
  %v1233 = vpack.c.b16 %v1073, %v1057
  %v1234 = vpack.c.b16 %v1074, %v1058
  %v1235 = vpack.c.b16 %v1091, %v1075
  %v1236 = vpack.c.b16 %v1092, %v1076
  %v1237 = vpack.c.b16 %v1093, %v1077
  %v1238 = vpack.c.b16 %v1094, %v1078
  %v1239 = vpack.c.b16 %v1095, %v1079
  %v1240 = vpack.c.b16 %v1096, %v1080
  %v1241 = vpack.c.b16 %v1097, %v1081
  %v1242 = vpack.c.b16 %v1098, %v1082
  %v1243 = vpack.c.b16 %v1099, %v1083
  %v1244 = vpack.c.b16 %v1100, %v1084
  %v1245 = vpack.c.b16 %v1101, %v1085
  %v1246 = vpack.c.b16 %v1102, %v1086
  %v1247 = vpack.c.b16 %v1103, %v1087
  %v1248 = vpack.c.b16 %v1104, %v1088
  %v1249 = vpack.c.b16 %v1105, %v1089
  %v1250 = vpack.c.b16 %v1106, %v1090
  %v1251 = vpack.c.b16 %v1123, %v1107
  %v1252 = vpack.c.b16 %v1124, %v1108
  %v1253 = vpack.c.b16 %v1125, %v1109
  %v1254 = vpack.c.b16 %v1126, %v1110
  %v1255 = vpack.c.b16 %v1127, %v1111
  %v1256 = vpack.c.b16 %v1128, %v1112
  %v1257 = vpack.c.b16 %v1129, %v1113
  %v1258 = vpack.c.b16 %v1130, %v1114
  %v1259 = vpack.c.b16 %v1131, %v1115
  %v1260 = vpack.c.b16 %v1132, %v1116
  %v1261 = vpack.c.b16 %v1133, %v1117
  %v1262 = vpack.c.b16 %v1134, %v1118
  %v1263 = vpack.c.b16 %v1135, %v1119
  %v1264 = vpack.c.b16 %v1136, %v1120
  %v1265 = vpack.c.b16 %v1137, %v1121
  %v1266 = vpack.c.b16 %v1138, %v1122
  %1395 = vmatprep.subr.bf16.mxu0 %v1140
  %1396 = vmatpush1.bf16.msra.mxu0 %v1139
  %1397 = vmatprep.subr.bf16.mxu0 %v1156
  %1398 = vmatpush1.bf16.msra.mxu0 %v1155
  %1399 = vmatprep.subr.bf16.mxu0 %v1172
  %1400 = vmatpush1.bf16.msra.mxu0 %v1171
  %1401 = vmatprep.subr.bf16.mxu0 %v1188
  %1402 = vmatpush1.bf16.msra.mxu0 %v1187
  %1403 = vmatprep.subr.bf16.mxu0 %v1204
  %1404 = vmatpush1.bf16.msra.mxu0 %v1203
  %1405 = vmatprep.subr.bf16.mxu0 %v1220
  %1406 = vmatpush1.bf16.msra.mxu0 %v1219
  %1407 = vmatprep.subr.bf16.mxu0 %v1236
  %1408 = vmatpush1.bf16.msra.mxu0 %v1235
  %1409 = vmatprep.subr.bf16.mxu0 %v1252
  %1410 = vmatpush1.bf16.msra.mxu0 %v1251
  %1411 = vmatprep.subr.bf16.mxu0 0
  %1412 = vmatpush1.bf16.msra.mxu0 0
  %1413 = vmatprep.subr.bf16.mxu0 0
  %1414 = vmatpush1.bf16.msra.mxu0 0
  %1415 = vmatprep.subr.bf16.mxu0 0
  %1416 = vmatpush1.bf16.msra.mxu0 0
  %1417 = vmatprep.subr.bf16.mxu0 0
  %1418 = vmatpush1.bf16.msra.mxu0 0
  %1419 = vmatprep.subr.bf16.mxu0 0
  %1420 = vmatpush1.bf16.msra.mxu0 0
  %1421 = vmatprep.subr.bf16.mxu0 0
  %1422 = vmatpush1.bf16.msra.mxu0 0
  %1423 = vmatprep.subr.bf16.mxu0 0
  %1424 = vmatpush1.bf16.msra.mxu0 0
  %1425 = vmatprep.subr.bf16.mxu0 0
  %1426 = vmatpush1.bf16.msra.mxu0 0
  %1427 = vmatprep.mubr.bf16.mxu0 0
  %1428 = vmatmul.mubr.bf16.gmra.mrb[0].mxu0 %v213
  %v1429 = vpop.f32.mrb[0].mxu0
  %v1430 = vadd.f32 %v678, %v1429
  %v1431 = vpop.f32.mrb[0].mxu0
  %v1432 = vadd.f32 %v682, %v1431
  %v1433 = vpop.f32.mrb[0].mxu0
  %v1434 = vpop.f32.mrb[0].mxu0
  %1435 = vdwg.mxu0
  %1436 = vmatprep.subr.bf16.mxu0 %v1142
  %1437 = vmatpush1.bf16.msra.mxu0 %v1141
  %1438 = vmatprep.subr.bf16.mxu0 %v1158
  %1439 = vmatpush1.bf16.msra.mxu0 %v1157
  %1440 = vmatprep.subr.bf16.mxu0 %v1174
  %1441 = vmatpush1.bf16.msra.mxu0 %v1173
  %1442 = vmatprep.subr.bf16.mxu0 %v1190
  %1443 = vmatpush1.bf16.msra.mxu0 %v1189
  %1444 = vmatprep.subr.bf16.mxu0 %v1206
  %1445 = vmatpush1.bf16.msra.mxu0 %v1205
  %1446 = vmatprep.subr.bf16.mxu0 %v1222
  %1447 = vmatpush1.bf16.msra.mxu0 %v1221
  %1448 = vmatprep.subr.bf16.mxu0 %v1238
  %1449 = vmatpush1.bf16.msra.mxu0 %v1237
  %1450 = vmatprep.subr.bf16.mxu0 %v1254
  %1451 = vmatpush1.bf16.msra.mxu0 %v1253
  %1452 = vmatprep.subr.bf16.mxu0 0
  %1453 = vmatpush1.bf16.msra.mxu0 0
  %1454 = vmatprep.subr.bf16.mxu0 0
  %1455 = vmatpush1.bf16.msra.mxu0 0
  %1456 = vmatprep.subr.bf16.mxu0 0
  %1457 = vmatpush1.bf16.msra.mxu0 0
  %1458 = vmatprep.subr.bf16.mxu0 0
  %1459 = vmatpush1.bf16.msra.mxu0 0
  %1460 = vmatprep.subr.bf16.mxu0 0
  %1461 = vmatpush1.bf16.msra.mxu0 0
  %1462 = vmatprep.subr.bf16.mxu0 0
  %1463 = vmatpush1.bf16.msra.mxu0 0
  %1464 = vmatprep.subr.bf16.mxu0 0
  %1465 = vmatpush1.bf16.msra.mxu0 0
  %1466 = vmatprep.subr.bf16.mxu0 0
  %1467 = vmatpush1.bf16.msra.mxu0 0
  %1468 = vmatprep.mubr.bf16.mxu0 0
  %1469 = vmatmul.mubr.bf16.gmra.mrb[0].mxu0 %v213
  %v1470 = vpop.f32.mrb[0].mxu0
  %v1471 = vadd.f32 %v686, %v1470
  %v1472 = vpop.f32.mrb[0].mxu0
  %v1473 = vadd.f32 %v690, %v1472
  %v1474 = vpop.f32.mrb[0].mxu0
  %v1475 = vpop.f32.mrb[0].mxu0
  %1476 = vdwg.mxu0
  %1477 = vmatprep.subr.bf16.mxu0 %v1144
  %1478 = vmatpush1.bf16.msra.mxu0 %v1143
  %1479 = vmatprep.subr.bf16.mxu0 %v1160
  %1480 = vmatpush1.bf16.msra.mxu0 %v1159
  %1481 = vmatprep.subr.bf16.mxu0 %v1176
  %1482 = vmatpush1.bf16.msra.mxu0 %v1175
  %1483 = vmatprep.subr.bf16.mxu0 %v1192
  %1484 = vmatpush1.bf16.msra.mxu0 %v1191
  %1485 = vmatprep.subr.bf16.mxu0 %v1208
  %1486 = vmatpush1.bf16.msra.mxu0 %v1207
  %1487 = vmatprep.subr.bf16.mxu0 %v1224
  %1488 = vmatpush1.bf16.msra.mxu0 %v1223
  %1489 = vmatprep.subr.bf16.mxu0 %v1240
  %1490 = vmatpush1.bf16.msra.mxu0 %v1239
  %1491 = vmatprep.subr.bf16.mxu0 %v1256
  %1492 = vmatpush1.bf16.msra.mxu0 %v1255
  %1493 = vmatprep.subr.bf16.mxu0 0
  %1494 = vmatpush1.bf16.msra.mxu0 0
  %1495 = vmatprep.subr.bf16.mxu0 0
  %1496 = vmatpush1.bf16.msra.mxu0 0
  %1497 = vmatprep.subr.bf16.mxu0 0
  %1498 = vmatpush1.bf16.msra.mxu0 0
  %1499 = vmatprep.subr.bf16.mxu0 0
  %1500 = vmatpush1.bf16.msra.mxu0 0
  %1501 = vmatprep.subr.bf16.mxu0 0
  %1502 = vmatpush1.bf16.msra.mxu0 0
  %1503 = vmatprep.subr.bf16.mxu0 0
  %1504 = vmatpush1.bf16.msra.mxu0 0
  %1505 = vmatprep.subr.bf16.mxu0 0
  %1506 = vmatpush1.bf16.msra.mxu0 0
  %1507 = vmatprep.subr.bf16.mxu0 0
  %1508 = vmatpush1.bf16.msra.mxu0 0
  %1509 = vmatprep.mubr.bf16.mxu0 0
  %1510 = vmatmul.mubr.bf16.gmra.mrb[0].mxu0 %v213
  %v1511 = vpop.f32.mrb[0].mxu0
  %v1512 = vadd.f32 %v694, %v1511
  %v1513 = vpop.f32.mrb[0].mxu0
  %v1514 = vadd.f32 %v698, %v1513
  %v1515 = vpop.f32.mrb[0].mxu0
  %v1516 = vpop.f32.mrb[0].mxu0
  %1517 = vdwg.mxu0
  %1518 = vmatprep.subr.bf16.mxu0 %v1146
  %1519 = vmatpush1.bf16.msra.mxu0 %v1145
  %1520 = vmatprep.subr.bf16.mxu0 %v1162
  %1521 = vmatpush1.bf16.msra.mxu0 %v1161
  %1522 = vmatprep.subr.bf16.mxu0 %v1178
  %1523 = vmatpush1.bf16.msra.mxu0 %v1177
  %1524 = vmatprep.subr.bf16.mxu0 %v1194
  %1525 = vmatpush1.bf16.msra.mxu0 %v1193
  %1526 = vmatprep.subr.bf16.mxu0 %v1210
  %1527 = vmatpush1.bf16.msra.mxu0 %v1209
  %1528 = vmatprep.subr.bf16.mxu0 %v1226
  %1529 = vmatpush1.bf16.msra.mxu0 %v1225
  %1530 = vmatprep.subr.bf16.mxu0 %v1242
  %1531 = vmatpush1.bf16.msra.mxu0 %v1241
  %1532 = vmatprep.subr.bf16.mxu0 %v1258
  %1533 = vmatpush1.bf16.msra.mxu0 %v1257
  %1534 = vmatprep.subr.bf16.mxu0 0
  %1535 = vmatpush1.bf16.msra.mxu0 0
  %1536 = vmatprep.subr.bf16.mxu0 0
  %1537 = vmatpush1.bf16.msra.mxu0 0
  %1538 = vmatprep.subr.bf16.mxu0 0
  %1539 = vmatpush1.bf16.msra.mxu0 0
  %1540 = vmatprep.subr.bf16.mxu0 0
  %1541 = vmatpush1.bf16.msra.mxu0 0
  %1542 = vmatprep.subr.bf16.mxu0 0
  %1543 = vmatpush1.bf16.msra.mxu0 0
  %1544 = vmatprep.subr.bf16.mxu0 0
  %1545 = vmatpush1.bf16.msra.mxu0 0
  %1546 = vmatprep.subr.bf16.mxu0 0
  %1547 = vmatpush1.bf16.msra.mxu0 0
  %1548 = vmatprep.subr.bf16.mxu0 0
  %1549 = vmatpush1.bf16.msra.mxu0 0
  %1550 = vmatprep.mubr.bf16.mxu0 0
  %1551 = vmatmul.mubr.bf16.gmra.mrb[0].mxu0 %v213
  %v1552 = vpop.f32.mrb[0].mxu0
  %v1553 = vadd.f32 %v702, %v1552
  %v1554 = vpop.f32.mrb[0].mxu0
  %v1555 = vadd.f32 %v706, %v1554
  %v1556 = vpop.f32.mrb[0].mxu0
  %v1557 = vpop.f32.mrb[0].mxu0
  %1558 = vdwg.mxu0
  %1559 = vmatprep.subr.bf16.mxu0 %v1148
  %1560 = vmatpush1.bf16.msra.mxu0 %v1147
  %1561 = vmatprep.subr.bf16.mxu0 %v1164
  %1562 = vmatpush1.bf16.msra.mxu0 %v1163
  %1563 = vmatprep.subr.bf16.mxu0 %v1180
  %1564 = vmatpush1.bf16.msra.mxu0 %v1179
  %1565 = vmatprep.subr.bf16.mxu0 %v1196
  %1566 = vmatpush1.bf16.msra.mxu0 %v1195
  %1567 = vmatprep.subr.bf16.mxu0 %v1212
  %1568 = vmatpush1.bf16.msra.mxu0 %v1211
  %1569 = vmatprep.subr.bf16.mxu0 %v1228
  %1570 = vmatpush1.bf16.msra.mxu0 %v1227
  %1571 = vmatprep.subr.bf16.mxu0 %v1244
  %1572 = vmatpush1.bf16.msra.mxu0 %v1243
  %1573 = vmatprep.subr.bf16.mxu0 %v1260
  %1574 = vmatpush1.bf16.msra.mxu0 %v1259
  %1575 = vmatprep.subr.bf16.mxu0 0
  %1576 = vmatpush1.bf16.msra.mxu0 0
  %1577 = vmatprep.subr.bf16.mxu0 0
  %1578 = vmatpush1.bf16.msra.mxu0 0
  %1579 = vmatprep.subr.bf16.mxu0 0
  %1580 = vmatpush1.bf16.msra.mxu0 0
  %1581 = vmatprep.subr.bf16.mxu0 0
  %1582 = vmatpush1.bf16.msra.mxu0 0
  %1583 = vmatprep.subr.bf16.mxu0 0
  %1584 = vmatpush1.bf16.msra.mxu0 0
  %1585 = vmatprep.subr.bf16.mxu0 0
  %1586 = vmatpush1.bf16.msra.mxu0 0
  %1587 = vmatprep.subr.bf16.mxu0 0
  %1588 = vmatpush1.bf16.msra.mxu0 0
  %1589 = vmatprep.subr.bf16.mxu0 0
  %1590 = vmatpush1.bf16.msra.mxu0 0
  %1591 = vmatprep.mubr.bf16.mxu0 0
  %1592 = vmatmul.mubr.bf16.gmra.mrb[0].mxu0 %v213
  %v1593 = vpop.f32.mrb[0].mxu0
  %v1594 = vadd.f32 %v710, %v1593
  %v1595 = vpop.f32.mrb[0].mxu0
  %v1596 = vadd.f32 %v714, %v1595
  %v1597 = vpop.f32.mrb[0].mxu0
  %v1598 = vpop.f32.mrb[0].mxu0
  %1599 = vdwg.mxu0
  %1600 = vmatprep.subr.bf16.mxu0 %v1150
  %1601 = vmatpush1.bf16.msra.mxu0 %v1149
  %1602 = vmatprep.subr.bf16.mxu0 %v1166
  %1603 = vmatpush1.bf16.msra.mxu0 %v1165
  %1604 = vmatprep.subr.bf16.mxu0 %v1182
  %1605 = vmatpush1.bf16.msra.mxu0 %v1181
  %1606 = vmatprep.subr.bf16.mxu0 %v1198
  %1607 = vmatpush1.bf16.msra.mxu0 %v1197
  %1608 = vmatprep.subr.bf16.mxu0 %v1214
  %1609 = vmatpush1.bf16.msra.mxu0 %v1213
  %1610 = vmatprep.subr.bf16.mxu0 %v1230
  %1611 = vmatpush1.bf16.msra.mxu0 %v1229
  %1612 = vmatprep.subr.bf16.mxu0 %v1246
  %1613 = vmatpush1.bf16.msra.mxu0 %v1245
  %1614 = vmatprep.subr.bf16.mxu0 %v1262
  %1615 = vmatpush1.bf16.msra.mxu0 %v1261
  %1616 = vmatprep.subr.bf16.mxu0 0
  %1617 = vmatpush1.bf16.msra.mxu0 0
  %1618 = vmatprep.subr.bf16.mxu0 0
  %1619 = vmatpush1.bf16.msra.mxu0 0
  %1620 = vmatprep.subr.bf16.mxu0 0
  %1621 = vmatpush1.bf16.msra.mxu0 0
  %1622 = vmatprep.subr.bf16.mxu0 0
  %1623 = vmatpush1.bf16.msra.mxu0 0
  %1624 = vmatprep.subr.bf16.mxu0 0
  %1625 = vmatpush1.bf16.msra.mxu0 0
  %1626 = vmatprep.subr.bf16.mxu0 0
  %1627 = vmatpush1.bf16.msra.mxu0 0
  %1628 = vmatprep.subr.bf16.mxu0 0
  %1629 = vmatpush1.bf16.msra.mxu0 0
  %1630 = vmatprep.subr.bf16.mxu0 0
  %1631 = vmatpush1.bf16.msra.mxu0 0
  %1632 = vmatprep.mubr.bf16.mxu0 0
  %1633 = vmatmul.mubr.bf16.gmra.mrb[0].mxu0 %v213
  %v1634 = vpop.f32.mrb[0].mxu0
  %v1635 = vadd.f32 %v718, %v1634
  %v1636 = vpop.f32.mrb[0].mxu0
  %v1637 = vadd.f32 %v722, %v1636
  %v1638 = vpop.f32.mrb[0].mxu0
  %v1639 = vpop.f32.mrb[0].mxu0
  %1640 = vdwg.mxu0
  %1641 = vmatprep.subr.bf16.mxu0 %v1152
  %1642 = vmatpush1.bf16.msra.mxu0 %v1151
  %1643 = vmatprep.subr.bf16.mxu0 %v1168
  %1644 = vmatpush1.bf16.msra.mxu0 %v1167
  %1645 = vmatprep.subr.bf16.mxu0 %v1184
  %1646 = vmatpush1.bf16.msra.mxu0 %v1183
  %1647 = vmatprep.subr.bf16.mxu0 %v1200
  %1648 = vmatpush1.bf16.msra.mxu0 %v1199
  %1649 = vmatprep.subr.bf16.mxu0 %v1216
  %1650 = vmatpush1.bf16.msra.mxu0 %v1215
  %1651 = vmatprep.subr.bf16.mxu0 %v1232
  %1652 = vmatpush1.bf16.msra.mxu0 %v1231
  %1653 = vmatprep.subr.bf16.mxu0 %v1248
  %1654 = vmatpush1.bf16.msra.mxu0 %v1247
  %1655 = vmatprep.subr.bf16.mxu0 %v1264
  %1656 = vmatpush1.bf16.msra.mxu0 %v1263
  %1657 = vmatprep.subr.bf16.mxu0 0
  %1658 = vmatpush1.bf16.msra.mxu0 0
  %1659 = vmatprep.subr.bf16.mxu0 0
  %1660 = vmatpush1.bf16.msra.mxu0 0
  %1661 = vmatprep.subr.bf16.mxu0 0
  %1662 = vmatpush1.bf16.msra.mxu0 0
  %1663 = vmatprep.subr.bf16.mxu0 0
  %1664 = vmatpush1.bf16.msra.mxu0 0
  %1665 = vmatprep.subr.bf16.mxu0 0
  %1666 = vmatpush1.bf16.msra.mxu0 0
  %1667 = vmatprep.subr.bf16.mxu0 0
  %1668 = vmatpush1.bf16.msra.mxu0 0
  %1669 = vmatprep.subr.bf16.mxu0 0
  %1670 = vmatpush1.bf16.msra.mxu0 0
  %1671 = vmatprep.subr.bf16.mxu0 0
  %1672 = vmatpush1.bf16.msra.mxu0 0
  %1673 = vmatprep.mubr.bf16.mxu0 0
  %1674 = vmatmul.mubr.bf16.gmra.mrb[0].mxu0 %v213
  %v1675 = vpop.f32.mrb[0].mxu0
  %v1676 = vadd.f32 %v726, %v1675
  %v1677 = vpop.f32.mrb[0].mxu0
  %v1678 = vadd.f32 %v730, %v1677
  %v1679 = vpop.f32.mrb[0].mxu0
  %v1680 = vpop.f32.mrb[0].mxu0
  %1681 = vdwg.mxu0
  %1682 = vmatprep.subr.bf16.mxu0 %v1154
  %1683 = vmatpush1.bf16.msra.mxu0 %v1153
  %1684 = vmatprep.subr.bf16.mxu0 %v1170
  %1685 = vmatpush1.bf16.msra.mxu0 %v1169
  %1686 = vmatprep.subr.bf16.mxu0 %v1186
  %1687 = vmatpush1.bf16.msra.mxu0 %v1185
  %1688 = vmatprep.subr.bf16.mxu0 %v1202
  %1689 = vmatpush1.bf16.msra.mxu0 %v1201
  %1690 = vmatprep.subr.bf16.mxu0 %v1218
  %1691 = vmatpush1.bf16.msra.mxu0 %v1217
  %1692 = vmatprep.subr.bf16.mxu0 %v1234
  %1693 = vmatpush1.bf16.msra.mxu0 %v1233
  %1694 = vmatprep.subr.bf16.mxu0 %v1250
  %1695 = vmatpush1.bf16.msra.mxu0 %v1249
  %1696 = vmatprep.subr.bf16.mxu0 %v1266
  %1697 = vmatpush1.bf16.msra.mxu0 %v1265
  %1698 = vmatprep.subr.bf16.mxu0 0
  %1699 = vmatpush1.bf16.msra.mxu0 0
  %1700 = vmatprep.subr.bf16.mxu0 0
  %1701 = vmatpush1.bf16.msra.mxu0 0
  %1702 = vmatprep.subr.bf16.mxu0 0
  %1703 = vmatpush1.bf16.msra.mxu0 0
  %1704 = vmatprep.subr.bf16.mxu0 0
  %1705 = vmatpush1.bf16.msra.mxu0 0
  %1706 = vmatprep.subr.bf16.mxu0 0
  %1707 = vmatpush1.bf16.msra.mxu0 0
  %1708 = vmatprep.subr.bf16.mxu0 0
  %1709 = vmatpush1.bf16.msra.mxu0 0
  %1710 = vmatprep.subr.bf16.mxu0 0
  %1711 = vmatpush1.bf16.msra.mxu0 0
  %1712 = vmatprep.subr.bf16.mxu0 0
  %1713 = vmatpush1.bf16.msra.mxu0 0
  %1714 = vmatprep.mubr.bf16.mxu0 0
  %1715 = vmatmul.mubr.bf16.gmra.mrb[0].mxu0 %v213
  %v1716 = vpop.f32.mrb[0].mxu0
  %v1717 = vadd.f32 %v734, %v1716
  %v1718 = vpop.f32.mrb[0].mxu0
  %v1719 = vadd.f32 %v738, %v1718
  %v1720 = vpop.f32.mrb[0].mxu0
  %v1721 = vpop.f32.mrb[0].mxu0
  %1722 = vdwg.mxu0
  %v1723 = vmax.f32 %v1430, 0.0
  %v1724 = vmax.f32 %v1432, 0.0
  %v1725 = vmax.f32 %v1471, 0.0
  %v1726 = vmax.f32 %v1473, 0.0
  %v1727 = vmax.f32 %v1512, 0.0
  %v1728 = vmax.f32 %v1514, 0.0
  %v1729 = vmax.f32 %v1553, 0.0
  %v1730 = vmax.f32 %v1555, 0.0
  %v1731 = vmax.f32 %v1594, 0.0
  %v1732 = vmax.f32 %v1596, 0.0
  %v1733 = vmax.f32 %v1635, 0.0
  %v1734 = vmax.f32 %v1637, 0.0
  %v1735 = vmax.f32 %v1676, 0.0
  %v1736 = vmax.f32 %v1678, 0.0
  %v1737 = vmax.f32 %v1717, 0.0
  %v1738 = vmax.f32 %v1719, 0.0
  %1739 = vst [vmem:[%s12] sm:$0xff] %v1723
  %1740 = vst [vmem:[%s12 + $0x8] sm:$0xff] %v1724
  %1741 = vst [vmem:[%s12 + $0x10] sm:$0xff] %v1725
  %1742 = vst [vmem:[%s12 + $0x18] sm:$0xff] %v1726
  %1743 = vst [vmem:[%s12 + $0x20] sm:$0xff] %v1727
  %1744 = vst [vmem:[%s12 + $0x28] sm:$0xff] %v1728
  %1745 = vst [vmem:[%s12 + $0x30] sm:$0xff] %v1729
  %1746 = vst [vmem:[%s12 + $0x38] sm:$0xff] %v1730
  %1747 = vst [vmem:[%s12 + $0x40] sm:$0xff] %v1731
  %1748 = vst [vmem:[%s12 + $0x48] sm:$0xff] %v1732
  %1749 = vst [vmem:[%s12 + $0x50] sm:$0xff] %v1733
  %1750 = vst [vmem:[%s12 + $0x58] sm:$0xff] %v1734
  %1751 = vst [vmem:[%s12 + $0x60] sm:$0xff] %v1735
  %1752 = vst [vmem:[%s12 + $0x68] sm:$0xff] %v1736
  %1753 = vst [vmem:[%s12 + $0x70] sm:$0xff] %v1737
  %1754 = vst [vmem:[%s12 + $0x78] sm:$0xff] %v1738
  // Predicated region
  $region42: #{cxr_autoencoder_forward.10} parent=0 // pred_check
    _
  $region43: #{cxr_autoencoder_forward.10} parent=0 // pred_check_branch
    %1756 = sbr.rel (0) target = $region45
  $region44: #{cxr_autoencoder_forward.10} parent=0 // pred_region
    _
  $region45: #{cxr_autoencoder_forward.10} parent=0 // pred_fallthru
    _
  // Predicated region
  $region46: #{cxr_autoencoder_forward.10} parent=0 // pred_check
    _
  $region47: #{cxr_autoencoder_forward.10} parent=0 // pred_check_branch
    %1758 = sbr.rel (0) target = $region49
  $region48: #{cxr_autoencoder_forward.10} parent=0 // pred_region
    _
  $region49: #{cxr_autoencoder_forward.10} parent=0 // pred_fallthru
    _
  // Predicated region
  $region50: #{cxr_autoencoder_forward.10} parent=0 // pred_check
    _
  $region51: #{cxr_autoencoder_forward.10} parent=0 // pred_check_branch
    %1760 = sbr.rel (0) target = $region53
  $region52: #{cxr_autoencoder_forward.10} parent=0 // pred_region
    _
  $region53: #{cxr_autoencoder_forward.10} parent=0 // pred_fallthru
    _
  // Predicated region
  $region54: #{cxr_autoencoder_forward.10} parent=0 // pred_check
    _
  $region55: #{cxr_autoencoder_forward.10} parent=0 // pred_check_branch
    %1762 = sbr.rel (0) target = $region57
  $region56: #{cxr_autoencoder_forward.10} parent=0 // pred_region
    _
  $region57: #{cxr_autoencoder_forward.10} parent=0 // pred_fallthru
    _
  // Predicated region
  $region58: #{cxr_autoencoder_forward.10} parent=0 // pred_check
    _
  $region59: #{cxr_autoencoder_forward.10} parent=0 // pred_check_branch
    %1764 = sbr.rel (0) target = $region61
  $region60: #{cxr_autoencoder_forward.10} parent=0 // pred_region
    _
  $region61: #{cxr_autoencoder_forward.10} parent=0 // pred_fallthru
    _
  // Predicated region
  $region62: #{cxr_autoencoder_forward.10} parent=0 // pred_check
    _
  $region63: #{cxr_autoencoder_forward.10} parent=0 // pred_check_branch
    %1766 = sbr.rel (0) target = $region65
  $region64: #{cxr_autoencoder_forward.10} parent=0 // pred_region
    _
  $region65: #{cxr_autoencoder_forward.10} parent=0 // pred_fallthru
    _

// kernel: cxr_autoencoder_forward.12
$region0: #{cxr_autoencoder_forward.12}
  #allocation0 [shape = 'u32[]', space=smem, size = 0x4, offset = 0x4, fixed_abs, tag = 'smem constant byte address 0x4 - core index']
  #allocation1 [shape = 'u32[144,128]{1,0:T(1,128)}', space=vmem, size = 0x12000, scoped, tag = 'internal scratch']
  #allocation2 [shape = 'f32[256,128]{1,0:T(8,128)}', space=vmem, size = 0x20000, scoped, tag = 'scratch operand']
  %s0 = inlined_call_operand.vmem [shape: bf16[512,1152], index: 0, kind: input, shape index: {}]
  %s1 = inlined_call_operand.vmem [shape: bf16[1152,128], index: 1, kind: input, shape index: {}]
  %s2 = inlined_call_operand.vmem [shape: f32[1,128], index: 2, kind: input, shape index: {}]
  %s3 = inlined_call_operand.vmem [shape: f32[512,128], index: 3, kind: output, shape index: {}]
  %s4 = sld [smem:[#allocation0]]
  $region79: #{cxr_autoencoder_forward.12} parent=0
    _
  %s6 = ssub.s32 1, %s4
  %s7 = scalar_select 0, %s6, %s4
  $region1: #{cxr_autoencoder_forward.12} parent=0
    #allocation3 [shape = 'u8[393216]{0}', space=vmem, size = 0x60000, scoped, tag = 'input window, operand 0']
    loop: start=0, step=1, limit=8
    $region2: #{cxr_autoencoder_forward.12} parent=1 // loop_pre_header
      _
    $region3: #{cxr_autoencoder_forward.12} parent=1 // loop_header
      %s9 = sphi 0, %s13
      %p10 = scmp.ge.s32.totalorder %s9, 8
      %s16 = sphi 0, %s35
      %s17 = sphi 0, %s31
      %s18 = sphi 0, %s27
      %s19 = sphi 0, %s16
      %s20 = sphi 0, %s17
      %s21 = sphi 0, %s18
      %s22 = sphi 0, %s19
      %s23 = sphi 0, %s20
      %s24 = sphi 0, %s21
      %s40 = sphi 0, %s42
      %s43 = sphi 0, %s40
      %s44 = sphi 0, %s43
      %s60 = sphi 0, %s44
      %s68 = sphi 0, %s70
      %s71 = sphi 0, %s68
      %s72 = sphi 0, %s71
      %s88 = sphi 0, %s72
      %s94 = sphi 0, %s96
      %s97 = sphi 0, %s94
      %s98 = sphi 0, %s97
      %s114 = sphi 0, %s98
      %s122 = sphi 0, %s124
      %s125 = sphi 0, %s122
      %s126 = sphi 0, %s125
      %s142 = sphi 0, %s126
    $region4: #{cxr_autoencoder_forward.12} parent=1 // loop_header_branch
      %12 = sbr.rel (%p10) target = $region8
    $region5: #{cxr_autoencoder_forward.12} parent=1 // loop_body
      %s14 = ssub.s32 %s9, 1
      %s15 = ssub.s32 %s9, 2
      %s25 = sadd.s32 1, %s18
      %p26 = scmp.ge.s32.totalorder %s25, 3
      %s27 = scalar_select %p26, 0, %s25
      %s28 = sadd.s32 1, %s17
      %s29 = scalar_select %p26, %s28, %s17
      %p30 = scmp.ge.s32.totalorder %s29, 1
      %s31 = scalar_select %p30, 0, %s29
      %s32 = sadd.s32 1, %s16
      %s33 = scalar_select %p30, %s32, %s16
      %p34 = scmp.ge.s32.totalorder %s33, 2
      %s35 = scalar_select %p34, 0, %s33
      %s36 = ssub.s32 %s16, %s35
      %s37 = ssub.s32 %s18, %s27
      %s38 = sor.u32 %s36, %s37
      %p39 = scmp.eq.s32.totalorder %s38, 0
      %s41 = sadd.s32 %s40, 1
      %s42 = scalar_select %p39, %s40, %s41
      %p45 = pneg %p39
      %p46 = scmp.eq.s32.totalorder %s9, 5
      %p47 = por %p45, %p46
      %p48 = scmp.ne.s32.totalorder %s40, %s43
      %p49 = scmp.eq.s32.totalorder %s9, 0
      %p50 = por %p48, %p49
      %p51 = scmp.ne.s32.totalorder %s40, %s43
      %p52 = scmp.eq.s32.totalorder %s14, 5
      %p53 = por %p51, %p52
      %p54 = scmp.ne.s32.totalorder %s43, %s44
      %p55 = scmp.eq.s32.totalorder %s14, 0
      %p56 = por %p54, %p55
      %p57 = scmp.ne.s32.totalorder %s43, %s44
      %p58 = scmp.eq.s32.totalorder %s15, 5
      %p59 = por %p57, %p58
      %p61 = scmp.ne.s32.totalorder %s44, %s60
      %p62 = scmp.eq.s32.totalorder %s15, 0
      %p63 = por %p61, %p62
      %s64 = ssub.s32 %s18, %s27
      %s65 = ssub.s32 %s17, %s31
      %s66 = sor.u32 %s64, %s65
      %p67 = scmp.eq.s32.totalorder %s66, 0
      %s69 = sadd.s32 %s68, 1
      %s70 = scalar_select %p67, %s68, %s69
      %p73 = pneg %p67
      %p74 = scmp.eq.s32.totalorder %s9, 5
      %p75 = por %p73, %p74
      %p76 = scmp.ne.s32.totalorder %s68, %s71
      %p77 = scmp.eq.s32.totalorder %s9, 0
      %p78 = por %p76, %p77
      %p79 = scmp.ne.s32.totalorder %s68, %s71
      %p80 = scmp.eq.s32.totalorder %s14, 5
      %p81 = por %p79, %p80
      %p82 = scmp.ne.s32.totalorder %s71, %s72
      %p83 = scmp.eq.s32.totalorder %s14, 0
      %p84 = por %p82, %p83
      %p85 = scmp.ne.s32.totalorder %s71, %s72
      %p86 = scmp.eq.s32.totalorder %s15, 5
      %p87 = por %p85, %p86
      %p89 = scmp.ne.s32.totalorder %s72, %s88
      %p90 = scmp.eq.s32.totalorder %s15, 0
      %p91 = por %p89, %p90
      %s92 = ssub.s32 %s17, %s31
      %p93 = scmp.eq.s32.totalorder %s92, 0
      %s95 = sadd.s32 %s94, 1
      %s96 = scalar_select %p93, %s94, %s95
      %p99 = pneg %p93
      %p100 = scmp.eq.s32.totalorder %s9, 5
      %p101 = por %p99, %p100
      %p102 = scmp.ne.s32.totalorder %s94, %s97
      %p103 = scmp.eq.s32.totalorder %s9, 0
      %p104 = por %p102, %p103
      %p105 = scmp.ne.s32.totalorder %s94, %s97
      %p106 = scmp.eq.s32.totalorder %s14, 5
      %p107 = por %p105, %p106
      %p108 = scmp.ne.s32.totalorder %s97, %s98
      %p109 = scmp.eq.s32.totalorder %s14, 0
      %p110 = por %p108, %p109
      %p111 = scmp.ne.s32.totalorder %s97, %s98
      %p112 = scmp.eq.s32.totalorder %s15, 5
      %p113 = por %p111, %p112
      %p115 = scmp.ne.s32.totalorder %s98, %s114
      %p116 = scmp.eq.s32.totalorder %s15, 0
      %p117 = por %p115, %p116
      %s118 = ssub.s32 %s16, %s35
      %s119 = ssub.s32 %s17, %s31
      %s120 = sor.u32 %s118, %s119
      %p121 = scmp.eq.s32.totalorder %s120, 0
      %s123 = sadd.s32 %s122, 1
      %s124 = scalar_select %p121, %s122, %s123
      %p127 = pneg %p121
      %p128 = scmp.eq.s32.totalorder %s9, 5
      %p129 = por %p127, %p128
      %p130 = scmp.ne.s32.totalorder %s122, %s125
      %p131 = scmp.eq.s32.totalorder %s9, 0
      %p132 = por %p130, %p131
      %p133 = scmp.ne.s32.totalorder %s122, %s125
      %p134 = scmp.eq.s32.totalorder %s14, 5
      %p135 = por %p133, %p134
      %p136 = scmp.ne.s32.totalorder %s125, %s126
      %p137 = scmp.eq.s32.totalorder %s14, 0
      %p138 = por %p136, %p137
      %p139 = scmp.ne.s32.totalorder %s125, %s126
      %p140 = scmp.eq.s32.totalorder %s15, 5
      %p141 = por %p139, %p140
      %p143 = scmp.ne.s32.totalorder %s126, %s142
      %p144 = scmp.eq.s32.totalorder %s15, 0
      %p145 = por %p143, %p144
      %p146 = scmp.le.s32.totalorder 1, %s9
      %p147 = scmp.lt.s32.totalorder %s9, 7
      %p148 = pnand %p146, %p147
      %p149 = pneg %p148
      // Predicated region
      $region9: #{cxr_autoencoder_forward.12} parent=5 // pred_check
        _
      $region10: #{cxr_autoencoder_forward.12} parent=5 // pred_check_branch
        %151 = sbr.rel (%p148) target = $region12
      $region11: #{cxr_autoencoder_forward.12} parent=5 // pred_region
        %s152 = ssub.s32 %s9, 1
        // Predicated region
        $region13: #{cxr_autoencoder_forward.12} parent=11 // pred_check
          %p153 = pneg %p110
        $region14: #{cxr_autoencoder_forward.12} parent=11 // pred_check_branch
          %155 = sbr.rel (%p153) target = $region16
        $region15: #{cxr_autoencoder_forward.12} parent=11 // pred_region
          %p156 = scmp.lt.s32.totalorder %s20, 0
          %s157 = scalar_select %p156, %s20, 0
          %s158 = scalar_lea.vmem %s2, %s157
        $region16: #{cxr_autoencoder_forward.12} parent=11 // pred_fallthru
          _
      $region12: #{cxr_autoencoder_forward.12} parent=5 // pred_fallthru
        _
      %p159 = scmp.lt.s32.totalorder %s9, 6
      // Predicated region
      $region17: #{cxr_autoencoder_forward.12} parent=5 // pred_check
        %p160 = pneg %p159
      $region18: #{cxr_autoencoder_forward.12} parent=5 // pred_check_branch
        %162 = sbr.rel (%p160) target = $region20
      $region19: #{cxr_autoencoder_forward.12} parent=5 // pred_region
        // Predicated region
        $region21: #{cxr_autoencoder_forward.12} parent=19 // pred_check
          %p163 = pneg %p50
        $region22: #{cxr_autoencoder_forward.12} parent=19 // pred_check_branch
          %165 = sbr.rel (%p163) target = $region24
        $region23: #{cxr_autoencoder_forward.12} parent=19 // pred_region
          %s166 = sand.u32 %s40, 1
          %s167 = sand.u32 %s40, 1
          %s168 = smul.addr %s167, 384
          %s169 = scalar_lea.vmem [#allocation3], %s168
          %s170 = smul.u32 32, %s16
          %s171 = smul.u32 3, %s18
          %s172 = smul.addr %s170, 9
          %s173 = sadd.s32 %s171, %s172
          %s174 = smul.addr %s173, 4
          %s175 = scalar_lea.vmem %s0, %s174
          // Predicated region
          $region25: #{cxr_autoencoder_forward.12} parent=23 // pred_check
            _
          $region26: #{cxr_autoencoder_forward.12} parent=23 // pred_check_branch
            %177 = sbr.rel (0) target = $region28
          $region27: #{cxr_autoencoder_forward.12} parent=23 // pred_region
            // Predicated region
            $region29: #{cxr_autoencoder_forward.12} parent=27 // pred_check
              _
            $region30: #{cxr_autoencoder_forward.12} parent=27 // pred_check_branch
              %179 = sbr.rel (0) target = $region32
            $region31: #{cxr_autoencoder_forward.12} parent=27 // pred_region
              %s180 = scalar_lea.vmem %s175, 8
              %s181 = scalar_lea.vmem %s169, 8 [#allocation3]
              loop: start=0, step=1, limit=1
              $region33: #{cxr_autoencoder_forward.12} parent=31 // loop_pre_header
                _
              $region34: #{cxr_autoencoder_forward.12} parent=31 // loop_header
                %s183 = sphi 0, %s187
                %p184 = scmp.ge.s32.totalorder %s183, 1
                %s188 = sphi %s175, %s175
                %s189 = sphi %s169, %s169
              $region35: #{cxr_autoencoder_forward.12} parent=31 // loop_header_branch
                %186 = sbr.rel (%p184) target = $region39
              $region36: #{cxr_autoencoder_forward.12} parent=31 // loop_body
                %v190 = vld [vmem:[%s188] sm:$0xff]
                %191 = vst [vmem:[%s189] sm:$0xff] %v190
                %v192 = vld [vmem:[%s188 + $0x24] sm:$0xff]
                %193 = vst [vmem:[%s189 + $0xc] sm:$0xff] %v192
                %v194 = vld [vmem:[%s188 + $0x48] sm:$0xff]
                %195 = vst [vmem:[%s189 + $0x18] sm:$0xff] %v194
                %v196 = vld [vmem:[%s188 + $0x6c] sm:$0xff]
                %197 = vst [vmem:[%s189 + $0x24] sm:$0xff] %v196
                %v198 = vld [vmem:[%s188 + $0x90] sm:$0xff]
                %199 = vst [vmem:[%s189 + $0x30] sm:$0xff] %v198
                %v200 = vld [vmem:[%s188 + $0xb4] sm:$0xff]
                %201 = vst [vmem:[%s189 + $0x3c] sm:$0xff] %v200
                %v202 = vld [vmem:[%s188 + $0xd8] sm:$0xff]
                %203 = vst [vmem:[%s189 + $0x48] sm:$0xff] %v202
                %v204 = vld [vmem:[%s188 + $0xfc] sm:$0xff]
                %205 = vst [vmem:[%s189 + $0x54] sm:$0xff] %v204
                %v206 = vld [vmem:[%s188 + $0x120] sm:$0xff]
                %207 = vst [vmem:[%s189 + $0x60] sm:$0xff] %v206
                %v208 = vld [vmem:[%s188 + $0x144] sm:$0xff]
                %209 = vst [vmem:[%s189 + $0x6c] sm:$0xff] %v208
                %v210 = vld [vmem:[%s188 + $0x168] sm:$0xff]
                %211 = vst [vmem:[%s189 + $0x78] sm:$0xff] %v210
                %v212 = vld [vmem:[%s188 + $0x18c] sm:$0xff]
                %213 = vst [vmem:[%s189 + $0x84] sm:$0xff] %v212
                %v214 = vld [vmem:[%s188 + $0x1b0] sm:$0xff]
                %215 = vst [vmem:[%s189 + $0x90] sm:$0xff] %v214
                %v216 = vld [vmem:[%s188 + $0x1d4] sm:$0xff]
                %217 = vst [vmem:[%s189 + $0x9c] sm:$0xff] %v216
                %v218 = vld [vmem:[%s188 + $0x1f8] sm:$0xff]
                %219 = vst [vmem:[%s189 + $0xa8] sm:$0xff] %v218
                %v220 = vld [vmem:[%s188 + $0x21c] sm:$0xff]
                %221 = vst [vmem:[%s189 + $0xb4] sm:$0xff] %v220
                %v222 = vld [vmem:[%s188 + $0x240] sm:$0xff]
                %223 = vst [vmem:[%s189 + $0xc0] sm:$0xff] %v222
                %v224 = vld [vmem:[%s188 + $0x264] sm:$0xff]
                %225 = vst [vmem:[%s189 + $0xcc] sm:$0xff] %v224
                %v226 = vld [vmem:[%s188 + $0x288] sm:$0xff]
                %227 = vst [vmem:[%s189 + $0xd8] sm:$0xff] %v226
                %v228 = vld [vmem:[%s188 + $0x2ac] sm:$0xff]
                %229 = vst [vmem:[%s189 + $0xe4] sm:$0xff] %v228
                %v230 = vld [vmem:[%s188 + $0x2d0] sm:$0xff]
                %231 = vst [vmem:[%s189 + $0xf0] sm:$0xff] %v230
                %v232 = vld [vmem:[%s188 + $0x2f4] sm:$0xff]
                %233 = vst [vmem:[%s189 + $0xfc] sm:$0xff] %v232
                %v234 = vld [vmem:[%s188 + $0x318] sm:$0xff]
                %235 = vst [vmem:[%s189 + $0x108] sm:$0xff] %v234
                %v236 = vld [vmem:[%s188 + $0x33c] sm:$0xff]
                %237 = vst [vmem:[%s189 + $0x114] sm:$0xff] %v236
                %v238 = vld [vmem:[%s188 + $0x360] sm:$0xff]
                %239 = vst [vmem:[%s189 + $0x120] sm:$0xff] %v238
                %v240 = vld [vmem:[%s188 + $0x384] sm:$0xff]
                %241 = vst [vmem:[%s189 + $0x12c] sm:$0xff] %v240
                %v242 = vld [vmem:[%s188 + $0x3a8] sm:$0xff]
                %243 = vst [vmem:[%s189 + $0x138] sm:$0xff] %v242
                %v244 = vld [vmem:[%s188 + $0x3cc] sm:$0xff]
                %245 = vst [vmem:[%s189 + $0x144] sm:$0xff] %v244
                %v246 = vld [vmem:[%s188 + $0x3f0] sm:$0xff]
                %247 = vst [vmem:[%s189 + $0x150] sm:$0xff] %v246
                %v248 = vld [vmem:[%s188 + $0x414] sm:$0xff]
                %249 = vst [vmem:[%s189 + $0x15c] sm:$0xff] %v248
                %v250 = vld [vmem:[%s188 + $0x438] sm:$0xff]
                %251 = vst [vmem:[%s189 + $0x168] sm:$0xff] %v250
                %v252 = vld [vmem:[%s188 + $0x45c] sm:$0xff]
                %253 = vst [vmem:[%s189 + $0x174] sm:$0xff] %v252
              $region37: #{cxr_autoencoder_forward.12} parent=31 // loop_footer
                %s187 = sadd.s32 1, %s183
              $region38: #{cxr_autoencoder_forward.12} parent=31 // loop_footer_branch
                %182 = sbr.rel target = $region34
              $region39: #{cxr_autoencoder_forward.12} parent=31 // loop_exit
                _
              loop: start=0, step=1, limit=1
              $region40: #{cxr_autoencoder_forward.12} parent=31 // loop_pre_header
                _
              $region41: #{cxr_autoencoder_forward.12} parent=31 // loop_header
                %s256 = sphi 0, %s260
                %p257 = scmp.ge.s32.totalorder %s256, 1
                %s261 = sphi %s180, %s180
                %s262 = sphi %s181, %s181
              $region42: #{cxr_autoencoder_forward.12} parent=31 // loop_header_branch
                %259 = sbr.rel (%p257) target = $region46
              $region43: #{cxr_autoencoder_forward.12} parent=31 // loop_body
                %v263 = vld [vmem:[%s261] sm:$0xf]
                %264 = vst [vmem:[%s262] sm:$0xf] %v263
                %v265 = vld [vmem:[%s261 + $0x24] sm:$0xf]
                %266 = vst [vmem:[%s262 + $0xc] sm:$0xf] %v265
                %v267 = vld [vmem:[%s261 + $0x48] sm:$0xf]
                %268 = vst [vmem:[%s262 + $0x18] sm:$0xf] %v267
                %v269 = vld [vmem:[%s261 + $0x6c] sm:$0xf]
                %270 = vst [vmem:[%s262 + $0x24] sm:$0xf] %v269
                %v271 = vld [vmem:[%s261 + $0x90] sm:$0xf]
                %272 = vst [vmem:[%s262 + $0x30] sm:$0xf] %v271
                %v273 = vld [vmem:[%s261 + $0xb4] sm:$0xf]
                %274 = vst [vmem:[%s262 + $0x3c] sm:$0xf] %v273
                %v275 = vld [vmem:[%s261 + $0xd8] sm:$0xf]
                %276 = vst [vmem:[%s262 + $0x48] sm:$0xf] %v275
                %v277 = vld [vmem:[%s261 + $0xfc] sm:$0xf]
                %278 = vst [vmem:[%s262 + $0x54] sm:$0xf] %v277
                %v279 = vld [vmem:[%s261 + $0x120] sm:$0xf]
                %280 = vst [vmem:[%s262 + $0x60] sm:$0xf] %v279
                %v281 = vld [vmem:[%s261 + $0x144] sm:$0xf]
                %282 = vst [vmem:[%s262 + $0x6c] sm:$0xf] %v281
                %v283 = vld [vmem:[%s261 + $0x168] sm:$0xf]
                %284 = vst [vmem:[%s262 + $0x78] sm:$0xf] %v283
                %v285 = vld [vmem:[%s261 + $0x18c] sm:$0xf]
                %286 = vst [vmem:[%s262 + $0x84] sm:$0xf] %v285
                %v287 = vld [vmem:[%s261 + $0x1b0] sm:$0xf]
                %288 = vst [vmem:[%s262 + $0x90] sm:$0xf] %v287
                %v289 = vld [vmem:[%s261 + $0x1d4] sm:$0xf]
                %290 = vst [vmem:[%s262 + $0x9c] sm:$0xf] %v289
                %v291 = vld [vmem:[%s261 + $0x1f8] sm:$0xf]
                %292 = vst [vmem:[%s262 + $0xa8] sm:$0xf] %v291
                %v293 = vld [vmem:[%s261 + $0x21c] sm:$0xf]
                %294 = vst [vmem:[%s262 + $0xb4] sm:$0xf] %v293
                %v295 = vld [vmem:[%s261 + $0x240] sm:$0xf]
                %296 = vst [vmem:[%s262 + $0xc0] sm:$0xf] %v295
                %v297 = vld [vmem:[%s261 + $0x264] sm:$0xf]
                %298 = vst [vmem:[%s262 + $0xcc] sm:$0xf] %v297
                %v299 = vld [vmem:[%s261 + $0x288] sm:$0xf]
                %300 = vst [vmem:[%s262 + $0xd8] sm:$0xf] %v299
                %v301 = vld [vmem:[%s261 + $0x2ac] sm:$0xf]
                %302 = vst [vmem:[%s262 + $0xe4] sm:$0xf] %v301
                %v303 = vld [vmem:[%s261 + $0x2d0] sm:$0xf]
                %304 = vst [vmem:[%s262 + $0xf0] sm:$0xf] %v303
                %v305 = vld [vmem:[%s261 + $0x2f4] sm:$0xf]
                %306 = vst [vmem:[%s262 + $0xfc] sm:$0xf] %v305
                %v307 = vld [vmem:[%s261 + $0x318] sm:$0xf]
                %308 = vst [vmem:[%s262 + $0x108] sm:$0xf] %v307
                %v309 = vld [vmem:[%s261 + $0x33c] sm:$0xf]
                %310 = vst [vmem:[%s262 + $0x114] sm:$0xf] %v309
                %v311 = vld [vmem:[%s261 + $0x360] sm:$0xf]
                %312 = vst [vmem:[%s262 + $0x120] sm:$0xf] %v311
                %v313 = vld [vmem:[%s261 + $0x384] sm:$0xf]
                %314 = vst [vmem:[%s262 + $0x12c] sm:$0xf] %v313
                %v315 = vld [vmem:[%s261 + $0x3a8] sm:$0xf]
                %316 = vst [vmem:[%s262 + $0x138] sm:$0xf] %v315
                %v317 = vld [vmem:[%s261 + $0x3cc] sm:$0xf]
                %318 = vst [vmem:[%s262 + $0x144] sm:$0xf] %v317
                %v319 = vld [vmem:[%s261 + $0x3f0] sm:$0xf]
                %320 = vst [vmem:[%s262 + $0x150] sm:$0xf] %v319
                %v321 = vld [vmem:[%s261 + $0x414] sm:$0xf]
                %322 = vst [vmem:[%s262 + $0x15c] sm:$0xf] %v321
                %v323 = vld [vmem:[%s261 + $0x438] sm:$0xf]
                %324 = vst [vmem:[%s262 + $0x168] sm:$0xf] %v323
                %v325 = vld [vmem:[%s261 + $0x45c] sm:$0xf]
                %326 = vst [vmem:[%s262 + $0x174] sm:$0xf] %v325
              $region44: #{cxr_autoencoder_forward.12} parent=31 // loop_footer
                %s260 = sadd.s32 1, %s256
              $region45: #{cxr_autoencoder_forward.12} parent=31 // loop_footer_branch
                %255 = sbr.rel target = $region41
              $region46: #{cxr_autoencoder_forward.12} parent=31 // loop_exit
                _
            $region32: #{cxr_autoencoder_forward.12} parent=27 // pred_fallthru
              _
          $region28: #{cxr_autoencoder_forward.12} parent=23 // pred_fallthru
            _
          %327 = vnop
        $region24: #{cxr_autoencoder_forward.12} parent=19 // pred_fallthru
          _
        // Predicated region
        $region47: #{cxr_autoencoder_forward.12} parent=19 // pred_check
          %p328 = pneg %p78
        $region48: #{cxr_autoencoder_forward.12} parent=19 // pred_check_branch
          %330 = sbr.rel (%p328) target = $region50
        $region49: #{cxr_autoencoder_forward.12} parent=19 // pred_region
          %s331 = smul.u32 48, %s18
          %p332 = scmp.lt.s32.totalorder %s331, 143
          %s333 = scalar_select %p332, %s331, 143
          %p334 = scmp.lt.s32.totalorder %s17, 0
          %s335 = scalar_select %p334, %s17, 0
          %s336 = sadd.s32 %s335, %s333
          %s337 = smul.addr %s336, 4
          %s338 = scalar_lea.vmem %s1, %s337
          %s339 = smul.u32 48, %s18
        $region50: #{cxr_autoencoder_forward.12} parent=19 // pred_fallthru
          _
      $region20: #{cxr_autoencoder_forward.12} parent=5 // pred_fallthru
        _
      %p340 = scmp.le.s32.totalorder 1, %s9
      %p341 = scmp.lt.s32.totalorder %s9, 7
      %p342 = pnand %p340, %p341
      %p343 = pneg %p342
      // Predicated region
      $region51: #{cxr_autoencoder_forward.12} parent=5 // pred_check
        _
      $region52: #{cxr_autoencoder_forward.12} parent=5 // pred_check_branch
        %345 = sbr.rel (%p342) target = $region54
      $region53: #{cxr_autoencoder_forward.12} parent=5 // pred_region
        %s346 = ssub.s32 %s9, 1
        %s347 = sand.u32 %s43, 1
        %s348 = sand.u32 %s43, 1
        %s349 = smul.addr %s348, 384
        %s350 = scalar_lea.vmem [#allocation3], %s349
        // Predicated region
        $region55: #{cxr_autoencoder_forward.12} parent=53 // pred_check
          %p351 = pneg %p56
        $region56: #{cxr_autoencoder_forward.12} parent=53 // pred_check_branch
          %353 = sbr.rel (%p351) target = $region58
        $region57: #{cxr_autoencoder_forward.12} parent=53 // pred_region
          _
        $region58: #{cxr_autoencoder_forward.12} parent=53 // pred_fallthru
          _
        %s354 = sand.u32 %s43, 1
        %s355 = sand.u32 %s43, 1
        %s356 = smul.addr %s355, 384
        %s357 = scalar_lea.vmem [#allocation3], %s356
        %p358 = pneg %p56
        %p359 = pneg %p53
        %s360 = smul.u32 48, %s21
        %p361 = scmp.lt.s32.totalorder %s360, 143
        %s362 = scalar_select %p361, %s360, 143
        %p363 = scmp.lt.s32.totalorder %s20, 0
        %s364 = scalar_select %p363, %s20, 0
        %s365 = sadd.s32 %s364, %s362
        %s366 = smul.addr %s365, 4
        %s367 = scalar_lea.vmem %s1, %s366
        %p368 = pneg %p84
        %p369 = pneg %p81
        %p370 = scmp.lt.s32.totalorder %s20, 0
        %s371 = scalar_select %p370, %s20, 0
        %s372 = scalar_lea.vmem %s2, %s371
        %p373 = pneg %p110
        %p374 = pneg %p107
        %p375 = pneg %p138
        %p376 = pneg %p135
        %s377 = smul.u32 32, %s19
        %p378 = scmp.lt.s32.totalorder %s377, 63
        %s379 = scalar_select %p378, %s377, 63
        %p380 = scmp.lt.s32.totalorder %s20, 0
        %s381 = scalar_select %p380, %s20, 0
        %s382 = sadd.s32 %s381, %s379
        %s383 = smul.addr %s382, 8
        %s384 = scalar_lea.vmem %s3, %s383
        %s385 = smul.u32 32, %s19
        %s386 = smul.u32 3, %s21
        %s387 = smul.u32 48, %s21
        %p388 = scmp.lt.s32.totalorder %s387, 143
        %s389 = scalar_select %p388, %s387, 143
        %p390 = scmp.lt.s32.totalorder %s20, 0
        %s391 = scalar_select %p390, %s20, 0
        %s392 = sadd.s32 %s391, %s389
        %s393 = smul.addr %s392, 4
        %s394 = scalar_lea.vmem %s1, %s393
        %s395 = smul.u32 48, %s21
        %p396 = scmp.lt.s32.totalorder %s20, 0
        %s397 = scalar_select %p396, %s20, 0
        %s398 = scalar_lea.vmem %s2, %s397
        %s399 = smul.u32 32, %s19
        %p400 = scmp.lt.s32.totalorder %s399, 63
        %s401 = scalar_select %p400, %s399, 63
        %p402 = scmp.lt.s32.totalorder %s20, 0
        %s403 = scalar_select %p402, %s20, 0
        %s404 = sadd.s32 %s403, %s401
        %s405 = smul.addr %s404, 8
        %s406 = scalar_lea.vmem %s3, %s405
        %s407 = smul.u32 32, %s19
        %p409 = scmp.eq.s32.totalorder %s21, 0
        // Predicated region
        $region59: #{cxr_autoencoder_forward.12} parent=53 // pred_check
          %p410 = pneg %p409
        $region60: #{cxr_autoencoder_forward.12} parent=53 // pred_check_branch
          %412 = sbr.rel (%p410) target = $region62
        $region61: #{cxr_autoencoder_forward.12} parent=53 // pred_region
          %413 = vst [vmem:[#allocation2] sm:$0xff] 0.0
          %414 = vst [vmem:[#allocation2 + $0x8] sm:$0xff] 0.0
          %415 = vst [vmem:[#allocation2 + $0x10] sm:$0xff] 0.0
          %416 = vst [vmem:[#allocation2 + $0x18] sm:$0xff] 0.0
          %417 = vst [vmem:[#allocation2 + $0x20] sm:$0xff] 0.0
          %418 = vst [vmem:[#allocation2 + $0x28] sm:$0xff] 0.0
          %419 = vst [vmem:[#allocation2 + $0x30] sm:$0xff] 0.0
          %420 = vst [vmem:[#allocation2 + $0x38] sm:$0xff] 0.0
          %421 = vst [vmem:[#allocation2 + $0x40] sm:$0xff] 0.0
          %422 = vst [vmem:[#allocation2 + $0x48] sm:$0xff] 0.0
          %423 = vst [vmem:[#allocation2 + $0x50] sm:$0xff] 0.0
          %424 = vst [vmem:[#allocation2 + $0x58] sm:$0xff] 0.0
          %425 = vst [vmem:[#allocation2 + $0x60] sm:$0xff] 0.0
          %426 = vst [vmem:[#allocation2 + $0x68] sm:$0xff] 0.0
          %427 = vst [vmem:[#allocation2 + $0x70] sm:$0xff] 0.0
          %428 = vst [vmem:[#allocation2 + $0x78] sm:$0xff] 0.0
          %429 = vst [vmem:[#allocation2 + $0x80] sm:$0xff] 0.0
          %430 = vst [vmem:[#allocation2 + $0x88] sm:$0xff] 0.0
          %431 = vst [vmem:[#allocation2 + $0x90] sm:$0xff] 0.0
          %432 = vst [vmem:[#allocation2 + $0x98] sm:$0xff] 0.0
          %433 = vst [vmem:[#allocation2 + $0xa0] sm:$0xff] 0.0
          %434 = vst [vmem:[#allocation2 + $0xa8] sm:$0xff] 0.0
          %435 = vst [vmem:[#allocation2 + $0xb0] sm:$0xff] 0.0
          %436 = vst [vmem:[#allocation2 + $0xb8] sm:$0xff] 0.0
          %437 = vst [vmem:[#allocation2 + $0xc0] sm:$0xff] 0.0
          %438 = vst [vmem:[#allocation2 + $0xc8] sm:$0xff] 0.0
          %439 = vst [vmem:[#allocation2 + $0xd0] sm:$0xff] 0.0
          %440 = vst [vmem:[#allocation2 + $0xd8] sm:$0xff] 0.0
          %441 = vst [vmem:[#allocation2 + $0xe0] sm:$0xff] 0.0
          %442 = vst [vmem:[#allocation2 + $0xe8] sm:$0xff] 0.0
          %443 = vst [vmem:[#allocation2 + $0xf0] sm:$0xff] 0.0
          %444 = vst [vmem:[#allocation2 + $0xf8] sm:$0xff] 0.0
        $region62: #{cxr_autoencoder_forward.12} parent=53 // pred_fallthru
          _
        %v445 = vld [vmem:[#allocation2] sm:$0xff]
        %v446 = vld [vmem:[#allocation2 + $0x8] sm:$0xff]
        %v447 = vld [vmem:[#allocation2 + $0x10] sm:$0xff]
        %v448 = vld [vmem:[#allocation2 + $0x18] sm:$0xff]
        %v449 = vld [vmem:[#allocation2 + $0x20] sm:$0xff]
        %v450 = vld [vmem:[#allocation2 + $0x28] sm:$0xff]
        %v451 = vld [vmem:[#allocation2 + $0x30] sm:$0xff]
        %v452 = vld [vmem:[#allocation2 + $0x38] sm:$0xff]
        %v453 = vld [vmem:[#allocation2 + $0x40] sm:$0xff]
        %v454 = vld [vmem:[#allocation2 + $0x48] sm:$0xff]
        %v455 = vld [vmem:[#allocation2 + $0x50] sm:$0xff]
        %v456 = vld [vmem:[#allocation2 + $0x58] sm:$0xff]
        %v457 = vld [vmem:[#allocation2 + $0x60] sm:$0xff]
        %v458 = vld [vmem:[#allocation2 + $0x68] sm:$0xff]
        %v459 = vld [vmem:[#allocation2 + $0x70] sm:$0xff]
        %v460 = vld [vmem:[#allocation2 + $0x78] sm:$0xff]
        %v461 = vld [vmem:[#allocation2 + $0x80] sm:$0xff]
        %v462 = vld [vmem:[#allocation2 + $0x88] sm:$0xff]
        %v463 = vld [vmem:[#allocation2 + $0x90] sm:$0xff]
        %v464 = vld [vmem:[#allocation2 + $0x98] sm:$0xff]
        %v465 = vld [vmem:[#allocation2 + $0xa0] sm:$0xff]
        %v466 = vld [vmem:[#allocation2 + $0xa8] sm:$0xff]
        %v467 = vld [vmem:[#allocation2 + $0xb0] sm:$0xff]
        %v468 = vld [vmem:[#allocation2 + $0xb8] sm:$0xff]
        %v469 = vld [vmem:[#allocation2 + $0xc0] sm:$0xff]
        %v470 = vld [vmem:[#allocation2 + $0xc8] sm:$0xff]
        %v471 = vld [vmem:[#allocation2 + $0xd0] sm:$0xff]
        %v472 = vld [vmem:[#allocation2 + $0xd8] sm:$0xff]
        %v473 = vld [vmem:[#allocation2 + $0xe0] sm:$0xff]
        %v474 = vld [vmem:[#allocation2 + $0xe8] sm:$0xff]
        %v475 = vld [vmem:[#allocation2 + $0xf0] sm:$0xff]
        %v476 = vld [vmem:[#allocation2 + $0xf8] sm:$0xff]
        %v477 = vld [vmem:[%s350] sm:$0xff]
        %v478 = vld [vmem:[%s350 + $0x8] sm:$0xf]
        %v479 = vld [vmem:[%s350 + $0xc] sm:$0xff]
        %v480 = vld [vmem:[%s350 + $0x14] sm:$0xf]
        %v481 = vld [vmem:[%s350 + $0x18] sm:$0xff]
        %v482 = vld [vmem:[%s350 + $0x20] sm:$0xf]
        %v483 = vld [vmem:[%s350 + $0x24] sm:$0xff]
        %v484 = vld [vmem:[%s350 + $0x2c] sm:$0xf]
        %v485 = vld [vmem:[%s350 + $0x30] sm:$0xff]
        %v486 = vld [vmem:[%s350 + $0x38] sm:$0xf]
        %v487 = vld [vmem:[%s350 + $0x3c] sm:$0xff]
        %v488 = vld [vmem:[%s350 + $0x44] sm:$0xf]
        %v489 = vld [vmem:[%s350 + $0x48] sm:$0xff]
        %v490 = vld [vmem:[%s350 + $0x50] sm:$0xf]
        %v491 = vld [vmem:[%s350 + $0x54] sm:$0xff]
        %v492 = vld [vmem:[%s350 + $0x5c] sm:$0xf]
        %v493 = vld [vmem:[%s350 + $0x60] sm:$0xff]
        %v494 = vld [vmem:[%s350 + $0x68] sm:$0xf]
        %v495 = vld [vmem:[%s350 + $0x6c] sm:$0xff]
        %v496 = vld [vmem:[%s350 + $0x74] sm:$0xf]
        %v497 = vld [vmem:[%s350 + $0x78] sm:$0xff]
        %v498 = vld [vmem:[%s350 + $0x80] sm:$0xf]
        %v499 = vld [vmem:[%s350 + $0x84] sm:$0xff]
        %v500 = vld [vmem:[%s350 + $0x8c] sm:$0xf]
        %v501 = vld [vmem:[%s350 + $0x90] sm:$0xff]
        %v502 = vld [vmem:[%s350 + $0x98] sm:$0xf]
        %v503 = vld [vmem:[%s350 + $0x9c] sm:$0xff]
        %v504 = vld [vmem:[%s350 + $0xa4] sm:$0xf]
        %v505 = vld [vmem:[%s350 + $0xa8] sm:$0xff]
        %v506 = vld [vmem:[%s350 + $0xb0] sm:$0xf]
        %v507 = vld [vmem:[%s350 + $0xb4] sm:$0xff]
        %v508 = vld [vmem:[%s350 + $0xbc] sm:$0xf]
        %v509 = vld [vmem:[%s350 + $0xc0] sm:$0xff]
        %v510 = vld [vmem:[%s350 + $0xc8] sm:$0xf]
        %v511 = vld [vmem:[%s350 + $0xcc] sm:$0xff]
        %v512 = vld [vmem:[%s350 + $0xd4] sm:$0xf]
        %v513 = vld [vmem:[%s350 + $0xd8] sm:$0xff]
        %v514 = vld [vmem:[%s350 + $0xe0] sm:$0xf]
        %v515 = vld [vmem:[%s350 + $0xe4] sm:$0xff]
        %v516 = vld [vmem:[%s350 + $0xec] sm:$0xf]
        %v517 = vld [vmem:[%s350 + $0xf0] sm:$0xff]
        %v518 = vld [vmem:[%s350 + $0xf8] sm:$0xf]
        %v519 = vld [vmem:[%s350 + $0xfc] sm:$0xff]
        %v520 = vld [vmem:[%s350 + $0x104] sm:$0xf]
        %v521 = vld [vmem:[%s350 + $0x108] sm:$0xff]
        %v522 = vld [vmem:[%s350 + $0x110] sm:$0xf]
        %v523 = vld [vmem:[%s350 + $0x114] sm:$0xff]
        %v524 = vld [vmem:[%s350 + $0x11c] sm:$0xf]
        %v525 = vld [vmem:[%s350 + $0x120] sm:$0xff]
        %v526 = vld [vmem:[%s350 + $0x128] sm:$0xf]
        %v527 = vld [vmem:[%s350 + $0x12c] sm:$0xff]
        %v528 = vld [vmem:[%s350 + $0x134] sm:$0xf]
        %v529 = vld [vmem:[%s350 + $0x138] sm:$0xff]
        %v530 = vld [vmem:[%s350 + $0x140] sm:$0xf]
        %v531 = vld [vmem:[%s350 + $0x144] sm:$0xff]
        %v532 = vld [vmem:[%s350 + $0x14c] sm:$0xf]
        %v533 = vld [vmem:[%s350 + $0x150] sm:$0xff]
        %v534 = vld [vmem:[%s350 + $0x158] sm:$0xf]
        %v535 = vld [vmem:[%s350 + $0x15c] sm:$0xff]
        %v536 = vld [vmem:[%s350 + $0x164] sm:$0xf]
        %v537 = vld [vmem:[%s350 + $0x168] sm:$0xff]
        %v538 = vld [vmem:[%s350 + $0x170] sm:$0xf]
        %v539 = vld [vmem:[%s350 + $0x174] sm:$0xff]
        %v540 = vld [vmem:[%s350 + $0x17c] sm:$0xf]
        %v541 = vld [vmem:[%s394] sm:$0xf]
        %v542 = vld [vmem:[%s394 + $0x4] sm:$0xf]
        %v543 = vld [vmem:[%s394 + $0x8] sm:$0xf]
        %v544 = vld [vmem:[%s394 + $0xc] sm:$0xf]
        %v545 = vld [vmem:[%s394 + $0x10] sm:$0xf]
        %v546 = vld [vmem:[%s394 + $0x14] sm:$0xf]
        %v547 = vld [vmem:[%s394 + $0x18] sm:$0xf]
        %v548 = vld [vmem:[%s394 + $0x1c] sm:$0xf]
        %v549 = vld [vmem:[%s394 + $0x20] sm:$0xf]
        %v550 = vld [vmem:[%s394 + $0x24] sm:$0xf]
        %v551 = vld [vmem:[%s394 + $0x28] sm:$0xf]
        %v552 = vld [vmem:[%s394 + $0x2c] sm:$0xf]
        %v553 = vld [vmem:[%s394 + $0x30] sm:$0xf]
        %v554 = vld [vmem:[%s394 + $0x34] sm:$0xf]
        %v555 = vld [vmem:[%s394 + $0x38] sm:$0xf]
        %v556 = vld [vmem:[%s394 + $0x3c] sm:$0xf]
        %v557 = vld [vmem:[%s394 + $0x40] sm:$0xf]
        %v558 = vld [vmem:[%s394 + $0x44] sm:$0xf]
        %v559 = vld [vmem:[%s394 + $0x48] sm:$0xf]
        %v560 = vld [vmem:[%s394 + $0x4c] sm:$0xf]
        %v561 = vld [vmem:[%s394 + $0x50] sm:$0xf]
        %v562 = vld [vmem:[%s394 + $0x54] sm:$0xf]
        %v563 = vld [vmem:[%s394 + $0x58] sm:$0xf]
        %v564 = vld [vmem:[%s394 + $0x5c] sm:$0xf]
        %v565 = vld [vmem:[%s394 + $0x60] sm:$0xf]
        %v566 = vld [vmem:[%s394 + $0x64] sm:$0xf]
        %v567 = vld [vmem:[%s394 + $0x68] sm:$0xf]
        %v568 = vld [vmem:[%s394 + $0x6c] sm:$0xf]
        %v569 = vld [vmem:[%s394 + $0x70] sm:$0xf]
        %v570 = vld [vmem:[%s394 + $0x74] sm:$0xf]
        %v571 = vld [vmem:[%s394 + $0x78] sm:$0xf]
        %v572 = vld [vmem:[%s394 + $0x7c] sm:$0xf]
        %v573 = vld [vmem:[%s394 + $0x80] sm:$0xf]
        %v574 = vld [vmem:[%s394 + $0x84] sm:$0xf]
        %v575 = vld [vmem:[%s394 + $0x88] sm:$0xf]
        %v576 = vld [vmem:[%s394 + $0x8c] sm:$0xf]
        %v577 = vld [vmem:[%s394 + $0x90] sm:$0xf]
        %v578 = vld [vmem:[%s394 + $0x94] sm:$0xf]
        %v579 = vld [vmem:[%s394 + $0x98] sm:$0xf]
        %v580 = vld [vmem:[%s394 + $0x9c] sm:$0xf]
        %v581 = vld [vmem:[%s394 + $0xa0] sm:$0xf]
        %v582 = vld [vmem:[%s394 + $0xa4] sm:$0xf]
        %v583 = vld [vmem:[%s394 + $0xa8] sm:$0xf]
        %v584 = vld [vmem:[%s394 + $0xac] sm:$0xf]
        %v585 = vld [vmem:[%s394 + $0xb0] sm:$0xf]
        %v586 = vld [vmem:[%s394 + $0xb4] sm:$0xf]
        %v587 = vld [vmem:[%s394 + $0xb8] sm:$0xf]
        %v588 = vld [vmem:[%s394 + $0xbc] sm:$0xf]
        %v653 = vunpack.c.l.b16 %v477
        %v654 = vunpack.c.h.b16 %v477
        %v655 = vunpack.c.l.b16 %v478
        %v656 = vunpack.c.l.b16 %v479
        %v657 = vunpack.c.h.b16 %v479
        %v658 = vunpack.c.l.b16 %v480
        %v659 = vunpack.c.l.b16 %v481
        %v660 = vunpack.c.h.b16 %v481
        %v661 = vunpack.c.l.b16 %v482
        %v662 = vunpack.c.l.b16 %v483
        %v663 = vunpack.c.h.b16 %v483
        %v664 = vunpack.c.l.b16 %v484
        %v665 = vunpack.c.l.b16 %v485
        %v666 = vunpack.c.h.b16 %v485
        %v667 = vunpack.c.l.b16 %v486
        %v668 = vunpack.c.l.b16 %v487
        %v669 = vunpack.c.h.b16 %v487
        %v670 = vunpack.c.l.b16 %v488
        %v671 = vunpack.c.l.b16 %v489
        %v672 = vunpack.c.h.b16 %v489
        %v673 = vunpack.c.l.b16 %v490
        %v674 = vunpack.c.l.b16 %v491
        %v675 = vunpack.c.h.b16 %v491
        %v676 = vunpack.c.l.b16 %v492
        %v677 = vunpack.c.l.b16 %v493
        %v678 = vunpack.c.h.b16 %v493
        %v679 = vunpack.c.l.b16 %v494
        %v680 = vunpack.c.l.b16 %v495
        %v681 = vunpack.c.h.b16 %v495
        %v682 = vunpack.c.l.b16 %v496
        %v683 = vunpack.c.l.b16 %v497
        %v684 = vunpack.c.h.b16 %v497
        %v685 = vunpack.c.l.b16 %v498
        %v686 = vunpack.c.l.b16 %v499
        %v687 = vunpack.c.h.b16 %v499
        %v688 = vunpack.c.l.b16 %v500
        %v689 = vunpack.c.l.b16 %v501
        %v690 = vunpack.c.h.b16 %v501
        %v691 = vunpack.c.l.b16 %v502
        %v692 = vunpack.c.l.b16 %v503
        %v693 = vunpack.c.h.b16 %v503
        %v694 = vunpack.c.l.b16 %v504
        %v695 = vunpack.c.l.b16 %v505
        %v696 = vunpack.c.h.b16 %v505
        %v697 = vunpack.c.l.b16 %v506
        %v698 = vunpack.c.l.b16 %v507
        %v699 = vunpack.c.h.b16 %v507
        %v700 = vunpack.c.l.b16 %v508
        %v701 = vunpack.c.l.b16 %v509
        %v702 = vunpack.c.h.b16 %v509
        %v703 = vunpack.c.l.b16 %v510
        %v704 = vunpack.c.l.b16 %v511
        %v705 = vunpack.c.h.b16 %v511
        %v706 = vunpack.c.l.b16 %v512
        %v707 = vunpack.c.l.b16 %v513
        %v708 = vunpack.c.h.b16 %v513
        %v709 = vunpack.c.l.b16 %v514
        %v710 = vunpack.c.l.b16 %v515
        %v711 = vunpack.c.h.b16 %v515
        %v712 = vunpack.c.l.b16 %v516
        %v713 = vunpack.c.l.b16 %v517
        %v714 = vunpack.c.h.b16 %v517
        %v715 = vunpack.c.l.b16 %v518
        %v716 = vunpack.c.l.b16 %v519
        %v717 = vunpack.c.h.b16 %v519
        %v718 = vunpack.c.l.b16 %v520
        %v719 = vunpack.c.l.b16 %v521
        %v720 = vunpack.c.h.b16 %v521
        %v721 = vunpack.c.l.b16 %v522
        %v722 = vunpack.c.l.b16 %v523
        %v723 = vunpack.c.h.b16 %v523
        %v724 = vunpack.c.l.b16 %v524
        %v725 = vunpack.c.l.b16 %v525
        %v726 = vunpack.c.h.b16 %v525
        %v727 = vunpack.c.l.b16 %v526
        %v728 = vunpack.c.l.b16 %v527
        %v729 = vunpack.c.h.b16 %v527
        %v730 = vunpack.c.l.b16 %v528
        %v731 = vunpack.c.l.b16 %v529
        %v732 = vunpack.c.h.b16 %v529
        %v733 = vunpack.c.l.b16 %v530
        %v734 = vunpack.c.l.b16 %v531
        %v735 = vunpack.c.h.b16 %v531
        %v736 = vunpack.c.l.b16 %v532
        %v737 = vunpack.c.l.b16 %v533
        %v738 = vunpack.c.h.b16 %v533
        %v739 = vunpack.c.l.b16 %v534
        %v740 = vunpack.c.l.b16 %v535
        %v741 = vunpack.c.h.b16 %v535
        %v742 = vunpack.c.l.b16 %v536
        %v743 = vunpack.c.l.b16 %v537
        %v744 = vunpack.c.h.b16 %v537
        %v745 = vunpack.c.l.b16 %v538
        %v746 = vunpack.c.l.b16 %v539
        %v747 = vunpack.c.h.b16 %v539
        %v748 = vunpack.c.l.b16 %v540
        %v749 = vpack.c.b16 %v656, %v653
        %v750 = vpack.c.b16 %v657, %v654
        %v751 = vpack.c.b16 %v658, %v655
        %v752 = vpack.c.b16 %v662, %v659
        %v753 = vpack.c.b16 %v663, %v660
        %v754 = vpack.c.b16 %v664, %v661
        %v755 = vpack.c.b16 %v668, %v665
        %v756 = vpack.c.b16 %v669, %v666
        %v757 = vpack.c.b16 %v670, %v667
        %v758 = vpack.c.b16 %v674, %v671
        %v759 = vpack.c.b16 %v675, %v672
        %v760 = vpack.c.b16 %v676, %v673
        %v761 = vpack.c.b16 %v680, %v677
        %v762 = vpack.c.b16 %v681, %v678
        %v763 = vpack.c.b16 %v682, %v679
        %v764 = vpack.c.b16 %v686, %v683
        %v765 = vpack.c.b16 %v687, %v684
        %v766 = vpack.c.b16 %v688, %v685
        %v767 = vpack.c.b16 %v692, %v689
        %v768 = vpack.c.b16 %v693, %v690
        %v769 = vpack.c.b16 %v694, %v691
        %v770 = vpack.c.b16 %v698, %v695
        %v771 = vpack.c.b16 %v699, %v696
        %v772 = vpack.c.b16 %v700, %v697
        %v773 = vpack.c.b16 %v704, %v701
        %v774 = vpack.c.b16 %v705, %v702
        %v775 = vpack.c.b16 %v706, %v703
        %v776 = vpack.c.b16 %v710, %v707
        %v777 = vpack.c.b16 %v711, %v708
        %v778 = vpack.c.b16 %v712, %v709
        %v779 = vpack.c.b16 %v716, %v713
        %v780 = vpack.c.b16 %v717, %v714
        %v781 = vpack.c.b16 %v718, %v715
        %v782 = vpack.c.b16 %v722, %v719
        %v783 = vpack.c.b16 %v723, %v720
        %v784 = vpack.c.b16 %v724, %v721
        %v785 = vpack.c.b16 %v728, %v725
        %v786 = vpack.c.b16 %v729, %v726
        %v787 = vpack.c.b16 %v730, %v727
        %v788 = vpack.c.b16 %v734, %v731
        %v789 = vpack.c.b16 %v735, %v732
        %v790 = vpack.c.b16 %v736, %v733
        %v791 = vpack.c.b16 %v740, %v737
        %v792 = vpack.c.b16 %v741, %v738
        %v793 = vpack.c.b16 %v742, %v739
        %v794 = vpack.c.b16 %v746, %v743
        %v795 = vpack.c.b16 %v747, %v744
        %v796 = vpack.c.b16 %v748, %v745
        %v893 = vunpack.c.l.b16 %v541
        %v894 = vunpack.c.l.b16 %v542
        %v895 = vunpack.c.l.b16 %v543
        %v896 = vunpack.c.l.b16 %v544
        %v897 = vunpack.c.l.b16 %v545
        %v898 = vunpack.c.l.b16 %v546
        %v899 = vunpack.c.l.b16 %v547
        %v900 = vunpack.c.l.b16 %v548
        %v901 = vunpack.c.l.b16 %v549
        %v902 = vunpack.c.l.b16 %v550
        %v903 = vunpack.c.l.b16 %v551
        %v904 = vunpack.c.l.b16 %v552
        %v905 = vunpack.c.l.b16 %v553
        %v906 = vunpack.c.l.b16 %v554
        %v907 = vunpack.c.l.b16 %v555
        %v908 = vunpack.c.l.b16 %v556
        %v909 = vunpack.c.l.b16 %v557
        %v910 = vunpack.c.l.b16 %v558
        %v911 = vunpack.c.l.b16 %v559
        %v912 = vunpack.c.l.b16 %v560
        %v913 = vunpack.c.l.b16 %v561
        %v914 = vunpack.c.l.b16 %v562
        %v915 = vunpack.c.l.b16 %v563
        %v916 = vunpack.c.l.b16 %v564
        %v917 = vunpack.c.l.b16 %v565
        %v918 = vunpack.c.l.b16 %v566
        %v919 = vunpack.c.l.b16 %v567
        %v920 = vunpack.c.l.b16 %v568
        %v921 = vunpack.c.l.b16 %v569
        %v922 = vunpack.c.l.b16 %v570
        %v923 = vunpack.c.l.b16 %v571
        %v924 = vunpack.c.l.b16 %v572
        %v925 = vunpack.c.l.b16 %v573
        %v926 = vunpack.c.l.b16 %v574
        %v927 = vunpack.c.l.b16 %v575
        %v928 = vunpack.c.l.b16 %v576
        %v929 = vunpack.c.l.b16 %v577
        %v930 = vunpack.c.l.b16 %v578
        %v931 = vunpack.c.l.b16 %v579
        %v932 = vunpack.c.l.b16 %v580
        %v933 = vunpack.c.l.b16 %v581
        %v934 = vunpack.c.l.b16 %v582
        %v935 = vunpack.c.l.b16 %v583
        %v936 = vunpack.c.l.b16 %v584
        %v937 = vunpack.c.l.b16 %v585
        %v938 = vunpack.c.l.b16 %v586
        %v939 = vunpack.c.l.b16 %v587
        %v940 = vunpack.c.l.b16 %v588
        %v941 = vpack.c.b16 %v894, %v893
        %v942 = vpack.c.b16 %v896, %v895
        %v943 = vpack.c.b16 %v898, %v897
        %v944 = vpack.c.b16 %v900, %v899
        %v945 = vpack.c.b16 %v902, %v901
        %v946 = vpack.c.b16 %v904, %v903
        %v947 = vpack.c.b16 %v906, %v905
        %v948 = vpack.c.b16 %v908, %v907
        %v949 = vpack.c.b16 %v910, %v909
        %v950 = vpack.c.b16 %v912, %v911
        %v951 = vpack.c.b16 %v914, %v913
        %v952 = vpack.c.b16 %v916, %v915
        %v953 = vpack.c.b16 %v918, %v917
        %v954 = vpack.c.b16 %v920, %v919
        %v955 = vpack.c.b16 %v922, %v921
        %v956 = vpack.c.b16 %v924, %v923
        %v957 = vpack.c.b16 %v926, %v925
        %v958 = vpack.c.b16 %v928, %v927
        %v959 = vpack.c.b16 %v930, %v929
        %v960 = vpack.c.b16 %v932, %v931
        %v961 = vpack.c.b16 %v934, %v933
        %v962 = vpack.c.b16 %v936, %v935
        %v963 = vpack.c.b16 %v938, %v937
        %v964 = vpack.c.b16 %v940, %v939
        %989 = vmatprep.subr.bf16.mxu0 0
        %990 = vmatpush1.bf16.msra.mxu0 %v941
        %991 = vmatprep.subr.bf16.mxu0 0
        %992 = vmatpush1.bf16.msra.mxu0 %v942
        %993 = vmatprep.subr.bf16.mxu0 0
        %994 = vmatpush1.bf16.msra.mxu0 %v943
        %995 = vmatprep.subr.bf16.mxu0 0
        %996 = vmatpush1.bf16.msra.mxu0 %v944
        %997 = vmatprep.subr.bf16.mxu0 0
        %998 = vmatpush1.bf16.msra.mxu0 %v945
        %999 = vmatprep.subr.bf16.mxu0 0
        %1000 = vmatpush1.bf16.msra.mxu0 %v946
        %1001 = vmatprep.subr.bf16.mxu0 0
        %1002 = vmatpush1.bf16.msra.mxu0 %v947
        %1003 = vmatprep.subr.bf16.mxu0 0
        %1004 = vmatpush1.bf16.msra.mxu0 %v948
        %1005 = vmatprep.subr.bf16.mxu0 0
        %1006 = vmatpush1.bf16.msra.mxu0 %v949
        %1007 = vmatprep.subr.bf16.mxu0 0
        %1008 = vmatpush1.bf16.msra.mxu0 %v950
        %1009 = vmatprep.subr.bf16.mxu0 0
        %1010 = vmatpush1.bf16.msra.mxu0 %v951
        %1011 = vmatprep.subr.bf16.mxu0 0
        %1012 = vmatpush1.bf16.msra.mxu0 %v952
        %1013 = vmatprep.subr.bf16.mxu0 0
        %1014 = vmatpush1.bf16.msra.mxu0 %v953
        %1015 = vmatprep.subr.bf16.mxu0 0
        %1016 = vmatpush1.bf16.msra.mxu0 %v954
        %1017 = vmatprep.subr.bf16.mxu0 0
        %1018 = vmatpush1.bf16.msra.mxu0 %v955
        %1019 = vmatprep.subr.bf16.mxu0 0
        %1020 = vmatpush1.bf16.msra.mxu0 %v956
        %1021 = vmatprep.mubr.bf16.mxu0 %v750
        %1022 = vmatmul.mubr.bf16.gmra.mrb[0].mxu0 %v749
        %v1023 = vpop.f32.mrb[0].mxu0
        %v1024 = vadd.f32 0.0, %v1023
        %v1025 = vpop.f32.mrb[0].mxu0
        %v1026 = vpop.f32.mrb[0].mxu0
        %v1027 = vadd.f32 0.0, %v1026
        %v1028 = vpop.f32.mrb[0].mxu0
        %1029 = vmatprep.mubr.bf16.mxu0 %v753
        %1030 = vmatmul.mubr.bf16.gmra.mrb[0].mxu0 %v752
        %v1031 = vpop.f32.mrb[0].mxu0
        %v1032 = vadd.f32 0.0, %v1031
        %v1033 = vpop.f32.mrb[0].mxu0
        %v1034 = vpop.f32.mrb[0].mxu0
        %v1035 = vadd.f32 0.0, %v1034
        %v1036 = vpop.f32.mrb[0].mxu0
        %1037 = vmatprep.mubr.bf16.mxu0 %v756
        %1038 = vmatmul.mubr.bf16.gmra.mrb[0].mxu0 %v755
        %v1039 = vpop.f32.mrb[0].mxu0
        %v1040 = vadd.f32 0.0, %v1039
        %v1041 = vpop.f32.mrb[0].mxu0
        %v1042 = vpop.f32.mrb[0].mxu0
        %v1043 = vadd.f32 0.0, %v1042
        %v1044 = vpop.f32.mrb[0].mxu0
        %1045 = vmatprep.mubr.bf16.mxu0 %v759
        %1046 = vmatmul.mubr.bf16.gmra.mrb[0].mxu0 %v758
        %v1047 = vpop.f32.mrb[0].mxu0
        %v1048 = vadd.f32 0.0, %v1047
        %v1049 = vpop.f32.mrb[0].mxu0
        %v1050 = vpop.f32.mrb[0].mxu0
        %v1051 = vadd.f32 0.0, %v1050
        %v1052 = vpop.f32.mrb[0].mxu0
        %1053 = vmatprep.mubr.bf16.mxu0 %v762
        %1054 = vmatmul.mubr.bf16.gmra.mrb[0].mxu0 %v761
        %v1055 = vpop.f32.mrb[0].mxu0
        %v1056 = vadd.f32 0.0, %v1055
        %v1057 = vpop.f32.mrb[0].mxu0
        %v1058 = vpop.f32.mrb[0].mxu0
        %v1059 = vadd.f32 0.0, %v1058
        %v1060 = vpop.f32.mrb[0].mxu0
        %1061 = vmatprep.mubr.bf16.mxu0 %v765
        %1062 = vmatmul.mubr.bf16.gmra.mrb[0].mxu0 %v764
        %v1063 = vpop.f32.mrb[0].mxu0
        %v1064 = vadd.f32 0.0, %v1063
        %v1065 = vpop.f32.mrb[0].mxu0
        %v1066 = vpop.f32.mrb[0].mxu0
        %v1067 = vadd.f32 0.0, %v1066
        %v1068 = vpop.f32.mrb[0].mxu0
        %1069 = vmatprep.mubr.bf16.mxu0 %v768
        %1070 = vmatmul.mubr.bf16.gmra.mrb[0].mxu0 %v767
        %v1071 = vpop.f32.mrb[0].mxu0
        %v1072 = vadd.f32 0.0, %v1071
        %v1073 = vpop.f32.mrb[0].mxu0
        %v1074 = vpop.f32.mrb[0].mxu0
        %v1075 = vadd.f32 0.0, %v1074
        %v1076 = vpop.f32.mrb[0].mxu0
        %1077 = vmatprep.mubr.bf16.mxu0 %v771
        %1078 = vmatmul.mubr.bf16.gmra.mrb[0].mxu0 %v770
        %v1079 = vpop.f32.mrb[0].mxu0
        %v1080 = vadd.f32 0.0, %v1079
        %v1081 = vpop.f32.mrb[0].mxu0
        %v1082 = vpop.f32.mrb[0].mxu0
        %v1083 = vadd.f32 0.0, %v1082
        %v1084 = vpop.f32.mrb[0].mxu0
        %1085 = vmatprep.mubr.bf16.mxu0 %v774
        %1086 = vmatmul.mubr.bf16.gmra.mrb[0].mxu0 %v773
        %v1087 = vpop.f32.mrb[0].mxu0
        %v1088 = vadd.f32 0.0, %v1087
        %v1089 = vpop.f32.mrb[0].mxu0
        %v1090 = vpop.f32.mrb[0].mxu0
        %v1091 = vadd.f32 0.0, %v1090
        %v1092 = vpop.f32.mrb[0].mxu0
        %1093 = vmatprep.mubr.bf16.mxu0 %v777
        %1094 = vmatmul.mubr.bf16.gmra.mrb[0].mxu0 %v776
        %v1095 = vpop.f32.mrb[0].mxu0
        %v1096 = vadd.f32 0.0, %v1095
        %v1097 = vpop.f32.mrb[0].mxu0
        %v1098 = vpop.f32.mrb[0].mxu0
        %v1099 = vadd.f32 0.0, %v1098
        %v1100 = vpop.f32.mrb[0].mxu0
        %1101 = vmatprep.mubr.bf16.mxu0 %v780
        %1102 = vmatmul.mubr.bf16.gmra.mrb[0].mxu0 %v779
        %v1103 = vpop.f32.mrb[0].mxu0
        %v1104 = vadd.f32 0.0, %v1103
        %v1105 = vpop.f32.mrb[0].mxu0
        %v1106 = vpop.f32.mrb[0].mxu0
        %v1107 = vadd.f32 0.0, %v1106
        %v1108 = vpop.f32.mrb[0].mxu0
        %1109 = vmatprep.mubr.bf16.mxu0 %v783
        %1110 = vmatmul.mubr.bf16.gmra.mrb[0].mxu0 %v782
        %v1111 = vpop.f32.mrb[0].mxu0
        %v1112 = vadd.f32 0.0, %v1111
        %v1113 = vpop.f32.mrb[0].mxu0
        %v1114 = vpop.f32.mrb[0].mxu0
        %v1115 = vadd.f32 0.0, %v1114
        %v1116 = vpop.f32.mrb[0].mxu0
        %1117 = vmatprep.mubr.bf16.mxu0 %v786
        %1118 = vmatmul.mubr.bf16.gmra.mrb[0].mxu0 %v785
        %v1119 = vpop.f32.mrb[0].mxu0
        %v1120 = vadd.f32 0.0, %v1119
        %v1121 = vpop.f32.mrb[0].mxu0
        %v1122 = vpop.f32.mrb[0].mxu0
        %v1123 = vadd.f32 0.0, %v1122
        %v1124 = vpop.f32.mrb[0].mxu0
        %1125 = vmatprep.mubr.bf16.mxu0 %v789
        %1126 = vmatmul.mubr.bf16.gmra.mrb[0].mxu0 %v788
        %v1127 = vpop.f32.mrb[0].mxu0
        %v1128 = vadd.f32 0.0, %v1127
        %v1129 = vpop.f32.mrb[0].mxu0
        %v1130 = vpop.f32.mrb[0].mxu0
        %v1131 = vadd.f32 0.0, %v1130
        %v1132 = vpop.f32.mrb[0].mxu0
        %1133 = vmatprep.mubr.bf16.mxu0 %v792
        %1134 = vmatmul.mubr.bf16.gmra.mrb[0].mxu0 %v791
        %v1135 = vpop.f32.mrb[0].mxu0
        %v1136 = vadd.f32 0.0, %v1135
        %v1137 = vpop.f32.mrb[0].mxu0
        %v1138 = vpop.f32.mrb[0].mxu0
        %v1139 = vadd.f32 0.0, %v1138
        %v1140 = vpop.f32.mrb[0].mxu0
        %1141 = vmatprep.mubr.bf16.mxu0 %v795
        %1142 = vmatmul.mubr.bf16.gmra.mrb[0].mxu0 %v794
        %v1143 = vpop.f32.mrb[0].mxu0
        %v1144 = vadd.f32 0.0, %v1143
        %v1145 = vpop.f32.mrb[0].mxu0
        %v1146 = vpop.f32.mrb[0].mxu0
        %v1147 = vadd.f32 0.0, %v1146
        %v1148 = vpop.f32.mrb[0].mxu0
        %1149 = vdwg.mxu0
        %1150 = vmatprep.subr.bf16.mxu0 0
        %1151 = vmatpush1.bf16.msra.mxu0 %v957
        %1152 = vmatprep.subr.bf16.mxu0 0
        %1153 = vmatpush1.bf16.msra.mxu0 %v958
        %1154 = vmatprep.subr.bf16.mxu0 0
        %1155 = vmatpush1.bf16.msra.mxu0 %v959
        %1156 = vmatprep.subr.bf16.mxu0 0
        %1157 = vmatpush1.bf16.msra.mxu0 %v960
        %1158 = vmatprep.subr.bf16.mxu0 0
        %1159 = vmatpush1.bf16.msra.mxu0 %v961
        %1160 = vmatprep.subr.bf16.mxu0 0
        %1161 = vmatpush1.bf16.msra.mxu0 %v962
        %1162 = vmatprep.subr.bf16.mxu0 0
        %1163 = vmatpush1.bf16.msra.mxu0 %v963
        %1164 = vmatprep.subr.bf16.mxu0 0
        %1165 = vmatpush1.bf16.msra.mxu0 %v964
        %1166 = vmatprep.subr.bf16.mxu0 0
        %1167 = vmatpush1.bf16.msra.mxu0 0
        %1168 = vmatprep.subr.bf16.mxu0 0
        %1169 = vmatpush1.bf16.msra.mxu0 0
        %1170 = vmatprep.subr.bf16.mxu0 0
        %1171 = vmatpush1.bf16.msra.mxu0 0
        %1172 = vmatprep.subr.bf16.mxu0 0
        %1173 = vmatpush1.bf16.msra.mxu0 0
        %1174 = vmatprep.subr.bf16.mxu0 0
        %1175 = vmatpush1.bf16.msra.mxu0 0
        %1176 = vmatprep.subr.bf16.mxu0 0
        %1177 = vmatpush1.bf16.msra.mxu0 0
        %1178 = vmatprep.subr.bf16.mxu0 0
        %1179 = vmatpush1.bf16.msra.mxu0 0
        %1180 = vmatprep.subr.bf16.mxu0 0
        %1181 = vmatpush1.bf16.msra.mxu0 0
        %1182 = vmatprep.mubr.bf16.mxu0 0
        %1183 = vmatmul.mubr.bf16.gmra.mrb[0].mxu0 %v751
        %v1184 = vpop.f32.mrb[0].mxu0
        %v1185 = vadd.f32 %v1024, %v1184
        %v1186 = vpop.f32.mrb[0].mxu0
        %v1187 = vpop.f32.mrb[0].mxu0
        %v1188 = vadd.f32 %v1027, %v1187
        %v1189 = vpop.f32.mrb[0].mxu0
        %1190 = vmatprep.mubr.bf16.mxu0 0
        %1191 = vmatmul.mubr.bf16.gmra.mrb[0].mxu0 %v754
        %v1192 = vpop.f32.mrb[0].mxu0
        %v1193 = vadd.f32 %v1032, %v1192
        %v1194 = vpop.f32.mrb[0].mxu0
        %v1195 = vpop.f32.mrb[0].mxu0
        %v1196 = vadd.f32 %v1035, %v1195
        %v1197 = vpop.f32.mrb[0].mxu0
        %1198 = vmatprep.mubr.bf16.mxu0 0
        %1199 = vmatmul.mubr.bf16.gmra.mrb[0].mxu0 %v757
        %v1200 = vpop.f32.mrb[0].mxu0
        %v1201 = vadd.f32 %v1040, %v1200
        %v1202 = vpop.f32.mrb[0].mxu0
        %v1203 = vpop.f32.mrb[0].mxu0
        %v1204 = vadd.f32 %v1043, %v1203
        %v1205 = vpop.f32.mrb[0].mxu0
        %1206 = vmatprep.mubr.bf16.mxu0 0
        %1207 = vmatmul.mubr.bf16.gmra.mrb[0].mxu0 %v760
        %v1208 = vpop.f32.mrb[0].mxu0
        %v1209 = vadd.f32 %v1048, %v1208
        %v1210 = vpop.f32.mrb[0].mxu0
        %v1211 = vpop.f32.mrb[0].mxu0
        %v1212 = vadd.f32 %v1051, %v1211
        %v1213 = vpop.f32.mrb[0].mxu0
        %1214 = vmatprep.mubr.bf16.mxu0 0
        %1215 = vmatmul.mubr.bf16.gmra.mrb[0].mxu0 %v763
        %v1216 = vpop.f32.mrb[0].mxu0
        %v1217 = vadd.f32 %v1056, %v1216
        %v1218 = vpop.f32.mrb[0].mxu0
        %v1219 = vpop.f32.mrb[0].mxu0
        %v1220 = vadd.f32 %v1059, %v1219
        %v1221 = vpop.f32.mrb[0].mxu0
        %1222 = vmatprep.mubr.bf16.mxu0 0
        %1223 = vmatmul.mubr.bf16.gmra.mrb[0].mxu0 %v766
        %v1224 = vpop.f32.mrb[0].mxu0
        %v1225 = vadd.f32 %v1064, %v1224
        %v1226 = vpop.f32.mrb[0].mxu0
        %v1227 = vpop.f32.mrb[0].mxu0
        %v1228 = vadd.f32 %v1067, %v1227
        %v1229 = vpop.f32.mrb[0].mxu0
        %1230 = vmatprep.mubr.bf16.mxu0 0
        %1231 = vmatmul.mubr.bf16.gmra.mrb[0].mxu0 %v769
        %v1232 = vpop.f32.mrb[0].mxu0
        %v1233 = vadd.f32 %v1072, %v1232
        %v1234 = vpop.f32.mrb[0].mxu0
        %v1235 = vpop.f32.mrb[0].mxu0
        %v1236 = vadd.f32 %v1075, %v1235
        %v1237 = vpop.f32.mrb[0].mxu0
        %1238 = vmatprep.mubr.bf16.mxu0 0
        %1239 = vmatmul.mubr.bf16.gmra.mrb[0].mxu0 %v772
        %v1240 = vpop.f32.mrb[0].mxu0
        %v1241 = vadd.f32 %v1080, %v1240
        %v1242 = vpop.f32.mrb[0].mxu0
        %v1243 = vpop.f32.mrb[0].mxu0
        %v1244 = vadd.f32 %v1083, %v1243
        %v1245 = vpop.f32.mrb[0].mxu0
        %1246 = vmatprep.mubr.bf16.mxu0 0
        %1247 = vmatmul.mubr.bf16.gmra.mrb[0].mxu0 %v775
        %v1248 = vpop.f32.mrb[0].mxu0
        %v1249 = vadd.f32 %v1088, %v1248
        %v1250 = vpop.f32.mrb[0].mxu0
        %v1251 = vpop.f32.mrb[0].mxu0
        %v1252 = vadd.f32 %v1091, %v1251
        %v1253 = vpop.f32.mrb[0].mxu0
        %1254 = vmatprep.mubr.bf16.mxu0 0
        %1255 = vmatmul.mubr.bf16.gmra.mrb[0].mxu0 %v778
        %v1256 = vpop.f32.mrb[0].mxu0
        %v1257 = vadd.f32 %v1096, %v1256
        %v1258 = vpop.f32.mrb[0].mxu0
        %v1259 = vpop.f32.mrb[0].mxu0
        %v1260 = vadd.f32 %v1099, %v1259
        %v1261 = vpop.f32.mrb[0].mxu0
        %1262 = vmatprep.mubr.bf16.mxu0 0
        %1263 = vmatmul.mubr.bf16.gmra.mrb[0].mxu0 %v781
        %v1264 = vpop.f32.mrb[0].mxu0
        %v1265 = vadd.f32 %v1104, %v1264
        %v1266 = vpop.f32.mrb[0].mxu0
        %v1267 = vpop.f32.mrb[0].mxu0
        %v1268 = vadd.f32 %v1107, %v1267
        %v1269 = vpop.f32.mrb[0].mxu0
        %1270 = vmatprep.mubr.bf16.mxu0 0
        %1271 = vmatmul.mubr.bf16.gmra.mrb[0].mxu0 %v784
        %v1272 = vpop.f32.mrb[0].mxu0
        %v1273 = vadd.f32 %v1112, %v1272
        %v1274 = vpop.f32.mrb[0].mxu0
        %v1275 = vpop.f32.mrb[0].mxu0
        %v1276 = vadd.f32 %v1115, %v1275
        %v1277 = vpop.f32.mrb[0].mxu0
        %1278 = vmatprep.mubr.bf16.mxu0 0
        %1279 = vmatmul.mubr.bf16.gmra.mrb[0].mxu0 %v787
        %v1280 = vpop.f32.mrb[0].mxu0
        %v1281 = vadd.f32 %v1120, %v1280
        %v1282 = vpop.f32.mrb[0].mxu0
        %v1283 = vpop.f32.mrb[0].mxu0
        %v1284 = vadd.f32 %v1123, %v1283
        %v1285 = vpop.f32.mrb[0].mxu0
        %1286 = vmatprep.mubr.bf16.mxu0 0
        %1287 = vmatmul.mubr.bf16.gmra.mrb[0].mxu0 %v790
        %v1288 = vpop.f32.mrb[0].mxu0
        %v1289 = vadd.f32 %v1128, %v1288
        %v1290 = vpop.f32.mrb[0].mxu0
        %v1291 = vpop.f32.mrb[0].mxu0
        %v1292 = vadd.f32 %v1131, %v1291
        %v1293 = vpop.f32.mrb[0].mxu0
        %1294 = vmatprep.mubr.bf16.mxu0 0
        %1295 = vmatmul.mubr.bf16.gmra.mrb[0].mxu0 %v793
        %v1296 = vpop.f32.mrb[0].mxu0
        %v1297 = vadd.f32 %v1136, %v1296
        %v1298 = vpop.f32.mrb[0].mxu0
        %v1299 = vpop.f32.mrb[0].mxu0
        %v1300 = vadd.f32 %v1139, %v1299
        %v1301 = vpop.f32.mrb[0].mxu0
        %1302 = vmatprep.mubr.bf16.mxu0 0
        %1303 = vmatmul.mubr.bf16.gmra.mrb[0].mxu0 %v796
        %v1304 = vpop.f32.mrb[0].mxu0
        %v1305 = vadd.f32 %v1144, %v1304
        %v1306 = vpop.f32.mrb[0].mxu0
        %v1307 = vpop.f32.mrb[0].mxu0
        %v1308 = vadd.f32 %v1147, %v1307
        %v1309 = vpop.f32.mrb[0].mxu0
        %1310 = vdwg.mxu0
        %v1311 = vadd.f32 %v445, %v1185
        %v1312 = vadd.f32 %v446, %v1188
        %v1313 = vadd.f32 %v447, %v1193
        %v1314 = vadd.f32 %v448, %v1196
        %v1315 = vadd.f32 %v449, %v1201
        %v1316 = vadd.f32 %v450, %v1204
        %v1317 = vadd.f32 %v451, %v1209
        %v1318 = vadd.f32 %v452, %v1212
        %v1319 = vadd.f32 %v453, %v1217
        %v1320 = vadd.f32 %v454, %v1220
        %v1321 = vadd.f32 %v455, %v1225
        %v1322 = vadd.f32 %v456, %v1228
        %v1323 = vadd.f32 %v457, %v1233
        %v1324 = vadd.f32 %v458, %v1236
        %v1325 = vadd.f32 %v459, %v1241
        %v1326 = vadd.f32 %v460, %v1244
        %v1327 = vadd.f32 %v461, %v1249
        %v1328 = vadd.f32 %v462, %v1252
        %v1329 = vadd.f32 %v463, %v1257
        %v1330 = vadd.f32 %v464, %v1260
        %v1331 = vadd.f32 %v465, %v1265
        %v1332 = vadd.f32 %v466, %v1268
        %v1333 = vadd.f32 %v467, %v1273
        %v1334 = vadd.f32 %v468, %v1276
        %v1335 = vadd.f32 %v469, %v1281
        %v1336 = vadd.f32 %v470, %v1284
        %v1337 = vadd.f32 %v471, %v1289
        %v1338 = vadd.f32 %v472, %v1292
        %v1339 = vadd.f32 %v473, %v1297
        %v1340 = vadd.f32 %v474, %v1300
        %v1341 = vadd.f32 %v475, %v1305
        %v1342 = vadd.f32 %v476, %v1308
        %1343 = vst [vmem:[#allocation2] sm:$0xff] %v1311
        %1344 = vst [vmem:[#allocation2 + $0x8] sm:$0xff] %v1312
        %1345 = vst [vmem:[#allocation2 + $0x10] sm:$0xff] %v1313
        %1346 = vst [vmem:[#allocation2 + $0x18] sm:$0xff] %v1314
        %1347 = vst [vmem:[#allocation2 + $0x20] sm:$0xff] %v1315
        %1348 = vst [vmem:[#allocation2 + $0x28] sm:$0xff] %v1316
        %1349 = vst [vmem:[#allocation2 + $0x30] sm:$0xff] %v1317
        %1350 = vst [vmem:[#allocation2 + $0x38] sm:$0xff] %v1318
        %1351 = vst [vmem:[#allocation2 + $0x40] sm:$0xff] %v1319
        %1352 = vst [vmem:[#allocation2 + $0x48] sm:$0xff] %v1320
        %1353 = vst [vmem:[#allocation2 + $0x50] sm:$0xff] %v1321
        %1354 = vst [vmem:[#allocation2 + $0x58] sm:$0xff] %v1322
        %1355 = vst [vmem:[#allocation2 + $0x60] sm:$0xff] %v1323
        %1356 = vst [vmem:[#allocation2 + $0x68] sm:$0xff] %v1324
        %1357 = vst [vmem:[#allocation2 + $0x70] sm:$0xff] %v1325
        %1358 = vst [vmem:[#allocation2 + $0x78] sm:$0xff] %v1326
        %1359 = vst [vmem:[#allocation2 + $0x80] sm:$0xff] %v1327
        %1360 = vst [vmem:[#allocation2 + $0x88] sm:$0xff] %v1328
        %1361 = vst [vmem:[#allocation2 + $0x90] sm:$0xff] %v1329
        %1362 = vst [vmem:[#allocation2 + $0x98] sm:$0xff] %v1330
        %1363 = vst [vmem:[#allocation2 + $0xa0] sm:$0xff] %v1331
        %1364 = vst [vmem:[#allocation2 + $0xa8] sm:$0xff] %v1332
        %1365 = vst [vmem:[#allocation2 + $0xb0] sm:$0xff] %v1333
        %1366 = vst [vmem:[#allocation2 + $0xb8] sm:$0xff] %v1334
        %1367 = vst [vmem:[#allocation2 + $0xc0] sm:$0xff] %v1335
        %1368 = vst [vmem:[#allocation2 + $0xc8] sm:$0xff] %v1336
        %1369 = vst [vmem:[#allocation2 + $0xd0] sm:$0xff] %v1337
        %1370 = vst [vmem:[#allocation2 + $0xd8] sm:$0xff] %v1338
        %1371 = vst [vmem:[#allocation2 + $0xe0] sm:$0xff] %v1339
        %1372 = vst [vmem:[#allocation2 + $0xe8] sm:$0xff] %v1340
        %1373 = vst [vmem:[#allocation2 + $0xf0] sm:$0xff] %v1341
        %1374 = vst [vmem:[#allocation2 + $0xf8] sm:$0xff] %v1342
        %p1375 = scmp.eq.s32.totalorder %s21, 2
        // Predicated region
        $region63: #{cxr_autoencoder_forward.12} parent=53 // pred_check
          %p1376 = pneg %p1375
        $region64: #{cxr_autoencoder_forward.12} parent=53 // pred_check_branch
          %1378 = sbr.rel (%p1376) target = $region66
        $region65: #{cxr_autoencoder_forward.12} parent=53 // pred_region
          %v1379 = vld [vmem:[#allocation2] sm:$0xff]
          %v1380 = vld [vmem:[#allocation2 + $0x8] sm:$0xff]
          %v1381 = vld [vmem:[#allocation2 + $0x10] sm:$0xff]
          %v1382 = vld [vmem:[#allocation2 + $0x18] sm:$0xff]
          %v1383 = vld [vmem:[#allocation2 + $0x20] sm:$0xff]
          %v1384 = vld [vmem:[#allocation2 + $0x28] sm:$0xff]
          %v1385 = vld [vmem:[#allocation2 + $0x30] sm:$0xff]
          %v1386 = vld [vmem:[#allocation2 + $0x38] sm:$0xff]
          %v1387 = vld [vmem:[#allocation2 + $0x40] sm:$0xff]
          %v1388 = vld [vmem:[#allocation2 + $0x48] sm:$0xff]
          %v1389 = vld [vmem:[#allocation2 + $0x50] sm:$0xff]
          %v1390 = vld [vmem:[#allocation2 + $0x58] sm:$0xff]
          %v1391 = vld [vmem:[#allocation2 + $0x60] sm:$0xff]
          %v1392 = vld [vmem:[#allocation2 + $0x68] sm:$0xff]
          %v1393 = vld [vmem:[#allocation2 + $0x70] sm:$0xff]
          %v1394 = vld [vmem:[#allocation2 + $0x78] sm:$0xff]
          %v1395 = vld [vmem:[#allocation2 + $0x80] sm:$0xff]
          %v1396 = vld [vmem:[#allocation2 + $0x88] sm:$0xff]
          %v1397 = vld [vmem:[#allocation2 + $0x90] sm:$0xff]
          %v1398 = vld [vmem:[#allocation2 + $0x98] sm:$0xff]
          %v1399 = vld [vmem:[#allocation2 + $0xa0] sm:$0xff]
          %v1400 = vld [vmem:[#allocation2 + $0xa8] sm:$0xff]
          %v1401 = vld [vmem:[#allocation2 + $0xb0] sm:$0xff]
          %v1402 = vld [vmem:[#allocation2 + $0xb8] sm:$0xff]
          %v1403 = vld [vmem:[#allocation2 + $0xc0] sm:$0xff]
          %v1404 = vld [vmem:[#allocation2 + $0xc8] sm:$0xff]
          %v1405 = vld [vmem:[#allocation2 + $0xd0] sm:$0xff]
          %v1406 = vld [vmem:[#allocation2 + $0xd8] sm:$0xff]
          %v1407 = vld [vmem:[#allocation2 + $0xe0] sm:$0xff]
          %v1408 = vld [vmem:[#allocation2 + $0xe8] sm:$0xff]
          %v1409 = vld [vmem:[#allocation2 + $0xf0] sm:$0xff]
          %v1410 = vld [vmem:[#allocation2 + $0xf8] sm:$0xff]
          %v1411 = vld [vmem:[%s398] sm:$0x1]
          %v1413 = vlaneseq
          %v1414 = vshrl.u32 %v1413, 7
          %v1415 = vsub.s32 0, %v1414
          %v1416 = vrot.slane %v1411, %v1415
          %v1418 = vadd.f32 %v1379, %v1416
          %v1419 = vadd.f32 %v1380, %v1416
          %v1420 = vadd.f32 %v1381, %v1416
          %v1421 = vadd.f32 %v1382, %v1416
          %v1422 = vadd.f32 %v1383, %v1416
          %v1423 = vadd.f32 %v1384, %v1416
          %v1424 = vadd.f32 %v1385, %v1416
          %v1425 = vadd.f32 %v1386, %v1416
          %v1426 = vadd.f32 %v1387, %v1416
          %v1427 = vadd.f32 %v1388, %v1416
          %v1428 = vadd.f32 %v1389, %v1416
          %v1429 = vadd.f32 %v1390, %v1416
          %v1430 = vadd.f32 %v1391, %v1416
          %v1431 = vadd.f32 %v1392, %v1416
          %v1432 = vadd.f32 %v1393, %v1416
          %v1433 = vadd.f32 %v1394, %v1416
          %v1434 = vadd.f32 %v1395, %v1416
          %v1435 = vadd.f32 %v1396, %v1416
          %v1436 = vadd.f32 %v1397, %v1416
          %v1437 = vadd.f32 %v1398, %v1416
          %v1438 = vadd.f32 %v1399, %v1416
          %v1439 = vadd.f32 %v1400, %v1416
          %v1440 = vadd.f32 %v1401, %v1416
          %v1441 = vadd.f32 %v1402, %v1416
          %v1442 = vadd.f32 %v1403, %v1416
          %v1443 = vadd.f32 %v1404, %v1416
          %v1444 = vadd.f32 %v1405, %v1416
          %v1445 = vadd.f32 %v1406, %v1416
          %v1446 = vadd.f32 %v1407, %v1416
          %v1447 = vadd.f32 %v1408, %v1416
          %v1448 = vadd.f32 %v1409, %v1416
          %v1449 = vadd.f32 %v1410, %v1416
          %v1450 = vmax.f32 %v1418, 0.0
          %v1451 = vmax.f32 %v1419, 0.0
          %v1452 = vmax.f32 %v1420, 0.0
          %v1453 = vmax.f32 %v1421, 0.0
          %v1454 = vmax.f32 %v1422, 0.0
          %v1455 = vmax.f32 %v1423, 0.0
          %v1456 = vmax.f32 %v1424, 0.0
          %v1457 = vmax.f32 %v1425, 0.0
          %v1458 = vmax.f32 %v1426, 0.0
          %v1459 = vmax.f32 %v1427, 0.0
          %v1460 = vmax.f32 %v1428, 0.0
          %v1461 = vmax.f32 %v1429, 0.0
          %v1462 = vmax.f32 %v1430, 0.0
          %v1463 = vmax.f32 %v1431, 0.0
          %v1464 = vmax.f32 %v1432, 0.0
          %v1465 = vmax.f32 %v1433, 0.0
          %v1466 = vmax.f32 %v1434, 0.0
          %v1467 = vmax.f32 %v1435, 0.0
          %v1468 = vmax.f32 %v1436, 0.0
          %v1469 = vmax.f32 %v1437, 0.0
          %v1470 = vmax.f32 %v1438, 0.0
          %v1471 = vmax.f32 %v1439, 0.0
          %v1472 = vmax.f32 %v1440, 0.0
          %v1473 = vmax.f32 %v1441, 0.0
          %v1474 = vmax.f32 %v1442, 0.0
          %v1475 = vmax.f32 %v1443, 0.0
          %v1476 = vmax.f32 %v1444, 0.0
          %v1477 = vmax.f32 %v1445, 0.0
          %v1478 = vmax.f32 %v1446, 0.0
          %v1479 = vmax.f32 %v1447, 0.0
          %v1480 = vmax.f32 %v1448, 0.0
          %v1481 = vmax.f32 %v1449, 0.0
          %1482 = vst [vmem:[%s406] sm:$0xff] %v1450
          %1483 = vst [vmem:[%s406 + $0x8] sm:$0xff] %v1451
          %1484 = vst [vmem:[%s406 + $0x10] sm:$0xff] %v1452
          %1485 = vst [vmem:[%s406 + $0x18] sm:$0xff] %v1453
          %1486 = vst [vmem:[%s406 + $0x20] sm:$0xff] %v1454
          %1487 = vst [vmem:[%s406 + $0x28] sm:$0xff] %v1455
          %1488 = vst [vmem:[%s406 + $0x30] sm:$0xff] %v1456
          %1489 = vst [vmem:[%s406 + $0x38] sm:$0xff] %v1457
          %1490 = vst [vmem:[%s406 + $0x40] sm:$0xff] %v1458
          %1491 = vst [vmem:[%s406 + $0x48] sm:$0xff] %v1459
          %1492 = vst [vmem:[%s406 + $0x50] sm:$0xff] %v1460
          %1493 = vst [vmem:[%s406 + $0x58] sm:$0xff] %v1461
          %1494 = vst [vmem:[%s406 + $0x60] sm:$0xff] %v1462
          %1495 = vst [vmem:[%s406 + $0x68] sm:$0xff] %v1463
          %1496 = vst [vmem:[%s406 + $0x70] sm:$0xff] %v1464
          %1497 = vst [vmem:[%s406 + $0x78] sm:$0xff] %v1465
          %1498 = vst [vmem:[%s406 + $0x80] sm:$0xff] %v1466
          %1499 = vst [vmem:[%s406 + $0x88] sm:$0xff] %v1467
          %1500 = vst [vmem:[%s406 + $0x90] sm:$0xff] %v1468
          %1501 = vst [vmem:[%s406 + $0x98] sm:$0xff] %v1469
          %1502 = vst [vmem:[%s406 + $0xa0] sm:$0xff] %v1470
          %1503 = vst [vmem:[%s406 + $0xa8] sm:$0xff] %v1471
          %1504 = vst [vmem:[%s406 + $0xb0] sm:$0xff] %v1472
          %1505 = vst [vmem:[%s406 + $0xb8] sm:$0xff] %v1473
          %1506 = vst [vmem:[%s406 + $0xc0] sm:$0xff] %v1474
          %1507 = vst [vmem:[%s406 + $0xc8] sm:$0xff] %v1475
          %1508 = vst [vmem:[%s406 + $0xd0] sm:$0xff] %v1476
          %1509 = vst [vmem:[%s406 + $0xd8] sm:$0xff] %v1477
          %1510 = vst [vmem:[%s406 + $0xe0] sm:$0xff] %v1478
          %1511 = vst [vmem:[%s406 + $0xe8] sm:$0xff] %v1479
          %1512 = vst [vmem:[%s406 + $0xf0] sm:$0xff] %v1480
          %1513 = vst [vmem:[%s406 + $0xf8] sm:$0xff] %v1481
        $region66: #{cxr_autoencoder_forward.12} parent=53 // pred_fallthru
          _
        %s1514 = smul.u32 32, %s19
        %p1515 = scmp.lt.s32.totalorder %s1514, 63
        %s1516 = scalar_select %p1515, %s1514, 63
        %p1517 = scmp.lt.s32.totalorder %s20, 0
        %s1518 = scalar_select %p1517, %s20, 0
        %s1519 = sadd.s32 %s1518, %s1516
        %s1520 = smul.addr %s1519, 8
        %s1521 = scalar_lea.vmem %s3, %s1520
        // Predicated region
        $region67: #{cxr_autoencoder_forward.12} parent=53 // pred_check
          %p1522 = pneg %p135
        $region68: #{cxr_autoencoder_forward.12} parent=53 // pred_check_branch
          %1524 = sbr.rel (%p1522) target = $region70
        $region69: #{cxr_autoencoder_forward.12} parent=53 // pred_region
          %s1525 = smul.u32 32, %s19
        $region70: #{cxr_autoencoder_forward.12} parent=53 // pred_fallthru
          _
      $region54: #{cxr_autoencoder_forward.12} parent=5 // pred_fallthru
        _
      %p1526 = scmp.le.s32.totalorder 2, %s9
      // Predicated region
      $region71: #{cxr_autoencoder_forward.12} parent=5 // pred_check
        %p1527 = pneg %p1526
      $region72: #{cxr_autoencoder_forward.12} parent=5 // pred_check_branch
        %1529 = sbr.rel (%p1527) target = $region74
      $region73: #{cxr_autoencoder_forward.12} parent=5 // pred_region
        %s1530 = ssub.s32 %s9, 2
        // Predicated region
        $region75: #{cxr_autoencoder_forward.12} parent=73 // pred_check
          %p1531 = pneg %p141
        $region76: #{cxr_autoencoder_forward.12} parent=73 // pred_check_branch
          %1533 = sbr.rel (%p1531) target = $region78
        $region77: #{cxr_autoencoder_forward.12} parent=73 // pred_region
          %s1534 = smul.u32 32, %s22
          %p1535 = scmp.lt.s32.totalorder %s1534, 63
          %s1536 = scalar_select %p1535, %s1534, 63
          %p1537 = scmp.lt.s32.totalorder %s23, 0
          %s1538 = scalar_select %p1537, %s23, 0
          %s1539 = sadd.s32 %s1538, %s1536
          %s1540 = smul.addr %s1539, 8
          %s1541 = scalar_lea.vmem %s3, %s1540
        $region78: #{cxr_autoencoder_forward.12} parent=73 // pred_fallthru
          _
      $region74: #{cxr_autoencoder_forward.12} parent=5 // pred_fallthru
        _
    $region6: #{cxr_autoencoder_forward.12} parent=1 // loop_footer
      %s13 = sadd.s32 1, %s9
    $region7: #{cxr_autoencoder_forward.12} parent=1 // loop_footer_branch
      %8 = sbr.rel target = $region3
    $region8: #{cxr_autoencoder_forward.12} parent=1 // loop_exit
      _

// kernel: cxr_autoencoder_forward.13
$region0: #{cxr_autoencoder_forward.13}
  #allocation0 [shape = 'u32[]', space=smem, size = 0x4, offset = 0x4, fixed_abs, tag = 'smem constant byte address 0x4 - core index']
  #allocation1 [shape = 'u32[144,128]{1,0:T(1,128)}', space=vmem, size = 0x12000, scoped, tag = 'internal scratch']
  #allocation2 [shape = 'f32[256,128]{1,0:T(8,128)}', space=vmem, size = 0x20000, scoped, tag = 'scratch operand']
  %s0 = inlined_call_operand.vmem [shape: bf16[2048,1152], index: 0, kind: input, shape index: {}]
  %s1 = inlined_call_operand.vmem [shape: bf16[1152,128], index: 1, kind: input, shape index: {}]
  %s2 = inlined_call_operand.vmem [shape: f32[1,128], index: 2, kind: input, shape index: {}]
  %s3 = inlined_call_operand.vmem [shape: f32[2048,128], index: 3, kind: output, shape index: {}]
  %s4 = sld [smem:[#allocation0]]
  $region79: #{cxr_autoencoder_forward.13} parent=0
    _
  %s6 = ssub.s32 1, %s4
  %s7 = scalar_select 0, %s6, %s4
  $region1: #{cxr_autoencoder_forward.13} parent=0
    #allocation3 [shape = 'u8[393216]{0}', space=vmem, size = 0x60000, scoped, tag = 'input window, operand 0']
    loop: start=0, step=1, limit=26
    $region2: #{cxr_autoencoder_forward.13} parent=1 // loop_pre_header
      _
    $region3: #{cxr_autoencoder_forward.13} parent=1 // loop_header
      %s9 = sphi 0, %s13
      %p10 = scmp.ge.s32.totalorder %s9, 26
      %s16 = sphi 0, %s35
      %s17 = sphi 0, %s31
      %s18 = sphi 0, %s27
      %s19 = sphi 0, %s16
      %s20 = sphi 0, %s17
      %s21 = sphi 0, %s18
      %s22 = sphi 0, %s19
      %s23 = sphi 0, %s20
      %s24 = sphi 0, %s21
      %s40 = sphi 0, %s42
      %s43 = sphi 0, %s40
      %s44 = sphi 0, %s43
      %s60 = sphi 0, %s44
      %s68 = sphi 0, %s70
      %s71 = sphi 0, %s68
      %s72 = sphi 0, %s71
      %s88 = sphi 0, %s72
      %s94 = sphi 0, %s96
      %s97 = sphi 0, %s94
      %s98 = sphi 0, %s97
      %s114 = sphi 0, %s98
      %s122 = sphi 0, %s124
      %s125 = sphi 0, %s122
      %s126 = sphi 0, %s125
      %s142 = sphi 0, %s126
    $region4: #{cxr_autoencoder_forward.13} parent=1 // loop_header_branch
      %12 = sbr.rel (%p10) target = $region8
    $region5: #{cxr_autoencoder_forward.13} parent=1 // loop_body
      %s14 = ssub.s32 %s9, 1
      %s15 = ssub.s32 %s9, 2
      %s25 = sadd.s32 1, %s18
      %p26 = scmp.ge.s32.totalorder %s25, 3
      %s27 = scalar_select %p26, 0, %s25
      %s28 = sadd.s32 1, %s17
      %s29 = scalar_select %p26, %s28, %s17
      %p30 = scmp.ge.s32.totalorder %s29, 1
      %s31 = scalar_select %p30, 0, %s29
      %s32 = sadd.s32 1, %s16
      %s33 = scalar_select %p30, %s32, %s16
      %p34 = scmp.ge.s32.totalorder %s33, 8
      %s35 = scalar_select %p34, 0, %s33
      %s36 = ssub.s32 %s16, %s35
      %s37 = ssub.s32 %s18, %s27
      %s38 = sor.u32 %s36, %s37
      %p39 = scmp.eq.s32.totalorder %s38, 0
      %s41 = sadd.s32 %s40, 1
      %s42 = scalar_select %p39, %s40, %s41
      %p45 = pneg %p39
      %p46 = scmp.eq.s32.totalorder %s9, 23
      %p47 = por %p45, %p46
      %p48 = scmp.ne.s32.totalorder %s40, %s43
      %p49 = scmp.eq.s32.totalorder %s9, 0
      %p50 = por %p48, %p49
      %p51 = scmp.ne.s32.totalorder %s40, %s43
      %p52 = scmp.eq.s32.totalorder %s14, 23
      %p53 = por %p51, %p52
      %p54 = scmp.ne.s32.totalorder %s43, %s44
      %p55 = scmp.eq.s32.totalorder %s14, 0
      %p56 = por %p54, %p55
      %p57 = scmp.ne.s32.totalorder %s43, %s44
      %p58 = scmp.eq.s32.totalorder %s15, 23
      %p59 = por %p57, %p58
      %p61 = scmp.ne.s32.totalorder %s44, %s60
      %p62 = scmp.eq.s32.totalorder %s15, 0
      %p63 = por %p61, %p62
      %s64 = ssub.s32 %s18, %s27
      %s65 = ssub.s32 %s17, %s31
      %s66 = sor.u32 %s64, %s65
      %p67 = scmp.eq.s32.totalorder %s66, 0
      %s69 = sadd.s32 %s68, 1
      %s70 = scalar_select %p67, %s68, %s69
      %p73 = pneg %p67
      %p74 = scmp.eq.s32.totalorder %s9, 23
      %p75 = por %p73, %p74
      %p76 = scmp.ne.s32.totalorder %s68, %s71
      %p77 = scmp.eq.s32.totalorder %s9, 0
      %p78 = por %p76, %p77
      %p79 = scmp.ne.s32.totalorder %s68, %s71
      %p80 = scmp.eq.s32.totalorder %s14, 23
      %p81 = por %p79, %p80
      %p82 = scmp.ne.s32.totalorder %s71, %s72
      %p83 = scmp.eq.s32.totalorder %s14, 0
      %p84 = por %p82, %p83
      %p85 = scmp.ne.s32.totalorder %s71, %s72
      %p86 = scmp.eq.s32.totalorder %s15, 23
      %p87 = por %p85, %p86
      %p89 = scmp.ne.s32.totalorder %s72, %s88
      %p90 = scmp.eq.s32.totalorder %s15, 0
      %p91 = por %p89, %p90
      %s92 = ssub.s32 %s17, %s31
      %p93 = scmp.eq.s32.totalorder %s92, 0
      %s95 = sadd.s32 %s94, 1
      %s96 = scalar_select %p93, %s94, %s95
      %p99 = pneg %p93
      %p100 = scmp.eq.s32.totalorder %s9, 23
      %p101 = por %p99, %p100
      %p102 = scmp.ne.s32.totalorder %s94, %s97
      %p103 = scmp.eq.s32.totalorder %s9, 0
      %p104 = por %p102, %p103
      %p105 = scmp.ne.s32.totalorder %s94, %s97
      %p106 = scmp.eq.s32.totalorder %s14, 23
      %p107 = por %p105, %p106
      %p108 = scmp.ne.s32.totalorder %s97, %s98
      %p109 = scmp.eq.s32.totalorder %s14, 0
      %p110 = por %p108, %p109
      %p111 = scmp.ne.s32.totalorder %s97, %s98
      %p112 = scmp.eq.s32.totalorder %s15, 23
      %p113 = por %p111, %p112
      %p115 = scmp.ne.s32.totalorder %s98, %s114
      %p116 = scmp.eq.s32.totalorder %s15, 0
      %p117 = por %p115, %p116
      %s118 = ssub.s32 %s16, %s35
      %s119 = ssub.s32 %s17, %s31
      %s120 = sor.u32 %s118, %s119
      %p121 = scmp.eq.s32.totalorder %s120, 0
      %s123 = sadd.s32 %s122, 1
      %s124 = scalar_select %p121, %s122, %s123
      %p127 = pneg %p121
      %p128 = scmp.eq.s32.totalorder %s9, 23
      %p129 = por %p127, %p128
      %p130 = scmp.ne.s32.totalorder %s122, %s125
      %p131 = scmp.eq.s32.totalorder %s9, 0
      %p132 = por %p130, %p131
      %p133 = scmp.ne.s32.totalorder %s122, %s125
      %p134 = scmp.eq.s32.totalorder %s14, 23
      %p135 = por %p133, %p134
      %p136 = scmp.ne.s32.totalorder %s125, %s126
      %p137 = scmp.eq.s32.totalorder %s14, 0
      %p138 = por %p136, %p137
      %p139 = scmp.ne.s32.totalorder %s125, %s126
      %p140 = scmp.eq.s32.totalorder %s15, 23
      %p141 = por %p139, %p140
      %p143 = scmp.ne.s32.totalorder %s126, %s142
      %p144 = scmp.eq.s32.totalorder %s15, 0
      %p145 = por %p143, %p144
      %p146 = scmp.le.s32.totalorder 1, %s9
      %p147 = scmp.lt.s32.totalorder %s9, 25
      %p148 = pnand %p146, %p147
      %p149 = pneg %p148
      // Predicated region
      $region9: #{cxr_autoencoder_forward.13} parent=5 // pred_check
        _
      $region10: #{cxr_autoencoder_forward.13} parent=5 // pred_check_branch
        %151 = sbr.rel (%p148) target = $region12
      $region11: #{cxr_autoencoder_forward.13} parent=5 // pred_region
        %s152 = ssub.s32 %s9, 1
        // Predicated region
        $region13: #{cxr_autoencoder_forward.13} parent=11 // pred_check
          %p153 = pneg %p110
        $region14: #{cxr_autoencoder_forward.13} parent=11 // pred_check_branch
          %155 = sbr.rel (%p153) target = $region16
        $region15: #{cxr_autoencoder_forward.13} parent=11 // pred_region
          %p156 = scmp.lt.s32.totalorder %s20, 0
          %s157 = scalar_select %p156, %s20, 0
          %s158 = scalar_lea.vmem %s2, %s157
        $region16: #{cxr_autoencoder_forward.13} parent=11 // pred_fallthru
          _
      $region12: #{cxr_autoencoder_forward.13} parent=5 // pred_fallthru
        _
      %p159 = scmp.lt.s32.totalorder %s9, 24
      // Predicated region
      $region17: #{cxr_autoencoder_forward.13} parent=5 // pred_check
        %p160 = pneg %p159
      $region18: #{cxr_autoencoder_forward.13} parent=5 // pred_check_branch
        %162 = sbr.rel (%p160) target = $region20
      $region19: #{cxr_autoencoder_forward.13} parent=5 // pred_region
        // Predicated region
        $region21: #{cxr_autoencoder_forward.13} parent=19 // pred_check
          %p163 = pneg %p50
        $region22: #{cxr_autoencoder_forward.13} parent=19 // pred_check_branch
          %165 = sbr.rel (%p163) target = $region24
        $region23: #{cxr_autoencoder_forward.13} parent=19 // pred_region
          %s166 = sand.u32 %s40, 1
          %s167 = sand.u32 %s40, 1
          %s168 = smul.addr %s167, 384
          %s169 = scalar_lea.vmem [#allocation3], %s168
          %s170 = smul.u32 32, %s16
          %s171 = smul.u32 3, %s18
          %s172 = smul.addr %s170, 9
          %s173 = sadd.s32 %s171, %s172
          %s174 = smul.addr %s173, 4
          %s175 = scalar_lea.vmem %s0, %s174
          // Predicated region
          $region25: #{cxr_autoencoder_forward.13} parent=23 // pred_check
            _
          $region26: #{cxr_autoencoder_forward.13} parent=23 // pred_check_branch
            %177 = sbr.rel (0) target = $region28
          $region27: #{cxr_autoencoder_forward.13} parent=23 // pred_region
            // Predicated region
            $region29: #{cxr_autoencoder_forward.13} parent=27 // pred_check
              _
            $region30: #{cxr_autoencoder_forward.13} parent=27 // pred_check_branch
              %179 = sbr.rel (0) target = $region32
            $region31: #{cxr_autoencoder_forward.13} parent=27 // pred_region
              %s180 = scalar_lea.vmem %s175, 8
              %s181 = scalar_lea.vmem %s169, 8 [#allocation3]
              loop: start=0, step=1, limit=1
              $region33: #{cxr_autoencoder_forward.13} parent=31 // loop_pre_header
                _
              $region34: #{cxr_autoencoder_forward.13} parent=31 // loop_header
                %s183 = sphi 0, %s187
                %p184 = scmp.ge.s32.totalorder %s183, 1
                %s188 = sphi %s175, %s175
                %s189 = sphi %s169, %s169
              $region35: #{cxr_autoencoder_forward.13} parent=31 // loop_header_branch
                %186 = sbr.rel (%p184) target = $region39
              $region36: #{cxr_autoencoder_forward.13} parent=31 // loop_body
                %v190 = vld [vmem:[%s188] sm:$0xff]
                %191 = vst [vmem:[%s189] sm:$0xff] %v190
                %v192 = vld [vmem:[%s188 + $0x24] sm:$0xff]
                %193 = vst [vmem:[%s189 + $0xc] sm:$0xff] %v192
                %v194 = vld [vmem:[%s188 + $0x48] sm:$0xff]
                %195 = vst [vmem:[%s189 + $0x18] sm:$0xff] %v194
                %v196 = vld [vmem:[%s188 + $0x6c] sm:$0xff]
                %197 = vst [vmem:[%s189 + $0x24] sm:$0xff] %v196
                %v198 = vld [vmem:[%s188 + $0x90] sm:$0xff]
                %199 = vst [vmem:[%s189 + $0x30] sm:$0xff] %v198
                %v200 = vld [vmem:[%s188 + $0xb4] sm:$0xff]
                %201 = vst [vmem:[%s189 + $0x3c] sm:$0xff] %v200
                %v202 = vld [vmem:[%s188 + $0xd8] sm:$0xff]
                %203 = vst [vmem:[%s189 + $0x48] sm:$0xff] %v202
                %v204 = vld [vmem:[%s188 + $0xfc] sm:$0xff]
                %205 = vst [vmem:[%s189 + $0x54] sm:$0xff] %v204
                %v206 = vld [vmem:[%s188 + $0x120] sm:$0xff]
                %207 = vst [vmem:[%s189 + $0x60] sm:$0xff] %v206
                %v208 = vld [vmem:[%s188 + $0x144] sm:$0xff]
                %209 = vst [vmem:[%s189 + $0x6c] sm:$0xff] %v208
                %v210 = vld [vmem:[%s188 + $0x168] sm:$0xff]
                %211 = vst [vmem:[%s189 + $0x78] sm:$0xff] %v210
                %v212 = vld [vmem:[%s188 + $0x18c] sm:$0xff]
                %213 = vst [vmem:[%s189 + $0x84] sm:$0xff] %v212
                %v214 = vld [vmem:[%s188 + $0x1b0] sm:$0xff]
                %215 = vst [vmem:[%s189 + $0x90] sm:$0xff] %v214
                %v216 = vld [vmem:[%s188 + $0x1d4] sm:$0xff]
                %217 = vst [vmem:[%s189 + $0x9c] sm:$0xff] %v216
                %v218 = vld [vmem:[%s188 + $0x1f8] sm:$0xff]
                %219 = vst [vmem:[%s189 + $0xa8] sm:$0xff] %v218
                %v220 = vld [vmem:[%s188 + $0x21c] sm:$0xff]
                %221 = vst [vmem:[%s189 + $0xb4] sm:$0xff] %v220
                %v222 = vld [vmem:[%s188 + $0x240] sm:$0xff]
                %223 = vst [vmem:[%s189 + $0xc0] sm:$0xff] %v222
                %v224 = vld [vmem:[%s188 + $0x264] sm:$0xff]
                %225 = vst [vmem:[%s189 + $0xcc] sm:$0xff] %v224
                %v226 = vld [vmem:[%s188 + $0x288] sm:$0xff]
                %227 = vst [vmem:[%s189 + $0xd8] sm:$0xff] %v226
                %v228 = vld [vmem:[%s188 + $0x2ac] sm:$0xff]
                %229 = vst [vmem:[%s189 + $0xe4] sm:$0xff] %v228
                %v230 = vld [vmem:[%s188 + $0x2d0] sm:$0xff]
                %231 = vst [vmem:[%s189 + $0xf0] sm:$0xff] %v230
                %v232 = vld [vmem:[%s188 + $0x2f4] sm:$0xff]
                %233 = vst [vmem:[%s189 + $0xfc] sm:$0xff] %v232
                %v234 = vld [vmem:[%s188 + $0x318] sm:$0xff]
                %235 = vst [vmem:[%s189 + $0x108] sm:$0xff] %v234
                %v236 = vld [vmem:[%s188 + $0x33c] sm:$0xff]
                %237 = vst [vmem:[%s189 + $0x114] sm:$0xff] %v236
                %v238 = vld [vmem:[%s188 + $0x360] sm:$0xff]
                %239 = vst [vmem:[%s189 + $0x120] sm:$0xff] %v238
                %v240 = vld [vmem:[%s188 + $0x384] sm:$0xff]
                %241 = vst [vmem:[%s189 + $0x12c] sm:$0xff] %v240
                %v242 = vld [vmem:[%s188 + $0x3a8] sm:$0xff]
                %243 = vst [vmem:[%s189 + $0x138] sm:$0xff] %v242
                %v244 = vld [vmem:[%s188 + $0x3cc] sm:$0xff]
                %245 = vst [vmem:[%s189 + $0x144] sm:$0xff] %v244
                %v246 = vld [vmem:[%s188 + $0x3f0] sm:$0xff]
                %247 = vst [vmem:[%s189 + $0x150] sm:$0xff] %v246
                %v248 = vld [vmem:[%s188 + $0x414] sm:$0xff]
                %249 = vst [vmem:[%s189 + $0x15c] sm:$0xff] %v248
                %v250 = vld [vmem:[%s188 + $0x438] sm:$0xff]
                %251 = vst [vmem:[%s189 + $0x168] sm:$0xff] %v250
                %v252 = vld [vmem:[%s188 + $0x45c] sm:$0xff]
                %253 = vst [vmem:[%s189 + $0x174] sm:$0xff] %v252
              $region37: #{cxr_autoencoder_forward.13} parent=31 // loop_footer
                %s187 = sadd.s32 1, %s183
              $region38: #{cxr_autoencoder_forward.13} parent=31 // loop_footer_branch
                %182 = sbr.rel target = $region34
              $region39: #{cxr_autoencoder_forward.13} parent=31 // loop_exit
                _
              loop: start=0, step=1, limit=1
              $region40: #{cxr_autoencoder_forward.13} parent=31 // loop_pre_header
                _
              $region41: #{cxr_autoencoder_forward.13} parent=31 // loop_header
                %s256 = sphi 0, %s260
                %p257 = scmp.ge.s32.totalorder %s256, 1
                %s261 = sphi %s180, %s180
                %s262 = sphi %s181, %s181
              $region42: #{cxr_autoencoder_forward.13} parent=31 // loop_header_branch
                %259 = sbr.rel (%p257) target = $region46
              $region43: #{cxr_autoencoder_forward.13} parent=31 // loop_body
                %v263 = vld [vmem:[%s261] sm:$0xf]
                %264 = vst [vmem:[%s262] sm:$0xf] %v263
                %v265 = vld [vmem:[%s261 + $0x24] sm:$0xf]
                %266 = vst [vmem:[%s262 + $0xc] sm:$0xf] %v265
                %v267 = vld [vmem:[%s261 + $0x48] sm:$0xf]
                %268 = vst [vmem:[%s262 + $0x18] sm:$0xf] %v267
                %v269 = vld [vmem:[%s261 + $0x6c] sm:$0xf]
                %270 = vst [vmem:[%s262 + $0x24] sm:$0xf] %v269
                %v271 = vld [vmem:[%s261 + $0x90] sm:$0xf]
                %272 = vst [vmem:[%s262 + $0x30] sm:$0xf] %v271
                %v273 = vld [vmem:[%s261 + $0xb4] sm:$0xf]
                %274 = vst [vmem:[%s262 + $0x3c] sm:$0xf] %v273
                %v275 = vld [vmem:[%s261 + $0xd8] sm:$0xf]
                %276 = vst [vmem:[%s262 + $0x48] sm:$0xf] %v275
                %v277 = vld [vmem:[%s261 + $0xfc] sm:$0xf]
                %278 = vst [vmem:[%s262 + $0x54] sm:$0xf] %v277
                %v279 = vld [vmem:[%s261 + $0x120] sm:$0xf]
                %280 = vst [vmem:[%s262 + $0x60] sm:$0xf] %v279
                %v281 = vld [vmem:[%s261 + $0x144] sm:$0xf]
                %282 = vst [vmem:[%s262 + $0x6c] sm:$0xf] %v281
                %v283 = vld [vmem:[%s261 + $0x168] sm:$0xf]
                %284 = vst [vmem:[%s262 + $0x78] sm:$0xf] %v283
                %v285 = vld [vmem:[%s261 + $0x18c] sm:$0xf]
                %286 = vst [vmem:[%s262 + $0x84] sm:$0xf] %v285
                %v287 = vld [vmem:[%s261 + $0x1b0] sm:$0xf]
                %288 = vst [vmem:[%s262 + $0x90] sm:$0xf] %v287
                %v289 = vld [vmem:[%s261 + $0x1d4] sm:$0xf]
                %290 = vst [vmem:[%s262 + $0x9c] sm:$0xf] %v289
                %v291 = vld [vmem:[%s261 + $0x1f8] sm:$0xf]
                %292 = vst [vmem:[%s262 + $0xa8] sm:$0xf] %v291
                %v293 = vld [vmem:[%s261 + $0x21c] sm:$0xf]
                %294 = vst [vmem:[%s262 + $0xb4] sm:$0xf] %v293
                %v295 = vld [vmem:[%s261 + $0x240] sm:$0xf]
                %296 = vst [vmem:[%s262 + $0xc0] sm:$0xf] %v295
                %v297 = vld [vmem:[%s261 + $0x264] sm:$0xf]
                %298 = vst [vmem:[%s262 + $0xcc] sm:$0xf] %v297
                %v299 = vld [vmem:[%s261 + $0x288] sm:$0xf]
                %300 = vst [vmem:[%s262 + $0xd8] sm:$0xf] %v299
                %v301 = vld [vmem:[%s261 + $0x2ac] sm:$0xf]
                %302 = vst [vmem:[%s262 + $0xe4] sm:$0xf] %v301
                %v303 = vld [vmem:[%s261 + $0x2d0] sm:$0xf]
                %304 = vst [vmem:[%s262 + $0xf0] sm:$0xf] %v303
                %v305 = vld [vmem:[%s261 + $0x2f4] sm:$0xf]
                %306 = vst [vmem:[%s262 + $0xfc] sm:$0xf] %v305
                %v307 = vld [vmem:[%s261 + $0x318] sm:$0xf]
                %308 = vst [vmem:[%s262 + $0x108] sm:$0xf] %v307
                %v309 = vld [vmem:[%s261 + $0x33c] sm:$0xf]
                %310 = vst [vmem:[%s262 + $0x114] sm:$0xf] %v309
                %v311 = vld [vmem:[%s261 + $0x360] sm:$0xf]
                %312 = vst [vmem:[%s262 + $0x120] sm:$0xf] %v311
                %v313 = vld [vmem:[%s261 + $0x384] sm:$0xf]
                %314 = vst [vmem:[%s262 + $0x12c] sm:$0xf] %v313
                %v315 = vld [vmem:[%s261 + $0x3a8] sm:$0xf]
                %316 = vst [vmem:[%s262 + $0x138] sm:$0xf] %v315
                %v317 = vld [vmem:[%s261 + $0x3cc] sm:$0xf]
                %318 = vst [vmem:[%s262 + $0x144] sm:$0xf] %v317
                %v319 = vld [vmem:[%s261 + $0x3f0] sm:$0xf]
                %320 = vst [vmem:[%s262 + $0x150] sm:$0xf] %v319
                %v321 = vld [vmem:[%s261 + $0x414] sm:$0xf]
                %322 = vst [vmem:[%s262 + $0x15c] sm:$0xf] %v321
                %v323 = vld [vmem:[%s261 + $0x438] sm:$0xf]
                %324 = vst [vmem:[%s262 + $0x168] sm:$0xf] %v323
                %v325 = vld [vmem:[%s261 + $0x45c] sm:$0xf]
                %326 = vst [vmem:[%s262 + $0x174] sm:$0xf] %v325
              $region44: #{cxr_autoencoder_forward.13} parent=31 // loop_footer
                %s260 = sadd.s32 1, %s256
              $region45: #{cxr_autoencoder_forward.13} parent=31 // loop_footer_branch
                %255 = sbr.rel target = $region41
              $region46: #{cxr_autoencoder_forward.13} parent=31 // loop_exit
                _
            $region32: #{cxr_autoencoder_forward.13} parent=27 // pred_fallthru
              _
          $region28: #{cxr_autoencoder_forward.13} parent=23 // pred_fallthru
            _
          %327 = vnop
        $region24: #{cxr_autoencoder_forward.13} parent=19 // pred_fallthru
          _
        // Predicated region
        $region47: #{cxr_autoencoder_forward.13} parent=19 // pred_check
          %p328 = pneg %p78
        $region48: #{cxr_autoencoder_forward.13} parent=19 // pred_check_branch
          %330 = sbr.rel (%p328) target = $region50
        $region49: #{cxr_autoencoder_forward.13} parent=19 // pred_region
          %s331 = smul.u32 48, %s18
          %p332 = scmp.lt.s32.totalorder %s331, 143
          %s333 = scalar_select %p332, %s331, 143
          %p334 = scmp.lt.s32.totalorder %s17, 0
          %s335 = scalar_select %p334, %s17, 0
          %s336 = sadd.s32 %s335, %s333
          %s337 = smul.addr %s336, 4
          %s338 = scalar_lea.vmem %s1, %s337
          %s339 = smul.u32 48, %s18
        $region50: #{cxr_autoencoder_forward.13} parent=19 // pred_fallthru
          _
      $region20: #{cxr_autoencoder_forward.13} parent=5 // pred_fallthru
        _
      %p340 = scmp.le.s32.totalorder 1, %s9
      %p341 = scmp.lt.s32.totalorder %s9, 25
      %p342 = pnand %p340, %p341
      %p343 = pneg %p342
      // Predicated region
      $region51: #{cxr_autoencoder_forward.13} parent=5 // pred_check
        _
      $region52: #{cxr_autoencoder_forward.13} parent=5 // pred_check_branch
        %345 = sbr.rel (%p342) target = $region54
      $region53: #{cxr_autoencoder_forward.13} parent=5 // pred_region
        %s346 = ssub.s32 %s9, 1
        %s347 = sand.u32 %s43, 1
        %s348 = sand.u32 %s43, 1
        %s349 = smul.addr %s348, 384
        %s350 = scalar_lea.vmem [#allocation3], %s349
        // Predicated region
        $region55: #{cxr_autoencoder_forward.13} parent=53 // pred_check
          %p351 = pneg %p56
        $region56: #{cxr_autoencoder_forward.13} parent=53 // pred_check_branch
          %353 = sbr.rel (%p351) target = $region58
        $region57: #{cxr_autoencoder_forward.13} parent=53 // pred_region
          _
        $region58: #{cxr_autoencoder_forward.13} parent=53 // pred_fallthru
          _
        %s354 = sand.u32 %s43, 1
        %s355 = sand.u32 %s43, 1
        %s356 = smul.addr %s355, 384
        %s357 = scalar_lea.vmem [#allocation3], %s356
        %p358 = pneg %p56
        %p359 = pneg %p53
        %s360 = smul.u32 48, %s21
        %p361 = scmp.lt.s32.totalorder %s360, 143
        %s362 = scalar_select %p361, %s360, 143
        %p363 = scmp.lt.s32.totalorder %s20, 0
        %s364 = scalar_select %p363, %s20, 0
        %s365 = sadd.s32 %s364, %s362
        %s366 = smul.addr %s365, 4
        %s367 = scalar_lea.vmem %s1, %s366
        %p368 = pneg %p84
        %p369 = pneg %p81
        %p370 = scmp.lt.s32.totalorder %s20, 0
        %s371 = scalar_select %p370, %s20, 0
        %s372 = scalar_lea.vmem %s2, %s371
        %p373 = pneg %p110
        %p374 = pneg %p107
        %p375 = pneg %p138
        %p376 = pneg %p135
        %s377 = smul.u32 32, %s19
        %p378 = scmp.lt.s32.totalorder %s377, 255
        %s379 = scalar_select %p378, %s377, 255
        %p380 = scmp.lt.s32.totalorder %s20, 0
        %s381 = scalar_select %p380, %s20, 0
        %s382 = sadd.s32 %s381, %s379
        %s383 = smul.addr %s382, 8
        %s384 = scalar_lea.vmem %s3, %s383
        %s385 = smul.u32 32, %s19
        %s386 = smul.u32 3, %s21
        %s387 = smul.u32 48, %s21
        %p388 = scmp.lt.s32.totalorder %s387, 143
        %s389 = scalar_select %p388, %s387, 143
        %p390 = scmp.lt.s32.totalorder %s20, 0
        %s391 = scalar_select %p390, %s20, 0
        %s392 = sadd.s32 %s391, %s389
        %s393 = smul.addr %s392, 4
        %s394 = scalar_lea.vmem %s1, %s393
        %s395 = smul.u32 48, %s21
        %p396 = scmp.lt.s32.totalorder %s20, 0
        %s397 = scalar_select %p396, %s20, 0
        %s398 = scalar_lea.vmem %s2, %s397
        %s399 = smul.u32 32, %s19
        %p400 = scmp.lt.s32.totalorder %s399, 255
        %s401 = scalar_select %p400, %s399, 255
        %p402 = scmp.lt.s32.totalorder %s20, 0
        %s403 = scalar_select %p402, %s20, 0
        %s404 = sadd.s32 %s403, %s401
        %s405 = smul.addr %s404, 8
        %s406 = scalar_lea.vmem %s3, %s405
        %s407 = smul.u32 32, %s19
        %p409 = scmp.eq.s32.totalorder %s21, 0
        // Predicated region
        $region59: #{cxr_autoencoder_forward.13} parent=53 // pred_check
          %p410 = pneg %p409
        $region60: #{cxr_autoencoder_forward.13} parent=53 // pred_check_branch
          %412 = sbr.rel (%p410) target = $region62
        $region61: #{cxr_autoencoder_forward.13} parent=53 // pred_region
          %413 = vst [vmem:[#allocation2] sm:$0xff] 0.0
          %414 = vst [vmem:[#allocation2 + $0x8] sm:$0xff] 0.0
          %415 = vst [vmem:[#allocation2 + $0x10] sm:$0xff] 0.0
          %416 = vst [vmem:[#allocation2 + $0x18] sm:$0xff] 0.0
          %417 = vst [vmem:[#allocation2 + $0x20] sm:$0xff] 0.0
          %418 = vst [vmem:[#allocation2 + $0x28] sm:$0xff] 0.0
          %419 = vst [vmem:[#allocation2 + $0x30] sm:$0xff] 0.0
          %420 = vst [vmem:[#allocation2 + $0x38] sm:$0xff] 0.0
          %421 = vst [vmem:[#allocation2 + $0x40] sm:$0xff] 0.0
          %422 = vst [vmem:[#allocation2 + $0x48] sm:$0xff] 0.0
          %423 = vst [vmem:[#allocation2 + $0x50] sm:$0xff] 0.0
          %424 = vst [vmem:[#allocation2 + $0x58] sm:$0xff] 0.0
          %425 = vst [vmem:[#allocation2 + $0x60] sm:$0xff] 0.0
          %426 = vst [vmem:[#allocation2 + $0x68] sm:$0xff] 0.0
          %427 = vst [vmem:[#allocation2 + $0x70] sm:$0xff] 0.0
          %428 = vst [vmem:[#allocation2 + $0x78] sm:$0xff] 0.0
          %429 = vst [vmem:[#allocation2 + $0x80] sm:$0xff] 0.0
          %430 = vst [vmem:[#allocation2 + $0x88] sm:$0xff] 0.0
          %431 = vst [vmem:[#allocation2 + $0x90] sm:$0xff] 0.0
          %432 = vst [vmem:[#allocation2 + $0x98] sm:$0xff] 0.0
          %433 = vst [vmem:[#allocation2 + $0xa0] sm:$0xff] 0.0
          %434 = vst [vmem:[#allocation2 + $0xa8] sm:$0xff] 0.0
          %435 = vst [vmem:[#allocation2 + $0xb0] sm:$0xff] 0.0
          %436 = vst [vmem:[#allocation2 + $0xb8] sm:$0xff] 0.0
          %437 = vst [vmem:[#allocation2 + $0xc0] sm:$0xff] 0.0
          %438 = vst [vmem:[#allocation2 + $0xc8] sm:$0xff] 0.0
          %439 = vst [vmem:[#allocation2 + $0xd0] sm:$0xff] 0.0
          %440 = vst [vmem:[#allocation2 + $0xd8] sm:$0xff] 0.0
          %441 = vst [vmem:[#allocation2 + $0xe0] sm:$0xff] 0.0
          %442 = vst [vmem:[#allocation2 + $0xe8] sm:$0xff] 0.0
          %443 = vst [vmem:[#allocation2 + $0xf0] sm:$0xff] 0.0
          %444 = vst [vmem:[#allocation2 + $0xf8] sm:$0xff] 0.0
        $region62: #{cxr_autoencoder_forward.13} parent=53 // pred_fallthru
          _
        %v445 = vld [vmem:[#allocation2] sm:$0xff]
        %v446 = vld [vmem:[#allocation2 + $0x8] sm:$0xff]
        %v447 = vld [vmem:[#allocation2 + $0x10] sm:$0xff]
        %v448 = vld [vmem:[#allocation2 + $0x18] sm:$0xff]
        %v449 = vld [vmem:[#allocation2 + $0x20] sm:$0xff]
        %v450 = vld [vmem:[#allocation2 + $0x28] sm:$0xff]
        %v451 = vld [vmem:[#allocation2 + $0x30] sm:$0xff]
        %v452 = vld [vmem:[#allocation2 + $0x38] sm:$0xff]
        %v453 = vld [vmem:[#allocation2 + $0x40] sm:$0xff]
        %v454 = vld [vmem:[#allocation2 + $0x48] sm:$0xff]
        %v455 = vld [vmem:[#allocation2 + $0x50] sm:$0xff]
        %v456 = vld [vmem:[#allocation2 + $0x58] sm:$0xff]
        %v457 = vld [vmem:[#allocation2 + $0x60] sm:$0xff]
        %v458 = vld [vmem:[#allocation2 + $0x68] sm:$0xff]
        %v459 = vld [vmem:[#allocation2 + $0x70] sm:$0xff]
        %v460 = vld [vmem:[#allocation2 + $0x78] sm:$0xff]
        %v461 = vld [vmem:[#allocation2 + $0x80] sm:$0xff]
        %v462 = vld [vmem:[#allocation2 + $0x88] sm:$0xff]
        %v463 = vld [vmem:[#allocation2 + $0x90] sm:$0xff]
        %v464 = vld [vmem:[#allocation2 + $0x98] sm:$0xff]
        %v465 = vld [vmem:[#allocation2 + $0xa0] sm:$0xff]
        %v466 = vld [vmem:[#allocation2 + $0xa8] sm:$0xff]
        %v467 = vld [vmem:[#allocation2 + $0xb0] sm:$0xff]
        %v468 = vld [vmem:[#allocation2 + $0xb8] sm:$0xff]
        %v469 = vld [vmem:[#allocation2 + $0xc0] sm:$0xff]
        %v470 = vld [vmem:[#allocation2 + $0xc8] sm:$0xff]
        %v471 = vld [vmem:[#allocation2 + $0xd0] sm:$0xff]
        %v472 = vld [vmem:[#allocation2 + $0xd8] sm:$0xff]
        %v473 = vld [vmem:[#allocation2 + $0xe0] sm:$0xff]
        %v474 = vld [vmem:[#allocation2 + $0xe8] sm:$0xff]
        %v475 = vld [vmem:[#allocation2 + $0xf0] sm:$0xff]
        %v476 = vld [vmem:[#allocation2 + $0xf8] sm:$0xff]
        %v477 = vld [vmem:[%s350] sm:$0xff]
        %v478 = vld [vmem:[%s350 + $0x8] sm:$0xf]
        %v479 = vld [vmem:[%s350 + $0xc] sm:$0xff]
        %v480 = vld [vmem:[%s350 + $0x14] sm:$0xf]
        %v481 = vld [vmem:[%s350 + $0x18] sm:$0xff]
        %v482 = vld [vmem:[%s350 + $0x20] sm:$0xf]
        %v483 = vld [vmem:[%s350 + $0x24] sm:$0xff]
        %v484 = vld [vmem:[%s350 + $0x2c] sm:$0xf]
        %v485 = vld [vmem:[%s350 + $0x30] sm:$0xff]
        %v486 = vld [vmem:[%s350 + $0x38] sm:$0xf]
        %v487 = vld [vmem:[%s350 + $0x3c] sm:$0xff]
        %v488 = vld [vmem:[%s350 + $0x44] sm:$0xf]
        %v489 = vld [vmem:[%s350 + $0x48] sm:$0xff]
        %v490 = vld [vmem:[%s350 + $0x50] sm:$0xf]
        %v491 = vld [vmem:[%s350 + $0x54] sm:$0xff]
        %v492 = vld [vmem:[%s350 + $0x5c] sm:$0xf]
        %v493 = vld [vmem:[%s350 + $0x60] sm:$0xff]
        %v494 = vld [vmem:[%s350 + $0x68] sm:$0xf]
        %v495 = vld [vmem:[%s350 + $0x6c] sm:$0xff]
        %v496 = vld [vmem:[%s350 + $0x74] sm:$0xf]
        %v497 = vld [vmem:[%s350 + $0x78] sm:$0xff]
        %v498 = vld [vmem:[%s350 + $0x80] sm:$0xf]
        %v499 = vld [vmem:[%s350 + $0x84] sm:$0xff]
        %v500 = vld [vmem:[%s350 + $0x8c] sm:$0xf]
        %v501 = vld [vmem:[%s350 + $0x90] sm:$0xff]
        %v502 = vld [vmem:[%s350 + $0x98] sm:$0xf]
        %v503 = vld [vmem:[%s350 + $0x9c] sm:$0xff]
        %v504 = vld [vmem:[%s350 + $0xa4] sm:$0xf]
        %v505 = vld [vmem:[%s350 + $0xa8] sm:$0xff]
        %v506 = vld [vmem:[%s350 + $0xb0] sm:$0xf]
        %v507 = vld [vmem:[%s350 + $0xb4] sm:$0xff]
        %v508 = vld [vmem:[%s350 + $0xbc] sm:$0xf]
        %v509 = vld [vmem:[%s350 + $0xc0] sm:$0xff]
        %v510 = vld [vmem:[%s350 + $0xc8] sm:$0xf]
        %v511 = vld [vmem:[%s350 + $0xcc] sm:$0xff]
        %v512 = vld [vmem:[%s350 + $0xd4] sm:$0xf]
        %v513 = vld [vmem:[%s350 + $0xd8] sm:$0xff]
        %v514 = vld [vmem:[%s350 + $0xe0] sm:$0xf]
        %v515 = vld [vmem:[%s350 + $0xe4] sm:$0xff]
        %v516 = vld [vmem:[%s350 + $0xec] sm:$0xf]
        %v517 = vld [vmem:[%s350 + $0xf0] sm:$0xff]
        %v518 = vld [vmem:[%s350 + $0xf8] sm:$0xf]
        %v519 = vld [vmem:[%s350 + $0xfc] sm:$0xff]
        %v520 = vld [vmem:[%s350 + $0x104] sm:$0xf]
        %v521 = vld [vmem:[%s350 + $0x108] sm:$0xff]
        %v522 = vld [vmem:[%s350 + $0x110] sm:$0xf]
        %v523 = vld [vmem:[%s350 + $0x114] sm:$0xff]
        %v524 = vld [vmem:[%s350 + $0x11c] sm:$0xf]
        %v525 = vld [vmem:[%s350 + $0x120] sm:$0xff]
        %v526 = vld [vmem:[%s350 + $0x128] sm:$0xf]
        %v527 = vld [vmem:[%s350 + $0x12c] sm:$0xff]
        %v528 = vld [vmem:[%s350 + $0x134] sm:$0xf]
        %v529 = vld [vmem:[%s350 + $0x138] sm:$0xff]
        %v530 = vld [vmem:[%s350 + $0x140] sm:$0xf]
        %v531 = vld [vmem:[%s350 + $0x144] sm:$0xff]
        %v532 = vld [vmem:[%s350 + $0x14c] sm:$0xf]
        %v533 = vld [vmem:[%s350 + $0x150] sm:$0xff]
        %v534 = vld [vmem:[%s350 + $0x158] sm:$0xf]
        %v535 = vld [vmem:[%s350 + $0x15c] sm:$0xff]
        %v536 = vld [vmem:[%s350 + $0x164] sm:$0xf]
        %v537 = vld [vmem:[%s350 + $0x168] sm:$0xff]
        %v538 = vld [vmem:[%s350 + $0x170] sm:$0xf]
        %v539 = vld [vmem:[%s350 + $0x174] sm:$0xff]
        %v540 = vld [vmem:[%s350 + $0x17c] sm:$0xf]
        %v541 = vld [vmem:[%s394] sm:$0xf]
        %v542 = vld [vmem:[%s394 + $0x4] sm:$0xf]
        %v543 = vld [vmem:[%s394 + $0x8] sm:$0xf]
        %v544 = vld [vmem:[%s394 + $0xc] sm:$0xf]
        %v545 = vld [vmem:[%s394 + $0x10] sm:$0xf]
        %v546 = vld [vmem:[%s394 + $0x14] sm:$0xf]
        %v547 = vld [vmem:[%s394 + $0x18] sm:$0xf]
        %v548 = vld [vmem:[%s394 + $0x1c] sm:$0xf]
        %v549 = vld [vmem:[%s394 + $0x20] sm:$0xf]
        %v550 = vld [vmem:[%s394 + $0x24] sm:$0xf]
        %v551 = vld [vmem:[%s394 + $0x28] sm:$0xf]
        %v552 = vld [vmem:[%s394 + $0x2c] sm:$0xf]
        %v553 = vld [vmem:[%s394 + $0x30] sm:$0xf]
        %v554 = vld [vmem:[%s394 + $0x34] sm:$0xf]
        %v555 = vld [vmem:[%s394 + $0x38] sm:$0xf]
        %v556 = vld [vmem:[%s394 + $0x3c] sm:$0xf]
        %v557 = vld [vmem:[%s394 + $0x40] sm:$0xf]
        %v558 = vld [vmem:[%s394 + $0x44] sm:$0xf]
        %v559 = vld [vmem:[%s394 + $0x48] sm:$0xf]
        %v560 = vld [vmem:[%s394 + $0x4c] sm:$0xf]
        %v561 = vld [vmem:[%s394 + $0x50] sm:$0xf]
        %v562 = vld [vmem:[%s394 + $0x54] sm:$0xf]
        %v563 = vld [vmem:[%s394 + $0x58] sm:$0xf]
        %v564 = vld [vmem:[%s394 + $0x5c] sm:$0xf]
        %v565 = vld [vmem:[%s394 + $0x60] sm:$0xf]
        %v566 = vld [vmem:[%s394 + $0x64] sm:$0xf]
        %v567 = vld [vmem:[%s394 + $0x68] sm:$0xf]
        %v568 = vld [vmem:[%s394 + $0x6c] sm:$0xf]
        %v569 = vld [vmem:[%s394 + $0x70] sm:$0xf]
        %v570 = vld [vmem:[%s394 + $0x74] sm:$0xf]
        %v571 = vld [vmem:[%s394 + $0x78] sm:$0xf]
        %v572 = vld [vmem:[%s394 + $0x7c] sm:$0xf]
        %v573 = vld [vmem:[%s394 + $0x80] sm:$0xf]
        %v574 = vld [vmem:[%s394 + $0x84] sm:$0xf]
        %v575 = vld [vmem:[%s394 + $0x88] sm:$0xf]
        %v576 = vld [vmem:[%s394 + $0x8c] sm:$0xf]
        %v577 = vld [vmem:[%s394 + $0x90] sm:$0xf]
        %v578 = vld [vmem:[%s394 + $0x94] sm:$0xf]
        %v579 = vld [vmem:[%s394 + $0x98] sm:$0xf]
        %v580 = vld [vmem:[%s394 + $0x9c] sm:$0xf]
        %v581 = vld [vmem:[%s394 + $0xa0] sm:$0xf]
        %v582 = vld [vmem:[%s394 + $0xa4] sm:$0xf]
        %v583 = vld [vmem:[%s394 + $0xa8] sm:$0xf]
        %v584 = vld [vmem:[%s394 + $0xac] sm:$0xf]
        %v585 = vld [vmem:[%s394 + $0xb0] sm:$0xf]
        %v586 = vld [vmem:[%s394 + $0xb4] sm:$0xf]
        %v587 = vld [vmem:[%s394 + $0xb8] sm:$0xf]
        %v588 = vld [vmem:[%s394 + $0xbc] sm:$0xf]
        %v653 = vunpack.c.l.b16 %v477
        %v654 = vunpack.c.h.b16 %v477
        %v655 = vunpack.c.l.b16 %v478
        %v656 = vunpack.c.l.b16 %v479
        %v657 = vunpack.c.h.b16 %v479
        %v658 = vunpack.c.l.b16 %v480
        %v659 = vunpack.c.l.b16 %v481
        %v660 = vunpack.c.h.b16 %v481
        %v661 = vunpack.c.l.b16 %v482
        %v662 = vunpack.c.l.b16 %v483
        %v663 = vunpack.c.h.b16 %v483
        %v664 = vunpack.c.l.b16 %v484
        %v665 = vunpack.c.l.b16 %v485
        %v666 = vunpack.c.h.b16 %v485
        %v667 = vunpack.c.l.b16 %v486
        %v668 = vunpack.c.l.b16 %v487
        %v669 = vunpack.c.h.b16 %v487
        %v670 = vunpack.c.l.b16 %v488
        %v671 = vunpack.c.l.b16 %v489
        %v672 = vunpack.c.h.b16 %v489
        %v673 = vunpack.c.l.b16 %v490
        %v674 = vunpack.c.l.b16 %v491
        %v675 = vunpack.c.h.b16 %v491
        %v676 = vunpack.c.l.b16 %v492
        %v677 = vunpack.c.l.b16 %v493
        %v678 = vunpack.c.h.b16 %v493
        %v679 = vunpack.c.l.b16 %v494
        %v680 = vunpack.c.l.b16 %v495
        %v681 = vunpack.c.h.b16 %v495
        %v682 = vunpack.c.l.b16 %v496
        %v683 = vunpack.c.l.b16 %v497
        %v684 = vunpack.c.h.b16 %v497
        %v685 = vunpack.c.l.b16 %v498
        %v686 = vunpack.c.l.b16 %v499
        %v687 = vunpack.c.h.b16 %v499
        %v688 = vunpack.c.l.b16 %v500
        %v689 = vunpack.c.l.b16 %v501
        %v690 = vunpack.c.h.b16 %v501
        %v691 = vunpack.c.l.b16 %v502
        %v692 = vunpack.c.l.b16 %v503
        %v693 = vunpack.c.h.b16 %v503
        %v694 = vunpack.c.l.b16 %v504
        %v695 = vunpack.c.l.b16 %v505
        %v696 = vunpack.c.h.b16 %v505
        %v697 = vunpack.c.l.b16 %v506
        %v698 = vunpack.c.l.b16 %v507
        %v699 = vunpack.c.h.b16 %v507
        %v700 = vunpack.c.l.b16 %v508
        %v701 = vunpack.c.l.b16 %v509
        %v702 = vunpack.c.h.b16 %v509
        %v703 = vunpack.c.l.b16 %v510
        %v704 = vunpack.c.l.b16 %v511
        %v705 = vunpack.c.h.b16 %v511
        %v706 = vunpack.c.l.b16 %v512
        %v707 = vunpack.c.l.b16 %v513
        %v708 = vunpack.c.h.b16 %v513
        %v709 = vunpack.c.l.b16 %v514
        %v710 = vunpack.c.l.b16 %v515
        %v711 = vunpack.c.h.b16 %v515
        %v712 = vunpack.c.l.b16 %v516
        %v713 = vunpack.c.l.b16 %v517
        %v714 = vunpack.c.h.b16 %v517
        %v715 = vunpack.c.l.b16 %v518
        %v716 = vunpack.c.l.b16 %v519
        %v717 = vunpack.c.h.b16 %v519
        %v718 = vunpack.c.l.b16 %v520
        %v719 = vunpack.c.l.b16 %v521
        %v720 = vunpack.c.h.b16 %v521
        %v721 = vunpack.c.l.b16 %v522
        %v722 = vunpack.c.l.b16 %v523
        %v723 = vunpack.c.h.b16 %v523
        %v724 = vunpack.c.l.b16 %v524
        %v725 = vunpack.c.l.b16 %v525
        %v726 = vunpack.c.h.b16 %v525
        %v727 = vunpack.c.l.b16 %v526
        %v728 = vunpack.c.l.b16 %v527
        %v729 = vunpack.c.h.b16 %v527
        %v730 = vunpack.c.l.b16 %v528
        %v731 = vunpack.c.l.b16 %v529
        %v732 = vunpack.c.h.b16 %v529
        %v733 = vunpack.c.l.b16 %v530
        %v734 = vunpack.c.l.b16 %v531
        %v735 = vunpack.c.h.b16 %v531
        %v736 = vunpack.c.l.b16 %v532
        %v737 = vunpack.c.l.b16 %v533
        %v738 = vunpack.c.h.b16 %v533
        %v739 = vunpack.c.l.b16 %v534
        %v740 = vunpack.c.l.b16 %v535
        %v741 = vunpack.c.h.b16 %v535
        %v742 = vunpack.c.l.b16 %v536
        %v743 = vunpack.c.l.b16 %v537
        %v744 = vunpack.c.h.b16 %v537
        %v745 = vunpack.c.l.b16 %v538
        %v746 = vunpack.c.l.b16 %v539
        %v747 = vunpack.c.h.b16 %v539
        %v748 = vunpack.c.l.b16 %v540
        %v749 = vpack.c.b16 %v656, %v653
        %v750 = vpack.c.b16 %v657, %v654
        %v751 = vpack.c.b16 %v658, %v655
        %v752 = vpack.c.b16 %v662, %v659
        %v753 = vpack.c.b16 %v663, %v660
        %v754 = vpack.c.b16 %v664, %v661
        %v755 = vpack.c.b16 %v668, %v665
        %v756 = vpack.c.b16 %v669, %v666
        %v757 = vpack.c.b16 %v670, %v667
        %v758 = vpack.c.b16 %v674, %v671
        %v759 = vpack.c.b16 %v675, %v672
        %v760 = vpack.c.b16 %v676, %v673
        %v761 = vpack.c.b16 %v680, %v677
        %v762 = vpack.c.b16 %v681, %v678
        %v763 = vpack.c.b16 %v682, %v679
        %v764 = vpack.c.b16 %v686, %v683
        %v765 = vpack.c.b16 %v687, %v684
        %v766 = vpack.c.b16 %v688, %v685
        %v767 = vpack.c.b16 %v692, %v689
        %v768 = vpack.c.b16 %v693, %v690
        %v769 = vpack.c.b16 %v694, %v691
        %v770 = vpack.c.b16 %v698, %v695
        %v771 = vpack.c.b16 %v699, %v696
        %v772 = vpack.c.b16 %v700, %v697
        %v773 = vpack.c.b16 %v704, %v701
        %v774 = vpack.c.b16 %v705, %v702
        %v775 = vpack.c.b16 %v706, %v703
        %v776 = vpack.c.b16 %v710, %v707
        %v777 = vpack.c.b16 %v711, %v708
        %v778 = vpack.c.b16 %v712, %v709
        %v779 = vpack.c.b16 %v716, %v713
        %v780 = vpack.c.b16 %v717, %v714
        %v781 = vpack.c.b16 %v718, %v715
        %v782 = vpack.c.b16 %v722, %v719
        %v783 = vpack.c.b16 %v723, %v720
        %v784 = vpack.c.b16 %v724, %v721
        %v785 = vpack.c.b16 %v728, %v725
        %v786 = vpack.c.b16 %v729, %v726
        %v787 = vpack.c.b16 %v730, %v727
        %v788 = vpack.c.b16 %v734, %v731
        %v789 = vpack.c.b16 %v735, %v732
        %v790 = vpack.c.b16 %v736, %v733
        %v791 = vpack.c.b16 %v740, %v737
        %v792 = vpack.c.b16 %v741, %v738
        %v793 = vpack.c.b16 %v742, %v739
        %v794 = vpack.c.b16 %v746, %v743
        %v795 = vpack.c.b16 %v747, %v744
        %v796 = vpack.c.b16 %v748, %v745
        %v893 = vunpack.c.l.b16 %v541
        %v894 = vunpack.c.l.b16 %v542
        %v895 = vunpack.c.l.b16 %v543
        %v896 = vunpack.c.l.b16 %v544
        %v897 = vunpack.c.l.b16 %v545
        %v898 = vunpack.c.l.b16 %v546
        %v899 = vunpack.c.l.b16 %v547
        %v900 = vunpack.c.l.b16 %v548
        %v901 = vunpack.c.l.b16 %v549
        %v902 = vunpack.c.l.b16 %v550
        %v903 = vunpack.c.l.b16 %v551
        %v904 = vunpack.c.l.b16 %v552
        %v905 = vunpack.c.l.b16 %v553
        %v906 = vunpack.c.l.b16 %v554
        %v907 = vunpack.c.l.b16 %v555
        %v908 = vunpack.c.l.b16 %v556
        %v909 = vunpack.c.l.b16 %v557
        %v910 = vunpack.c.l.b16 %v558
        %v911 = vunpack.c.l.b16 %v559
        %v912 = vunpack.c.l.b16 %v560
        %v913 = vunpack.c.l.b16 %v561
        %v914 = vunpack.c.l.b16 %v562
        %v915 = vunpack.c.l.b16 %v563
        %v916 = vunpack.c.l.b16 %v564
        %v917 = vunpack.c.l.b16 %v565
        %v918 = vunpack.c.l.b16 %v566
        %v919 = vunpack.c.l.b16 %v567
        %v920 = vunpack.c.l.b16 %v568
        %v921 = vunpack.c.l.b16 %v569
        %v922 = vunpack.c.l.b16 %v570
        %v923 = vunpack.c.l.b16 %v571
        %v924 = vunpack.c.l.b16 %v572
        %v925 = vunpack.c.l.b16 %v573
        %v926 = vunpack.c.l.b16 %v574
        %v927 = vunpack.c.l.b16 %v575
        %v928 = vunpack.c.l.b16 %v576
        %v929 = vunpack.c.l.b16 %v577
        %v930 = vunpack.c.l.b16 %v578
        %v931 = vunpack.c.l.b16 %v579
        %v932 = vunpack.c.l.b16 %v580
        %v933 = vunpack.c.l.b16 %v581
        %v934 = vunpack.c.l.b16 %v582
        %v935 = vunpack.c.l.b16 %v583
        %v936 = vunpack.c.l.b16 %v584
        %v937 = vunpack.c.l.b16 %v585
        %v938 = vunpack.c.l.b16 %v586
        %v939 = vunpack.c.l.b16 %v587
        %v940 = vunpack.c.l.b16 %v588
        %v941 = vpack.c.b16 %v894, %v893
        %v942 = vpack.c.b16 %v896, %v895
        %v943 = vpack.c.b16 %v898, %v897
        %v944 = vpack.c.b16 %v900, %v899
        %v945 = vpack.c.b16 %v902, %v901
        %v946 = vpack.c.b16 %v904, %v903
        %v947 = vpack.c.b16 %v906, %v905
        %v948 = vpack.c.b16 %v908, %v907
        %v949 = vpack.c.b16 %v910, %v909
        %v950 = vpack.c.b16 %v912, %v911
        %v951 = vpack.c.b16 %v914, %v913
        %v952 = vpack.c.b16 %v916, %v915
        %v953 = vpack.c.b16 %v918, %v917
        %v954 = vpack.c.b16 %v920, %v919
        %v955 = vpack.c.b16 %v922, %v921
        %v956 = vpack.c.b16 %v924, %v923
        %v957 = vpack.c.b16 %v926, %v925
        %v958 = vpack.c.b16 %v928, %v927
        %v959 = vpack.c.b16 %v930, %v929
        %v960 = vpack.c.b16 %v932, %v931
        %v961 = vpack.c.b16 %v934, %v933
        %v962 = vpack.c.b16 %v936, %v935
        %v963 = vpack.c.b16 %v938, %v937
        %v964 = vpack.c.b16 %v940, %v939
        %989 = vmatprep.subr.bf16.mxu0 0
        %990 = vmatpush1.bf16.msra.mxu0 %v941
        %991 = vmatprep.subr.bf16.mxu0 0
        %992 = vmatpush1.bf16.msra.mxu0 %v942
        %993 = vmatprep.subr.bf16.mxu0 0
        %994 = vmatpush1.bf16.msra.mxu0 %v943
        %995 = vmatprep.subr.bf16.mxu0 0
        %996 = vmatpush1.bf16.msra.mxu0 %v944
        %997 = vmatprep.subr.bf16.mxu0 0
        %998 = vmatpush1.bf16.msra.mxu0 %v945
        %999 = vmatprep.subr.bf16.mxu0 0
        %1000 = vmatpush1.bf16.msra.mxu0 %v946
        %1001 = vmatprep.subr.bf16.mxu0 0
        %1002 = vmatpush1.bf16.msra.mxu0 %v947
        %1003 = vmatprep.subr.bf16.mxu0 0
        %1004 = vmatpush1.bf16.msra.mxu0 %v948
        %1005 = vmatprep.subr.bf16.mxu0 0
        %1006 = vmatpush1.bf16.msra.mxu0 %v949
        %1007 = vmatprep.subr.bf16.mxu0 0
        %1008 = vmatpush1.bf16.msra.mxu0 %v950
        %1009 = vmatprep.subr.bf16.mxu0 0
        %1010 = vmatpush1.bf16.msra.mxu0 %v951
        %1011 = vmatprep.subr.bf16.mxu0 0
        %1012 = vmatpush1.bf16.msra.mxu0 %v952
        %1013 = vmatprep.subr.bf16.mxu0 0
        %1014 = vmatpush1.bf16.msra.mxu0 %v953
        %1015 = vmatprep.subr.bf16.mxu0 0
        %1016 = vmatpush1.bf16.msra.mxu0 %v954
        %1017 = vmatprep.subr.bf16.mxu0 0
        %1018 = vmatpush1.bf16.msra.mxu0 %v955
        %1019 = vmatprep.subr.bf16.mxu0 0
        %1020 = vmatpush1.bf16.msra.mxu0 %v956
        %1021 = vmatprep.mubr.bf16.mxu0 %v750
        %1022 = vmatmul.mubr.bf16.gmra.mrb[0].mxu0 %v749
        %v1023 = vpop.f32.mrb[0].mxu0
        %v1024 = vadd.f32 0.0, %v1023
        %v1025 = vpop.f32.mrb[0].mxu0
        %v1026 = vpop.f32.mrb[0].mxu0
        %v1027 = vadd.f32 0.0, %v1026
        %v1028 = vpop.f32.mrb[0].mxu0
        %1029 = vmatprep.mubr.bf16.mxu0 %v753
        %1030 = vmatmul.mubr.bf16.gmra.mrb[0].mxu0 %v752
        %v1031 = vpop.f32.mrb[0].mxu0
        %v1032 = vadd.f32 0.0, %v1031
        %v1033 = vpop.f32.mrb[0].mxu0
        %v1034 = vpop.f32.mrb[0].mxu0
        %v1035 = vadd.f32 0.0, %v1034
        %v1036 = vpop.f32.mrb[0].mxu0
        %1037 = vmatprep.mubr.bf16.mxu0 %v756
        %1038 = vmatmul.mubr.bf16.gmra.mrb[0].mxu0 %v755
        %v1039 = vpop.f32.mrb[0].mxu0
        %v1040 = vadd.f32 0.0, %v1039
        %v1041 = vpop.f32.mrb[0].mxu0
        %v1042 = vpop.f32.mrb[0].mxu0
        %v1043 = vadd.f32 0.0, %v1042
        %v1044 = vpop.f32.mrb[0].mxu0
        %1045 = vmatprep.mubr.bf16.mxu0 %v759
        %1046 = vmatmul.mubr.bf16.gmra.mrb[0].mxu0 %v758
        %v1047 = vpop.f32.mrb[0].mxu0
        %v1048 = vadd.f32 0.0, %v1047
        %v1049 = vpop.f32.mrb[0].mxu0
        %v1050 = vpop.f32.mrb[0].mxu0
        %v1051 = vadd.f32 0.0, %v1050
        %v1052 = vpop.f32.mrb[0].mxu0
        %1053 = vmatprep.mubr.bf16.mxu0 %v762
        %1054 = vmatmul.mubr.bf16.gmra.mrb[0].mxu0 %v761
        %v1055 = vpop.f32.mrb[0].mxu0
        %v1056 = vadd.f32 0.0, %v1055
        %v1057 = vpop.f32.mrb[0].mxu0
        %v1058 = vpop.f32.mrb[0].mxu0
        %v1059 = vadd.f32 0.0, %v1058
        %v1060 = vpop.f32.mrb[0].mxu0
        %1061 = vmatprep.mubr.bf16.mxu0 %v765
        %1062 = vmatmul.mubr.bf16.gmra.mrb[0].mxu0 %v764
        %v1063 = vpop.f32.mrb[0].mxu0
        %v1064 = vadd.f32 0.0, %v1063
        %v1065 = vpop.f32.mrb[0].mxu0
        %v1066 = vpop.f32.mrb[0].mxu0
        %v1067 = vadd.f32 0.0, %v1066
        %v1068 = vpop.f32.mrb[0].mxu0
        %1069 = vmatprep.mubr.bf16.mxu0 %v768
        %1070 = vmatmul.mubr.bf16.gmra.mrb[0].mxu0 %v767
        %v1071 = vpop.f32.mrb[0].mxu0
        %v1072 = vadd.f32 0.0, %v1071
        %v1073 = vpop.f32.mrb[0].mxu0
        %v1074 = vpop.f32.mrb[0].mxu0
        %v1075 = vadd.f32 0.0, %v1074
        %v1076 = vpop.f32.mrb[0].mxu0
        %1077 = vmatprep.mubr.bf16.mxu0 %v771
        %1078 = vmatmul.mubr.bf16.gmra.mrb[0].mxu0 %v770
        %v1079 = vpop.f32.mrb[0].mxu0
        %v1080 = vadd.f32 0.0, %v1079
        %v1081 = vpop.f32.mrb[0].mxu0
        %v1082 = vpop.f32.mrb[0].mxu0
        %v1083 = vadd.f32 0.0, %v1082
        %v1084 = vpop.f32.mrb[0].mxu0
        %1085 = vmatprep.mubr.bf16.mxu0 %v774
        %1086 = vmatmul.mubr.bf16.gmra.mrb[0].mxu0 %v773
        %v1087 = vpop.f32.mrb[0].mxu0
        %v1088 = vadd.f32 0.0, %v1087
        %v1089 = vpop.f32.mrb[0].mxu0
        %v1090 = vpop.f32.mrb[0].mxu0
        %v1091 = vadd.f32 0.0, %v1090
        %v1092 = vpop.f32.mrb[0].mxu0
        %1093 = vmatprep.mubr.bf16.mxu0 %v777
        %1094 = vmatmul.mubr.bf16.gmra.mrb[0].mxu0 %v776
        %v1095 = vpop.f32.mrb[0].mxu0
        %v1096 = vadd.f32 0.0, %v1095
        %v1097 = vpop.f32.mrb[0].mxu0
        %v1098 = vpop.f32.mrb[0].mxu0
        %v1099 = vadd.f32 0.0, %v1098
        %v1100 = vpop.f32.mrb[0].mxu0
        %1101 = vmatprep.mubr.bf16.mxu0 %v780
        %1102 = vmatmul.mubr.bf16.gmra.mrb[0].mxu0 %v779
        %v1103 = vpop.f32.mrb[0].mxu0
        %v1104 = vadd.f32 0.0, %v1103
        %v1105 = vpop.f32.mrb[0].mxu0
        %v1106 = vpop.f32.mrb[0].mxu0
        %v1107 = vadd.f32 0.0, %v1106
        %v1108 = vpop.f32.mrb[0].mxu0
        %1109 = vmatprep.mubr.bf16.mxu0 %v783
        %1110 = vmatmul.mubr.bf16.gmra.mrb[0].mxu0 %v782
        %v1111 = vpop.f32.mrb[0].mxu0
        %v1112 = vadd.f32 0.0, %v1111
        %v1113 = vpop.f32.mrb[0].mxu0
        %v1114 = vpop.f32.mrb[0].mxu0
        %v1115 = vadd.f32 0.0, %v1114
        %v1116 = vpop.f32.mrb[0].mxu0
        %1117 = vmatprep.mubr.bf16.mxu0 %v786
        %1118 = vmatmul.mubr.bf16.gmra.mrb[0].mxu0 %v785
        %v1119 = vpop.f32.mrb[0].mxu0
        %v1120 = vadd.f32 0.0, %v1119
        %v1121 = vpop.f32.mrb[0].mxu0
        %v1122 = vpop.f32.mrb[0].mxu0
        %v1123 = vadd.f32 0.0, %v1122
        %v1124 = vpop.f32.mrb[0].mxu0
        %1125 = vmatprep.mubr.bf16.mxu0 %v789
        %1126 = vmatmul.mubr.bf16.gmra.mrb[0].mxu0 %v788
        %v1127 = vpop.f32.mrb[0].mxu0
        %v1128 = vadd.f32 0.0, %v1127
        %v1129 = vpop.f32.mrb[0].mxu0
        %v1130 = vpop.f32.mrb[0].mxu0
        %v1131 = vadd.f32 0.0, %v1130
        %v1132 = vpop.f32.mrb[0].mxu0
        %1133 = vmatprep.mubr.bf16.mxu0 %v792
        %1134 = vmatmul.mubr.bf16.gmra.mrb[0].mxu0 %v791
        %v1135 = vpop.f32.mrb[0].mxu0
        %v1136 = vadd.f32 0.0, %v1135
        %v1137 = vpop.f32.mrb[0].mxu0
        %v1138 = vpop.f32.mrb[0].mxu0
        %v1139 = vadd.f32 0.0, %v1138
        %v1140 = vpop.f32.mrb[0].mxu0
        %1141 = vmatprep.mubr.bf16.mxu0 %v795
        %1142 = vmatmul.mubr.bf16.gmra.mrb[0].mxu0 %v794
        %v1143 = vpop.f32.mrb[0].mxu0
        %v1144 = vadd.f32 0.0, %v1143
        %v1145 = vpop.f32.mrb[0].mxu0
        %v1146 = vpop.f32.mrb[0].mxu0
        %v1147 = vadd.f32 0.0, %v1146
        %v1148 = vpop.f32.mrb[0].mxu0
        %1149 = vdwg.mxu0
        %1150 = vmatprep.subr.bf16.mxu0 0
        %1151 = vmatpush1.bf16.msra.mxu0 %v957
        %1152 = vmatprep.subr.bf16.mxu0 0
        %1153 = vmatpush1.bf16.msra.mxu0 %v958
        %1154 = vmatprep.subr.bf16.mxu0 0
        %1155 = vmatpush1.bf16.msra.mxu0 %v959
        %1156 = vmatprep.subr.bf16.mxu0 0
        %1157 = vmatpush1.bf16.msra.mxu0 %v960
        %1158 = vmatprep.subr.bf16.mxu0 0
        %1159 = vmatpush1.bf16.msra.mxu0 %v961
        %1160 = vmatprep.subr.bf16.mxu0 0
        %1161 = vmatpush1.bf16.msra.mxu0 %v962
        %1162 = vmatprep.subr.bf16.mxu0 0
        %1163 = vmatpush1.bf16.msra.mxu0 %v963
        %1164 = vmatprep.subr.bf16.mxu0 0
        %1165 = vmatpush1.bf16.msra.mxu0 %v964
        %1166 = vmatprep.subr.bf16.mxu0 0
        %1167 = vmatpush1.bf16.msra.mxu0 0
        %1168 = vmatprep.subr.bf16.mxu0 0
        %1169 = vmatpush1.bf16.msra.mxu0 0
        %1170 = vmatprep.subr.bf16.mxu0 0
        %1171 = vmatpush1.bf16.msra.mxu0 0
        %1172 = vmatprep.subr.bf16.mxu0 0
        %1173 = vmatpush1.bf16.msra.mxu0 0
        %1174 = vmatprep.subr.bf16.mxu0 0
        %1175 = vmatpush1.bf16.msra.mxu0 0
        %1176 = vmatprep.subr.bf16.mxu0 0
        %1177 = vmatpush1.bf16.msra.mxu0 0
        %1178 = vmatprep.subr.bf16.mxu0 0
        %1179 = vmatpush1.bf16.msra.mxu0 0
        %1180 = vmatprep.subr.bf16.mxu0 0
        %1181 = vmatpush1.bf16.msra.mxu0 0
        %1182 = vmatprep.mubr.bf16.mxu0 0
        %1183 = vmatmul.mubr.bf16.gmra.mrb[0].mxu0 %v751
        %v1184 = vpop.f32.mrb[0].mxu0
        %v1185 = vadd.f32 %v1024, %v1184
        %v1186 = vpop.f32.mrb[0].mxu0
        %v1187 = vpop.f32.mrb[0].mxu0
        %v1188 = vadd.f32 %v1027, %v1187
        %v1189 = vpop.f32.mrb[0].mxu0
        %1190 = vmatprep.mubr.bf16.mxu0 0
        %1191 = vmatmul.mubr.bf16.gmra.mrb[0].mxu0 %v754
        %v1192 = vpop.f32.mrb[0].mxu0
        %v1193 = vadd.f32 %v1032, %v1192
        %v1194 = vpop.f32.mrb[0].mxu0
        %v1195 = vpop.f32.mrb[0].mxu0
        %v1196 = vadd.f32 %v1035, %v1195
        %v1197 = vpop.f32.mrb[0].mxu0
        %1198 = vmatprep.mubr.bf16.mxu0 0
        %1199 = vmatmul.mubr.bf16.gmra.mrb[0].mxu0 %v757
        %v1200 = vpop.f32.mrb[0].mxu0
        %v1201 = vadd.f32 %v1040, %v1200
        %v1202 = vpop.f32.mrb[0].mxu0
        %v1203 = vpop.f32.mrb[0].mxu0
        %v1204 = vadd.f32 %v1043, %v1203
        %v1205 = vpop.f32.mrb[0].mxu0
        %1206 = vmatprep.mubr.bf16.mxu0 0
        %1207 = vmatmul.mubr.bf16.gmra.mrb[0].mxu0 %v760
        %v1208 = vpop.f32.mrb[0].mxu0
        %v1209 = vadd.f32 %v1048, %v1208
        %v1210 = vpop.f32.mrb[0].mxu0
        %v1211 = vpop.f32.mrb[0].mxu0
        %v1212 = vadd.f32 %v1051, %v1211
        %v1213 = vpop.f32.mrb[0].mxu0
        %1214 = vmatprep.mubr.bf16.mxu0 0
        %1215 = vmatmul.mubr.bf16.gmra.mrb[0].mxu0 %v763
        %v1216 = vpop.f32.mrb[0].mxu0
        %v1217 = vadd.f32 %v1056, %v1216
        %v1218 = vpop.f32.mrb[0].mxu0
        %v1219 = vpop.f32.mrb[0].mxu0
        %v1220 = vadd.f32 %v1059, %v1219
        %v1221 = vpop.f32.mrb[0].mxu0
        %1222 = vmatprep.mubr.bf16.mxu0 0
        %1223 = vmatmul.mubr.bf16.gmra.mrb[0].mxu0 %v766
        %v1224 = vpop.f32.mrb[0].mxu0
        %v1225 = vadd.f32 %v1064, %v1224
        %v1226 = vpop.f32.mrb[0].mxu0
        %v1227 = vpop.f32.mrb[0].mxu0
        %v1228 = vadd.f32 %v1067, %v1227
        %v1229 = vpop.f32.mrb[0].mxu0
        %1230 = vmatprep.mubr.bf16.mxu0 0
        %1231 = vmatmul.mubr.bf16.gmra.mrb[0].mxu0 %v769
        %v1232 = vpop.f32.mrb[0].mxu0
        %v1233 = vadd.f32 %v1072, %v1232
        %v1234 = vpop.f32.mrb[0].mxu0
        %v1235 = vpop.f32.mrb[0].mxu0
        %v1236 = vadd.f32 %v1075, %v1235
        %v1237 = vpop.f32.mrb[0].mxu0
        %1238 = vmatprep.mubr.bf16.mxu0 0
        %1239 = vmatmul.mubr.bf16.gmra.mrb[0].mxu0 %v772
        %v1240 = vpop.f32.mrb[0].mxu0
        %v1241 = vadd.f32 %v1080, %v1240
        %v1242 = vpop.f32.mrb[0].mxu0
        %v1243 = vpop.f32.mrb[0].mxu0
        %v1244 = vadd.f32 %v1083, %v1243
        %v1245 = vpop.f32.mrb[0].mxu0
        %1246 = vmatprep.mubr.bf16.mxu0 0
        %1247 = vmatmul.mubr.bf16.gmra.mrb[0].mxu0 %v775
        %v1248 = vpop.f32.mrb[0].mxu0
        %v1249 = vadd.f32 %v1088, %v1248
        %v1250 = vpop.f32.mrb[0].mxu0
        %v1251 = vpop.f32.mrb[0].mxu0
        %v1252 = vadd.f32 %v1091, %v1251
        %v1253 = vpop.f32.mrb[0].mxu0
        %1254 = vmatprep.mubr.bf16.mxu0 0
        %1255 = vmatmul.mubr.bf16.gmra.mrb[0].mxu0 %v778
        %v1256 = vpop.f32.mrb[0].mxu0
        %v1257 = vadd.f32 %v1096, %v1256
        %v1258 = vpop.f32.mrb[0].mxu0
        %v1259 = vpop.f32.mrb[0].mxu0
        %v1260 = vadd.f32 %v1099, %v1259
        %v1261 = vpop.f32.mrb[0].mxu0
        %1262 = vmatprep.mubr.bf16.mxu0 0
        %1263 = vmatmul.mubr.bf16.gmra.mrb[0].mxu0 %v781
        %v1264 = vpop.f32.mrb[0].mxu0
        %v1265 = vadd.f32 %v1104, %v1264
        %v1266 = vpop.f32.mrb[0].mxu0
        %v1267 = vpop.f32.mrb[0].mxu0
        %v1268 = vadd.f32 %v1107, %v1267
        %v1269 = vpop.f32.mrb[0].mxu0
        %1270 = vmatprep.mubr.bf16.mxu0 0
        %1271 = vmatmul.mubr.bf16.gmra.mrb[0].mxu0 %v784
        %v1272 = vpop.f32.mrb[0].mxu0
        %v1273 = vadd.f32 %v1112, %v1272
        %v1274 = vpop.f32.mrb[0].mxu0
        %v1275 = vpop.f32.mrb[0].mxu0
        %v1276 = vadd.f32 %v1115, %v1275
        %v1277 = vpop.f32.mrb[0].mxu0
        %1278 = vmatprep.mubr.bf16.mxu0 0
        %1279 = vmatmul.mubr.bf16.gmra.mrb[0].mxu0 %v787
        %v1280 = vpop.f32.mrb[0].mxu0
        %v1281 = vadd.f32 %v1120, %v1280
        %v1282 = vpop.f32.mrb[0].mxu0
        %v1283 = vpop.f32.mrb[0].mxu0
        %v1284 = vadd.f32 %v1123, %v1283
        %v1285 = vpop.f32.mrb[0].mxu0
        %1286 = vmatprep.mubr.bf16.mxu0 0
        %1287 = vmatmul.mubr.bf16.gmra.mrb[0].mxu0 %v790
        %v1288 = vpop.f32.mrb[0].mxu0
        %v1289 = vadd.f32 %v1128, %v1288
        %v1290 = vpop.f32.mrb[0].mxu0
        %v1291 = vpop.f32.mrb[0].mxu0
        %v1292 = vadd.f32 %v1131, %v1291
        %v1293 = vpop.f32.mrb[0].mxu0
        %1294 = vmatprep.mubr.bf16.mxu0 0
        %1295 = vmatmul.mubr.bf16.gmra.mrb[0].mxu0 %v793
        %v1296 = vpop.f32.mrb[0].mxu0
        %v1297 = vadd.f32 %v1136, %v1296
        %v1298 = vpop.f32.mrb[0].mxu0
        %v1299 = vpop.f32.mrb[0].mxu0
        %v1300 = vadd.f32 %v1139, %v1299
        %v1301 = vpop.f32.mrb[0].mxu0
        %1302 = vmatprep.mubr.bf16.mxu0 0
        %1303 = vmatmul.mubr.bf16.gmra.mrb[0].mxu0 %v796
        %v1304 = vpop.f32.mrb[0].mxu0
        %v1305 = vadd.f32 %v1144, %v1304
        %v1306 = vpop.f32.mrb[0].mxu0
        %v1307 = vpop.f32.mrb[0].mxu0
        %v1308 = vadd.f32 %v1147, %v1307
        %v1309 = vpop.f32.mrb[0].mxu0
        %1310 = vdwg.mxu0
        %v1311 = vadd.f32 %v445, %v1185
        %v1312 = vadd.f32 %v446, %v1188
        %v1313 = vadd.f32 %v447, %v1193
        %v1314 = vadd.f32 %v448, %v1196
        %v1315 = vadd.f32 %v449, %v1201
        %v1316 = vadd.f32 %v450, %v1204
        %v1317 = vadd.f32 %v451, %v1209
        %v1318 = vadd.f32 %v452, %v1212
        %v1319 = vadd.f32 %v453, %v1217
        %v1320 = vadd.f32 %v454, %v1220
        %v1321 = vadd.f32 %v455, %v1225
        %v1322 = vadd.f32 %v456, %v1228
        %v1323 = vadd.f32 %v457, %v1233
        %v1324 = vadd.f32 %v458, %v1236
        %v1325 = vadd.f32 %v459, %v1241
        %v1326 = vadd.f32 %v460, %v1244
        %v1327 = vadd.f32 %v461, %v1249
        %v1328 = vadd.f32 %v462, %v1252
        %v1329 = vadd.f32 %v463, %v1257
        %v1330 = vadd.f32 %v464, %v1260
        %v1331 = vadd.f32 %v465, %v1265
        %v1332 = vadd.f32 %v466, %v1268
        %v1333 = vadd.f32 %v467, %v1273
        %v1334 = vadd.f32 %v468, %v1276
        %v1335 = vadd.f32 %v469, %v1281
        %v1336 = vadd.f32 %v470, %v1284
        %v1337 = vadd.f32 %v471, %v1289
        %v1338 = vadd.f32 %v472, %v1292
        %v1339 = vadd.f32 %v473, %v1297
        %v1340 = vadd.f32 %v474, %v1300
        %v1341 = vadd.f32 %v475, %v1305
        %v1342 = vadd.f32 %v476, %v1308
        %1343 = vst [vmem:[#allocation2] sm:$0xff] %v1311
        %1344 = vst [vmem:[#allocation2 + $0x8] sm:$0xff] %v1312
        %1345 = vst [vmem:[#allocation2 + $0x10] sm:$0xff] %v1313
        %1346 = vst [vmem:[#allocation2 + $0x18] sm:$0xff] %v1314
        %1347 = vst [vmem:[#allocation2 + $0x20] sm:$0xff] %v1315
        %1348 = vst [vmem:[#allocation2 + $0x28] sm:$0xff] %v1316
        %1349 = vst [vmem:[#allocation2 + $0x30] sm:$0xff] %v1317
        %1350 = vst [vmem:[#allocation2 + $0x38] sm:$0xff] %v1318
        %1351 = vst [vmem:[#allocation2 + $0x40] sm:$0xff] %v1319
        %1352 = vst [vmem:[#allocation2 + $0x48] sm:$0xff] %v1320
        %1353 = vst [vmem:[#allocation2 + $0x50] sm:$0xff] %v1321
        %1354 = vst [vmem:[#allocation2 + $0x58] sm:$0xff] %v1322
        %1355 = vst [vmem:[#allocation2 + $0x60] sm:$0xff] %v1323
        %1356 = vst [vmem:[#allocation2 + $0x68] sm:$0xff] %v1324
        %1357 = vst [vmem:[#allocation2 + $0x70] sm:$0xff] %v1325
        %1358 = vst [vmem:[#allocation2 + $0x78] sm:$0xff] %v1326
        %1359 = vst [vmem:[#allocation2 + $0x80] sm:$0xff] %v1327
        %1360 = vst [vmem:[#allocation2 + $0x88] sm:$0xff] %v1328
        %1361 = vst [vmem:[#allocation2 + $0x90] sm:$0xff] %v1329
        %1362 = vst [vmem:[#allocation2 + $0x98] sm:$0xff] %v1330
        %1363 = vst [vmem:[#allocation2 + $0xa0] sm:$0xff] %v1331
        %1364 = vst [vmem:[#allocation2 + $0xa8] sm:$0xff] %v1332
        %1365 = vst [vmem:[#allocation2 + $0xb0] sm:$0xff] %v1333
        %1366 = vst [vmem:[#allocation2 + $0xb8] sm:$0xff] %v1334
        %1367 = vst [vmem:[#allocation2 + $0xc0] sm:$0xff] %v1335
        %1368 = vst [vmem:[#allocation2 + $0xc8] sm:$0xff] %v1336
        %1369 = vst [vmem:[#allocation2 + $0xd0] sm:$0xff] %v1337
        %1370 = vst [vmem:[#allocation2 + $0xd8] sm:$0xff] %v1338
        %1371 = vst [vmem:[#allocation2 + $0xe0] sm:$0xff] %v1339
        %1372 = vst [vmem:[#allocation2 + $0xe8] sm:$0xff] %v1340
        %1373 = vst [vmem:[#allocation2 + $0xf0] sm:$0xff] %v1341
        %1374 = vst [vmem:[#allocation2 + $0xf8] sm:$0xff] %v1342
        %p1375 = scmp.eq.s32.totalorder %s21, 2
        // Predicated region
        $region63: #{cxr_autoencoder_forward.13} parent=53 // pred_check
          %p1376 = pneg %p1375
        $region64: #{cxr_autoencoder_forward.13} parent=53 // pred_check_branch
          %1378 = sbr.rel (%p1376) target = $region66
        $region65: #{cxr_autoencoder_forward.13} parent=53 // pred_region
          %v1379 = vld [vmem:[#allocation2] sm:$0xff]
          %v1380 = vld [vmem:[#allocation2 + $0x8] sm:$0xff]
          %v1381 = vld [vmem:[#allocation2 + $0x10] sm:$0xff]
          %v1382 = vld [vmem:[#allocation2 + $0x18] sm:$0xff]
          %v1383 = vld [vmem:[#allocation2 + $0x20] sm:$0xff]
          %v1384 = vld [vmem:[#allocation2 + $0x28] sm:$0xff]
          %v1385 = vld [vmem:[#allocation2 + $0x30] sm:$0xff]
          %v1386 = vld [vmem:[#allocation2 + $0x38] sm:$0xff]
          %v1387 = vld [vmem:[#allocation2 + $0x40] sm:$0xff]
          %v1388 = vld [vmem:[#allocation2 + $0x48] sm:$0xff]
          %v1389 = vld [vmem:[#allocation2 + $0x50] sm:$0xff]
          %v1390 = vld [vmem:[#allocation2 + $0x58] sm:$0xff]
          %v1391 = vld [vmem:[#allocation2 + $0x60] sm:$0xff]
          %v1392 = vld [vmem:[#allocation2 + $0x68] sm:$0xff]
          %v1393 = vld [vmem:[#allocation2 + $0x70] sm:$0xff]
          %v1394 = vld [vmem:[#allocation2 + $0x78] sm:$0xff]
          %v1395 = vld [vmem:[#allocation2 + $0x80] sm:$0xff]
          %v1396 = vld [vmem:[#allocation2 + $0x88] sm:$0xff]
          %v1397 = vld [vmem:[#allocation2 + $0x90] sm:$0xff]
          %v1398 = vld [vmem:[#allocation2 + $0x98] sm:$0xff]
          %v1399 = vld [vmem:[#allocation2 + $0xa0] sm:$0xff]
          %v1400 = vld [vmem:[#allocation2 + $0xa8] sm:$0xff]
          %v1401 = vld [vmem:[#allocation2 + $0xb0] sm:$0xff]
          %v1402 = vld [vmem:[#allocation2 + $0xb8] sm:$0xff]
          %v1403 = vld [vmem:[#allocation2 + $0xc0] sm:$0xff]
          %v1404 = vld [vmem:[#allocation2 + $0xc8] sm:$0xff]
          %v1405 = vld [vmem:[#allocation2 + $0xd0] sm:$0xff]
          %v1406 = vld [vmem:[#allocation2 + $0xd8] sm:$0xff]
          %v1407 = vld [vmem:[#allocation2 + $0xe0] sm:$0xff]
          %v1408 = vld [vmem:[#allocation2 + $0xe8] sm:$0xff]
          %v1409 = vld [vmem:[#allocation2 + $0xf0] sm:$0xff]
          %v1410 = vld [vmem:[#allocation2 + $0xf8] sm:$0xff]
          %v1411 = vld [vmem:[%s398] sm:$0x1]
          %v1413 = vlaneseq
          %v1414 = vshrl.u32 %v1413, 7
          %v1415 = vsub.s32 0, %v1414
          %v1416 = vrot.slane %v1411, %v1415
          %v1418 = vadd.f32 %v1379, %v1416
          %v1419 = vadd.f32 %v1380, %v1416
          %v1420 = vadd.f32 %v1381, %v1416
          %v1421 = vadd.f32 %v1382, %v1416
          %v1422 = vadd.f32 %v1383, %v1416
          %v1423 = vadd.f32 %v1384, %v1416
          %v1424 = vadd.f32 %v1385, %v1416
          %v1425 = vadd.f32 %v1386, %v1416
          %v1426 = vadd.f32 %v1387, %v1416
          %v1427 = vadd.f32 %v1388, %v1416
          %v1428 = vadd.f32 %v1389, %v1416
          %v1429 = vadd.f32 %v1390, %v1416
          %v1430 = vadd.f32 %v1391, %v1416
          %v1431 = vadd.f32 %v1392, %v1416
          %v1432 = vadd.f32 %v1393, %v1416
          %v1433 = vadd.f32 %v1394, %v1416
          %v1434 = vadd.f32 %v1395, %v1416
          %v1435 = vadd.f32 %v1396, %v1416
          %v1436 = vadd.f32 %v1397, %v1416
          %v1437 = vadd.f32 %v1398, %v1416
          %v1438 = vadd.f32 %v1399, %v1416
          %v1439 = vadd.f32 %v1400, %v1416
          %v1440 = vadd.f32 %v1401, %v1416
          %v1441 = vadd.f32 %v1402, %v1416
          %v1442 = vadd.f32 %v1403, %v1416
          %v1443 = vadd.f32 %v1404, %v1416
          %v1444 = vadd.f32 %v1405, %v1416
          %v1445 = vadd.f32 %v1406, %v1416
          %v1446 = vadd.f32 %v1407, %v1416
          %v1447 = vadd.f32 %v1408, %v1416
          %v1448 = vadd.f32 %v1409, %v1416
          %v1449 = vadd.f32 %v1410, %v1416
          %1450 = vst [vmem:[%s406] sm:$0xff] %v1418
          %1451 = vst [vmem:[%s406 + $0x8] sm:$0xff] %v1419
          %1452 = vst [vmem:[%s406 + $0x10] sm:$0xff] %v1420
          %1453 = vst [vmem:[%s406 + $0x18] sm:$0xff] %v1421
          %1454 = vst [vmem:[%s406 + $0x20] sm:$0xff] %v1422
          %1455 = vst [vmem:[%s406 + $0x28] sm:$0xff] %v1423
          %1456 = vst [vmem:[%s406 + $0x30] sm:$0xff] %v1424
          %1457 = vst [vmem:[%s406 + $0x38] sm:$0xff] %v1425
          %1458 = vst [vmem:[%s406 + $0x40] sm:$0xff] %v1426
          %1459 = vst [vmem:[%s406 + $0x48] sm:$0xff] %v1427
          %1460 = vst [vmem:[%s406 + $0x50] sm:$0xff] %v1428
          %1461 = vst [vmem:[%s406 + $0x58] sm:$0xff] %v1429
          %1462 = vst [vmem:[%s406 + $0x60] sm:$0xff] %v1430
          %1463 = vst [vmem:[%s406 + $0x68] sm:$0xff] %v1431
          %1464 = vst [vmem:[%s406 + $0x70] sm:$0xff] %v1432
          %1465 = vst [vmem:[%s406 + $0x78] sm:$0xff] %v1433
          %1466 = vst [vmem:[%s406 + $0x80] sm:$0xff] %v1434
          %1467 = vst [vmem:[%s406 + $0x88] sm:$0xff] %v1435
          %1468 = vst [vmem:[%s406 + $0x90] sm:$0xff] %v1436
          %1469 = vst [vmem:[%s406 + $0x98] sm:$0xff] %v1437
          %1470 = vst [vmem:[%s406 + $0xa0] sm:$0xff] %v1438
          %1471 = vst [vmem:[%s406 + $0xa8] sm:$0xff] %v1439
          %1472 = vst [vmem:[%s406 + $0xb0] sm:$0xff] %v1440
          %1473 = vst [vmem:[%s406 + $0xb8] sm:$0xff] %v1441
          %1474 = vst [vmem:[%s406 + $0xc0] sm:$0xff] %v1442
          %1475 = vst [vmem:[%s406 + $0xc8] sm:$0xff] %v1443
          %1476 = vst [vmem:[%s406 + $0xd0] sm:$0xff] %v1444
          %1477 = vst [vmem:[%s406 + $0xd8] sm:$0xff] %v1445
          %1478 = vst [vmem:[%s406 + $0xe0] sm:$0xff] %v1446
          %1479 = vst [vmem:[%s406 + $0xe8] sm:$0xff] %v1447
          %1480 = vst [vmem:[%s406 + $0xf0] sm:$0xff] %v1448
          %1481 = vst [vmem:[%s406 + $0xf8] sm:$0xff] %v1449
        $region66: #{cxr_autoencoder_forward.13} parent=53 // pred_fallthru
          _
        %s1482 = smul.u32 32, %s19
        %p1483 = scmp.lt.s32.totalorder %s1482, 255
        %s1484 = scalar_select %p1483, %s1482, 255
        %p1485 = scmp.lt.s32.totalorder %s20, 0
        %s1486 = scalar_select %p1485, %s20, 0
        %s1487 = sadd.s32 %s1486, %s1484
        %s1488 = smul.addr %s1487, 8
        %s1489 = scalar_lea.vmem %s3, %s1488
        // Predicated region
        $region67: #{cxr_autoencoder_forward.13} parent=53 // pred_check
          %p1490 = pneg %p135
        $region68: #{cxr_autoencoder_forward.13} parent=53 // pred_check_branch
          %1492 = sbr.rel (%p1490) target = $region70
        $region69: #{cxr_autoencoder_forward.13} parent=53 // pred_region
          %s1493 = smul.u32 32, %s19
        $region70: #{cxr_autoencoder_forward.13} parent=53 // pred_fallthru
          _
      $region54: #{cxr_autoencoder_forward.13} parent=5 // pred_fallthru
        _
      %p1494 = scmp.le.s32.totalorder 2, %s9
      // Predicated region
      $region71: #{cxr_autoencoder_forward.13} parent=5 // pred_check
        %p1495 = pneg %p1494
      $region72: #{cxr_autoencoder_forward.13} parent=5 // pred_check_branch
        %1497 = sbr.rel (%p1495) target = $region74
      $region73: #{cxr_autoencoder_forward.13} parent=5 // pred_region
        %s1498 = ssub.s32 %s9, 2
        // Predicated region
        $region75: #{cxr_autoencoder_forward.13} parent=73 // pred_check
          %p1499 = pneg %p141
        $region76: #{cxr_autoencoder_forward.13} parent=73 // pred_check_branch
          %1501 = sbr.rel (%p1499) target = $region78
        $region77: #{cxr_autoencoder_forward.13} parent=73 // pred_region
          %s1502 = smul.u32 32, %s22
          %p1503 = scmp.lt.s32.totalorder %s1502, 255
          %s1504 = scalar_select %p1503, %s1502, 255
          %p1505 = scmp.lt.s32.totalorder %s23, 0
          %s1506 = scalar_select %p1505, %s23, 0
          %s1507 = sadd.s32 %s1506, %s1504
          %s1508 = smul.addr %s1507, 8
          %s1509 = scalar_lea.vmem %s3, %s1508
        $region78: #{cxr_autoencoder_forward.13} parent=73 // pred_fallthru
          _
      $region74: #{cxr_autoencoder_forward.13} parent=5 // pred_fallthru
        _
    $region6: #{cxr_autoencoder_forward.13} parent=1 // loop_footer
      %s13 = sadd.s32 1, %s9
    $region7: #{cxr_autoencoder_forward.13} parent=1 // loop_footer_branch
      %8 = sbr.rel target = $region3
    $region8: #{cxr_autoencoder_forward.13} parent=1 // loop_exit
      _

</llo_original>
